<compile_context>
chip_gen: v6e
topology: v6e:2x2x1
jax: 0.10.0
libtpu: 0.0.40
codegen_flags: <defaults>
</compile_context>

<pallas_src>
import math

import jax
import jax.numpy as jnp
from jax.experimental import pallas as pl
from jax.experimental.pallas import tpu as pltpu

IN_CHANNELS = 3
NUM_CLASSES = 16
H_IN = 16                                   # input spatial size (square)
CFG = [32, "M", 64, "M", 128, "M", 512, "M"]
CONV_CHANNELS = [32, 64, 128, 512]


# ----------------------------------------------------------------------------
# In-kernel building blocks (operate on flattened (H*W, C) activations).
# ----------------------------------------------------------------------------
def _zero_halo(pad_ref, H, W):
    """Zero only the top/bottom halo rows of a padded flat buffer.

    The interior rows are fully overwritten every grid step (by the image
    write or by the previous layer's pool), so zeroing them again is wasted
    store bandwidth.
    """
    HW = H * W
    C = pad_ref.shape[-1]
    zeros = jnp.zeros((W + 1, C), jnp.float32)
    pad_ref[pl.ds(0, W + 1), :] = zeros                 # top halo
    pad_ref[pl.ds(W + 1 + HW, W + 1), :] = zeros        # bottom halo


def _conv3x3(pad_ref, w_ref, b_ref, H, W):
    """3x3 conv (pad=1, stride=1) + bias + ReLU.

    `pad_ref` holds the input image flattened row-major as (H*W, Cin), placed
    at rows [W+1, W+1+H*W) of a zero-padded flat buffer, so every 3x3 tap is a
    plain row-shifted slab.  Column-border taps are masked with an iota mask.
    Returns the (H*W, Cout) f32 activation.
    """
    HW = H * W
    Cout = w_ref.shape[-1]
    base = W + 1
    col = jax.lax.broadcasted_iota(jnp.int32, (HW, 1), 0) % W
    not_left = col != 0            # valid rows for kw == 0 taps
    not_right = col != (W - 1)     # valid rows for kw == 2 taps

    acc = jnp.zeros((HW, Cout), jnp.float32)
    for kh in range(3):
        for kw in range(3):
            off = (kh - 1) * W + (kw - 1)
            slab = pad_ref[pl.ds(base + off, HW), :]        # (HW, Cin) f32
            if kw == 0:
                slab = jnp.where(not_left, slab, 0.0)
            elif kw == 2:
                slab = jnp.where(not_right, slab, 0.0)
            acc = acc + jnp.dot(slab.astype(jnp.bfloat16), w_ref[kh, kw],
                                preferred_element_type=jnp.float32)
    return jnp.maximum(acc + b_ref[...], 0.0)               # bias + ReLU (f32)


def _pool_into_pad(act_ref, dst_pad_ref, H, W):
    """2x2 max-pool (stride 2) of the flattened (H*W, C) activation.

    Column pairs are selected with stride-2 sublane loads (channels stay on
    the lane axis); pooled rows are written straight into the interior of the
    next layer's zero-padded flat buffer.
    """
    Ho, Wo = H // 2, W // 2
    for ho in range(Ho):
        r0 = (2 * ho) * W
        r1 = r0 + W
        a = act_ref[pl.ds(r0, Wo, stride=2), :]
        b = act_ref[pl.ds(r0 + 1, Wo, stride=2), :]
        c = act_ref[pl.ds(r1, Wo, stride=2), :]
        d = act_ref[pl.ds(r1 + 1, Wo, stride=2), :]
        dst_pad_ref[pl.ds((Wo + 1) + ho * Wo, Wo), :] = jnp.maximum(
            jnp.maximum(a, b), jnp.maximum(c, d))


# ----------------------------------------------------------------------------
# Fused whole-network kernel (one grid step == one image).
# ----------------------------------------------------------------------------
def _vgg_kernel(x_ref,
                w1_ref, b1_ref, w2_ref, b2_ref, w3_ref, b3_ref, w4_ref, b4_ref,
                wl_ref, bl_ref,
                o_ref,
                pad1, act1, pad2, act2, pad3, act3, pad4):
    # Halo rows must be zero; interiors are overwritten below every step.
    _zero_halo(pad1, 16, 16)
    _zero_halo(pad2, 8, 8)
    _zero_halo(pad3, 4, 4)
    _zero_halo(pad4, 2, 2)

    # Stage 0: image -> interior of layer-1 padded buffer.
    pad1[pl.ds(H_IN + 1, H_IN * H_IN), :] = x_ref[0]

    # conv1 (3->32, 16x16) + pool -> pad2 (8x8)
    act1[...] = _conv3x3(pad1, w1_ref, b1_ref, 16, 16)
    _pool_into_pad(act1, pad2, 16, 16)

    # conv2 (32->64, 8x8) + pool -> pad3 (4x4)
    act2[...] = _conv3x3(pad2, w2_ref, b2_ref, 8, 8)
    _pool_into_pad(act2, pad3, 8, 8)

    # conv3 (64->128, 4x4) + pool -> pad4 (2x2)
    act3[...] = _conv3x3(pad3, w3_ref, b3_ref, 4, 4)
    _pool_into_pad(act3, pad4, 4, 4)

    # conv4 (128->512, 2x2) + final 2x2 pool -> (1, 512) feature vector
    y4 = _conv3x3(pad4, w4_ref, b4_ref, 2, 2)       # (4, 512)
    feat = jnp.max(y4, axis=0, keepdims=True)       # (1, 512)

    # classifier: (1, 512) @ (512, num_classes) + bias
    logits = jnp.dot(feat.astype(jnp.bfloat16), wl_ref[...],
                     preferred_element_type=jnp.float32) + bl_ref[...]
    o_ref[0] = logits


# ----------------------------------------------------------------------------
# Host wrapper.
# ----------------------------------------------------------------------------
def vgg_forward(x_nchw, conv_params, fc_params):
    B = x_nchw.shape[0]
    assert x_nchw.shape[1:] == (IN_CHANNELS, H_IN, H_IN), x_nchw.shape

    # NCHW -> NHWC -> flatten spatial: (B, H*W, Cin), channels on the lane dim.
    x = jnp.transpose(x_nchw, (0, 2, 3, 1)).astype(jnp.float32)
    x = x.reshape(B, H_IN * H_IN, IN_CHANNELS)

    (w1, b1), (w2, b2), (w3, b3), (w4, b4) = conv_params
    wl, bl = fc_params
    bf = jnp.bfloat16
    args = (x,
            w1.astype(bf), b1, w2.astype(bf), b2,
            w3.astype(bf), b3, w4.astype(bf), b4,
            wl.astype(bf), bl)

    def full(a):  # whole array resident in VMEM, constant index map
        return pl.BlockSpec(a.shape, lambda i, _nd=a.ndim: (0,) * _nd)

    in_specs = [pl.BlockSpec((1, H_IN * H_IN, IN_CHANNELS), lambda i: (i, 0, 0))]
    in_specs += [full(a) for a in args[1:]]

    out = pl.pallas_call(
        _vgg_kernel,
        out_shape=jax.ShapeDtypeStruct((B, 1, NUM_CLASSES), jnp.float32),
        grid=(B,),
        in_specs=in_specs,
        out_specs=pl.BlockSpec((1, 1, NUM_CLASSES), lambda i: (i, 0, 0)),
        scratch_shapes=[
            pltpu.VMEM((16 * 16 + 2 * 17, IN_CHANNELS), jnp.float32),  # pad1
            pltpu.VMEM((16 * 16, 32), jnp.float32),                    # act1
            pltpu.VMEM((8 * 8 + 2 * 9, 32), jnp.float32),              # pad2
            pltpu.VMEM((8 * 8, 64), jnp.float32),                      # act2
            pltpu.VMEM((4 * 4 + 2 * 5, 64), jnp.float32),              # pad3
            pltpu.VMEM((4 * 4, 128), jnp.float32),                     # act3
            pltpu.VMEM((2 * 2 + 2 * 3, 128), jnp.float32),             # pad4
        ],
        compiler_params=pltpu.CompilerParams(
            dimension_semantics=("parallel",),
            vmem_limit_bytes=32 * 1024 * 1024),
    )(*args)
    return out.reshape(B, NUM_CLASSES)


# ----------------------------------------------------------------------------
# Parameter init (matches the PyTorch _initialize_weights distributions).
# ----------------------------------------------------------------------------
def init_params(key):
    conv_params = []
    cin = IN_CHANNELS
    for cout in CONV_CHANNELS:
        key, kc = jax.random.split(key)
        n = 3 * 3 * cout                                   # kh*kw*out_channels
        w = jax.random.normal(kc, (3, 3, cin, cout), jnp.float32) * math.sqrt(2.0 / n)
        b = jnp.zeros((1, cout), jnp.float32)              # conv bias zeroed
        conv_params.append((w, b))
        cin = cout
    key, kl = jax.random.split(key)
    wl = jax.random.normal(kl, (512, NUM_CLASSES), jnp.float32) * 0.01
    bl = jnp.zeros((1, NUM_CLASSES), jnp.float32)          # linear bias zeroed
    return conv_params, (wl, bl)


if __name__ == "__main__":
    key = jax.random.PRNGKey(0)
    kparam, kx = jax.random.split(key)
    conv_params, fc_params = init_params(kparam)
    # batch=2, channels=3, spatial=16x16 -> after 4 pools: 1x1x512 features
    x = jax.random.normal(kx, (2, IN_CHANNELS, H_IN, H_IN), jnp.float32)

    out = jax.jit(vgg_forward)(x, conv_params, fc_params)
    jax.block_until_ready(out)
    assert out.shape == (2, NUM_CLASSES), out.shape
    assert bool(jnp.all(jnp.isfinite(out)))
    print("KERNEL_OK")
</pallas_src>

<mosaic_0001>
module attributes {stable_mosaic.version = 11 : i64} {
  func.func @_vgg_kernel(%arg0: i32, %arg1: memref<1x256x3xf32, #tpu.memory_space<vmem>>, %arg2: memref<3x3x3x32xbf16, #tpu.memory_space<vmem>>, %arg3: memref<1x32xf32, #tpu.memory_space<vmem>>, %arg4: memref<3x3x32x64xbf16, #tpu.memory_space<vmem>>, %arg5: memref<1x64xf32, #tpu.memory_space<vmem>>, %arg6: memref<3x3x64x128xbf16, #tpu.memory_space<vmem>>, %arg7: memref<1x128xf32, #tpu.memory_space<vmem>>, %arg8: memref<3x3x128x512xbf16, #tpu.memory_space<vmem>>, %arg9: memref<1x512xf32, #tpu.memory_space<vmem>>, %arg10: memref<512x16xbf16, #tpu.memory_space<vmem>>, %arg11: memref<1x16xf32, #tpu.memory_space<vmem>>, %arg12: memref<1x1x16xf32, #tpu.memory_space<vmem>>, %arg13: memref<290x3xf32, #tpu.memory_space<vmem>>, %arg14: memref<256x32xf32, #tpu.memory_space<vmem>>, %arg15: memref<82x32xf32, #tpu.memory_space<vmem>>, %arg16: memref<64x64xf32, #tpu.memory_space<vmem>>, %arg17: memref<26x64xf32, #tpu.memory_space<vmem>>, %arg18: memref<16x128xf32, #tpu.memory_space<vmem>>, %arg19: memref<10x128xf32, #tpu.memory_space<vmem>>) attributes {dimension_semantics = [#tpu.dimension_semantics<parallel>], iteration_bounds = array<i64: 2>, scalar_prefetch = 0 : i64, scratch_operands = 7 : i64, tpu.core_type = #tpu.core_type<tc>, window_params = [{transform_indices = @transform_0, window_bounds = array<i64: 1, 256, 3>}, {pipeline_mode = #tpu.pipeline_mode<synchronous>, transform_indices = @transform_1, window_bounds = array<i64: 3, 3, 3, 32>}, {pipeline_mode = #tpu.pipeline_mode<synchronous>, transform_indices = @transform_2, window_bounds = array<i64: 1, 32>}, {pipeline_mode = #tpu.pipeline_mode<synchronous>, transform_indices = @transform_3, window_bounds = array<i64: 3, 3, 32, 64>}, {pipeline_mode = #tpu.pipeline_mode<synchronous>, transform_indices = @transform_4, window_bounds = array<i64: 1, 64>}, {pipeline_mode = #tpu.pipeline_mode<synchronous>, transform_indices = @transform_5, window_bounds = array<i64: 3, 3, 64, 128>}, {pipeline_mode = #tpu.pipeline_mode<synchronous>, transform_indices = @transform_6, window_bounds = array<i64: 1, 128>}, {pipeline_mode = #tpu.pipeline_mode<synchronous>, transform_indices = @transform_7, window_bounds = array<i64: 3, 3, 128, 512>}, {pipeline_mode = #tpu.pipeline_mode<synchronous>, transform_indices = @transform_8, window_bounds = array<i64: 1, 512>}, {pipeline_mode = #tpu.pipeline_mode<synchronous>, transform_indices = @transform_9, window_bounds = array<i64: 512, 16>}, {pipeline_mode = #tpu.pipeline_mode<synchronous>, transform_indices = @transform_10, window_bounds = array<i64: 1, 16>}, {transform_indices = @transform_11, window_bounds = array<i64: 1, 1, 16>}]} {
    %cst = arith.constant 0.000000e+00 : f32
    %0 = vector.broadcast %cst : f32 to vector<17x3xf32>
    %c0 = arith.constant 0 : index
    %c0_0 = arith.constant 0 : index
    %1 = vector.load %arg13[%c0, %c0_0] : memref<290x3xf32, #tpu.memory_space<vmem>>, vector<17x3xf32>
    tpu.vector_store %arg13[%c0, %c0_0], %0 {strides = array<i32>} : memref<290x3xf32, #tpu.memory_space<vmem>>, vector<17x3xf32>,
    %c273 = arith.constant 273 : index
    %c0_1 = arith.constant 0 : index
    %2 = vector.load %arg13[%c273, %c0_1] : memref<290x3xf32, #tpu.memory_space<vmem>>, vector<17x3xf32>
    tpu.vector_store %arg13[%c273, %c0_1], %0 {strides = array<i32>} : memref<290x3xf32, #tpu.memory_space<vmem>>, vector<17x3xf32>,
    %cst_2 = arith.constant 0.000000e+00 : f32
    %3 = vector.broadcast %cst_2 : f32 to vector<9x32xf32>
    %c0_3 = arith.constant 0 : index
    %c0_4 = arith.constant 0 : index
    %4 = vector.load %arg15[%c0_3, %c0_4] : memref<82x32xf32, #tpu.memory_space<vmem>>, vector<9x32xf32>
    tpu.vector_store %arg15[%c0_3, %c0_4], %3 {strides = array<i32>} : memref<82x32xf32, #tpu.memory_space<vmem>>, vector<9x32xf32>,
    %c73 = arith.constant 73 : index
    %c0_5 = arith.constant 0 : index
    %5 = vector.load %arg15[%c73, %c0_5] : memref<82x32xf32, #tpu.memory_space<vmem>>, vector<9x32xf32>
    tpu.vector_store %arg15[%c73, %c0_5], %3 {strides = array<i32>} : memref<82x32xf32, #tpu.memory_space<vmem>>, vector<9x32xf32>,
    %cst_6 = arith.constant 0.000000e+00 : f32
    %6 = vector.broadcast %cst_6 : f32 to vector<5x64xf32>
    %c0_7 = arith.constant 0 : index
    %c0_8 = arith.constant 0 : index
    %7 = vector.load %arg17[%c0_7, %c0_8] : memref<26x64xf32, #tpu.memory_space<vmem>>, vector<5x64xf32>
    tpu.vector_store %arg17[%c0_7, %c0_8], %6 {strides = array<i32>} : memref<26x64xf32, #tpu.memory_space<vmem>>, vector<5x64xf32>,
    %c21 = arith.constant 21 : index
    %c0_9 = arith.constant 0 : index
    %8 = vector.load %arg17[%c21, %c0_9] : memref<26x64xf32, #tpu.memory_space<vmem>>, vector<5x64xf32>
    tpu.vector_store %arg17[%c21, %c0_9], %6 {strides = array<i32>} : memref<26x64xf32, #tpu.memory_space<vmem>>, vector<5x64xf32>,
    %cst_10 = arith.constant 0.000000e+00 : f32
    %9 = vector.broadcast %cst_10 : f32 to vector<3x128xf32>
    %c0_11 = arith.constant 0 : index
    %c0_12 = arith.constant 0 : index
    %10 = vector.load %arg19[%c0_11, %c0_12] : memref<10x128xf32, #tpu.memory_space<vmem>>, vector<3x128xf32>
    tpu.vector_store %arg19[%c0_11, %c0_12], %9 {strides = array<i32>} : memref<10x128xf32, #tpu.memory_space<vmem>>, vector<3x128xf32>,
    %c7 = arith.constant 7 : index
    %c0_13 = arith.constant 0 : index
    %11 = vector.load %arg19[%c7, %c0_13] : memref<10x128xf32, #tpu.memory_space<vmem>>, vector<3x128xf32>
    tpu.vector_store %arg19[%c7, %c0_13], %9 {strides = array<i32>} : memref<10x128xf32, #tpu.memory_space<vmem>>, vector<3x128xf32>,
    %c0_14 = arith.constant 0 : index
    %c0_15 = arith.constant 0 : index
    %c0_16 = arith.constant 0 : index
    %12 = vector.load %arg1[%c0_14, %c0_15, %c0_16] : memref<1x256x3xf32, #tpu.memory_space<vmem>>, vector<1x256x3xf32>
    %13 = vector.shape_cast %12 : vector<1x256x3xf32> to vector<256x3xf32>
    %c17 = arith.constant 17 : index
    %c0_17 = arith.constant 0 : index
    %14 = vector.load %arg13[%c17, %c0_17] : memref<290x3xf32, #tpu.memory_space<vmem>>, vector<256x3xf32>
    tpu.vector_store %arg13[%c17, %c0_17], %13 {strides = array<i32>} : memref<290x3xf32, #tpu.memory_space<vmem>>, vector<256x3xf32>,
    %15 = tpu.iota {dimensions = array<i32: 0>} : vector<256x1xi32>
    %c16_i32 = arith.constant 16 : i32
    %c0_i32 = arith.constant 0 : i32
    %16 = arith.cmpi eq, %c16_i32, %c0_i32 : i32
    %c1_i32 = arith.constant 1 : i32
    %17 = arith.select %16, %c1_i32, %c16_i32 : i32
    %18 = vector.broadcast %17 : i32 to vector<256x1xi32>
    %19 = arith.remsi %15, %18 : vector<256x1xi32>
    %c0_i32_18 = arith.constant 0 : i32
    %20 = vector.broadcast %c0_i32_18 : i32 to vector<256x1xi32>
    %21 = arith.cmpi ne, %19, %20 : vector<256x1xi32>
    %c0_i32_19 = arith.constant 0 : i32
    %22 = vector.broadcast %c0_i32_19 : i32 to vector<256x1xi32>
    %23 = arith.cmpi slt, %19, %22 : vector<256x1xi32>
    %c0_i32_20 = arith.constant 0 : i32
    %24 = arith.cmpi slt, %17, %c0_i32_20 : i32
    %25 = vector.broadcast %24 : i1 to vector<256x1xi1>
    %26 = vector.broadcast %25 : vector<256x1xi1> to vector<256x1xi1>
    %27 = arith.xori %23, %26 : vector<256x1xi1>
    %28 = arith.andi %27, %21 : vector<256x1xi1>
    %29 = vector.broadcast %17 : i32 to vector<256x1xi32>
    %30 = arith.addi %19, %29 : vector<256x1xi32>
    %31 = arith.select %28, %30, %19 : vector<256x1xi1>, vector<256x1xi32>
    %c0_i32_21 = arith.constant 0 : i32
    %32 = vector.broadcast %c0_i32_21 : i32 to vector<256x1xi32>
    %33 = arith.cmpi ne, %31, %32 : vector<256x1xi32>
    %c15_i32 = arith.constant 15 : i32
    %34 = vector.broadcast %c15_i32 : i32 to vector<256x1xi32>
    %35 = arith.cmpi ne, %31, %34 : vector<256x1xi32>
    %cst_22 = arith.constant 0.000000e+00 : f32
    %36 = vector.broadcast %cst_22 : f32 to vector<256x32xf32>
    %c0_23 = arith.constant 0 : index
    %c0_24 = arith.constant 0 : index
    %37 = vector.load %arg13[%c0_23, %c0_24] : memref<290x3xf32, #tpu.memory_space<vmem>>, vector<256x3xf32>
    %cst_25 = arith.constant 0.000000e+00 : f32
    %38 = vector.shape_cast %33 : vector<256x1xi1> to vector<256x1xi1>
    %39 = vector.broadcast %38 : vector<256x1xi1> to vector<256x3xi1>
    %40 = vector.broadcast %cst_25 : f32 to vector<256x3xf32>
    %41 = arith.select %39, %37, %40 : vector<256x3xi1>, vector<256x3xf32>
    %42 = arith.truncf %41 : vector<256x3xf32> to vector<256x3xbf16>
    %c0_26 = arith.constant 0 : index
    %c0_27 = arith.constant 0 : index
    %c0_28 = arith.constant 0 : index
    %c0_29 = arith.constant 0 : index
    %43 = vector.load %arg2[%c0_26, %c0_27, %c0_28, %c0_29] : memref<3x3x3x32xbf16, #tpu.memory_space<vmem>>, vector<1x1x3x32xbf16>
    %44 = vector.shape_cast %43 : vector<1x1x3x32xbf16> to vector<3x32xbf16>
    %cst_30 = arith.constant dense<0.000000e+00> : vector<256x32xf32>
    %45 = tpu.matmul %42, %44, %cst_30 {dimension_numbers = #tpu.dot_dimension_numbers<[1], [0], [0], [1], [0, 0, 1, 1], [], []>} : vector<256x3xbf16>, vector<3x32xbf16>, vector<256x32xf32> -> vector<256x32xf32>
    %46 = arith.addf %36, %45 : vector<256x32xf32>
    %c1 = arith.constant 1 : index
    %c0_31 = arith.constant 0 : index
    %47 = vector.load %arg13[%c1, %c0_31] : memref<290x3xf32, #tpu.memory_space<vmem>>, vector<256x3xf32>
    %48 = arith.truncf %47 : vector<256x3xf32> to vector<256x3xbf16>
    %c0_32 = arith.constant 0 : index
    %c1_33 = arith.constant 1 : index
    %c0_34 = arith.constant 0 : index
    %c0_35 = arith.constant 0 : index
    %49 = vector.load %arg2[%c0_32, %c1_33, %c0_34, %c0_35] : memref<3x3x3x32xbf16, #tpu.memory_space<vmem>>, vector<1x1x3x32xbf16>
    %50 = vector.shape_cast %49 : vector<1x1x3x32xbf16> to vector<3x32xbf16>
    %cst_36 = arith.constant dense<0.000000e+00> : vector<256x32xf32>
    %51 = tpu.matmul %48, %50, %cst_36 {dimension_numbers = #tpu.dot_dimension_numbers<[1], [0], [0], [1], [0, 0, 1, 1], [], []>} : vector<256x3xbf16>, vector<3x32xbf16>, vector<256x32xf32> -> vector<256x32xf32>
    %52 = arith.addf %46, %51 : vector<256x32xf32>
    %c2 = arith.constant 2 : index
    %c0_37 = arith.constant 0 : index
    %53 = vector.load %arg13[%c2, %c0_37] : memref<290x3xf32, #tpu.memory_space<vmem>>, vector<256x3xf32>
    %cst_38 = arith.constant 0.000000e+00 : f32
    %54 = vector.shape_cast %35 : vector<256x1xi1> to vector<256x1xi1>
    %55 = vector.broadcast %54 : vector<256x1xi1> to vector<256x3xi1>
    %56 = vector.broadcast %cst_38 : f32 to vector<256x3xf32>
    %57 = arith.select %55, %53, %56 : vector<256x3xi1>, vector<256x3xf32>
    %58 = arith.truncf %57 : vector<256x3xf32> to vector<256x3xbf16>
    %c0_39 = arith.constant 0 : index
    %c2_40 = arith.constant 2 : index
    %c0_41 = arith.constant 0 : index
    %c0_42 = arith.constant 0 : index
    %59 = vector.load %arg2[%c0_39, %c2_40, %c0_41, %c0_42] : memref<3x3x3x32xbf16, #tpu.memory_space<vmem>>, vector<1x1x3x32xbf16>
    %60 = vector.shape_cast %59 : vector<1x1x3x32xbf16> to vector<3x32xbf16>
    %cst_43 = arith.constant dense<0.000000e+00> : vector<256x32xf32>
    %61 = tpu.matmul %58, %60, %cst_43 {dimension_numbers = #tpu.dot_dimension_numbers<[1], [0], [0], [1], [0, 0, 1, 1], [], []>} : vector<256x3xbf16>, vector<3x32xbf16>, vector<256x32xf32> -> vector<256x32xf32>
    %62 = arith.addf %52, %61 : vector<256x32xf32>
    %c16 = arith.constant 16 : index
    %c0_44 = arith.constant 0 : index
    %63 = vector.load %arg13[%c16, %c0_44] : memref<290x3xf32, #tpu.memory_space<vmem>>, vector<256x3xf32>
    %cst_45 = arith.constant 0.000000e+00 : f32
    %64 = vector.shape_cast %33 : vector<256x1xi1> to vector<256x1xi1>
    %65 = vector.broadcast %64 : vector<256x1xi1> to vector<256x3xi1>
    %66 = vector.broadcast %cst_45 : f32 to vector<256x3xf32>
    %67 = arith.select %65, %63, %66 : vector<256x3xi1>, vector<256x3xf32>
    %68 = arith.truncf %67 : vector<256x3xf32> to vector<256x3xbf16>
    %c1_46 = arith.constant 1 : index
    %c0_47 = arith.constant 0 : index
    %c0_48 = arith.constant 0 : index
    %c0_49 = arith.constant 0 : index
    %69 = vector.load %arg2[%c1_46, %c0_47, %c0_48, %c0_49] : memref<3x3x3x32xbf16, #tpu.memory_space<vmem>>, vector<1x1x3x32xbf16>
    %70 = vector.shape_cast %69 : vector<1x1x3x32xbf16> to vector<3x32xbf16>
    %cst_50 = arith.constant dense<0.000000e+00> : vector<256x32xf32>
    %71 = tpu.matmul %68, %70, %cst_50 {dimension_numbers = #tpu.dot_dimension_numbers<[1], [0], [0], [1], [0, 0, 1, 1], [], []>} : vector<256x3xbf16>, vector<3x32xbf16>, vector<256x32xf32> -> vector<256x32xf32>
    %72 = arith.addf %62, %71 : vector<256x32xf32>
    %c17_51 = arith.constant 17 : index
    %c0_52 = arith.constant 0 : index
    %73 = vector.load %arg13[%c17_51, %c0_52] : memref<290x3xf32, #tpu.memory_space<vmem>>, vector<256x3xf32>
    %74 = arith.truncf %73 : vector<256x3xf32> to vector<256x3xbf16>
    %c1_53 = arith.constant 1 : index
    %c1_54 = arith.constant 1 : index
    %c0_55 = arith.constant 0 : index
    %c0_56 = arith.constant 0 : index
    %75 = vector.load %arg2[%c1_53, %c1_54, %c0_55, %c0_56] : memref<3x3x3x32xbf16, #tpu.memory_space<vmem>>, vector<1x1x3x32xbf16>
    %76 = vector.shape_cast %75 : vector<1x1x3x32xbf16> to vector<3x32xbf16>
    %cst_57 = arith.constant dense<0.000000e+00> : vector<256x32xf32>
    %77 = tpu.matmul %74, %76, %cst_57 {dimension_numbers = #tpu.dot_dimension_numbers<[1], [0], [0], [1], [0, 0, 1, 1], [], []>} : vector<256x3xbf16>, vector<3x32xbf16>, vector<256x32xf32> -> vector<256x32xf32>
    %78 = arith.addf %72, %77 : vector<256x32xf32>
    %c18 = arith.constant 18 : index
    %c0_58 = arith.constant 0 : index
    %79 = vector.load %arg13[%c18, %c0_58] : memref<290x3xf32, #tpu.memory_space<vmem>>, vector<256x3xf32>
    %cst_59 = arith.constant 0.000000e+00 : f32
    %80 = vector.shape_cast %35 : vector<256x1xi1> to vector<256x1xi1>
    %81 = vector.broadcast %80 : vector<256x1xi1> to vector<256x3xi1>
    %82 = vector.broadcast %cst_59 : f32 to vector<256x3xf32>
    %83 = arith.select %81, %79, %82 : vector<256x3xi1>, vector<256x3xf32>
    %84 = arith.truncf %83 : vector<256x3xf32> to vector<256x3xbf16>
    %c1_60 = arith.constant 1 : index
    %c2_61 = arith.constant 2 : index
    %c0_62 = arith.constant 0 : index
    %c0_63 = arith.constant 0 : index
    %85 = vector.load %arg2[%c1_60, %c2_61, %c0_62, %c0_63] : memref<3x3x3x32xbf16, #tpu.memory_space<vmem>>, vector<1x1x3x32xbf16>
    %86 = vector.shape_cast %85 : vector<1x1x3x32xbf16> to vector<3x32xbf16>
    %cst_64 = arith.constant dense<0.000000e+00> : vector<256x32xf32>
    %87 = tpu.matmul %84, %86, %cst_64 {dimension_numbers = #tpu.dot_dimension_numbers<[1], [0], [0], [1], [0, 0, 1, 1], [], []>} : vector<256x3xbf16>, vector<3x32xbf16>, vector<256x32xf32> -> vector<256x32xf32>
    %88 = arith.addf %78, %87 : vector<256x32xf32>
    %c32 = arith.constant 32 : index
    %c0_65 = arith.constant 0 : index
    %89 = vector.load %arg13[%c32, %c0_65] : memref<290x3xf32, #tpu.memory_space<vmem>>, vector<256x3xf32>
    %cst_66 = arith.constant 0.000000e+00 : f32
    %90 = vector.shape_cast %33 : vector<256x1xi1> to vector<256x1xi1>
    %91 = vector.broadcast %90 : vector<256x1xi1> to vector<256x3xi1>
    %92 = vector.broadcast %cst_66 : f32 to vector<256x3xf32>
    %93 = arith.select %91, %89, %92 : vector<256x3xi1>, vector<256x3xf32>
    %94 = arith.truncf %93 : vector<256x3xf32> to vector<256x3xbf16>
    %c2_67 = arith.constant 2 : index
    %c0_68 = arith.constant 0 : index
    %c0_69 = arith.constant 0 : index
    %c0_70 = arith.constant 0 : index
    %95 = vector.load %arg2[%c2_67, %c0_68, %c0_69, %c0_70] : memref<3x3x3x32xbf16, #tpu.memory_space<vmem>>, vector<1x1x3x32xbf16>
    %96 = vector.shape_cast %95 : vector<1x1x3x32xbf16> to vector<3x32xbf16>
    %cst_71 = arith.constant dense<0.000000e+00> : vector<256x32xf32>
    %97 = tpu.matmul %94, %96, %cst_71 {dimension_numbers = #tpu.dot_dimension_numbers<[1], [0], [0], [1], [0, 0, 1, 1], [], []>} : vector<256x3xbf16>, vector<3x32xbf16>, vector<256x32xf32> -> vector<256x32xf32>
    %98 = arith.addf %88, %97 : vector<256x32xf32>
    %c33 = arith.constant 33 : index
    %c0_72 = arith.constant 0 : index
    %99 = vector.load %arg13[%c33, %c0_72] : memref<290x3xf32, #tpu.memory_space<vmem>>, vector<256x3xf32>
    %100 = arith.truncf %99 : vector<256x3xf32> to vector<256x3xbf16>
    %c2_73 = arith.constant 2 : index
    %c1_74 = arith.constant 1 : index
    %c0_75 = arith.constant 0 : index
    %c0_76 = arith.constant 0 : index
    %101 = vector.load %arg2[%c2_73, %c1_74, %c0_75, %c0_76] : memref<3x3x3x32xbf16, #tpu.memory_space<vmem>>, vector<1x1x3x32xbf16>
    %102 = vector.shape_cast %101 : vector<1x1x3x32xbf16> to vector<3x32xbf16>
    %cst_77 = arith.constant dense<0.000000e+00> : vector<256x32xf32>
    %103 = tpu.matmul %100, %102, %cst_77 {dimension_numbers = #tpu.dot_dimension_numbers<[1], [0], [0], [1], [0, 0, 1, 1], [], []>} : vector<256x3xbf16>, vector<3x32xbf16>, vector<256x32xf32> -> vector<256x32xf32>
    %104 = arith.addf %98, %103 : vector<256x32xf32>
    %c34 = arith.constant 34 : index
    %c0_78 = arith.constant 0 : index
    %105 = vector.load %arg13[%c34, %c0_78] : memref<290x3xf32, #tpu.memory_space<vmem>>, vector<256x3xf32>
    %cst_79 = arith.constant 0.000000e+00 : f32
    %106 = vector.shape_cast %35 : vector<256x1xi1> to vector<256x1xi1>
    %107 = vector.broadcast %106 : vector<256x1xi1> to vector<256x3xi1>
    %108 = vector.broadcast %cst_79 : f32 to vector<256x3xf32>
    %109 = arith.select %107, %105, %108 : vector<256x3xi1>, vector<256x3xf32>
    %110 = arith.truncf %109 : vector<256x3xf32> to vector<256x3xbf16>
    %c2_80 = arith.constant 2 : index
    %c2_81 = arith.constant 2 : index
    %c0_82 = arith.constant 0 : index
    %c0_83 = arith.constant 0 : index
    %111 = vector.load %arg2[%c2_80, %c2_81, %c0_82, %c0_83] : memref<3x3x3x32xbf16, #tpu.memory_space<vmem>>, vector<1x1x3x32xbf16>
    %112 = vector.shape_cast %111 : vector<1x1x3x32xbf16> to vector<3x32xbf16>
    %cst_84 = arith.constant dense<0.000000e+00> : vector<256x32xf32>
    %113 = tpu.matmul %110, %112, %cst_84 {dimension_numbers = #tpu.dot_dimension_numbers<[1], [0], [0], [1], [0, 0, 1, 1], [], []>} : vector<256x3xbf16>, vector<3x32xbf16>, vector<256x32xf32> -> vector<256x32xf32>
    %114 = arith.addf %104, %113 : vector<256x32xf32>
    %c0_85 = arith.constant 0 : index
    %c0_86 = arith.constant 0 : index
    %115 = vector.load %arg3[%c0_85, %c0_86] : memref<1x32xf32, #tpu.memory_space<vmem>>, vector<1x32xf32>
    %116 = vector.broadcast %115 : vector<1x32xf32> to vector<256x32xf32>
    %117 = arith.addf %114, %116 : vector<256x32xf32>
    %cst_87 = arith.constant 0.000000e+00 : f32
    %118 = vector.broadcast %cst_87 : f32 to vector<256x32xf32>
    %119 = arith.maximumf %117, %118 : vector<256x32xf32>
    %c0_88 = arith.constant 0 : index
    %c0_89 = arith.constant 0 : index
    %120 = vector.load %arg14[%c0_88, %c0_89] : memref<256x32xf32, #tpu.memory_space<vmem>>, vector<256x32xf32>
    tpu.vector_store %arg14[%c0_88, %c0_89], %119 {strides = array<i32>} : memref<256x32xf32, #tpu.memory_space<vmem>>, vector<256x32xf32>,
    %c0_90 = arith.constant 0 : index
    %c0_91 = arith.constant 0 : index
    %121 = tpu.strided_load %arg14[%c0_90, %c0_91] {strides = array<i32: 2, 1>} : memref<256x32xf32, #tpu.memory_space<vmem>>, vector<8x32xf32>
    %c1_92 = arith.constant 1 : index
    %c0_93 = arith.constant 0 : index
    %122 = tpu.strided_load %arg14[%c1_92, %c0_93] {strides = array<i32: 2, 1>} : memref<256x32xf32, #tpu.memory_space<vmem>>, vector<8x32xf32>
    %c16_94 = arith.constant 16 : index
    %c0_95 = arith.constant 0 : index
    %123 = tpu.strided_load %arg14[%c16_94, %c0_95] {strides = array<i32: 2, 1>} : memref<256x32xf32, #tpu.memory_space<vmem>>, vector<8x32xf32>
    %c17_96 = arith.constant 17 : index
    %c0_97 = arith.constant 0 : index
    %124 = tpu.strided_load %arg14[%c17_96, %c0_97] {strides = array<i32: 2, 1>} : memref<256x32xf32, #tpu.memory_space<vmem>>, vector<8x32xf32>
    %125 = arith.maximumf %121, %122 : vector<8x32xf32>
    %126 = arith.maximumf %123, %124 : vector<8x32xf32>
    %127 = arith.maximumf %125, %126 : vector<8x32xf32>
    %c9 = arith.constant 9 : index
    %c0_98 = arith.constant 0 : index
    %128 = vector.load %arg15[%c9, %c0_98] : memref<82x32xf32, #tpu.memory_space<vmem>>, vector<8x32xf32>
    tpu.vector_store %arg15[%c9, %c0_98], %127 {strides = array<i32>} : memref<82x32xf32, #tpu.memory_space<vmem>>, vector<8x32xf32>,
    %c32_99 = arith.constant 32 : index
    %c0_100 = arith.constant 0 : index
    %129 = tpu.strided_load %arg14[%c32_99, %c0_100] {strides = array<i32: 2, 1>} : memref<256x32xf32, #tpu.memory_space<vmem>>, vector<8x32xf32>
    %c33_101 = arith.constant 33 : index
    %c0_102 = arith.constant 0 : index
    %130 = tpu.strided_load %arg14[%c33_101, %c0_102] {strides = array<i32: 2, 1>} : memref<256x32xf32, #tpu.memory_space<vmem>>, vector<8x32xf32>
    %c48 = arith.constant 48 : index
    %c0_103 = arith.constant 0 : index
    %131 = tpu.strided_load %arg14[%c48, %c0_103] {strides = array<i32: 2, 1>} : memref<256x32xf32, #tpu.memory_space<vmem>>, vector<8x32xf32>
    %c49 = arith.constant 49 : index
    %c0_104 = arith.constant 0 : index
    %132 = tpu.strided_load %arg14[%c49, %c0_104] {strides = array<i32: 2, 1>} : memref<256x32xf32, #tpu.memory_space<vmem>>, vector<8x32xf32>
    %133 = arith.maximumf %129, %130 : vector<8x32xf32>
    %134 = arith.maximumf %131, %132 : vector<8x32xf32>
    %135 = arith.maximumf %133, %134 : vector<8x32xf32>
    %c17_105 = arith.constant 17 : index
    %c0_106 = arith.constant 0 : index
    %136 = vector.load %arg15[%c17_105, %c0_106] : memref<82x32xf32, #tpu.memory_space<vmem>>, vector<8x32xf32>
    tpu.vector_store %arg15[%c17_105, %c0_106], %135 {strides = array<i32>} : memref<82x32xf32, #tpu.memory_space<vmem>>, vector<8x32xf32>,
    %c64 = arith.constant 64 : index
    %c0_107 = arith.constant 0 : index
    %137 = tpu.strided_load %arg14[%c64, %c0_107] {strides = array<i32: 2, 1>} : memref<256x32xf32, #tpu.memory_space<vmem>>, vector<8x32xf32>
    %c65 = arith.constant 65 : index
    %c0_108 = arith.constant 0 : index
    %138 = tpu.strided_load %arg14[%c65, %c0_108] {strides = array<i32: 2, 1>} : memref<256x32xf32, #tpu.memory_space<vmem>>, vector<8x32xf32>
    %c80 = arith.constant 80 : index
    %c0_109 = arith.constant 0 : index
    %139 = tpu.strided_load %arg14[%c80, %c0_109] {strides = array<i32: 2, 1>} : memref<256x32xf32, #tpu.memory_space<vmem>>, vector<8x32xf32>
    %c81 = arith.constant 81 : index
    %c0_110 = arith.constant 0 : index
    %140 = tpu.strided_load %arg14[%c81, %c0_110] {strides = array<i32: 2, 1>} : memref<256x32xf32, #tpu.memory_space<vmem>>, vector<8x32xf32>
    %141 = arith.maximumf %137, %138 : vector<8x32xf32>
    %142 = arith.maximumf %139, %140 : vector<8x32xf32>
    %143 = arith.maximumf %141, %142 : vector<8x32xf32>
    %c25 = arith.constant 25 : index
    %c0_111 = arith.constant 0 : index
    %144 = vector.load %arg15[%c25, %c0_111] : memref<82x32xf32, #tpu.memory_space<vmem>>, vector<8x32xf32>
    tpu.vector_store %arg15[%c25, %c0_111], %143 {strides = array<i32>} : memref<82x32xf32, #tpu.memory_space<vmem>>, vector<8x32xf32>,
    %c96 = arith.constant 96 : index
    %c0_112 = arith.constant 0 : index
    %145 = tpu.strided_load %arg14[%c96, %c0_112] {strides = array<i32: 2, 1>} : memref<256x32xf32, #tpu.memory_space<vmem>>, vector<8x32xf32>
    %c97 = arith.constant 97 : index
    %c0_113 = arith.constant 0 : index
    %146 = tpu.strided_load %arg14[%c97, %c0_113] {strides = array<i32: 2, 1>} : memref<256x32xf32, #tpu.memory_space<vmem>>, vector<8x32xf32>
    %c112 = arith.constant 112 : index
    %c0_114 = arith.constant 0 : index
    %147 = tpu.strided_load %arg14[%c112, %c0_114] {strides = array<i32: 2, 1>} : memref<256x32xf32, #tpu.memory_space<vmem>>, vector<8x32xf32>
    %c113 = arith.constant 113 : index
    %c0_115 = arith.constant 0 : index
    %148 = tpu.strided_load %arg14[%c113, %c0_115] {strides = array<i32: 2, 1>} : memref<256x32xf32, #tpu.memory_space<vmem>>, vector<8x32xf32>
    %149 = arith.maximumf %145, %146 : vector<8x32xf32>
    %150 = arith.maximumf %147, %148 : vector<8x32xf32>
    %151 = arith.maximumf %149, %150 : vector<8x32xf32>
    %c33_116 = arith.constant 33 : index
    %c0_117 = arith.constant 0 : index
    %152 = vector.load %arg15[%c33_116, %c0_117] : memref<82x32xf32, #tpu.memory_space<vmem>>, vector<8x32xf32>
    tpu.vector_store %arg15[%c33_116, %c0_117], %151 {strides = array<i32>} : memref<82x32xf32, #tpu.memory_space<vmem>>, vector<8x32xf32>,
    %c128 = arith.constant 128 : index
    %c0_118 = arith.constant 0 : index
    %153 = tpu.strided_load %arg14[%c128, %c0_118] {strides = array<i32: 2, 1>} : memref<256x32xf32, #tpu.memory_space<vmem>>, vector<8x32xf32>
    %c129 = arith.constant 129 : index
    %c0_119 = arith.constant 0 : index
    %154 = tpu.strided_load %arg14[%c129, %c0_119] {strides = array<i32: 2, 1>} : memref<256x32xf32, #tpu.memory_space<vmem>>, vector<8x32xf32>
    %c144 = arith.constant 144 : index
    %c0_120 = arith.constant 0 : index
    %155 = tpu.strided_load %arg14[%c144, %c0_120] {strides = array<i32: 2, 1>} : memref<256x32xf32, #tpu.memory_space<vmem>>, vector<8x32xf32>
    %c145 = arith.constant 145 : index
    %c0_121 = arith.constant 0 : index
    %156 = tpu.strided_load %arg14[%c145, %c0_121] {strides = array<i32: 2, 1>} : memref<256x32xf32, #tpu.memory_space<vmem>>, vector<8x32xf32>
    %157 = arith.maximumf %153, %154 : vector<8x32xf32>
    %158 = arith.maximumf %155, %156 : vector<8x32xf32>
    %159 = arith.maximumf %157, %158 : vector<8x32xf32>
    %c41 = arith.constant 41 : index
    %c0_122 = arith.constant 0 : index
    %160 = vector.load %arg15[%c41, %c0_122] : memref<82x32xf32, #tpu.memory_space<vmem>>, vector<8x32xf32>
    tpu.vector_store %arg15[%c41, %c0_122], %159 {strides = array<i32>} : memref<82x32xf32, #tpu.memory_space<vmem>>, vector<8x32xf32>,
    %c160 = arith.constant 160 : index
    %c0_123 = arith.constant 0 : index
    %161 = tpu.strided_load %arg14[%c160, %c0_123] {strides = array<i32: 2, 1>} : memref<256x32xf32, #tpu.memory_space<vmem>>, vector<8x32xf32>
    %c161 = arith.constant 161 : index
    %c0_124 = arith.constant 0 : index
    %162 = tpu.strided_load %arg14[%c161, %c0_124] {strides = array<i32: 2, 1>} : memref<256x32xf32, #tpu.memory_space<vmem>>, vector<8x32xf32>
    %c176 = arith.constant 176 : index
    %c0_125 = arith.constant 0 : index
    %163 = tpu.strided_load %arg14[%c176, %c0_125] {strides = array<i32: 2, 1>} : memref<256x32xf32, #tpu.memory_space<vmem>>, vector<8x32xf32>
    %c177 = arith.constant 177 : index
    %c0_126 = arith.constant 0 : index
    %164 = tpu.strided_load %arg14[%c177, %c0_126] {strides = array<i32: 2, 1>} : memref<256x32xf32, #tpu.memory_space<vmem>>, vector<8x32xf32>
    %165 = arith.maximumf %161, %162 : vector<8x32xf32>
    %166 = arith.maximumf %163, %164 : vector<8x32xf32>
    %167 = arith.maximumf %165, %166 : vector<8x32xf32>
    %c49_127 = arith.constant 49 : index
    %c0_128 = arith.constant 0 : index
    %168 = vector.load %arg15[%c49_127, %c0_128] : memref<82x32xf32, #tpu.memory_space<vmem>>, vector<8x32xf32>
    tpu.vector_store %arg15[%c49_127, %c0_128], %167 {strides = array<i32>} : memref<82x32xf32, #tpu.memory_space<vmem>>, vector<8x32xf32>,
    %c192 = arith.constant 192 : index
    %c0_129 = arith.constant 0 : index
    %169 = tpu.strided_load %arg14[%c192, %c0_129] {strides = array<i32: 2, 1>} : memref<256x32xf32, #tpu.memory_space<vmem>>, vector<8x32xf32>
    %c193 = arith.constant 193 : index
    %c0_130 = arith.constant 0 : index
    %170 = tpu.strided_load %arg14[%c193, %c0_130] {strides = array<i32: 2, 1>} : memref<256x32xf32, #tpu.memory_space<vmem>>, vector<8x32xf32>
    %c208 = arith.constant 208 : index
    %c0_131 = arith.constant 0 : index
    %171 = tpu.strided_load %arg14[%c208, %c0_131] {strides = array<i32: 2, 1>} : memref<256x32xf32, #tpu.memory_space<vmem>>, vector<8x32xf32>
    %c209 = arith.constant 209 : index
    %c0_132 = arith.constant 0 : index
    %172 = tpu.strided_load %arg14[%c209, %c0_132] {strides = array<i32: 2, 1>} : memref<256x32xf32, #tpu.memory_space<vmem>>, vector<8x32xf32>
    %173 = arith.maximumf %169, %170 : vector<8x32xf32>
    %174 = arith.maximumf %171, %172 : vector<8x32xf32>
    %175 = arith.maximumf %173, %174 : vector<8x32xf32>
    %c57 = arith.constant 57 : index
    %c0_133 = arith.constant 0 : index
    %176 = vector.load %arg15[%c57, %c0_133] : memref<82x32xf32, #tpu.memory_space<vmem>>, vector<8x32xf32>
    tpu.vector_store %arg15[%c57, %c0_133], %175 {strides = array<i32>} : memref<82x32xf32, #tpu.memory_space<vmem>>, vector<8x32xf32>,
    %c224 = arith.constant 224 : index
    %c0_134 = arith.constant 0 : index
    %177 = tpu.strided_load %arg14[%c224, %c0_134] {strides = array<i32: 2, 1>} : memref<256x32xf32, #tpu.memory_space<vmem>>, vector<8x32xf32>
    %c225 = arith.constant 225 : index
    %c0_135 = arith.constant 0 : index
    %178 = tpu.strided_load %arg14[%c225, %c0_135] {strides = array<i32: 2, 1>} : memref<256x32xf32, #tpu.memory_space<vmem>>, vector<8x32xf32>
    %c240 = arith.constant 240 : index
    %c0_136 = arith.constant 0 : index
    %179 = tpu.strided_load %arg14[%c240, %c0_136] {strides = array<i32: 2, 1>} : memref<256x32xf32, #tpu.memory_space<vmem>>, vector<8x32xf32>
    %c241 = arith.constant 241 : index
    %c0_137 = arith.constant 0 : index
    %180 = tpu.strided_load %arg14[%c241, %c0_137] {strides = array<i32: 2, 1>} : memref<256x32xf32, #tpu.memory_space<vmem>>, vector<8x32xf32>
    %181 = arith.maximumf %177, %178 : vector<8x32xf32>
    %182 = arith.maximumf %179, %180 : vector<8x32xf32>
    %183 = arith.maximumf %181, %182 : vector<8x32xf32>
    %c65_138 = arith.constant 65 : index
    %c0_139 = arith.constant 0 : index
    %184 = vector.load %arg15[%c65_138, %c0_139] : memref<82x32xf32, #tpu.memory_space<vmem>>, vector<8x32xf32>
    tpu.vector_store %arg15[%c65_138, %c0_139], %183 {strides = array<i32>} : memref<82x32xf32, #tpu.memory_space<vmem>>, vector<8x32xf32>,
    %185 = tpu.iota {dimensions = array<i32: 0>} : vector<64x1xi32>
    %c8_i32 = arith.constant 8 : i32
    %c0_i32_140 = arith.constant 0 : i32
    %186 = arith.cmpi eq, %c8_i32, %c0_i32_140 : i32
    %c1_i32_141 = arith.constant 1 : i32
    %187 = arith.select %186, %c1_i32_141, %c8_i32 : i32
    %188 = vector.broadcast %187 : i32 to vector<64x1xi32>
    %189 = arith.remsi %185, %188 : vector<64x1xi32>
    %c0_i32_142 = arith.constant 0 : i32
    %190 = vector.broadcast %c0_i32_142 : i32 to vector<64x1xi32>
    %191 = arith.cmpi ne, %189, %190 : vector<64x1xi32>
    %c0_i32_143 = arith.constant 0 : i32
    %192 = vector.broadcast %c0_i32_143 : i32 to vector<64x1xi32>
    %193 = arith.cmpi slt, %189, %192 : vector<64x1xi32>
    %c0_i32_144 = arith.constant 0 : i32
    %194 = arith.cmpi slt, %187, %c0_i32_144 : i32
    %195 = vector.broadcast %194 : i1 to vector<64x1xi1>
    %196 = vector.broadcast %195 : vector<64x1xi1> to vector<64x1xi1>
    %197 = arith.xori %193, %196 : vector<64x1xi1>
    %198 = arith.andi %197, %191 : vector<64x1xi1>
    %199 = vector.broadcast %187 : i32 to vector<64x1xi32>
    %200 = arith.addi %189, %199 : vector<64x1xi32>
    %201 = arith.select %198, %200, %189 : vector<64x1xi1>, vector<64x1xi32>
    %c0_i32_145 = arith.constant 0 : i32
    %202 = vector.broadcast %c0_i32_145 : i32 to vector<64x1xi32>
    %203 = arith.cmpi ne, %201, %202 : vector<64x1xi32>
    %c7_i32 = arith.constant 7 : i32
    %204 = vector.broadcast %c7_i32 : i32 to vector<64x1xi32>
    %205 = arith.cmpi ne, %201, %204 : vector<64x1xi32>
    %cst_146 = arith.constant 0.000000e+00 : f32
    %206 = vector.broadcast %cst_146 : f32 to vector<64x64xf32>
    %c0_147 = arith.constant 0 : index
    %c0_148 = arith.constant 0 : index
    %207 = vector.load %arg15[%c0_147, %c0_148] : memref<82x32xf32, #tpu.memory_space<vmem>>, vector<64x32xf32>
    %cst_149 = arith.constant 0.000000e+00 : f32
    %208 = vector.shape_cast %203 : vector<64x1xi1> to vector<64x1xi1>
    %209 = vector.broadcast %208 : vector<64x1xi1> to vector<64x32xi1>
    %210 = vector.broadcast %cst_149 : f32 to vector<64x32xf32>
    %211 = arith.select %209, %207, %210 : vector<64x32xi1>, vector<64x32xf32>
    %212 = arith.truncf %211 : vector<64x32xf32> to vector<64x32xbf16>
    %c0_150 = arith.constant 0 : index
    %c0_151 = arith.constant 0 : index
    %c0_152 = arith.constant 0 : index
    %c0_153 = arith.constant 0 : index
    %213 = vector.load %arg4[%c0_150, %c0_151, %c0_152, %c0_153] : memref<3x3x32x64xbf16, #tpu.memory_space<vmem>>, vector<1x1x32x64xbf16>
    %214 = vector.shape_cast %213 : vector<1x1x32x64xbf16> to vector<32x64xbf16>
    %cst_154 = arith.constant dense<0.000000e+00> : vector<64x64xf32>
    %215 = tpu.matmul %212, %214, %cst_154 {dimension_numbers = #tpu.dot_dimension_numbers<[1], [0], [0], [1], [0, 0, 1, 1], [], []>} : vector<64x32xbf16>, vector<32x64xbf16>, vector<64x64xf32> -> vector<64x64xf32>
    %216 = arith.addf %206, %215 : vector<64x64xf32>
    %c1_155 = arith.constant 1 : index
    %c0_156 = arith.constant 0 : index
    %217 = vector.load %arg15[%c1_155, %c0_156] : memref<82x32xf32, #tpu.memory_space<vmem>>, vector<64x32xf32>
    %218 = arith.truncf %217 : vector<64x32xf32> to vector<64x32xbf16>
    %c0_157 = arith.constant 0 : index
    %c1_158 = arith.constant 1 : index
    %c0_159 = arith.constant 0 : index
    %c0_160 = arith.constant 0 : index
    %219 = vector.load %arg4[%c0_157, %c1_158, %c0_159, %c0_160] : memref<3x3x32x64xbf16, #tpu.memory_space<vmem>>, vector<1x1x32x64xbf16>
    %220 = vector.shape_cast %219 : vector<1x1x32x64xbf16> to vector<32x64xbf16>
    %cst_161 = arith.constant dense<0.000000e+00> : vector<64x64xf32>
    %221 = tpu.matmul %218, %220, %cst_161 {dimension_numbers = #tpu.dot_dimension_numbers<[1], [0], [0], [1], [0, 0, 1, 1], [], []>} : vector<64x32xbf16>, vector<32x64xbf16>, vector<64x64xf32> -> vector<64x64xf32>
    %222 = arith.addf %216, %221 : vector<64x64xf32>
    %c2_162 = arith.constant 2 : index
    %c0_163 = arith.constant 0 : index
    %223 = vector.load %arg15[%c2_162, %c0_163] : memref<82x32xf32, #tpu.memory_space<vmem>>, vector<64x32xf32>
    %cst_164 = arith.constant 0.000000e+00 : f32
    %224 = vector.shape_cast %205 : vector<64x1xi1> to vector<64x1xi1>
    %225 = vector.broadcast %224 : vector<64x1xi1> to vector<64x32xi1>
    %226 = vector.broadcast %cst_164 : f32 to vector<64x32xf32>
    %227 = arith.select %225, %223, %226 : vector<64x32xi1>, vector<64x32xf32>
    %228 = arith.truncf %227 : vector<64x32xf32> to vector<64x32xbf16>
    %c0_165 = arith.constant 0 : index
    %c2_166 = arith.constant 2 : index
    %c0_167 = arith.constant 0 : index
    %c0_168 = arith.constant 0 : index
    %229 = vector.load %arg4[%c0_165, %c2_166, %c0_167, %c0_168] : memref<3x3x32x64xbf16, #tpu.memory_space<vmem>>, vector<1x1x32x64xbf16>
    %230 = vector.shape_cast %229 : vector<1x1x32x64xbf16> to vector<32x64xbf16>
    %cst_169 = arith.constant dense<0.000000e+00> : vector<64x64xf32>
    %231 = tpu.matmul %228, %230, %cst_169 {dimension_numbers = #tpu.dot_dimension_numbers<[1], [0], [0], [1], [0, 0, 1, 1], [], []>} : vector<64x32xbf16>, vector<32x64xbf16>, vector<64x64xf32> -> vector<64x64xf32>
    %232 = arith.addf %222, %231 : vector<64x64xf32>
    %c8 = arith.constant 8 : index
    %c0_170 = arith.constant 0 : index
    %233 = vector.load %arg15[%c8, %c0_170] : memref<82x32xf32, #tpu.memory_space<vmem>>, vector<64x32xf32>
    %cst_171 = arith.constant 0.000000e+00 : f32
    %234 = vector.shape_cast %203 : vector<64x1xi1> to vector<64x1xi1>
    %235 = vector.broadcast %234 : vector<64x1xi1> to vector<64x32xi1>
    %236 = vector.broadcast %cst_171 : f32 to vector<64x32xf32>
    %237 = arith.select %235, %233, %236 : vector<64x32xi1>, vector<64x32xf32>
    %238 = arith.truncf %237 : vector<64x32xf32> to vector<64x32xbf16>
    %c1_172 = arith.constant 1 : index
    %c0_173 = arith.constant 0 : index
    %c0_174 = arith.constant 0 : index
    %c0_175 = arith.constant 0 : index
    %239 = vector.load %arg4[%c1_172, %c0_173, %c0_174, %c0_175] : memref<3x3x32x64xbf16, #tpu.memory_space<vmem>>, vector<1x1x32x64xbf16>
    %240 = vector.shape_cast %239 : vector<1x1x32x64xbf16> to vector<32x64xbf16>
    %cst_176 = arith.constant dense<0.000000e+00> : vector<64x64xf32>
    %241 = tpu.matmul %238, %240, %cst_176 {dimension_numbers = #tpu.dot_dimension_numbers<[1], [0], [0], [1], [0, 0, 1, 1], [], []>} : vector<64x32xbf16>, vector<32x64xbf16>, vector<64x64xf32> -> vector<64x64xf32>
    %242 = arith.addf %232, %241 : vector<64x64xf32>
    %c9_177 = arith.constant 9 : index
    %c0_178 = arith.constant 0 : index
    %243 = vector.load %arg15[%c9_177, %c0_178] : memref<82x32xf32, #tpu.memory_space<vmem>>, vector<64x32xf32>
    %244 = arith.truncf %243 : vector<64x32xf32> to vector<64x32xbf16>
    %c1_179 = arith.constant 1 : index
    %c1_180 = arith.constant 1 : index
    %c0_181 = arith.constant 0 : index
    %c0_182 = arith.constant 0 : index
    %245 = vector.load %arg4[%c1_179, %c1_180, %c0_181, %c0_182] : memref<3x3x32x64xbf16, #tpu.memory_space<vmem>>, vector<1x1x32x64xbf16>
    %246 = vector.shape_cast %245 : vector<1x1x32x64xbf16> to vector<32x64xbf16>
    %cst_183 = arith.constant dense<0.000000e+00> : vector<64x64xf32>
    %247 = tpu.matmul %244, %246, %cst_183 {dimension_numbers = #tpu.dot_dimension_numbers<[1], [0], [0], [1], [0, 0, 1, 1], [], []>} : vector<64x32xbf16>, vector<32x64xbf16>, vector<64x64xf32> -> vector<64x64xf32>
    %248 = arith.addf %242, %247 : vector<64x64xf32>
    %c10 = arith.constant 10 : index
    %c0_184 = arith.constant 0 : index
    %249 = vector.load %arg15[%c10, %c0_184] : memref<82x32xf32, #tpu.memory_space<vmem>>, vector<64x32xf32>
    %cst_185 = arith.constant 0.000000e+00 : f32
    %250 = vector.shape_cast %205 : vector<64x1xi1> to vector<64x1xi1>
    %251 = vector.broadcast %250 : vector<64x1xi1> to vector<64x32xi1>
    %252 = vector.broadcast %cst_185 : f32 to vector<64x32xf32>
    %253 = arith.select %251, %249, %252 : vector<64x32xi1>, vector<64x32xf32>
    %254 = arith.truncf %253 : vector<64x32xf32> to vector<64x32xbf16>
    %c1_186 = arith.constant 1 : index
    %c2_187 = arith.constant 2 : index
    %c0_188 = arith.constant 0 : index
    %c0_189 = arith.constant 0 : index
    %255 = vector.load %arg4[%c1_186, %c2_187, %c0_188, %c0_189] : memref<3x3x32x64xbf16, #tpu.memory_space<vmem>>, vector<1x1x32x64xbf16>
    %256 = vector.shape_cast %255 : vector<1x1x32x64xbf16> to vector<32x64xbf16>
    %cst_190 = arith.constant dense<0.000000e+00> : vector<64x64xf32>
    %257 = tpu.matmul %254, %256, %cst_190 {dimension_numbers = #tpu.dot_dimension_numbers<[1], [0], [0], [1], [0, 0, 1, 1], [], []>} : vector<64x32xbf16>, vector<32x64xbf16>, vector<64x64xf32> -> vector<64x64xf32>
    %258 = arith.addf %248, %257 : vector<64x64xf32>
    %c16_191 = arith.constant 16 : index
    %c0_192 = arith.constant 0 : index
    %259 = vector.load %arg15[%c16_191, %c0_192] : memref<82x32xf32, #tpu.memory_space<vmem>>, vector<64x32xf32>
    %cst_193 = arith.constant 0.000000e+00 : f32
    %260 = vector.shape_cast %203 : vector<64x1xi1> to vector<64x1xi1>
    %261 = vector.broadcast %260 : vector<64x1xi1> to vector<64x32xi1>
    %262 = vector.broadcast %cst_193 : f32 to vector<64x32xf32>
    %263 = arith.select %261, %259, %262 : vector<64x32xi1>, vector<64x32xf32>
    %264 = arith.truncf %263 : vector<64x32xf32> to vector<64x32xbf16>
    %c2_194 = arith.constant 2 : index
    %c0_195 = arith.constant 0 : index
    %c0_196 = arith.constant 0 : index
    %c0_197 = arith.constant 0 : index
    %265 = vector.load %arg4[%c2_194, %c0_195, %c0_196, %c0_197] : memref<3x3x32x64xbf16, #tpu.memory_space<vmem>>, vector<1x1x32x64xbf16>
    %266 = vector.shape_cast %265 : vector<1x1x32x64xbf16> to vector<32x64xbf16>
    %cst_198 = arith.constant dense<0.000000e+00> : vector<64x64xf32>
    %267 = tpu.matmul %264, %266, %cst_198 {dimension_numbers = #tpu.dot_dimension_numbers<[1], [0], [0], [1], [0, 0, 1, 1], [], []>} : vector<64x32xbf16>, vector<32x64xbf16>, vector<64x64xf32> -> vector<64x64xf32>
    %268 = arith.addf %258, %267 : vector<64x64xf32>
    %c17_199 = arith.constant 17 : index
    %c0_200 = arith.constant 0 : index
    %269 = vector.load %arg15[%c17_199, %c0_200] : memref<82x32xf32, #tpu.memory_space<vmem>>, vector<64x32xf32>
    %270 = arith.truncf %269 : vector<64x32xf32> to vector<64x32xbf16>
    %c2_201 = arith.constant 2 : index
    %c1_202 = arith.constant 1 : index
    %c0_203 = arith.constant 0 : index
    %c0_204 = arith.constant 0 : index
    %271 = vector.load %arg4[%c2_201, %c1_202, %c0_203, %c0_204] : memref<3x3x32x64xbf16, #tpu.memory_space<vmem>>, vector<1x1x32x64xbf16>
    %272 = vector.shape_cast %271 : vector<1x1x32x64xbf16> to vector<32x64xbf16>
    %cst_205 = arith.constant dense<0.000000e+00> : vector<64x64xf32>
    %273 = tpu.matmul %270, %272, %cst_205 {dimension_numbers = #tpu.dot_dimension_numbers<[1], [0], [0], [1], [0, 0, 1, 1], [], []>} : vector<64x32xbf16>, vector<32x64xbf16>, vector<64x64xf32> -> vector<64x64xf32>
    %274 = arith.addf %268, %273 : vector<64x64xf32>
    %c18_206 = arith.constant 18 : index
    %c0_207 = arith.constant 0 : index
    %275 = vector.load %arg15[%c18_206, %c0_207] : memref<82x32xf32, #tpu.memory_space<vmem>>, vector<64x32xf32>
    %cst_208 = arith.constant 0.000000e+00 : f32
    %276 = vector.shape_cast %205 : vector<64x1xi1> to vector<64x1xi1>
    %277 = vector.broadcast %276 : vector<64x1xi1> to vector<64x32xi1>
    %278 = vector.broadcast %cst_208 : f32 to vector<64x32xf32>
    %279 = arith.select %277, %275, %278 : vector<64x32xi1>, vector<64x32xf32>
    %280 = arith.truncf %279 : vector<64x32xf32> to vector<64x32xbf16>
    %c2_209 = arith.constant 2 : index
    %c2_210 = arith.constant 2 : index
    %c0_211 = arith.constant 0 : index
    %c0_212 = arith.constant 0 : index
    %281 = vector.load %arg4[%c2_209, %c2_210, %c0_211, %c0_212] : memref<3x3x32x64xbf16, #tpu.memory_space<vmem>>, vector<1x1x32x64xbf16>
    %282 = vector.shape_cast %281 : vector<1x1x32x64xbf16> to vector<32x64xbf16>
    %cst_213 = arith.constant dense<0.000000e+00> : vector<64x64xf32>
    %283 = tpu.matmul %280, %282, %cst_213 {dimension_numbers = #tpu.dot_dimension_numbers<[1], [0], [0], [1], [0, 0, 1, 1], [], []>} : vector<64x32xbf16>, vector<32x64xbf16>, vector<64x64xf32> -> vector<64x64xf32>
    %284 = arith.addf %274, %283 : vector<64x64xf32>
    %c0_214 = arith.constant 0 : index
    %c0_215 = arith.constant 0 : index
    %285 = vector.load %arg5[%c0_214, %c0_215] : memref<1x64xf32, #tpu.memory_space<vmem>>, vector<1x64xf32>
    %286 = vector.broadcast %285 : vector<1x64xf32> to vector<64x64xf32>
    %287 = arith.addf %284, %286 : vector<64x64xf32>
    %cst_216 = arith.constant 0.000000e+00 : f32
    %288 = vector.broadcast %cst_216 : f32 to vector<64x64xf32>
    %289 = arith.maximumf %287, %288 : vector<64x64xf32>
    %c0_217 = arith.constant 0 : index
    %c0_218 = arith.constant 0 : index
    %290 = vector.load %arg16[%c0_217, %c0_218] : memref<64x64xf32, #tpu.memory_space<vmem>>, vector<64x64xf32>
    tpu.vector_store %arg16[%c0_217, %c0_218], %289 {strides = array<i32>} : memref<64x64xf32, #tpu.memory_space<vmem>>, vector<64x64xf32>,
    %c0_219 = arith.constant 0 : index
    %c0_220 = arith.constant 0 : index
    %291 = tpu.strided_load %arg16[%c0_219, %c0_220] {strides = array<i32: 2, 1>} : memref<64x64xf32, #tpu.memory_space<vmem>>, vector<4x64xf32>
    %c1_221 = arith.constant 1 : index
    %c0_222 = arith.constant 0 : index
    %292 = tpu.strided_load %arg16[%c1_221, %c0_222] {strides = array<i32: 2, 1>} : memref<64x64xf32, #tpu.memory_space<vmem>>, vector<4x64xf32>
    %c8_223 = arith.constant 8 : index
    %c0_224 = arith.constant 0 : index
    %293 = tpu.strided_load %arg16[%c8_223, %c0_224] {strides = array<i32: 2, 1>} : memref<64x64xf32, #tpu.memory_space<vmem>>, vector<4x64xf32>
    %c9_225 = arith.constant 9 : index
    %c0_226 = arith.constant 0 : index
    %294 = tpu.strided_load %arg16[%c9_225, %c0_226] {strides = array<i32: 2, 1>} : memref<64x64xf32, #tpu.memory_space<vmem>>, vector<4x64xf32>
    %295 = arith.maximumf %291, %292 : vector<4x64xf32>
    %296 = arith.maximumf %293, %294 : vector<4x64xf32>
    %297 = arith.maximumf %295, %296 : vector<4x64xf32>
    %c5 = arith.constant 5 : index
    %c0_227 = arith.constant 0 : index
    %298 = vector.load %arg17[%c5, %c0_227] : memref<26x64xf32, #tpu.memory_space<vmem>>, vector<4x64xf32>
    tpu.vector_store %arg17[%c5, %c0_227], %297 {strides = array<i32>} : memref<26x64xf32, #tpu.memory_space<vmem>>, vector<4x64xf32>,
    %c16_228 = arith.constant 16 : index
    %c0_229 = arith.constant 0 : index
    %299 = tpu.strided_load %arg16[%c16_228, %c0_229] {strides = array<i32: 2, 1>} : memref<64x64xf32, #tpu.memory_space<vmem>>, vector<4x64xf32>
    %c17_230 = arith.constant 17 : index
    %c0_231 = arith.constant 0 : index
    %300 = tpu.strided_load %arg16[%c17_230, %c0_231] {strides = array<i32: 2, 1>} : memref<64x64xf32, #tpu.memory_space<vmem>>, vector<4x64xf32>
    %c24 = arith.constant 24 : index
    %c0_232 = arith.constant 0 : index
    %301 = tpu.strided_load %arg16[%c24, %c0_232] {strides = array<i32: 2, 1>} : memref<64x64xf32, #tpu.memory_space<vmem>>, vector<4x64xf32>
    %c25_233 = arith.constant 25 : index
    %c0_234 = arith.constant 0 : index
    %302 = tpu.strided_load %arg16[%c25_233, %c0_234] {strides = array<i32: 2, 1>} : memref<64x64xf32, #tpu.memory_space<vmem>>, vector<4x64xf32>
    %303 = arith.maximumf %299, %300 : vector<4x64xf32>
    %304 = arith.maximumf %301, %302 : vector<4x64xf32>
    %305 = arith.maximumf %303, %304 : vector<4x64xf32>
    %c9_235 = arith.constant 9 : index
    %c0_236 = arith.constant 0 : index
    %306 = vector.load %arg17[%c9_235, %c0_236] : memref<26x64xf32, #tpu.memory_space<vmem>>, vector<4x64xf32>
    tpu.vector_store %arg17[%c9_235, %c0_236], %305 {strides = array<i32>} : memref<26x64xf32, #tpu.memory_space<vmem>>, vector<4x64xf32>,
    %c32_237 = arith.constant 32 : index
    %c0_238 = arith.constant 0 : index
    %307 = tpu.strided_load %arg16[%c32_237, %c0_238] {strides = array<i32: 2, 1>} : memref<64x64xf32, #tpu.memory_space<vmem>>, vector<4x64xf32>
    %c33_239 = arith.constant 33 : index
    %c0_240 = arith.constant 0 : index
    %308 = tpu.strided_load %arg16[%c33_239, %c0_240] {strides = array<i32: 2, 1>} : memref<64x64xf32, #tpu.memory_space<vmem>>, vector<4x64xf32>
    %c40 = arith.constant 40 : index
    %c0_241 = arith.constant 0 : index
    %309 = tpu.strided_load %arg16[%c40, %c0_241] {strides = array<i32: 2, 1>} : memref<64x64xf32, #tpu.memory_space<vmem>>, vector<4x64xf32>
    %c41_242 = arith.constant 41 : index
    %c0_243 = arith.constant 0 : index
    %310 = tpu.strided_load %arg16[%c41_242, %c0_243] {strides = array<i32: 2, 1>} : memref<64x64xf32, #tpu.memory_space<vmem>>, vector<4x64xf32>
    %311 = arith.maximumf %307, %308 : vector<4x64xf32>
    %312 = arith.maximumf %309, %310 : vector<4x64xf32>
    %313 = arith.maximumf %311, %312 : vector<4x64xf32>
    %c13 = arith.constant 13 : index
    %c0_244 = arith.constant 0 : index
    %314 = vector.load %arg17[%c13, %c0_244] : memref<26x64xf32, #tpu.memory_space<vmem>>, vector<4x64xf32>
    tpu.vector_store %arg17[%c13, %c0_244], %313 {strides = array<i32>} : memref<26x64xf32, #tpu.memory_space<vmem>>, vector<4x64xf32>,
    %c48_245 = arith.constant 48 : index
    %c0_246 = arith.constant 0 : index
    %315 = tpu.strided_load %arg16[%c48_245, %c0_246] {strides = array<i32: 2, 1>} : memref<64x64xf32, #tpu.memory_space<vmem>>, vector<4x64xf32>
    %c49_247 = arith.constant 49 : index
    %c0_248 = arith.constant 0 : index
    %316 = tpu.strided_load %arg16[%c49_247, %c0_248] {strides = array<i32: 2, 1>} : memref<64x64xf32, #tpu.memory_space<vmem>>, vector<4x64xf32>
    %c56 = arith.constant 56 : index
    %c0_249 = arith.constant 0 : index
    %317 = tpu.strided_load %arg16[%c56, %c0_249] {strides = array<i32: 2, 1>} : memref<64x64xf32, #tpu.memory_space<vmem>>, vector<4x64xf32>
    %c57_250 = arith.constant 57 : index
    %c0_251 = arith.constant 0 : index
    %318 = tpu.strided_load %arg16[%c57_250, %c0_251] {strides = array<i32: 2, 1>} : memref<64x64xf32, #tpu.memory_space<vmem>>, vector<4x64xf32>
    %319 = arith.maximumf %315, %316 : vector<4x64xf32>
    %320 = arith.maximumf %317, %318 : vector<4x64xf32>
    %321 = arith.maximumf %319, %320 : vector<4x64xf32>
    %c17_252 = arith.constant 17 : index
    %c0_253 = arith.constant 0 : index
    %322 = vector.load %arg17[%c17_252, %c0_253] : memref<26x64xf32, #tpu.memory_space<vmem>>, vector<4x64xf32>
    tpu.vector_store %arg17[%c17_252, %c0_253], %321 {strides = array<i32>} : memref<26x64xf32, #tpu.memory_space<vmem>>, vector<4x64xf32>,
    %323 = tpu.iota {dimensions = array<i32: 0>} : vector<16x1xi32>
    %c4_i32 = arith.constant 4 : i32
    %c0_i32_254 = arith.constant 0 : i32
    %324 = arith.cmpi eq, %c4_i32, %c0_i32_254 : i32
    %c1_i32_255 = arith.constant 1 : i32
    %325 = arith.select %324, %c1_i32_255, %c4_i32 : i32
    %326 = vector.broadcast %325 : i32 to vector<16x1xi32>
    %327 = arith.remsi %323, %326 : vector<16x1xi32>
    %c0_i32_256 = arith.constant 0 : i32
    %328 = vector.broadcast %c0_i32_256 : i32 to vector<16x1xi32>
    %329 = arith.cmpi ne, %327, %328 : vector<16x1xi32>
    %c0_i32_257 = arith.constant 0 : i32
    %330 = vector.broadcast %c0_i32_257 : i32 to vector<16x1xi32>
    %331 = arith.cmpi slt, %327, %330 : vector<16x1xi32>
    %c0_i32_258 = arith.constant 0 : i32
    %332 = arith.cmpi slt, %325, %c0_i32_258 : i32
    %333 = vector.broadcast %332 : i1 to vector<16x1xi1>
    %334 = vector.broadcast %333 : vector<16x1xi1> to vector<16x1xi1>
    %335 = arith.xori %331, %334 : vector<16x1xi1>
    %336 = arith.andi %335, %329 : vector<16x1xi1>
    %337 = vector.broadcast %325 : i32 to vector<16x1xi32>
    %338 = arith.addi %327, %337 : vector<16x1xi32>
    %339 = arith.select %336, %338, %327 : vector<16x1xi1>, vector<16x1xi32>
    %c0_i32_259 = arith.constant 0 : i32
    %340 = vector.broadcast %c0_i32_259 : i32 to vector<16x1xi32>
    %341 = arith.cmpi ne, %339, %340 : vector<16x1xi32>
    %c3_i32 = arith.constant 3 : i32
    %342 = vector.broadcast %c3_i32 : i32 to vector<16x1xi32>
    %343 = arith.cmpi ne, %339, %342 : vector<16x1xi32>
    %cst_260 = arith.constant 0.000000e+00 : f32
    %344 = vector.broadcast %cst_260 : f32 to vector<16x128xf32>
    %c0_261 = arith.constant 0 : index
    %c0_262 = arith.constant 0 : index
    %345 = vector.load %arg17[%c0_261, %c0_262] : memref<26x64xf32, #tpu.memory_space<vmem>>, vector<16x64xf32>
    %cst_263 = arith.constant 0.000000e+00 : f32
    %346 = vector.shape_cast %341 : vector<16x1xi1> to vector<16x1xi1>
    %347 = vector.broadcast %346 : vector<16x1xi1> to vector<16x64xi1>
    %348 = vector.broadcast %cst_263 : f32 to vector<16x64xf32>
    %349 = arith.select %347, %345, %348 : vector<16x64xi1>, vector<16x64xf32>
    %350 = arith.truncf %349 : vector<16x64xf32> to vector<16x64xbf16>
    %c0_264 = arith.constant 0 : index
    %c0_265 = arith.constant 0 : index
    %c0_266 = arith.constant 0 : index
    %c0_267 = arith.constant 0 : index
    %351 = vector.load %arg6[%c0_264, %c0_265, %c0_266, %c0_267] : memref<3x3x64x128xbf16, #tpu.memory_space<vmem>>, vector<1x1x64x128xbf16>
    %352 = vector.shape_cast %351 : vector<1x1x64x128xbf16> to vector<64x128xbf16>
    %cst_268 = arith.constant dense<0.000000e+00> : vector<16x128xf32>
    %353 = tpu.matmul %350, %352, %cst_268 {dimension_numbers = #tpu.dot_dimension_numbers<[1], [0], [0], [1], [0, 0, 1, 1], [], []>} : vector<16x64xbf16>, vector<64x128xbf16>, vector<16x128xf32> -> vector<16x128xf32>
    %354 = arith.addf %344, %353 : vector<16x128xf32>
    %c1_269 = arith.constant 1 : index
    %c0_270 = arith.constant 0 : index
    %355 = vector.load %arg17[%c1_269, %c0_270] : memref<26x64xf32, #tpu.memory_space<vmem>>, vector<16x64xf32>
    %356 = arith.truncf %355 : vector<16x64xf32> to vector<16x64xbf16>
    %c0_271 = arith.constant 0 : index
    %c1_272 = arith.constant 1 : index
    %c0_273 = arith.constant 0 : index
    %c0_274 = arith.constant 0 : index
    %357 = vector.load %arg6[%c0_271, %c1_272, %c0_273, %c0_274] : memref<3x3x64x128xbf16, #tpu.memory_space<vmem>>, vector<1x1x64x128xbf16>
    %358 = vector.shape_cast %357 : vector<1x1x64x128xbf16> to vector<64x128xbf16>
    %cst_275 = arith.constant dense<0.000000e+00> : vector<16x128xf32>
    %359 = tpu.matmul %356, %358, %cst_275 {dimension_numbers = #tpu.dot_dimension_numbers<[1], [0], [0], [1], [0, 0, 1, 1], [], []>} : vector<16x64xbf16>, vector<64x128xbf16>, vector<16x128xf32> -> vector<16x128xf32>
    %360 = arith.addf %354, %359 : vector<16x128xf32>
    %c2_276 = arith.constant 2 : index
    %c0_277 = arith.constant 0 : index
    %361 = vector.load %arg17[%c2_276, %c0_277] : memref<26x64xf32, #tpu.memory_space<vmem>>, vector<16x64xf32>
    %cst_278 = arith.constant 0.000000e+00 : f32
    %362 = vector.shape_cast %343 : vector<16x1xi1> to vector<16x1xi1>
    %363 = vector.broadcast %362 : vector<16x1xi1> to vector<16x64xi1>
    %364 = vector.broadcast %cst_278 : f32 to vector<16x64xf32>
    %365 = arith.select %363, %361, %364 : vector<16x64xi1>, vector<16x64xf32>
    %366 = arith.truncf %365 : vector<16x64xf32> to vector<16x64xbf16>
    %c0_279 = arith.constant 0 : index
    %c2_280 = arith.constant 2 : index
    %c0_281 = arith.constant 0 : index
    %c0_282 = arith.constant 0 : index
    %367 = vector.load %arg6[%c0_279, %c2_280, %c0_281, %c0_282] : memref<3x3x64x128xbf16, #tpu.memory_space<vmem>>, vector<1x1x64x128xbf16>
    %368 = vector.shape_cast %367 : vector<1x1x64x128xbf16> to vector<64x128xbf16>
    %cst_283 = arith.constant dense<0.000000e+00> : vector<16x128xf32>
    %369 = tpu.matmul %366, %368, %cst_283 {dimension_numbers = #tpu.dot_dimension_numbers<[1], [0], [0], [1], [0, 0, 1, 1], [], []>} : vector<16x64xbf16>, vector<64x128xbf16>, vector<16x128xf32> -> vector<16x128xf32>
    %370 = arith.addf %360, %369 : vector<16x128xf32>
    %c4 = arith.constant 4 : index
    %c0_284 = arith.constant 0 : index
    %371 = vector.load %arg17[%c4, %c0_284] : memref<26x64xf32, #tpu.memory_space<vmem>>, vector<16x64xf32>
    %cst_285 = arith.constant 0.000000e+00 : f32
    %372 = vector.shape_cast %341 : vector<16x1xi1> to vector<16x1xi1>
    %373 = vector.broadcast %372 : vector<16x1xi1> to vector<16x64xi1>
    %374 = vector.broadcast %cst_285 : f32 to vector<16x64xf32>
    %375 = arith.select %373, %371, %374 : vector<16x64xi1>, vector<16x64xf32>
    %376 = arith.truncf %375 : vector<16x64xf32> to vector<16x64xbf16>
    %c1_286 = arith.constant 1 : index
    %c0_287 = arith.constant 0 : index
    %c0_288 = arith.constant 0 : index
    %c0_289 = arith.constant 0 : index
    %377 = vector.load %arg6[%c1_286, %c0_287, %c0_288, %c0_289] : memref<3x3x64x128xbf16, #tpu.memory_space<vmem>>, vector<1x1x64x128xbf16>
    %378 = vector.shape_cast %377 : vector<1x1x64x128xbf16> to vector<64x128xbf16>
    %cst_290 = arith.constant dense<0.000000e+00> : vector<16x128xf32>
    %379 = tpu.matmul %376, %378, %cst_290 {dimension_numbers = #tpu.dot_dimension_numbers<[1], [0], [0], [1], [0, 0, 1, 1], [], []>} : vector<16x64xbf16>, vector<64x128xbf16>, vector<16x128xf32> -> vector<16x128xf32>
    %380 = arith.addf %370, %379 : vector<16x128xf32>
    %c5_291 = arith.constant 5 : index
    %c0_292 = arith.constant 0 : index
    %381 = vector.load %arg17[%c5_291, %c0_292] : memref<26x64xf32, #tpu.memory_space<vmem>>, vector<16x64xf32>
    %382 = arith.truncf %381 : vector<16x64xf32> to vector<16x64xbf16>
    %c1_293 = arith.constant 1 : index
    %c1_294 = arith.constant 1 : index
    %c0_295 = arith.constant 0 : index
    %c0_296 = arith.constant 0 : index
    %383 = vector.load %arg6[%c1_293, %c1_294, %c0_295, %c0_296] : memref<3x3x64x128xbf16, #tpu.memory_space<vmem>>, vector<1x1x64x128xbf16>
    %384 = vector.shape_cast %383 : vector<1x1x64x128xbf16> to vector<64x128xbf16>
    %cst_297 = arith.constant dense<0.000000e+00> : vector<16x128xf32>
    %385 = tpu.matmul %382, %384, %cst_297 {dimension_numbers = #tpu.dot_dimension_numbers<[1], [0], [0], [1], [0, 0, 1, 1], [], []>} : vector<16x64xbf16>, vector<64x128xbf16>, vector<16x128xf32> -> vector<16x128xf32>
    %386 = arith.addf %380, %385 : vector<16x128xf32>
    %c6 = arith.constant 6 : index
    %c0_298 = arith.constant 0 : index
    %387 = vector.load %arg17[%c6, %c0_298] : memref<26x64xf32, #tpu.memory_space<vmem>>, vector<16x64xf32>
    %cst_299 = arith.constant 0.000000e+00 : f32
    %388 = vector.shape_cast %343 : vector<16x1xi1> to vector<16x1xi1>
    %389 = vector.broadcast %388 : vector<16x1xi1> to vector<16x64xi1>
    %390 = vector.broadcast %cst_299 : f32 to vector<16x64xf32>
    %391 = arith.select %389, %387, %390 : vector<16x64xi1>, vector<16x64xf32>
    %392 = arith.truncf %391 : vector<16x64xf32> to vector<16x64xbf16>
    %c1_300 = arith.constant 1 : index
    %c2_301 = arith.constant 2 : index
    %c0_302 = arith.constant 0 : index
    %c0_303 = arith.constant 0 : index
    %393 = vector.load %arg6[%c1_300, %c2_301, %c0_302, %c0_303] : memref<3x3x64x128xbf16, #tpu.memory_space<vmem>>, vector<1x1x64x128xbf16>
    %394 = vector.shape_cast %393 : vector<1x1x64x128xbf16> to vector<64x128xbf16>
    %cst_304 = arith.constant dense<0.000000e+00> : vector<16x128xf32>
    %395 = tpu.matmul %392, %394, %cst_304 {dimension_numbers = #tpu.dot_dimension_numbers<[1], [0], [0], [1], [0, 0, 1, 1], [], []>} : vector<16x64xbf16>, vector<64x128xbf16>, vector<16x128xf32> -> vector<16x128xf32>
    %396 = arith.addf %386, %395 : vector<16x128xf32>
    %c8_305 = arith.constant 8 : index
    %c0_306 = arith.constant 0 : index
    %397 = vector.load %arg17[%c8_305, %c0_306] : memref<26x64xf32, #tpu.memory_space<vmem>>, vector<16x64xf32>
    %cst_307 = arith.constant 0.000000e+00 : f32
    %398 = vector.shape_cast %341 : vector<16x1xi1> to vector<16x1xi1>
    %399 = vector.broadcast %398 : vector<16x1xi1> to vector<16x64xi1>
    %400 = vector.broadcast %cst_307 : f32 to vector<16x64xf32>
    %401 = arith.select %399, %397, %400 : vector<16x64xi1>, vector<16x64xf32>
    %402 = arith.truncf %401 : vector<16x64xf32> to vector<16x64xbf16>
    %c2_308 = arith.constant 2 : index
    %c0_309 = arith.constant 0 : index
    %c0_310 = arith.constant 0 : index
    %c0_311 = arith.constant 0 : index
    %403 = vector.load %arg6[%c2_308, %c0_309, %c0_310, %c0_311] : memref<3x3x64x128xbf16, #tpu.memory_space<vmem>>, vector<1x1x64x128xbf16>
    %404 = vector.shape_cast %403 : vector<1x1x64x128xbf16> to vector<64x128xbf16>
    %cst_312 = arith.constant dense<0.000000e+00> : vector<16x128xf32>
    %405 = tpu.matmul %402, %404, %cst_312 {dimension_numbers = #tpu.dot_dimension_numbers<[1], [0], [0], [1], [0, 0, 1, 1], [], []>} : vector<16x64xbf16>, vector<64x128xbf16>, vector<16x128xf32> -> vector<16x128xf32>
    %406 = arith.addf %396, %405 : vector<16x128xf32>
    %c9_313 = arith.constant 9 : index
    %c0_314 = arith.constant 0 : index
    %407 = vector.load %arg17[%c9_313, %c0_314] : memref<26x64xf32, #tpu.memory_space<vmem>>, vector<16x64xf32>
    %408 = arith.truncf %407 : vector<16x64xf32> to vector<16x64xbf16>
    %c2_315 = arith.constant 2 : index
    %c1_316 = arith.constant 1 : index
    %c0_317 = arith.constant 0 : index
    %c0_318 = arith.constant 0 : index
    %409 = vector.load %arg6[%c2_315, %c1_316, %c0_317, %c0_318] : memref<3x3x64x128xbf16, #tpu.memory_space<vmem>>, vector<1x1x64x128xbf16>
    %410 = vector.shape_cast %409 : vector<1x1x64x128xbf16> to vector<64x128xbf16>
    %cst_319 = arith.constant dense<0.000000e+00> : vector<16x128xf32>
    %411 = tpu.matmul %408, %410, %cst_319 {dimension_numbers = #tpu.dot_dimension_numbers<[1], [0], [0], [1], [0, 0, 1, 1], [], []>} : vector<16x64xbf16>, vector<64x128xbf16>, vector<16x128xf32> -> vector<16x128xf32>
    %412 = arith.addf %406, %411 : vector<16x128xf32>
    %c10_320 = arith.constant 10 : index
    %c0_321 = arith.constant 0 : index
    %413 = vector.load %arg17[%c10_320, %c0_321] : memref<26x64xf32, #tpu.memory_space<vmem>>, vector<16x64xf32>
    %cst_322 = arith.constant 0.000000e+00 : f32
    %414 = vector.shape_cast %343 : vector<16x1xi1> to vector<16x1xi1>
    %415 = vector.broadcast %414 : vector<16x1xi1> to vector<16x64xi1>
    %416 = vector.broadcast %cst_322 : f32 to vector<16x64xf32>
    %417 = arith.select %415, %413, %416 : vector<16x64xi1>, vector<16x64xf32>
    %418 = arith.truncf %417 : vector<16x64xf32> to vector<16x64xbf16>
    %c2_323 = arith.constant 2 : index
    %c2_324 = arith.constant 2 : index
    %c0_325 = arith.constant 0 : index
    %c0_326 = arith.constant 0 : index
    %419 = vector.load %arg6[%c2_323, %c2_324, %c0_325, %c0_326] : memref<3x3x64x128xbf16, #tpu.memory_space<vmem>>, vector<1x1x64x128xbf16>
    %420 = vector.shape_cast %419 : vector<1x1x64x128xbf16> to vector<64x128xbf16>
    %cst_327 = arith.constant dense<0.000000e+00> : vector<16x128xf32>
    %421 = tpu.matmul %418, %420, %cst_327 {dimension_numbers = #tpu.dot_dimension_numbers<[1], [0], [0], [1], [0, 0, 1, 1], [], []>} : vector<16x64xbf16>, vector<64x128xbf16>, vector<16x128xf32> -> vector<16x128xf32>
    %422 = arith.addf %412, %421 : vector<16x128xf32>
    %c0_328 = arith.constant 0 : index
    %c0_329 = arith.constant 0 : index
    %423 = vector.load %arg7[%c0_328, %c0_329] : memref<1x128xf32, #tpu.memory_space<vmem>>, vector<1x128xf32>
    %424 = vector.broadcast %423 : vector<1x128xf32> to vector<16x128xf32>
    %425 = arith.addf %422, %424 : vector<16x128xf32>
    %cst_330 = arith.constant 0.000000e+00 : f32
    %426 = vector.broadcast %cst_330 : f32 to vector<16x128xf32>
    %427 = arith.maximumf %425, %426 : vector<16x128xf32>
    %c0_331 = arith.constant 0 : index
    %c0_332 = arith.constant 0 : index
    %428 = vector.load %arg18[%c0_331, %c0_332] : memref<16x128xf32, #tpu.memory_space<vmem>>, vector<16x128xf32>
    tpu.vector_store %arg18[%c0_331, %c0_332], %427 {strides = array<i32>} : memref<16x128xf32, #tpu.memory_space<vmem>>, vector<16x128xf32>,
    %c0_333 = arith.constant 0 : index
    %c0_334 = arith.constant 0 : index
    %429 = tpu.strided_load %arg18[%c0_333, %c0_334] {strides = array<i32: 2, 1>} : memref<16x128xf32, #tpu.memory_space<vmem>>, vector<2x128xf32>
    %c1_335 = arith.constant 1 : index
    %c0_336 = arith.constant 0 : index
    %430 = tpu.strided_load %arg18[%c1_335, %c0_336] {strides = array<i32: 2, 1>} : memref<16x128xf32, #tpu.memory_space<vmem>>, vector<2x128xf32>
    %c4_337 = arith.constant 4 : index
    %c0_338 = arith.constant 0 : index
    %431 = tpu.strided_load %arg18[%c4_337, %c0_338] {strides = array<i32: 2, 1>} : memref<16x128xf32, #tpu.memory_space<vmem>>, vector<2x128xf32>
    %c5_339 = arith.constant 5 : index
    %c0_340 = arith.constant 0 : index
    %432 = tpu.strided_load %arg18[%c5_339, %c0_340] {strides = array<i32: 2, 1>} : memref<16x128xf32, #tpu.memory_space<vmem>>, vector<2x128xf32>
    %433 = arith.maximumf %429, %430 : vector<2x128xf32>
    %434 = arith.maximumf %431, %432 : vector<2x128xf32>
    %435 = arith.maximumf %433, %434 : vector<2x128xf32>
    %c3 = arith.constant 3 : index
    %c0_341 = arith.constant 0 : index
    %436 = vector.load %arg19[%c3, %c0_341] : memref<10x128xf32, #tpu.memory_space<vmem>>, vector<2x128xf32>
    tpu.vector_store %arg19[%c3, %c0_341], %435 {strides = array<i32>} : memref<10x128xf32, #tpu.memory_space<vmem>>, vector<2x128xf32>,
    %c8_342 = arith.constant 8 : index
    %c0_343 = arith.constant 0 : index
    %437 = tpu.strided_load %arg18[%c8_342, %c0_343] {strides = array<i32: 2, 1>} : memref<16x128xf32, #tpu.memory_space<vmem>>, vector<2x128xf32>
    %c9_344 = arith.constant 9 : index
    %c0_345 = arith.constant 0 : index
    %438 = tpu.strided_load %arg18[%c9_344, %c0_345] {strides = array<i32: 2, 1>} : memref<16x128xf32, #tpu.memory_space<vmem>>, vector<2x128xf32>
    %c12 = arith.constant 12 : index
    %c0_346 = arith.constant 0 : index
    %439 = tpu.strided_load %arg18[%c12, %c0_346] {strides = array<i32: 2, 1>} : memref<16x128xf32, #tpu.memory_space<vmem>>, vector<2x128xf32>
    %c13_347 = arith.constant 13 : index
    %c0_348 = arith.constant 0 : index
    %440 = tpu.strided_load %arg18[%c13_347, %c0_348] {strides = array<i32: 2, 1>} : memref<16x128xf32, #tpu.memory_space<vmem>>, vector<2x128xf32>
    %441 = arith.maximumf %437, %438 : vector<2x128xf32>
    %442 = arith.maximumf %439, %440 : vector<2x128xf32>
    %443 = arith.maximumf %441, %442 : vector<2x128xf32>
    %c5_349 = arith.constant 5 : index
    %c0_350 = arith.constant 0 : index
    %444 = vector.load %arg19[%c5_349, %c0_350] : memref<10x128xf32, #tpu.memory_space<vmem>>, vector<2x128xf32>
    tpu.vector_store %arg19[%c5_349, %c0_350], %443 {strides = array<i32>} : memref<10x128xf32, #tpu.memory_space<vmem>>, vector<2x128xf32>,
    %445 = tpu.iota {dimensions = array<i32: 0>} : vector<4x1xi32>
    %c2_i32 = arith.constant 2 : i32
    %c0_i32_351 = arith.constant 0 : i32
    %446 = arith.cmpi eq, %c2_i32, %c0_i32_351 : i32
    %c1_i32_352 = arith.constant 1 : i32
    %447 = arith.select %446, %c1_i32_352, %c2_i32 : i32
    %448 = vector.broadcast %447 : i32 to vector<4x1xi32>
    %449 = arith.remsi %445, %448 : vector<4x1xi32>
    %c0_i32_353 = arith.constant 0 : i32
    %450 = vector.broadcast %c0_i32_353 : i32 to vector<4x1xi32>
    %451 = arith.cmpi ne, %449, %450 : vector<4x1xi32>
    %c0_i32_354 = arith.constant 0 : i32
    %452 = vector.broadcast %c0_i32_354 : i32 to vector<4x1xi32>
    %453 = arith.cmpi slt, %449, %452 : vector<4x1xi32>
    %c0_i32_355 = arith.constant 0 : i32
    %454 = arith.cmpi slt, %447, %c0_i32_355 : i32
    %455 = vector.broadcast %454 : i1 to vector<4x1xi1>
    %456 = vector.broadcast %455 : vector<4x1xi1> to vector<4x1xi1>
    %457 = arith.xori %453, %456 : vector<4x1xi1>
    %458 = arith.andi %457, %451 : vector<4x1xi1>
    %459 = vector.broadcast %447 : i32 to vector<4x1xi32>
    %460 = arith.addi %449, %459 : vector<4x1xi32>
    %461 = arith.select %458, %460, %449 : vector<4x1xi1>, vector<4x1xi32>
    %c0_i32_356 = arith.constant 0 : i32
    %462 = vector.broadcast %c0_i32_356 : i32 to vector<4x1xi32>
    %463 = arith.cmpi ne, %461, %462 : vector<4x1xi32>
    %c1_i32_357 = arith.constant 1 : i32
    %464 = vector.broadcast %c1_i32_357 : i32 to vector<4x1xi32>
    %465 = arith.cmpi ne, %461, %464 : vector<4x1xi32>
    %cst_358 = arith.constant 0.000000e+00 : f32
    %466 = vector.broadcast %cst_358 : f32 to vector<4x512xf32>
    %c0_359 = arith.constant 0 : index
    %c0_360 = arith.constant 0 : index
    %467 = vector.load %arg19[%c0_359, %c0_360] : memref<10x128xf32, #tpu.memory_space<vmem>>, vector<4x128xf32>
    %cst_361 = arith.constant 0.000000e+00 : f32
    %468 = vector.shape_cast %463 : vector<4x1xi1> to vector<4x1xi1>
    %469 = vector.broadcast %468 : vector<4x1xi1> to vector<4x128xi1>
    %470 = vector.broadcast %cst_361 : f32 to vector<4x128xf32>
    %471 = arith.select %469, %467, %470 : vector<4x128xi1>, vector<4x128xf32>
    %472 = arith.truncf %471 : vector<4x128xf32> to vector<4x128xbf16>
    %c0_362 = arith.constant 0 : index
    %c0_363 = arith.constant 0 : index
    %c0_364 = arith.constant 0 : index
    %c0_365 = arith.constant 0 : index
    %473 = vector.load %arg8[%c0_362, %c0_363, %c0_364, %c0_365] : memref<3x3x128x512xbf16, #tpu.memory_space<vmem>>, vector<1x1x128x512xbf16>
    %474 = vector.shape_cast %473 : vector<1x1x128x512xbf16> to vector<128x512xbf16>
    %cst_366 = arith.constant dense<0.000000e+00> : vector<4x512xf32>
    %475 = tpu.matmul %472, %474, %cst_366 {dimension_numbers = #tpu.dot_dimension_numbers<[1], [0], [0], [1], [0, 0, 1, 1], [], []>} : vector<4x128xbf16>, vector<128x512xbf16>, vector<4x512xf32> -> vector<4x512xf32>
    %476 = arith.addf %466, %475 : vector<4x512xf32>
    %c1_367 = arith.constant 1 : index
    %c0_368 = arith.constant 0 : index
    %477 = vector.load %arg19[%c1_367, %c0_368] : memref<10x128xf32, #tpu.memory_space<vmem>>, vector<4x128xf32>
    %478 = arith.truncf %477 : vector<4x128xf32> to vector<4x128xbf16>
    %c0_369 = arith.constant 0 : index
    %c1_370 = arith.constant 1 : index
    %c0_371 = arith.constant 0 : index
    %c0_372 = arith.constant 0 : index
    %479 = vector.load %arg8[%c0_369, %c1_370, %c0_371, %c0_372] : memref<3x3x128x512xbf16, #tpu.memory_space<vmem>>, vector<1x1x128x512xbf16>
    %480 = vector.shape_cast %479 : vector<1x1x128x512xbf16> to vector<128x512xbf16>
    %cst_373 = arith.constant dense<0.000000e+00> : vector<4x512xf32>
    %481 = tpu.matmul %478, %480, %cst_373 {dimension_numbers = #tpu.dot_dimension_numbers<[1], [0], [0], [1], [0, 0, 1, 1], [], []>} : vector<4x128xbf16>, vector<128x512xbf16>, vector<4x512xf32> -> vector<4x512xf32>
    %482 = arith.addf %476, %481 : vector<4x512xf32>
    %c2_374 = arith.constant 2 : index
    %c0_375 = arith.constant 0 : index
    %483 = vector.load %arg19[%c2_374, %c0_375] : memref<10x128xf32, #tpu.memory_space<vmem>>, vector<4x128xf32>
    %cst_376 = arith.constant 0.000000e+00 : f32
    %484 = vector.shape_cast %465 : vector<4x1xi1> to vector<4x1xi1>
    %485 = vector.broadcast %484 : vector<4x1xi1> to vector<4x128xi1>
    %486 = vector.broadcast %cst_376 : f32 to vector<4x128xf32>
    %487 = arith.select %485, %483, %486 : vector<4x128xi1>, vector<4x128xf32>
    %488 = arith.truncf %487 : vector<4x128xf32> to vector<4x128xbf16>
    %c0_377 = arith.constant 0 : index
    %c2_378 = arith.constant 2 : index
    %c0_379 = arith.constant 0 : index
    %c0_380 = arith.constant 0 : index
    %489 = vector.load %arg8[%c0_377, %c2_378, %c0_379, %c0_380] : memref<3x3x128x512xbf16, #tpu.memory_space<vmem>>, vector<1x1x128x512xbf16>
    %490 = vector.shape_cast %489 : vector<1x1x128x512xbf16> to vector<128x512xbf16>
    %cst_381 = arith.constant dense<0.000000e+00> : vector<4x512xf32>
    %491 = tpu.matmul %488, %490, %cst_381 {dimension_numbers = #tpu.dot_dimension_numbers<[1], [0], [0], [1], [0, 0, 1, 1], [], []>} : vector<4x128xbf16>, vector<128x512xbf16>, vector<4x512xf32> -> vector<4x512xf32>
    %492 = arith.addf %482, %491 : vector<4x512xf32>
    %c2_382 = arith.constant 2 : index
    %c0_383 = arith.constant 0 : index
    %493 = vector.load %arg19[%c2_382, %c0_383] : memref<10x128xf32, #tpu.memory_space<vmem>>, vector<4x128xf32>
    %cst_384 = arith.constant 0.000000e+00 : f32
    %494 = vector.shape_cast %463 : vector<4x1xi1> to vector<4x1xi1>
    %495 = vector.broadcast %494 : vector<4x1xi1> to vector<4x128xi1>
    %496 = vector.broadcast %cst_384 : f32 to vector<4x128xf32>
    %497 = arith.select %495, %493, %496 : vector<4x128xi1>, vector<4x128xf32>
    %498 = arith.truncf %497 : vector<4x128xf32> to vector<4x128xbf16>
    %c1_385 = arith.constant 1 : index
    %c0_386 = arith.constant 0 : index
    %c0_387 = arith.constant 0 : index
    %c0_388 = arith.constant 0 : index
    %499 = vector.load %arg8[%c1_385, %c0_386, %c0_387, %c0_388] : memref<3x3x128x512xbf16, #tpu.memory_space<vmem>>, vector<1x1x128x512xbf16>
    %500 = vector.shape_cast %499 : vector<1x1x128x512xbf16> to vector<128x512xbf16>
    %cst_389 = arith.constant dense<0.000000e+00> : vector<4x512xf32>
    %501 = tpu.matmul %498, %500, %cst_389 {dimension_numbers = #tpu.dot_dimension_numbers<[1], [0], [0], [1], [0, 0, 1, 1], [], []>} : vector<4x128xbf16>, vector<128x512xbf16>, vector<4x512xf32> -> vector<4x512xf32>
    %502 = arith.addf %492, %501 : vector<4x512xf32>
    %c3_390 = arith.constant 3 : index
    %c0_391 = arith.constant 0 : index
    %503 = vector.load %arg19[%c3_390, %c0_391] : memref<10x128xf32, #tpu.memory_space<vmem>>, vector<4x128xf32>
    %504 = arith.truncf %503 : vector<4x128xf32> to vector<4x128xbf16>
    %c1_392 = arith.constant 1 : index
    %c1_393 = arith.constant 1 : index
    %c0_394 = arith.constant 0 : index
    %c0_395 = arith.constant 0 : index
    %505 = vector.load %arg8[%c1_392, %c1_393, %c0_394, %c0_395] : memref<3x3x128x512xbf16, #tpu.memory_space<vmem>>, vector<1x1x128x512xbf16>
    %506 = vector.shape_cast %505 : vector<1x1x128x512xbf16> to vector<128x512xbf16>
    %cst_396 = arith.constant dense<0.000000e+00> : vector<4x512xf32>
    %507 = tpu.matmul %504, %506, %cst_396 {dimension_numbers = #tpu.dot_dimension_numbers<[1], [0], [0], [1], [0, 0, 1, 1], [], []>} : vector<4x128xbf16>, vector<128x512xbf16>, vector<4x512xf32> -> vector<4x512xf32>
    %508 = arith.addf %502, %507 : vector<4x512xf32>
    %c4_397 = arith.constant 4 : index
    %c0_398 = arith.constant 0 : index
    %509 = vector.load %arg19[%c4_397, %c0_398] : memref<10x128xf32, #tpu.memory_space<vmem>>, vector<4x128xf32>
    %cst_399 = arith.constant 0.000000e+00 : f32
    %510 = vector.shape_cast %465 : vector<4x1xi1> to vector<4x1xi1>
    %511 = vector.broadcast %510 : vector<4x1xi1> to vector<4x128xi1>
    %512 = vector.broadcast %cst_399 : f32 to vector<4x128xf32>
    %513 = arith.select %511, %509, %512 : vector<4x128xi1>, vector<4x128xf32>
    %514 = arith.truncf %513 : vector<4x128xf32> to vector<4x128xbf16>
    %c1_400 = arith.constant 1 : index
    %c2_401 = arith.constant 2 : index
    %c0_402 = arith.constant 0 : index
    %c0_403 = arith.constant 0 : index
    %515 = vector.load %arg8[%c1_400, %c2_401, %c0_402, %c0_403] : memref<3x3x128x512xbf16, #tpu.memory_space<vmem>>, vector<1x1x128x512xbf16>
    %516 = vector.shape_cast %515 : vector<1x1x128x512xbf16> to vector<128x512xbf16>
    %cst_404 = arith.constant dense<0.000000e+00> : vector<4x512xf32>
    %517 = tpu.matmul %514, %516, %cst_404 {dimension_numbers = #tpu.dot_dimension_numbers<[1], [0], [0], [1], [0, 0, 1, 1], [], []>} : vector<4x128xbf16>, vector<128x512xbf16>, vector<4x512xf32> -> vector<4x512xf32>
    %518 = arith.addf %508, %517 : vector<4x512xf32>
    %c4_405 = arith.constant 4 : index
    %c0_406 = arith.constant 0 : index
    %519 = vector.load %arg19[%c4_405, %c0_406] : memref<10x128xf32, #tpu.memory_space<vmem>>, vector<4x128xf32>
    %cst_407 = arith.constant 0.000000e+00 : f32
    %520 = vector.shape_cast %463 : vector<4x1xi1> to vector<4x1xi1>
    %521 = vector.broadcast %520 : vector<4x1xi1> to vector<4x128xi1>
    %522 = vector.broadcast %cst_407 : f32 to vector<4x128xf32>
    %523 = arith.select %521, %519, %522 : vector<4x128xi1>, vector<4x128xf32>
    %524 = arith.truncf %523 : vector<4x128xf32> to vector<4x128xbf16>
    %c2_408 = arith.constant 2 : index
    %c0_409 = arith.constant 0 : index
    %c0_410 = arith.constant 0 : index
    %c0_411 = arith.constant 0 : index
    %525 = vector.load %arg8[%c2_408, %c0_409, %c0_410, %c0_411] : memref<3x3x128x512xbf16, #tpu.memory_space<vmem>>, vector<1x1x128x512xbf16>
    %526 = vector.shape_cast %525 : vector<1x1x128x512xbf16> to vector<128x512xbf16>
    %cst_412 = arith.constant dense<0.000000e+00> : vector<4x512xf32>
    %527 = tpu.matmul %524, %526, %cst_412 {dimension_numbers = #tpu.dot_dimension_numbers<[1], [0], [0], [1], [0, 0, 1, 1], [], []>} : vector<4x128xbf16>, vector<128x512xbf16>, vector<4x512xf32> -> vector<4x512xf32>
    %528 = arith.addf %518, %527 : vector<4x512xf32>
    %c5_413 = arith.constant 5 : index
    %c0_414 = arith.constant 0 : index
    %529 = vector.load %arg19[%c5_413, %c0_414] : memref<10x128xf32, #tpu.memory_space<vmem>>, vector<4x128xf32>
    %530 = arith.truncf %529 : vector<4x128xf32> to vector<4x128xbf16>
    %c2_415 = arith.constant 2 : index
    %c1_416 = arith.constant 1 : index
    %c0_417 = arith.constant 0 : index
    %c0_418 = arith.constant 0 : index
    %531 = vector.load %arg8[%c2_415, %c1_416, %c0_417, %c0_418] : memref<3x3x128x512xbf16, #tpu.memory_space<vmem>>, vector<1x1x128x512xbf16>
    %532 = vector.shape_cast %531 : vector<1x1x128x512xbf16> to vector<128x512xbf16>
    %cst_419 = arith.constant dense<0.000000e+00> : vector<4x512xf32>
    %533 = tpu.matmul %530, %532, %cst_419 {dimension_numbers = #tpu.dot_dimension_numbers<[1], [0], [0], [1], [0, 0, 1, 1], [], []>} : vector<4x128xbf16>, vector<128x512xbf16>, vector<4x512xf32> -> vector<4x512xf32>
    %534 = arith.addf %528, %533 : vector<4x512xf32>
    %c6_420 = arith.constant 6 : index
    %c0_421 = arith.constant 0 : index
    %535 = vector.load %arg19[%c6_420, %c0_421] : memref<10x128xf32, #tpu.memory_space<vmem>>, vector<4x128xf32>
    %cst_422 = arith.constant 0.000000e+00 : f32
    %536 = vector.shape_cast %465 : vector<4x1xi1> to vector<4x1xi1>
    %537 = vector.broadcast %536 : vector<4x1xi1> to vector<4x128xi1>
    %538 = vector.broadcast %cst_422 : f32 to vector<4x128xf32>
    %539 = arith.select %537, %535, %538 : vector<4x128xi1>, vector<4x128xf32>
    %540 = arith.truncf %539 : vector<4x128xf32> to vector<4x128xbf16>
    %c2_423 = arith.constant 2 : index
    %c2_424 = arith.constant 2 : index
    %c0_425 = arith.constant 0 : index
    %c0_426 = arith.constant 0 : index
    %541 = vector.load %arg8[%c2_423, %c2_424, %c0_425, %c0_426] : memref<3x3x128x512xbf16, #tpu.memory_space<vmem>>, vector<1x1x128x512xbf16>
    %542 = vector.shape_cast %541 : vector<1x1x128x512xbf16> to vector<128x512xbf16>
    %cst_427 = arith.constant dense<0.000000e+00> : vector<4x512xf32>
    %543 = tpu.matmul %540, %542, %cst_427 {dimension_numbers = #tpu.dot_dimension_numbers<[1], [0], [0], [1], [0, 0, 1, 1], [], []>} : vector<4x128xbf16>, vector<128x512xbf16>, vector<4x512xf32> -> vector<4x512xf32>
    %544 = arith.addf %534, %543 : vector<4x512xf32>
    %c0_428 = arith.constant 0 : index
    %c0_429 = arith.constant 0 : index
    %545 = vector.load %arg9[%c0_428, %c0_429] : memref<1x512xf32, #tpu.memory_space<vmem>>, vector<1x512xf32>
    %546 = vector.broadcast %545 : vector<1x512xf32> to vector<4x512xf32>
    %547 = arith.addf %544, %546 : vector<4x512xf32>
    %cst_430 = arith.constant 0.000000e+00 : f32
    %548 = vector.broadcast %cst_430 : f32 to vector<4x512xf32>
    %549 = arith.maximumf %547, %548 : vector<4x512xf32>
    %cst_431 = arith.constant dense<0xFF800000> : vector<512xf32>
    %550 = vector.multi_reduction <maximumf>, %549, %cst_431 [0] : vector<4x512xf32> to vector<512xf32>
    %551 = vector.shape_cast %550 : vector<512xf32> to vector<1x512xf32>
    %552 = arith.truncf %551 : vector<1x512xf32> to vector<1x512xbf16>
    %c0_432 = arith.constant 0 : index
    %c0_433 = arith.constant 0 : index
    %553 = vector.load %arg10[%c0_432, %c0_433] : memref<512x16xbf16, #tpu.memory_space<vmem>>, vector<512x16xbf16>
    %cst_434 = arith.constant dense<0.000000e+00> : vector<1x16xf32>
    %554 = tpu.matmul %552, %553, %cst_434 {dimension_numbers = #tpu.dot_dimension_numbers<[1], [0], [0], [1], [0, 0, 1, 1], [], []>} : vector<1x512xbf16>, vector<512x16xbf16>, vector<1x16xf32> -> vector<1x16xf32>
    %c0_435 = arith.constant 0 : index
    %c0_436 = arith.constant 0 : index
    %555 = vector.load %arg11[%c0_435, %c0_436] : memref<1x16xf32, #tpu.memory_space<vmem>>, vector<1x16xf32>
    %556 = arith.addf %554, %555 : vector<1x16xf32>
    %c0_437 = arith.constant 0 : index
    %c0_438 = arith.constant 0 : index
    %c0_439 = arith.constant 0 : index
    %557 = vector.load %arg12[%c0_437, %c0_438, %c0_439] : memref<1x1x16xf32, #tpu.memory_space<vmem>>, vector<1x1x16xf32>
    %558 = vector.shape_cast %557 : vector<1x1x16xf32> to vector<1x16xf32>
    %559 = vector.shape_cast %556 : vector<1x16xf32> to vector<1x1x16xf32>
    tpu.vector_store %arg12[%c0_437, %c0_438, %c0_439], %559 {strides = array<i32>} : memref<1x1x16xf32, #tpu.memory_space<vmem>>, vector<1x1x16xf32>,
    return
  }
  func.func @transform_0(%arg0: i32) -> (i32, i32, i32) {
    %c0_i32 = arith.constant 0 : i32
    %c0_i32_0 = arith.constant 0 : i32
    %c0_i32_1 = arith.constant 0 : i32
    return %arg0, %c0_i32, %c0_i32_0 : i32, i32, i32
  }
  func.func @transform_1(%arg0: i32) -> (i32, i32, i32, i32) {
    %c0_i32 = arith.constant 0 : i32
    %c0_i32_0 = arith.constant 0 : i32
    %c0_i32_1 = arith.constant 0 : i32
    %c0_i32_2 = arith.constant 0 : i32
    %c0_i32_3 = arith.constant 0 : i32
    return %c0_i32, %c0_i32_0, %c0_i32_1, %c0_i32_2 : i32, i32, i32, i32
  }
  func.func @transform_2(%arg0: i32) -> (i32, i32) {
    %c0_i32 = arith.constant 0 : i32
    %c0_i32_0 = arith.constant 0 : i32
    %c0_i32_1 = arith.constant 0 : i32
    return %c0_i32, %c0_i32_0 : i32, i32
  }
  func.func @transform_3(%arg0: i32) -> (i32, i32, i32, i32) {
    %c0_i32 = arith.constant 0 : i32
    %c0_i32_0 = arith.constant 0 : i32
    %c0_i32_1 = arith.constant 0 : i32
    %c0_i32_2 = arith.constant 0 : i32
    %c0_i32_3 = arith.constant 0 : i32
    return %c0_i32, %c0_i32_0, %c0_i32_1, %c0_i32_2 : i32, i32, i32, i32
  }
  func.func @transform_4(%arg0: i32) -> (i32, i32) {
    %c0_i32 = arith.constant 0 : i32
    %c0_i32_0 = arith.constant 0 : i32
    %c0_i32_1 = arith.constant 0 : i32
    return %c0_i32, %c0_i32_0 : i32, i32
  }
  func.func @transform_5(%arg0: i32) -> (i32, i32, i32, i32) {
    %c0_i32 = arith.constant 0 : i32
    %c0_i32_0 = arith.constant 0 : i32
    %c0_i32_1 = arith.constant 0 : i32
    %c0_i32_2 = arith.constant 0 : i32
    %c0_i32_3 = arith.constant 0 : i32
    return %c0_i32, %c0_i32_0, %c0_i32_1, %c0_i32_2 : i32, i32, i32, i32
  }
  func.func @transform_6(%arg0: i32) -> (i32, i32) {
    %c0_i32 = arith.constant 0 : i32
    %c0_i32_0 = arith.constant 0 : i32
    %c0_i32_1 = arith.constant 0 : i32
    return %c0_i32, %c0_i32_0 : i32, i32
  }
  func.func @transform_7(%arg0: i32) -> (i32, i32, i32, i32) {
    %c0_i32 = arith.constant 0 : i32
    %c0_i32_0 = arith.constant 0 : i32
    %c0_i32_1 = arith.constant 0 : i32
    %c0_i32_2 = arith.constant 0 : i32
    %c0_i32_3 = arith.constant 0 : i32
    return %c0_i32, %c0_i32_0, %c0_i32_1, %c0_i32_2 : i32, i32, i32, i32
  }
  func.func @transform_8(%arg0: i32) -> (i32, i32) {
    %c0_i32 = arith.constant 0 : i32
    %c0_i32_0 = arith.constant 0 : i32
    %c0_i32_1 = arith.constant 0 : i32
    return %c0_i32, %c0_i32_0 : i32, i32
  }
  func.func @transform_9(%arg0: i32) -> (i32, i32) {
    %c0_i32 = arith.constant 0 : i32
    %c0_i32_0 = arith.constant 0 : i32
    %c0_i32_1 = arith.constant 0 : i32
    return %c0_i32, %c0_i32_0 : i32, i32
  }
  func.func @transform_10(%arg0: i32) -> (i32, i32) {
    %c0_i32 = arith.constant 0 : i32
    %c0_i32_0 = arith.constant 0 : i32
    %c0_i32_1 = arith.constant 0 : i32
    return %c0_i32, %c0_i32_0 : i32, i32
  }
  func.func @transform_11(%arg0: i32) -> (i32, i32, i32) {
    %c0_i32 = arith.constant 0 : i32
    %c0_i32_0 = arith.constant 0 : i32
    %c0_i32_1 = arith.constant 0 : i32
    return %arg0, %c0_i32, %c0_i32_0 : i32, i32, i32
  }
}

</mosaic_0001>

<llo_original>
// kernel: vgg_forward.1
$region0: #{vgg_forward.1}
  #allocation0 [shape = 'u32[]', space=smem, size = 0x4, offset = 0x4, fixed_abs, tag = 'smem constant byte address 0x4 - core index']
  #allocation1 [shape = 'u32[144,128]{1,0:T(1,128)}', space=vmem, size = 0x12000, scoped, tag = 'internal scratch']
  #allocation2 [shape = 'f32[290,3]{1,0:T(8,128)}', space=vmem, size = 0x25000, scoped, tag = 'scratch operand']
  #allocation3 [shape = 'f32[256,32]{1,0:T(8,128)}', space=vmem, size = 0x20000, scoped, tag = 'scratch operand']
  #allocation4 [shape = 'f32[82,32]{1,0:T(8,128)}', space=vmem, size = 0xb000, scoped, tag = 'scratch operand']
  #allocation5 [shape = 'f32[64,64]{1,0:T(8,128)}', space=vmem, size = 0x8000, scoped, tag = 'scratch operand']
  #allocation6 [shape = 'f32[26,64]{1,0:T(8,128)}', space=vmem, size = 0x4000, scoped, tag = 'scratch operand']
  #allocation7 [shape = 'f32[16,128]{1,0:T(8,128)}', space=vmem, size = 0x2000, scoped, tag = 'scratch operand']
  #allocation8 [shape = 'f32[10,128]{1,0:T(8,128)}', space=vmem, size = 0x2000, scoped, tag = 'scratch operand']
  %s0 = inlined_call_operand.vmem [shape: f32[2,256,3], index: 0, kind: input, shape index: {}]
  %s1 = inlined_call_operand.vmem [shape: bf16[3,3,3,32], index: 1, kind: input, shape index: {}]
  %s2 = inlined_call_operand.vmem [shape: f32[1,32], index: 2, kind: input, shape index: {}]
  %s3 = inlined_call_operand.vmem [shape: bf16[3,3,32,64], index: 3, kind: input, shape index: {}]
  %s4 = inlined_call_operand.vmem [shape: f32[1,64], index: 4, kind: input, shape index: {}]
  %s5 = inlined_call_operand.vmem [shape: bf16[3,3,64,128], index: 5, kind: input, shape index: {}]
  %s6 = inlined_call_operand.vmem [shape: f32[1,128], index: 6, kind: input, shape index: {}]
  %s7 = inlined_call_operand.vmem [shape: bf16[3,3,128,512], index: 7, kind: input, shape index: {}]
  %s8 = inlined_call_operand.vmem [shape: f32[1,512], index: 8, kind: input, shape index: {}]
  %s9 = inlined_call_operand.vmem [shape: bf16[512,16], index: 9, kind: input, shape index: {}]
  %s10 = inlined_call_operand.vmem [shape: f32[1,16], index: 10, kind: input, shape index: {}]
  %s11 = inlined_call_operand.hbm [shape: f32[2,1,16], index: 11, kind: output, shape index: {}]
  %s12 = sld [smem:[#allocation0]]
  $region77: #{vgg_forward.1} parent=0
    _
  %s14 = ssub.s32 1, %s12
  %s15 = scalar_select 0, %s14, %s12
  $region1: #{vgg_forward.1} parent=0
    #allocation9 [shape = 'u8[1024]{0}', space=vmem, size = 0x400, scoped, tag = 'output window, operand 0']
    #allocation10 [shape = 's32[2]{0}', space=sflag, size = 0x8, scoped, tag = 'scoped memory for vgg_forward.1']
    %16 = vsyncpa [#allocation10], 0
    %s17 = scalar_lea.sflag [#allocation10], 1
    %18 = vsyncpa %s17, 0
    loop: start=0, step=1, limit=4
    $region2: #{vgg_forward.1} parent=1 // loop_pre_header
      _
    $region3: #{vgg_forward.1} parent=1 // loop_header
      %s20 = sphi 0, %s24
      %p21 = scmp.ge.s32.totalorder %s20, 4
      %s30 = sphi 0, %s32
      %s33 = sphi 0, %s30
      %s34 = sphi 0, %s33
      %s50 = sphi 0, %s34
      %s54 = sphi 0, %s54
      %s56 = sphi 0, %s54
      %s57 = sphi 0, %s56
      %s71 = sphi 0, %s57
      %s75 = sphi 0, %s75
      %s77 = sphi 0, %s75
      %s78 = sphi 0, %s77
      %s92 = sphi 0, %s78
      %s96 = sphi 0, %s96
      %s98 = sphi 0, %s96
      %s99 = sphi 0, %s98
      %s113 = sphi 0, %s99
      %s117 = sphi 0, %s117
      %s119 = sphi 0, %s117
      %s120 = sphi 0, %s119
      %s134 = sphi 0, %s120
      %s138 = sphi 0, %s138
      %s140 = sphi 0, %s138
      %s141 = sphi 0, %s140
      %s155 = sphi 0, %s141
      %s159 = sphi 0, %s159
      %s161 = sphi 0, %s159
      %s162 = sphi 0, %s161
      %s176 = sphi 0, %s162
      %s180 = sphi 0, %s180
      %s182 = sphi 0, %s180
      %s183 = sphi 0, %s182
      %s197 = sphi 0, %s183
      %s201 = sphi 0, %s201
      %s203 = sphi 0, %s201
      %s204 = sphi 0, %s203
      %s218 = sphi 0, %s204
      %s222 = sphi 0, %s222
      %s224 = sphi 0, %s222
      %s225 = sphi 0, %s224
      %s239 = sphi 0, %s225
      %s243 = sphi 0, %s243
      %s245 = sphi 0, %s243
      %s246 = sphi 0, %s245
      %s260 = sphi 0, %s246
      %s266 = sphi 0, %s268
      %s269 = sphi 0, %s266
      %s270 = sphi 0, %s269
      %s286 = sphi 0, %s270
    $region4: #{vgg_forward.1} parent=1 // loop_header_branch
      %23 = sbr.rel (%p21) target = $region8
    $region5: #{vgg_forward.1} parent=1 // loop_body
      %s25 = ssub.s32 %s20, 1
      %s26 = ssub.s32 %s20, 2
      %s27 = sadd.s32 %s20, 1
      %s28 = ssub.s32 %s20, %s27
      %p29 = scmp.eq.s32.totalorder %s28, 0
      %s31 = sadd.s32 %s30, 1
      %s32 = scalar_select %p29, %s30, %s31
      %p35 = pneg %p29
      %p36 = scmp.eq.s32.totalorder %s20, 1
      %p37 = por %p35, %p36
      %p38 = scmp.ne.s32.totalorder %s30, %s33
      %p39 = scmp.eq.s32.totalorder %s20, 0
      %p40 = por %p38, %p39
      %p41 = scmp.ne.s32.totalorder %s30, %s33
      %p42 = scmp.eq.s32.totalorder %s25, 1
      %p43 = por %p41, %p42
      %p44 = scmp.ne.s32.totalorder %s33, %s34
      %p45 = scmp.eq.s32.totalorder %s25, 0
      %p46 = por %p44, %p45
      %p47 = scmp.ne.s32.totalorder %s33, %s34
      %p48 = scmp.eq.s32.totalorder %s26, 1
      %p49 = por %p47, %p48
      %p51 = scmp.ne.s32.totalorder %s34, %s50
      %p52 = scmp.eq.s32.totalorder %s26, 0
      %p53 = por %p51, %p52
      %s55 = sadd.s32 %s54, 1
      %p58 = scmp.eq.s32.totalorder %s20, 1
      %p59 = scmp.ne.s32.totalorder %s54, %s56
      %p60 = scmp.eq.s32.totalorder %s20, 0
      %p61 = por %p59, %p60
      %p62 = scmp.ne.s32.totalorder %s54, %s56
      %p63 = scmp.eq.s32.totalorder %s25, 1
      %p64 = por %p62, %p63
      %p65 = scmp.ne.s32.totalorder %s56, %s57
      %p66 = scmp.eq.s32.totalorder %s25, 0
      %p67 = por %p65, %p66
      %p68 = scmp.ne.s32.totalorder %s56, %s57
      %p69 = scmp.eq.s32.totalorder %s26, 1
      %p70 = por %p68, %p69
      %p72 = scmp.ne.s32.totalorder %s57, %s71
      %p73 = scmp.eq.s32.totalorder %s26, 0
      %p74 = por %p72, %p73
      %s76 = sadd.s32 %s75, 1
      %p79 = scmp.eq.s32.totalorder %s20, 1
      %p80 = scmp.ne.s32.totalorder %s75, %s77
      %p81 = scmp.eq.s32.totalorder %s20, 0
      %p82 = por %p80, %p81
      %p83 = scmp.ne.s32.totalorder %s75, %s77
      %p84 = scmp.eq.s32.totalorder %s25, 1
      %p85 = por %p83, %p84
      %p86 = scmp.ne.s32.totalorder %s77, %s78
      %p87 = scmp.eq.s32.totalorder %s25, 0
      %p88 = por %p86, %p87
      %p89 = scmp.ne.s32.totalorder %s77, %s78
      %p90 = scmp.eq.s32.totalorder %s26, 1
      %p91 = por %p89, %p90
      %p93 = scmp.ne.s32.totalorder %s78, %s92
      %p94 = scmp.eq.s32.totalorder %s26, 0
      %p95 = por %p93, %p94
      %s97 = sadd.s32 %s96, 1
      %p100 = scmp.eq.s32.totalorder %s20, 1
      %p101 = scmp.ne.s32.totalorder %s96, %s98
      %p102 = scmp.eq.s32.totalorder %s20, 0
      %p103 = por %p101, %p102
      %p104 = scmp.ne.s32.totalorder %s96, %s98
      %p105 = scmp.eq.s32.totalorder %s25, 1
      %p106 = por %p104, %p105
      %p107 = scmp.ne.s32.totalorder %s98, %s99
      %p108 = scmp.eq.s32.totalorder %s25, 0
      %p109 = por %p107, %p108
      %p110 = scmp.ne.s32.totalorder %s98, %s99
      %p111 = scmp.eq.s32.totalorder %s26, 1
      %p112 = por %p110, %p111
      %p114 = scmp.ne.s32.totalorder %s99, %s113
      %p115 = scmp.eq.s32.totalorder %s26, 0
      %p116 = por %p114, %p115
      %s118 = sadd.s32 %s117, 1
      %p121 = scmp.eq.s32.totalorder %s20, 1
      %p122 = scmp.ne.s32.totalorder %s117, %s119
      %p123 = scmp.eq.s32.totalorder %s20, 0
      %p124 = por %p122, %p123
      %p125 = scmp.ne.s32.totalorder %s117, %s119
      %p126 = scmp.eq.s32.totalorder %s25, 1
      %p127 = por %p125, %p126
      %p128 = scmp.ne.s32.totalorder %s119, %s120
      %p129 = scmp.eq.s32.totalorder %s25, 0
      %p130 = por %p128, %p129
      %p131 = scmp.ne.s32.totalorder %s119, %s120
      %p132 = scmp.eq.s32.totalorder %s26, 1
      %p133 = por %p131, %p132
      %p135 = scmp.ne.s32.totalorder %s120, %s134
      %p136 = scmp.eq.s32.totalorder %s26, 0
      %p137 = por %p135, %p136
      %s139 = sadd.s32 %s138, 1
      %p142 = scmp.eq.s32.totalorder %s20, 1
      %p143 = scmp.ne.s32.totalorder %s138, %s140
      %p144 = scmp.eq.s32.totalorder %s20, 0
      %p145 = por %p143, %p144
      %p146 = scmp.ne.s32.totalorder %s138, %s140
      %p147 = scmp.eq.s32.totalorder %s25, 1
      %p148 = por %p146, %p147
      %p149 = scmp.ne.s32.totalorder %s140, %s141
      %p150 = scmp.eq.s32.totalorder %s25, 0
      %p151 = por %p149, %p150
      %p152 = scmp.ne.s32.totalorder %s140, %s141
      %p153 = scmp.eq.s32.totalorder %s26, 1
      %p154 = por %p152, %p153
      %p156 = scmp.ne.s32.totalorder %s141, %s155
      %p157 = scmp.eq.s32.totalorder %s26, 0
      %p158 = por %p156, %p157
      %s160 = sadd.s32 %s159, 1
      %p163 = scmp.eq.s32.totalorder %s20, 1
      %p164 = scmp.ne.s32.totalorder %s159, %s161
      %p165 = scmp.eq.s32.totalorder %s20, 0
      %p166 = por %p164, %p165
      %p167 = scmp.ne.s32.totalorder %s159, %s161
      %p168 = scmp.eq.s32.totalorder %s25, 1
      %p169 = por %p167, %p168
      %p170 = scmp.ne.s32.totalorder %s161, %s162
      %p171 = scmp.eq.s32.totalorder %s25, 0
      %p172 = por %p170, %p171
      %p173 = scmp.ne.s32.totalorder %s161, %s162
      %p174 = scmp.eq.s32.totalorder %s26, 1
      %p175 = por %p173, %p174
      %p177 = scmp.ne.s32.totalorder %s162, %s176
      %p178 = scmp.eq.s32.totalorder %s26, 0
      %p179 = por %p177, %p178
      %s181 = sadd.s32 %s180, 1
      %p184 = scmp.eq.s32.totalorder %s20, 1
      %p185 = scmp.ne.s32.totalorder %s180, %s182
      %p186 = scmp.eq.s32.totalorder %s20, 0
      %p187 = por %p185, %p186
      %p188 = scmp.ne.s32.totalorder %s180, %s182
      %p189 = scmp.eq.s32.totalorder %s25, 1
      %p190 = por %p188, %p189
      %p191 = scmp.ne.s32.totalorder %s182, %s183
      %p192 = scmp.eq.s32.totalorder %s25, 0
      %p193 = por %p191, %p192
      %p194 = scmp.ne.s32.totalorder %s182, %s183
      %p195 = scmp.eq.s32.totalorder %s26, 1
      %p196 = por %p194, %p195
      %p198 = scmp.ne.s32.totalorder %s183, %s197
      %p199 = scmp.eq.s32.totalorder %s26, 0
      %p200 = por %p198, %p199
      %s202 = sadd.s32 %s201, 1
      %p205 = scmp.eq.s32.totalorder %s20, 1
      %p206 = scmp.ne.s32.totalorder %s201, %s203
      %p207 = scmp.eq.s32.totalorder %s20, 0
      %p208 = por %p206, %p207
      %p209 = scmp.ne.s32.totalorder %s201, %s203
      %p210 = scmp.eq.s32.totalorder %s25, 1
      %p211 = por %p209, %p210
      %p212 = scmp.ne.s32.totalorder %s203, %s204
      %p213 = scmp.eq.s32.totalorder %s25, 0
      %p214 = por %p212, %p213
      %p215 = scmp.ne.s32.totalorder %s203, %s204
      %p216 = scmp.eq.s32.totalorder %s26, 1
      %p217 = por %p215, %p216
      %p219 = scmp.ne.s32.totalorder %s204, %s218
      %p220 = scmp.eq.s32.totalorder %s26, 0
      %p221 = por %p219, %p220
      %s223 = sadd.s32 %s222, 1
      %p226 = scmp.eq.s32.totalorder %s20, 1
      %p227 = scmp.ne.s32.totalorder %s222, %s224
      %p228 = scmp.eq.s32.totalorder %s20, 0
      %p229 = por %p227, %p228
      %p230 = scmp.ne.s32.totalorder %s222, %s224
      %p231 = scmp.eq.s32.totalorder %s25, 1
      %p232 = por %p230, %p231
      %p233 = scmp.ne.s32.totalorder %s224, %s225
      %p234 = scmp.eq.s32.totalorder %s25, 0
      %p235 = por %p233, %p234
      %p236 = scmp.ne.s32.totalorder %s224, %s225
      %p237 = scmp.eq.s32.totalorder %s26, 1
      %p238 = por %p236, %p237
      %p240 = scmp.ne.s32.totalorder %s225, %s239
      %p241 = scmp.eq.s32.totalorder %s26, 0
      %p242 = por %p240, %p241
      %s244 = sadd.s32 %s243, 1
      %p247 = scmp.eq.s32.totalorder %s20, 1
      %p248 = scmp.ne.s32.totalorder %s243, %s245
      %p249 = scmp.eq.s32.totalorder %s20, 0
      %p250 = por %p248, %p249
      %p251 = scmp.ne.s32.totalorder %s243, %s245
      %p252 = scmp.eq.s32.totalorder %s25, 1
      %p253 = por %p251, %p252
      %p254 = scmp.ne.s32.totalorder %s245, %s246
      %p255 = scmp.eq.s32.totalorder %s25, 0
      %p256 = por %p254, %p255
      %p257 = scmp.ne.s32.totalorder %s245, %s246
      %p258 = scmp.eq.s32.totalorder %s26, 1
      %p259 = por %p257, %p258
      %p261 = scmp.ne.s32.totalorder %s246, %s260
      %p262 = scmp.eq.s32.totalorder %s26, 0
      %p263 = por %p261, %p262
      %s264 = ssub.s32 %s20, %s27
      %p265 = scmp.eq.s32.totalorder %s264, 0
      %s267 = sadd.s32 %s266, 1
      %s268 = scalar_select %p265, %s266, %s267
      %p271 = pneg %p265
      %p272 = scmp.eq.s32.totalorder %s20, 1
      %p273 = por %p271, %p272
      %p274 = scmp.ne.s32.totalorder %s266, %s269
      %p275 = scmp.eq.s32.totalorder %s20, 0
      %p276 = por %p274, %p275
      %p277 = scmp.ne.s32.totalorder %s266, %s269
      %p278 = scmp.eq.s32.totalorder %s25, 1
      %p279 = por %p277, %p278
      %p280 = scmp.ne.s32.totalorder %s269, %s270
      %p281 = scmp.eq.s32.totalorder %s25, 0
      %p282 = por %p280, %p281
      %p283 = scmp.ne.s32.totalorder %s269, %s270
      %p284 = scmp.eq.s32.totalorder %s26, 1
      %p285 = por %p283, %p284
      %p287 = scmp.ne.s32.totalorder %s270, %s286
      %p288 = scmp.eq.s32.totalorder %s26, 0
      %p289 = por %p287, %p288
      %p290 = scmp.le.s32.totalorder 1, %s20
      %p291 = scmp.lt.s32.totalorder %s20, 3
      %p292 = pnand %p290, %p291
      %p293 = pneg %p292
      // Predicated region
      $region9: #{vgg_forward.1} parent=5 // pred_check
        _
      $region10: #{vgg_forward.1} parent=5 // pred_check_branch
        %295 = sbr.rel (%p292) target = $region12
      $region11: #{vgg_forward.1} parent=5 // pred_region
        %s296 = ssub.s32 %s20, 1
        // Predicated region
        $region13: #{vgg_forward.1} parent=11 // pred_check
          %p297 = pneg %p67
        $region14: #{vgg_forward.1} parent=11 // pred_check_branch
          %299 = sbr.rel (%p297) target = $region16
        $region15: #{vgg_forward.1} parent=11 // pred_region
          _
        $region16: #{vgg_forward.1} parent=11 // pred_fallthru
          _
        // Predicated region
        $region17: #{vgg_forward.1} parent=11 // pred_check
          %p300 = pneg %p88
        $region18: #{vgg_forward.1} parent=11 // pred_check_branch
          %302 = sbr.rel (%p300) target = $region20
        $region19: #{vgg_forward.1} parent=11 // pred_region
          _
        $region20: #{vgg_forward.1} parent=11 // pred_fallthru
          _
        // Predicated region
        $region21: #{vgg_forward.1} parent=11 // pred_check
          %p303 = pneg %p109
        $region22: #{vgg_forward.1} parent=11 // pred_check_branch
          %305 = sbr.rel (%p303) target = $region24
        $region23: #{vgg_forward.1} parent=11 // pred_region
          _
        $region24: #{vgg_forward.1} parent=11 // pred_fallthru
          _
        // Predicated region
        $region25: #{vgg_forward.1} parent=11 // pred_check
          %p306 = pneg %p130
        $region26: #{vgg_forward.1} parent=11 // pred_check_branch
          %308 = sbr.rel (%p306) target = $region28
        $region27: #{vgg_forward.1} parent=11 // pred_region
          _
        $region28: #{vgg_forward.1} parent=11 // pred_fallthru
          _
        // Predicated region
        $region29: #{vgg_forward.1} parent=11 // pred_check
          %p309 = pneg %p151
        $region30: #{vgg_forward.1} parent=11 // pred_check_branch
          %311 = sbr.rel (%p309) target = $region32
        $region31: #{vgg_forward.1} parent=11 // pred_region
          _
        $region32: #{vgg_forward.1} parent=11 // pred_fallthru
          _
        // Predicated region
        $region33: #{vgg_forward.1} parent=11 // pred_check
          %p312 = pneg %p172
        $region34: #{vgg_forward.1} parent=11 // pred_check_branch
          %314 = sbr.rel (%p312) target = $region36
        $region35: #{vgg_forward.1} parent=11 // pred_region
          _
        $region36: #{vgg_forward.1} parent=11 // pred_fallthru
          _
        // Predicated region
        $region37: #{vgg_forward.1} parent=11 // pred_check
          %p315 = pneg %p193
        $region38: #{vgg_forward.1} parent=11 // pred_check_branch
          %317 = sbr.rel (%p315) target = $region40
        $region39: #{vgg_forward.1} parent=11 // pred_region
          _
        $region40: #{vgg_forward.1} parent=11 // pred_fallthru
          _
        // Predicated region
        $region41: #{vgg_forward.1} parent=11 // pred_check
          %p318 = pneg %p214
        $region42: #{vgg_forward.1} parent=11 // pred_check_branch
          %320 = sbr.rel (%p318) target = $region44
        $region43: #{vgg_forward.1} parent=11 // pred_region
          _
        $region44: #{vgg_forward.1} parent=11 // pred_fallthru
          _
        // Predicated region
        $region45: #{vgg_forward.1} parent=11 // pred_check
          %p321 = pneg %p235
        $region46: #{vgg_forward.1} parent=11 // pred_check_branch
          %323 = sbr.rel (%p321) target = $region48
        $region47: #{vgg_forward.1} parent=11 // pred_region
          _
        $region48: #{vgg_forward.1} parent=11 // pred_fallthru
          _
        // Predicated region
        $region49: #{vgg_forward.1} parent=11 // pred_check
          %p324 = pneg %p256
        $region50: #{vgg_forward.1} parent=11 // pred_check_branch
          %326 = sbr.rel (%p324) target = $region52
        $region51: #{vgg_forward.1} parent=11 // pred_region
          _
        $region52: #{vgg_forward.1} parent=11 // pred_fallthru
          _
      $region12: #{vgg_forward.1} parent=5 // pred_fallthru
        _
      %p327 = scmp.lt.s32.totalorder %s20, 2
      // Predicated region
      $region53: #{vgg_forward.1} parent=5 // pred_check
        %p328 = pneg %p327
      $region54: #{vgg_forward.1} parent=5 // pred_check_branch
        %330 = sbr.rel (%p328) target = $region56
      $region55: #{vgg_forward.1} parent=5 // pred_region
        // Predicated region
        $region57: #{vgg_forward.1} parent=55 // pred_check
          %p331 = pneg %p40
        $region58: #{vgg_forward.1} parent=55 // pred_check_branch
          %333 = sbr.rel (%p331) target = $region60
        $region59: #{vgg_forward.1} parent=55 // pred_region
          %p334 = scmp.lt.s32.totalorder %s20, 1
          %s335 = scalar_select %p334, %s20, 1
          %s336 = smul.addr %s335, 32
          %s337 = smul.addr %s336, 8
          %s338 = scalar_lea.vmem %s0, %s337
        $region60: #{vgg_forward.1} parent=55 // pred_fallthru
          _
      $region56: #{vgg_forward.1} parent=5 // pred_fallthru
        _
      %p339 = scmp.le.s32.totalorder 1, %s20
      %p340 = scmp.lt.s32.totalorder %s20, 3
      %p341 = pnand %p339, %p340
      %p342 = pneg %p341
      // Predicated region
      $region61: #{vgg_forward.1} parent=5 // pred_check
        _
      $region62: #{vgg_forward.1} parent=5 // pred_check_branch
        %344 = sbr.rel (%p341) target = $region64
      $region63: #{vgg_forward.1} parent=5 // pred_region
        %s345 = ssub.s32 %s20, 1
        %p346 = scmp.lt.s32.totalorder %s25, 1
        %s347 = scalar_select %p346, %s25, 1
        %s348 = smul.addr %s347, 32
        %s349 = smul.addr %s348, 8
        %s350 = scalar_lea.vmem %s0, %s349
        %p351 = pneg %p46
        %p352 = pneg %p43
        %p353 = pneg %p67
        %p354 = pneg %p64
        %p355 = pneg %p88
        %p356 = pneg %p85
        %p357 = pneg %p109
        %p358 = pneg %p106
        %p359 = pneg %p130
        %p360 = pneg %p127
        %p361 = pneg %p151
        %p362 = pneg %p148
        %p363 = pneg %p172
        %p364 = pneg %p169
        %p365 = pneg %p193
        %p366 = pneg %p190
        %p367 = pneg %p214
        %p368 = pneg %p211
        %p369 = pneg %p235
        %p370 = pneg %p232
        %p371 = pneg %p256
        %p372 = pneg %p253
        %p373 = pneg %p282
        %p374 = pneg %p279
        %s375 = sand.u32 %s269, 1
        %s376 = scalar_lea.sflag [#allocation10], %s375
        %s377 = sand.u32 %s269, 1
        %s378 = scalar_lea.vmem [#allocation9], %s377
        %p379 = scmp.lt.s32.totalorder %s25, 1
        %s380 = scalar_select %p379, %s25, 1
        %s381 = smul.addr %s380, 32
        %s382 = smul.addr %s381, 8
        %s383 = scalar_lea.vmem %s0, %s382
        %vm385 = vcmask 23552
        %386 = vst.msk [vmem:[#allocation2] sm:$0xff] %vm385, 0.0
        %387 = vst.msk [vmem:[#allocation2 + $0x8] sm:$0xff] %vm385, 0.0
        %vm388 = vcmask 16384
        %389 = vst.msk [vmem:[#allocation2 + $0x10] sm:$0x1] %vm388, 0.0
        %390 = vst.msk [vmem:[#allocation2 + $0x111] sm:$0xff] %vm385, 0.0
        %391 = vst.msk [vmem:[#allocation2 + $0x119] sm:$0xff] %vm385, 0.0
        %392 = vst.msk [vmem:[#allocation2 + $0x121] sm:$0x1] %vm388, 0.0
        %vm393 = vcmask 261120
        %394 = vst.msk [vmem:[#allocation4] sm:$0xff] %vm393, 0.0
        %vm395 = vcmask 253952
        %396 = vst.msk [vmem:[#allocation4 + $0x8] sm:$0x1] %vm395, 0.0
        %397 = vst.msk [vmem:[#allocation4 + $0x49] sm:$0xff] %vm393, 0.0
        %398 = vst.msk [vmem:[#allocation4 + $0x51] sm:$0x1] %vm395, 0.0
        %vm399 = vcmask 520192
        %400 = vst.msk [vmem:[#allocation6] sm:$0x1f] %vm399, 0.0
        %401 = vst.msk [vmem:[#allocation6 + $0x15] sm:$0x1f] %vm399, 0.0
        %402 = vst [vmem:[#allocation8] sm:$0x7] 0.0
        %403 = vst [vmem:[#allocation8 + $0x7] sm:$0x7] 0.0
        %v404 = vld [vmem:[%s383] sm:$0xff]
        %v405 = vld [vmem:[%s383 + $0x8] sm:$0xff]
        %v406 = vld [vmem:[%s383 + $0x10] sm:$0xff]
        %v407 = vld [vmem:[%s383 + $0x18] sm:$0xff]
        %v408 = vld [vmem:[%s383 + $0x20] sm:$0xff]
        %v409 = vld [vmem:[%s383 + $0x28] sm:$0xff]
        %v410 = vld [vmem:[%s383 + $0x30] sm:$0xff]
        %v411 = vld [vmem:[%s383 + $0x38] sm:$0xff]
        %v412 = vld [vmem:[%s383 + $0x40] sm:$0xff]
        %v413 = vld [vmem:[%s383 + $0x48] sm:$0xff]
        %v414 = vld [vmem:[%s383 + $0x50] sm:$0xff]
        %v415 = vld [vmem:[%s383 + $0x58] sm:$0xff]
        %v416 = vld [vmem:[%s383 + $0x60] sm:$0xff]
        %v417 = vld [vmem:[%s383 + $0x68] sm:$0xff]
        %v418 = vld [vmem:[%s383 + $0x70] sm:$0xff]
        %v419 = vld [vmem:[%s383 + $0x78] sm:$0xff]
        %v420 = vld [vmem:[%s383 + $0x80] sm:$0xff]
        %v421 = vld [vmem:[%s383 + $0x88] sm:$0xff]
        %v422 = vld [vmem:[%s383 + $0x90] sm:$0xff]
        %v423 = vld [vmem:[%s383 + $0x98] sm:$0xff]
        %v424 = vld [vmem:[%s383 + $0xa0] sm:$0xff]
        %v425 = vld [vmem:[%s383 + $0xa8] sm:$0xff]
        %v426 = vld [vmem:[%s383 + $0xb0] sm:$0xff]
        %v427 = vld [vmem:[%s383 + $0xb8] sm:$0xff]
        %v428 = vld [vmem:[%s383 + $0xc0] sm:$0xff]
        %v429 = vld [vmem:[%s383 + $0xc8] sm:$0xff]
        %v430 = vld [vmem:[%s383 + $0xd0] sm:$0xff]
        %v431 = vld [vmem:[%s383 + $0xd8] sm:$0xff]
        %v432 = vld [vmem:[%s383 + $0xe0] sm:$0xff]
        %v433 = vld [vmem:[%s383 + $0xe8] sm:$0xff]
        %v434 = vld [vmem:[%s383 + $0xf0] sm:$0xff]
        %v435 = vld [vmem:[%s383 + $0xf8] sm:$0xff]
        %436 = vst.msk [vmem:[#allocation2 + $0x11] sm:$0xff] %vm385, %v404
        %437 = vst.msk [vmem:[#allocation2 + $0x19] sm:$0xff] %vm385, %v405
        %438 = vst.msk [vmem:[#allocation2 + $0x21] sm:$0xff] %vm385, %v406
        %439 = vst.msk [vmem:[#allocation2 + $0x29] sm:$0xff] %vm385, %v407
        %440 = vst.msk [vmem:[#allocation2 + $0x31] sm:$0xff] %vm385, %v408
        %441 = vst.msk [vmem:[#allocation2 + $0x39] sm:$0xff] %vm385, %v409
        %442 = vst.msk [vmem:[#allocation2 + $0x41] sm:$0xff] %vm385, %v410
        %443 = vst.msk [vmem:[#allocation2 + $0x49] sm:$0xff] %vm385, %v411
        %444 = vst.msk [vmem:[#allocation2 + $0x51] sm:$0xff] %vm385, %v412
        %445 = vst.msk [vmem:[#allocation2 + $0x59] sm:$0xff] %vm385, %v413
        %446 = vst.msk [vmem:[#allocation2 + $0x61] sm:$0xff] %vm385, %v414
        %447 = vst.msk [vmem:[#allocation2 + $0x69] sm:$0xff] %vm385, %v415
        %448 = vst.msk [vmem:[#allocation2 + $0x71] sm:$0xff] %vm385, %v416
        %449 = vst.msk [vmem:[#allocation2 + $0x79] sm:$0xff] %vm385, %v417
        %450 = vst.msk [vmem:[#allocation2 + $0x81] sm:$0xff] %vm385, %v418
        %451 = vst.msk [vmem:[#allocation2 + $0x89] sm:$0xff] %vm385, %v419
        %452 = vst.msk [vmem:[#allocation2 + $0x91] sm:$0xff] %vm385, %v420
        %453 = vst.msk [vmem:[#allocation2 + $0x99] sm:$0xff] %vm385, %v421
        %454 = vst.msk [vmem:[#allocation2 + $0xa1] sm:$0xff] %vm385, %v422
        %455 = vst.msk [vmem:[#allocation2 + $0xa9] sm:$0xff] %vm385, %v423
        %456 = vst.msk [vmem:[#allocation2 + $0xb1] sm:$0xff] %vm385, %v424
        %457 = vst.msk [vmem:[#allocation2 + $0xb9] sm:$0xff] %vm385, %v425
        %458 = vst.msk [vmem:[#allocation2 + $0xc1] sm:$0xff] %vm385, %v426
        %459 = vst.msk [vmem:[#allocation2 + $0xc9] sm:$0xff] %vm385, %v427
        %460 = vst.msk [vmem:[#allocation2 + $0xd1] sm:$0xff] %vm385, %v428
        %461 = vst.msk [vmem:[#allocation2 + $0xd9] sm:$0xff] %vm385, %v429
        %462 = vst.msk [vmem:[#allocation2 + $0xe1] sm:$0xff] %vm385, %v430
        %463 = vst.msk [vmem:[#allocation2 + $0xe9] sm:$0xff] %vm385, %v431
        %464 = vst.msk [vmem:[#allocation2 + $0xf1] sm:$0xff] %vm385, %v432
        %465 = vst.msk [vmem:[#allocation2 + $0xf9] sm:$0xff] %vm385, %v433
        %466 = vst.msk [vmem:[#allocation2 + $0x101] sm:$0xff] %vm385, %v434
        %467 = vst.msk [vmem:[#allocation2 + $0x109] sm:$0xff] %vm385, %v435
        %v468 = vlaneseq
        %v469 = vshrl.u32 %v468, 7
        %v470 = vadd.s32 %v469, 8
        %v471 = vadd.s32 %v469, 16
        %v472 = vadd.s32 %v469, 24
        %v473 = vadd.s32 %v469, 32
        %v474 = vadd.s32 %v469, 40
        %v475 = vadd.s32 %v469, 48
        %v476 = vadd.s32 %v469, 56
        %v477 = vadd.s32 %v469, 64
        %v478 = vadd.s32 %v469, 72
        %v479 = vadd.s32 %v469, 80
        %v480 = vadd.s32 %v469, 88
        %v481 = vadd.s32 %v469, 96
        %v482 = vadd.s32 %v469, 104
        %v483 = vadd.s32 %v469, 112
        %v484 = vadd.s32 %v469, 120
        %v485 = vadd.s32 %v469, 128
        %v486 = vadd.s32 %v469, 136
        %v487 = vadd.s32 %v469, 144
        %v488 = vadd.s32 %v469, 152
        %v489 = vadd.s32 %v469, 160
        %v490 = vadd.s32 %v469, 168
        %v491 = vadd.s32 %v469, 176
        %v492 = vadd.s32 %v469, 184
        %v493 = vadd.s32 %v469, 192
        %v494 = vadd.s32 %v469, 200
        %v495 = vadd.s32 %v469, 208
        %v496 = vadd.s32 %v469, 216
        %v497 = vadd.s32 %v469, 224
        %v498 = vadd.s32 %v469, 232
        %v499 = vadd.s32 %v469, 240
        %v500 = vadd.s32 %v469, 248
        %vm501 = vcmp.lt.s32.totalorder %v469, 0
        %v502 = vsub.s32 0, %v469
        %v503 = vsel %vm501, %v502, %v469
        %v504 = vshrl.u32 %v503, 4
        %v505 = vand.u32 %v503, 15
        %v506 = vsub.s32 0, %v505
        %v507 = vsel %vm501, %v506, %v505
        %vm508 = vcmp.lt.s32.totalorder %v470, 0
        %v509 = vsub.s32 0, %v470
        %v510 = vsel %vm508, %v509, %v470
        %v511 = vshrl.u32 %v510, 4
        %v512 = vand.u32 %v510, 15
        %v513 = vsub.s32 0, %v512
        %v514 = vsel %vm508, %v513, %v512
        %vm515 = vcmp.lt.s32.totalorder %v471, 0
        %v516 = vsub.s32 0, %v471
        %v517 = vsel %vm515, %v516, %v471
        %v518 = vshrl.u32 %v517, 4
        %v519 = vand.u32 %v517, 15
        %v520 = vsub.s32 0, %v519
        %v521 = vsel %vm515, %v520, %v519
        %vm522 = vcmp.lt.s32.totalorder %v472, 0
        %v523 = vsub.s32 0, %v472
        %v524 = vsel %vm522, %v523, %v472
        %v525 = vshrl.u32 %v524, 4
        %v526 = vand.u32 %v524, 15
        %v527 = vsub.s32 0, %v526
        %v528 = vsel %vm522, %v527, %v526
        %vm529 = vcmp.lt.s32.totalorder %v473, 0
        %v530 = vsub.s32 0, %v473
        %v531 = vsel %vm529, %v530, %v473
        %v532 = vshrl.u32 %v531, 4
        %v533 = vand.u32 %v531, 15
        %v534 = vsub.s32 0, %v533
        %v535 = vsel %vm529, %v534, %v533
        %vm536 = vcmp.lt.s32.totalorder %v474, 0
        %v537 = vsub.s32 0, %v474
        %v538 = vsel %vm536, %v537, %v474
        %v539 = vshrl.u32 %v538, 4
        %v540 = vand.u32 %v538, 15
        %v541 = vsub.s32 0, %v540
        %v542 = vsel %vm536, %v541, %v540
        %vm543 = vcmp.lt.s32.totalorder %v475, 0
        %v544 = vsub.s32 0, %v475
        %v545 = vsel %vm543, %v544, %v475
        %v546 = vshrl.u32 %v545, 4
        %v547 = vand.u32 %v545, 15
        %v548 = vsub.s32 0, %v547
        %v549 = vsel %vm543, %v548, %v547
        %vm550 = vcmp.lt.s32.totalorder %v476, 0
        %v551 = vsub.s32 0, %v476
        %v552 = vsel %vm550, %v551, %v476
        %v553 = vshrl.u32 %v552, 4
        %v554 = vand.u32 %v552, 15
        %v555 = vsub.s32 0, %v554
        %v556 = vsel %vm550, %v555, %v554
        %vm557 = vcmp.lt.s32.totalorder %v477, 0
        %v558 = vsub.s32 0, %v477
        %v559 = vsel %vm557, %v558, %v477
        %v560 = vshrl.u32 %v559, 4
        %v561 = vand.u32 %v559, 15
        %v562 = vsub.s32 0, %v561
        %v563 = vsel %vm557, %v562, %v561
        %vm564 = vcmp.lt.s32.totalorder %v478, 0
        %v565 = vsub.s32 0, %v478
        %v566 = vsel %vm564, %v565, %v478
        %v567 = vshrl.u32 %v566, 4
        %v568 = vand.u32 %v566, 15
        %v569 = vsub.s32 0, %v568
        %v570 = vsel %vm564, %v569, %v568
        %vm571 = vcmp.lt.s32.totalorder %v479, 0
        %v572 = vsub.s32 0, %v479
        %v573 = vsel %vm571, %v572, %v479
        %v574 = vshrl.u32 %v573, 4
        %v575 = vand.u32 %v573, 15
        %v576 = vsub.s32 0, %v575
        %v577 = vsel %vm571, %v576, %v575
        %vm578 = vcmp.lt.s32.totalorder %v480, 0
        %v579 = vsub.s32 0, %v480
        %v580 = vsel %vm578, %v579, %v480
        %v581 = vshrl.u32 %v580, 4
        %v582 = vand.u32 %v580, 15
        %v583 = vsub.s32 0, %v582
        %v584 = vsel %vm578, %v583, %v582
        %vm585 = vcmp.lt.s32.totalorder %v481, 0
        %v586 = vsub.s32 0, %v481
        %v587 = vsel %vm585, %v586, %v481
        %v588 = vshrl.u32 %v587, 4
        %v589 = vand.u32 %v587, 15
        %v590 = vsub.s32 0, %v589
        %v591 = vsel %vm585, %v590, %v589
        %vm592 = vcmp.lt.s32.totalorder %v482, 0
        %v593 = vsub.s32 0, %v482
        %v594 = vsel %vm592, %v593, %v482
        %v595 = vshrl.u32 %v594, 4
        %v596 = vand.u32 %v594, 15
        %v597 = vsub.s32 0, %v596
        %v598 = vsel %vm592, %v597, %v596
        %vm599 = vcmp.lt.s32.totalorder %v483, 0
        %v600 = vsub.s32 0, %v483
        %v601 = vsel %vm599, %v600, %v483
        %v602 = vshrl.u32 %v601, 4
        %v603 = vand.u32 %v601, 15
        %v604 = vsub.s32 0, %v603
        %v605 = vsel %vm599, %v604, %v603
        %vm606 = vcmp.lt.s32.totalorder %v484, 0
        %v607 = vsub.s32 0, %v484
        %v608 = vsel %vm606, %v607, %v484
        %v609 = vshrl.u32 %v608, 4
        %v610 = vand.u32 %v608, 15
        %v611 = vsub.s32 0, %v610
        %v612 = vsel %vm606, %v611, %v610
        %vm613 = vcmp.lt.s32.totalorder %v485, 0
        %v614 = vsub.s32 0, %v485
        %v615 = vsel %vm613, %v614, %v485
        %v616 = vshrl.u32 %v615, 4
        %v617 = vand.u32 %v615, 15
        %v618 = vsub.s32 0, %v617
        %v619 = vsel %vm613, %v618, %v617
        %vm620 = vcmp.lt.s32.totalorder %v486, 0
        %v621 = vsub.s32 0, %v486
        %v622 = vsel %vm620, %v621, %v486
        %v623 = vshrl.u32 %v622, 4
        %v624 = vand.u32 %v622, 15
        %v625 = vsub.s32 0, %v624
        %v626 = vsel %vm620, %v625, %v624
        %vm627 = vcmp.lt.s32.totalorder %v487, 0
        %v628 = vsub.s32 0, %v487
        %v629 = vsel %vm627, %v628, %v487
        %v630 = vshrl.u32 %v629, 4
        %v631 = vand.u32 %v629, 15
        %v632 = vsub.s32 0, %v631
        %v633 = vsel %vm627, %v632, %v631
        %vm634 = vcmp.lt.s32.totalorder %v488, 0
        %v635 = vsub.s32 0, %v488
        %v636 = vsel %vm634, %v635, %v488
        %v637 = vshrl.u32 %v636, 4
        %v638 = vand.u32 %v636, 15
        %v639 = vsub.s32 0, %v638
        %v640 = vsel %vm634, %v639, %v638
        %vm641 = vcmp.lt.s32.totalorder %v489, 0
        %v642 = vsub.s32 0, %v489
        %v643 = vsel %vm641, %v642, %v489
        %v644 = vshrl.u32 %v643, 4
        %v645 = vand.u32 %v643, 15
        %v646 = vsub.s32 0, %v645
        %v647 = vsel %vm641, %v646, %v645
        %vm648 = vcmp.lt.s32.totalorder %v490, 0
        %v649 = vsub.s32 0, %v490
        %v650 = vsel %vm648, %v649, %v490
        %v651 = vshrl.u32 %v650, 4
        %v652 = vand.u32 %v650, 15
        %v653 = vsub.s32 0, %v652
        %v654 = vsel %vm648, %v653, %v652
        %vm655 = vcmp.lt.s32.totalorder %v491, 0
        %v656 = vsub.s32 0, %v491
        %v657 = vsel %vm655, %v656, %v491
        %v658 = vshrl.u32 %v657, 4
        %v659 = vand.u32 %v657, 15
        %v660 = vsub.s32 0, %v659
        %v661 = vsel %vm655, %v660, %v659
        %vm662 = vcmp.lt.s32.totalorder %v492, 0
        %v663 = vsub.s32 0, %v492
        %v664 = vsel %vm662, %v663, %v492
        %v665 = vshrl.u32 %v664, 4
        %v666 = vand.u32 %v664, 15
        %v667 = vsub.s32 0, %v666
        %v668 = vsel %vm662, %v667, %v666
        %vm669 = vcmp.lt.s32.totalorder %v493, 0
        %v670 = vsub.s32 0, %v493
        %v671 = vsel %vm669, %v670, %v493
        %v672 = vshrl.u32 %v671, 4
        %v673 = vand.u32 %v671, 15
        %v674 = vsub.s32 0, %v673
        %v675 = vsel %vm669, %v674, %v673
        %vm676 = vcmp.lt.s32.totalorder %v494, 0
        %v677 = vsub.s32 0, %v494
        %v678 = vsel %vm676, %v677, %v494
        %v679 = vshrl.u32 %v678, 4
        %v680 = vand.u32 %v678, 15
        %v681 = vsub.s32 0, %v680
        %v682 = vsel %vm676, %v681, %v680
        %vm683 = vcmp.lt.s32.totalorder %v495, 0
        %v684 = vsub.s32 0, %v495
        %v685 = vsel %vm683, %v684, %v495
        %v686 = vshrl.u32 %v685, 4
        %v687 = vand.u32 %v685, 15
        %v688 = vsub.s32 0, %v687
        %v689 = vsel %vm683, %v688, %v687
        %vm690 = vcmp.lt.s32.totalorder %v496, 0
        %v691 = vsub.s32 0, %v496
        %v692 = vsel %vm690, %v691, %v496
        %v693 = vshrl.u32 %v692, 4
        %v694 = vand.u32 %v692, 15
        %v695 = vsub.s32 0, %v694
        %v696 = vsel %vm690, %v695, %v694
        %vm697 = vcmp.lt.s32.totalorder %v497, 0
        %v698 = vsub.s32 0, %v497
        %v699 = vsel %vm697, %v698, %v497
        %v700 = vshrl.u32 %v699, 4
        %v701 = vand.u32 %v699, 15
        %v702 = vsub.s32 0, %v701
        %v703 = vsel %vm697, %v702, %v701
        %vm704 = vcmp.lt.s32.totalorder %v498, 0
        %v705 = vsub.s32 0, %v498
        %v706 = vsel %vm704, %v705, %v498
        %v707 = vshrl.u32 %v706, 4
        %v708 = vand.u32 %v706, 15
        %v709 = vsub.s32 0, %v708
        %v710 = vsel %vm704, %v709, %v708
        %vm711 = vcmp.lt.s32.totalorder %v499, 0
        %v712 = vsub.s32 0, %v499
        %v713 = vsel %vm711, %v712, %v499
        %v714 = vshrl.u32 %v713, 4
        %v715 = vand.u32 %v713, 15
        %v716 = vsub.s32 0, %v715
        %v717 = vsel %vm711, %v716, %v715
        %vm718 = vcmp.lt.s32.totalorder %v500, 0
        %v719 = vsub.s32 0, %v500
        %v720 = vsel %vm718, %v719, %v500
        %v721 = vshrl.u32 %v720, 4
        %v722 = vand.u32 %v720, 15
        %v723 = vsub.s32 0, %v722
        %v724 = vsel %vm718, %v723, %v722
        %vm725 = vcmp.ne.s32.totalorder %v507, 0
        %vm726 = vcmp.ne.s32.totalorder %v514, 0
        %vm727 = vcmp.ne.s32.totalorder %v521, 0
        %vm728 = vcmp.ne.s32.totalorder %v528, 0
        %vm729 = vcmp.ne.s32.totalorder %v535, 0
        %vm730 = vcmp.ne.s32.totalorder %v542, 0
        %vm731 = vcmp.ne.s32.totalorder %v549, 0
        %vm732 = vcmp.ne.s32.totalorder %v556, 0
        %vm733 = vcmp.ne.s32.totalorder %v563, 0
        %vm734 = vcmp.ne.s32.totalorder %v570, 0
        %vm735 = vcmp.ne.s32.totalorder %v577, 0
        %vm736 = vcmp.ne.s32.totalorder %v584, 0
        %vm737 = vcmp.ne.s32.totalorder %v591, 0
        %vm738 = vcmp.ne.s32.totalorder %v598, 0
        %vm739 = vcmp.ne.s32.totalorder %v605, 0
        %vm740 = vcmp.ne.s32.totalorder %v612, 0
        %vm741 = vcmp.ne.s32.totalorder %v619, 0
        %vm742 = vcmp.ne.s32.totalorder %v626, 0
        %vm743 = vcmp.ne.s32.totalorder %v633, 0
        %vm744 = vcmp.ne.s32.totalorder %v640, 0
        %vm745 = vcmp.ne.s32.totalorder %v647, 0
        %vm746 = vcmp.ne.s32.totalorder %v654, 0
        %vm747 = vcmp.ne.s32.totalorder %v661, 0
        %vm748 = vcmp.ne.s32.totalorder %v668, 0
        %vm749 = vcmp.ne.s32.totalorder %v675, 0
        %vm750 = vcmp.ne.s32.totalorder %v682, 0
        %vm751 = vcmp.ne.s32.totalorder %v689, 0
        %vm752 = vcmp.ne.s32.totalorder %v696, 0
        %vm753 = vcmp.ne.s32.totalorder %v703, 0
        %vm754 = vcmp.ne.s32.totalorder %v710, 0
        %vm755 = vcmp.ne.s32.totalorder %v717, 0
        %vm756 = vcmp.ne.s32.totalorder %v724, 0
        %vm757 = vcmp.lt.s32.totalorder %v507, 0
        %vm758 = vcmp.lt.s32.totalorder %v514, 0
        %vm759 = vcmp.lt.s32.totalorder %v521, 0
        %vm760 = vcmp.lt.s32.totalorder %v528, 0
        %vm761 = vcmp.lt.s32.totalorder %v535, 0
        %vm762 = vcmp.lt.s32.totalorder %v542, 0
        %vm763 = vcmp.lt.s32.totalorder %v549, 0
        %vm764 = vcmp.lt.s32.totalorder %v556, 0
        %vm765 = vcmp.lt.s32.totalorder %v563, 0
        %vm766 = vcmp.lt.s32.totalorder %v570, 0
        %vm767 = vcmp.lt.s32.totalorder %v577, 0
        %vm768 = vcmp.lt.s32.totalorder %v584, 0
        %vm769 = vcmp.lt.s32.totalorder %v591, 0
        %vm770 = vcmp.lt.s32.totalorder %v598, 0
        %vm771 = vcmp.lt.s32.totalorder %v605, 0
        %vm772 = vcmp.lt.s32.totalorder %v612, 0
        %vm773 = vcmp.lt.s32.totalorder %v619, 0
        %vm774 = vcmp.lt.s32.totalorder %v626, 0
        %vm775 = vcmp.lt.s32.totalorder %v633, 0
        %vm776 = vcmp.lt.s32.totalorder %v640, 0
        %vm777 = vcmp.lt.s32.totalorder %v647, 0
        %vm778 = vcmp.lt.s32.totalorder %v654, 0
        %vm779 = vcmp.lt.s32.totalorder %v661, 0
        %vm780 = vcmp.lt.s32.totalorder %v668, 0
        %vm781 = vcmp.lt.s32.totalorder %v675, 0
        %vm782 = vcmp.lt.s32.totalorder %v682, 0
        %vm783 = vcmp.lt.s32.totalorder %v689, 0
        %vm784 = vcmp.lt.s32.totalorder %v696, 0
        %vm785 = vcmp.lt.s32.totalorder %v703, 0
        %vm786 = vcmp.lt.s32.totalorder %v710, 0
        %vm787 = vcmp.lt.s32.totalorder %v717, 0
        %vm788 = vcmp.lt.s32.totalorder %v724, 0
        %vm789 = vmand %vm757, %vm725
        %vm790 = vmand %vm758, %vm726
        %vm791 = vmand %vm759, %vm727
        %vm792 = vmand %vm760, %vm728
        %vm793 = vmand %vm761, %vm729
        %vm794 = vmand %vm762, %vm730
        %vm795 = vmand %vm763, %vm731
        %vm796 = vmand %vm764, %vm732
        %vm797 = vmand %vm765, %vm733
        %vm798 = vmand %vm766, %vm734
        %vm799 = vmand %vm767, %vm735
        %vm800 = vmand %vm768, %vm736
        %vm801 = vmand %vm769, %vm737
        %vm802 = vmand %vm770, %vm738
        %vm803 = vmand %vm771, %vm739
        %vm804 = vmand %vm772, %vm740
        %vm805 = vmand %vm773, %vm741
        %vm806 = vmand %vm774, %vm742
        %vm807 = vmand %vm775, %vm743
        %vm808 = vmand %vm776, %vm744
        %vm809 = vmand %vm777, %vm745
        %vm810 = vmand %vm778, %vm746
        %vm811 = vmand %vm779, %vm747
        %vm812 = vmand %vm780, %vm748
        %vm813 = vmand %vm781, %vm749
        %vm814 = vmand %vm782, %vm750
        %vm815 = vmand %vm783, %vm751
        %vm816 = vmand %vm784, %vm752
        %vm817 = vmand %vm785, %vm753
        %vm818 = vmand %vm786, %vm754
        %vm819 = vmand %vm787, %vm755
        %vm820 = vmand %vm788, %vm756
        %v821 = vadd.s32 %v507, 16
        %v822 = vadd.s32 %v514, 16
        %v823 = vadd.s32 %v521, 16
        %v824 = vadd.s32 %v528, 16
        %v825 = vadd.s32 %v535, 16
        %v826 = vadd.s32 %v542, 16
        %v827 = vadd.s32 %v549, 16
        %v828 = vadd.s32 %v556, 16
        %v829 = vadd.s32 %v563, 16
        %v830 = vadd.s32 %v570, 16
        %v831 = vadd.s32 %v577, 16
        %v832 = vadd.s32 %v584, 16
        %v833 = vadd.s32 %v591, 16
        %v834 = vadd.s32 %v598, 16
        %v835 = vadd.s32 %v605, 16
        %v836 = vadd.s32 %v612, 16
        %v837 = vadd.s32 %v619, 16
        %v838 = vadd.s32 %v626, 16
        %v839 = vadd.s32 %v633, 16
        %v840 = vadd.s32 %v640, 16
        %v841 = vadd.s32 %v647, 16
        %v842 = vadd.s32 %v654, 16
        %v843 = vadd.s32 %v661, 16
        %v844 = vadd.s32 %v668, 16
        %v845 = vadd.s32 %v675, 16
        %v846 = vadd.s32 %v682, 16
        %v847 = vadd.s32 %v689, 16
        %v848 = vadd.s32 %v696, 16
        %v849 = vadd.s32 %v703, 16
        %v850 = vadd.s32 %v710, 16
        %v851 = vadd.s32 %v717, 16
        %v852 = vadd.s32 %v724, 16
        %v853 = vsel %vm789, %v821, %v507
        %v854 = vsel %vm790, %v822, %v514
        %v855 = vsel %vm791, %v823, %v521
        %v856 = vsel %vm792, %v824, %v528
        %v857 = vsel %vm793, %v825, %v535
        %v858 = vsel %vm794, %v826, %v542
        %v859 = vsel %vm795, %v827, %v549
        %v860 = vsel %vm796, %v828, %v556
        %v861 = vsel %vm797, %v829, %v563
        %v862 = vsel %vm798, %v830, %v570
        %v863 = vsel %vm799, %v831, %v577
        %v864 = vsel %vm800, %v832, %v584
        %v865 = vsel %vm801, %v833, %v591
        %v866 = vsel %vm802, %v834, %v598
        %v867 = vsel %vm803, %v835, %v605
        %v868 = vsel %vm804, %v836, %v612
        %v869 = vsel %vm805, %v837, %v619
        %v870 = vsel %vm806, %v838, %v626
        %v871 = vsel %vm807, %v839, %v633
        %v872 = vsel %vm808, %v840, %v640
        %v873 = vsel %vm809, %v841, %v647
        %v874 = vsel %vm810, %v842, %v654
        %v875 = vsel %vm811, %v843, %v661
        %v876 = vsel %vm812, %v844, %v668
        %v877 = vsel %vm813, %v845, %v675
        %v878 = vsel %vm814, %v846, %v682
        %v879 = vsel %vm815, %v847, %v689
        %v880 = vsel %vm816, %v848, %v696
        %v881 = vsel %vm817, %v849, %v703
        %v882 = vsel %vm818, %v850, %v710
        %v883 = vsel %vm819, %v851, %v717
        %v884 = vsel %vm820, %v852, %v724
        %vm885 = vcmp.ne.s32.totalorder %v853, 0
        %vm886 = vcmp.ne.s32.totalorder %v854, 0
        %vm887 = vcmp.ne.s32.totalorder %v855, 0
        %vm888 = vcmp.ne.s32.totalorder %v856, 0
        %vm889 = vcmp.ne.s32.totalorder %v857, 0
        %vm890 = vcmp.ne.s32.totalorder %v858, 0
        %vm891 = vcmp.ne.s32.totalorder %v859, 0
        %vm892 = vcmp.ne.s32.totalorder %v860, 0
        %vm893 = vcmp.ne.s32.totalorder %v861, 0
        %vm894 = vcmp.ne.s32.totalorder %v862, 0
        %vm895 = vcmp.ne.s32.totalorder %v863, 0
        %vm896 = vcmp.ne.s32.totalorder %v864, 0
        %vm897 = vcmp.ne.s32.totalorder %v865, 0
        %vm898 = vcmp.ne.s32.totalorder %v866, 0
        %vm899 = vcmp.ne.s32.totalorder %v867, 0
        %vm900 = vcmp.ne.s32.totalorder %v868, 0
        %vm901 = vcmp.ne.s32.totalorder %v869, 0
        %vm902 = vcmp.ne.s32.totalorder %v870, 0
        %vm903 = vcmp.ne.s32.totalorder %v871, 0
        %vm904 = vcmp.ne.s32.totalorder %v872, 0
        %vm905 = vcmp.ne.s32.totalorder %v873, 0
        %vm906 = vcmp.ne.s32.totalorder %v874, 0
        %vm907 = vcmp.ne.s32.totalorder %v875, 0
        %vm908 = vcmp.ne.s32.totalorder %v876, 0
        %vm909 = vcmp.ne.s32.totalorder %v877, 0
        %vm910 = vcmp.ne.s32.totalorder %v878, 0
        %vm911 = vcmp.ne.s32.totalorder %v879, 0
        %vm912 = vcmp.ne.s32.totalorder %v880, 0
        %vm913 = vcmp.ne.s32.totalorder %v881, 0
        %vm914 = vcmp.ne.s32.totalorder %v882, 0
        %vm915 = vcmp.ne.s32.totalorder %v883, 0
        %vm916 = vcmp.ne.s32.totalorder %v884, 0
        %vm917 = vcmp.ne.s32.totalorder %v853, 15
        %vm918 = vcmp.ne.s32.totalorder %v854, 15
        %vm919 = vcmp.ne.s32.totalorder %v855, 15
        %vm920 = vcmp.ne.s32.totalorder %v856, 15
        %vm921 = vcmp.ne.s32.totalorder %v857, 15
        %vm922 = vcmp.ne.s32.totalorder %v858, 15
        %vm923 = vcmp.ne.s32.totalorder %v859, 15
        %vm924 = vcmp.ne.s32.totalorder %v860, 15
        %vm925 = vcmp.ne.s32.totalorder %v861, 15
        %vm926 = vcmp.ne.s32.totalorder %v862, 15
        %vm927 = vcmp.ne.s32.totalorder %v863, 15
        %vm928 = vcmp.ne.s32.totalorder %v864, 15
        %vm929 = vcmp.ne.s32.totalorder %v865, 15
        %vm930 = vcmp.ne.s32.totalorder %v866, 15
        %vm931 = vcmp.ne.s32.totalorder %v867, 15
        %vm932 = vcmp.ne.s32.totalorder %v868, 15
        %vm933 = vcmp.ne.s32.totalorder %v869, 15
        %vm934 = vcmp.ne.s32.totalorder %v870, 15
        %vm935 = vcmp.ne.s32.totalorder %v871, 15
        %vm936 = vcmp.ne.s32.totalorder %v872, 15
        %vm937 = vcmp.ne.s32.totalorder %v873, 15
        %vm938 = vcmp.ne.s32.totalorder %v874, 15
        %vm939 = vcmp.ne.s32.totalorder %v875, 15
        %vm940 = vcmp.ne.s32.totalorder %v876, 15
        %vm941 = vcmp.ne.s32.totalorder %v877, 15
        %vm942 = vcmp.ne.s32.totalorder %v878, 15
        %vm943 = vcmp.ne.s32.totalorder %v879, 15
        %vm944 = vcmp.ne.s32.totalorder %v880, 15
        %vm945 = vcmp.ne.s32.totalorder %v881, 15
        %vm946 = vcmp.ne.s32.totalorder %v882, 15
        %vm947 = vcmp.ne.s32.totalorder %v883, 15
        %vm948 = vcmp.ne.s32.totalorder %v884, 15
        %v949 = vld [vmem:[#allocation2] sm:$0xff]
        %v950 = vld [vmem:[#allocation2 + $0x8] sm:$0xff]
        %v951 = vld [vmem:[#allocation2 + $0x10] sm:$0xff]
        %v952 = vld [vmem:[#allocation2 + $0x18] sm:$0xff]
        %v953 = vld [vmem:[#allocation2 + $0x20] sm:$0xff]
        %v954 = vld [vmem:[#allocation2 + $0x28] sm:$0xff]
        %v955 = vld [vmem:[#allocation2 + $0x30] sm:$0xff]
        %v956 = vld [vmem:[#allocation2 + $0x38] sm:$0xff]
        %v957 = vld [vmem:[#allocation2 + $0x40] sm:$0xff]
        %v958 = vld [vmem:[#allocation2 + $0x48] sm:$0xff]
        %v959 = vld [vmem:[#allocation2 + $0x50] sm:$0xff]
        %v960 = vld [vmem:[#allocation2 + $0x58] sm:$0xff]
        %v961 = vld [vmem:[#allocation2 + $0x60] sm:$0xff]
        %v962 = vld [vmem:[#allocation2 + $0x68] sm:$0xff]
        %v963 = vld [vmem:[#allocation2 + $0x70] sm:$0xff]
        %v964 = vld [vmem:[#allocation2 + $0x78] sm:$0xff]
        %v965 = vld [vmem:[#allocation2 + $0x80] sm:$0xff]
        %v966 = vld [vmem:[#allocation2 + $0x88] sm:$0xff]
        %v967 = vld [vmem:[#allocation2 + $0x90] sm:$0xff]
        %v968 = vld [vmem:[#allocation2 + $0x98] sm:$0xff]
        %v969 = vld [vmem:[#allocation2 + $0xa0] sm:$0xff]
        %v970 = vld [vmem:[#allocation2 + $0xa8] sm:$0xff]
        %v971 = vld [vmem:[#allocation2 + $0xb0] sm:$0xff]
        %v972 = vld [vmem:[#allocation2 + $0xb8] sm:$0xff]
        %v973 = vld [vmem:[#allocation2 + $0xc0] sm:$0xff]
        %v974 = vld [vmem:[#allocation2 + $0xc8] sm:$0xff]
        %v975 = vld [vmem:[#allocation2 + $0xd0] sm:$0xff]
        %v976 = vld [vmem:[#allocation2 + $0xd8] sm:$0xff]
        %v977 = vld [vmem:[#allocation2 + $0xe0] sm:$0xff]
        %v978 = vld [vmem:[#allocation2 + $0xe8] sm:$0xff]
        %v979 = vld [vmem:[#allocation2 + $0xf0] sm:$0xff]
        %v980 = vld [vmem:[#allocation2 + $0xf8] sm:$0xff]
        %v981 = vsel %vm885, 1, 0
        %v982 = vsel %vm886, 1, 0
        %v983 = vsel %vm887, 1, 0
        %v984 = vsel %vm888, 1, 0
        %v985 = vsel %vm889, 1, 0
        %v986 = vsel %vm890, 1, 0
        %v987 = vsel %vm891, 1, 0
        %v988 = vsel %vm892, 1, 0
        %v989 = vsel %vm893, 1, 0
        %v990 = vsel %vm894, 1, 0
        %v991 = vsel %vm895, 1, 0
        %v992 = vsel %vm896, 1, 0
        %v993 = vsel %vm897, 1, 0
        %v994 = vsel %vm898, 1, 0
        %v995 = vsel %vm899, 1, 0
        %v996 = vsel %vm900, 1, 0
        %v997 = vsel %vm901, 1, 0
        %v998 = vsel %vm902, 1, 0
        %v999 = vsel %vm903, 1, 0
        %v1000 = vsel %vm904, 1, 0
        %v1001 = vsel %vm905, 1, 0
        %v1002 = vsel %vm906, 1, 0
        %v1003 = vsel %vm907, 1, 0
        %v1004 = vsel %vm908, 1, 0
        %v1005 = vsel %vm909, 1, 0
        %v1006 = vsel %vm910, 1, 0
        %v1007 = vsel %vm911, 1, 0
        %v1008 = vsel %vm912, 1, 0
        %v1009 = vsel %vm913, 1, 0
        %v1010 = vsel %vm914, 1, 0
        %v1011 = vsel %vm915, 1, 0
        %v1012 = vsel %vm916, 1, 0
        %vm1013 = vcmp.eq.s32.totalorder %v981, 1
        %vm1014 = vcmp.eq.s32.totalorder %v982, 1
        %vm1015 = vcmp.eq.s32.totalorder %v983, 1
        %vm1016 = vcmp.eq.s32.totalorder %v984, 1
        %vm1017 = vcmp.eq.s32.totalorder %v985, 1
        %vm1018 = vcmp.eq.s32.totalorder %v986, 1
        %vm1019 = vcmp.eq.s32.totalorder %v987, 1
        %vm1020 = vcmp.eq.s32.totalorder %v988, 1
        %vm1021 = vcmp.eq.s32.totalorder %v989, 1
        %vm1022 = vcmp.eq.s32.totalorder %v990, 1
        %vm1023 = vcmp.eq.s32.totalorder %v991, 1
        %vm1024 = vcmp.eq.s32.totalorder %v992, 1
        %vm1025 = vcmp.eq.s32.totalorder %v993, 1
        %vm1026 = vcmp.eq.s32.totalorder %v994, 1
        %vm1027 = vcmp.eq.s32.totalorder %v995, 1
        %vm1028 = vcmp.eq.s32.totalorder %v996, 1
        %vm1029 = vcmp.eq.s32.totalorder %v997, 1
        %vm1030 = vcmp.eq.s32.totalorder %v998, 1
        %vm1031 = vcmp.eq.s32.totalorder %v999, 1
        %vm1032 = vcmp.eq.s32.totalorder %v1000, 1
        %vm1033 = vcmp.eq.s32.totalorder %v1001, 1
        %vm1034 = vcmp.eq.s32.totalorder %v1002, 1
        %vm1035 = vcmp.eq.s32.totalorder %v1003, 1
        %vm1036 = vcmp.eq.s32.totalorder %v1004, 1
        %vm1037 = vcmp.eq.s32.totalorder %v1005, 1
        %vm1038 = vcmp.eq.s32.totalorder %v1006, 1
        %vm1039 = vcmp.eq.s32.totalorder %v1007, 1
        %vm1040 = vcmp.eq.s32.totalorder %v1008, 1
        %vm1041 = vcmp.eq.s32.totalorder %v1009, 1
        %vm1042 = vcmp.eq.s32.totalorder %v1010, 1
        %vm1043 = vcmp.eq.s32.totalorder %v1011, 1
        %vm1044 = vcmp.eq.s32.totalorder %v1012, 1
        %v1045 = vsel %vm1013, %v949, 0.0
        %v1046 = vsel %vm1014, %v950, 0.0
        %v1047 = vsel %vm1015, %v951, 0.0
        %v1048 = vsel %vm1016, %v952, 0.0
        %v1049 = vsel %vm1017, %v953, 0.0
        %v1050 = vsel %vm1018, %v954, 0.0
        %v1051 = vsel %vm1019, %v955, 0.0
        %v1052 = vsel %vm1020, %v956, 0.0
        %v1053 = vsel %vm1021, %v957, 0.0
        %v1054 = vsel %vm1022, %v958, 0.0
        %v1055 = vsel %vm1023, %v959, 0.0
        %v1056 = vsel %vm1024, %v960, 0.0
        %v1057 = vsel %vm1025, %v961, 0.0
        %v1058 = vsel %vm1026, %v962, 0.0
        %v1059 = vsel %vm1027, %v963, 0.0
        %v1060 = vsel %vm1028, %v964, 0.0
        %v1061 = vsel %vm1029, %v965, 0.0
        %v1062 = vsel %vm1030, %v966, 0.0
        %v1063 = vsel %vm1031, %v967, 0.0
        %v1064 = vsel %vm1032, %v968, 0.0
        %v1065 = vsel %vm1033, %v969, 0.0
        %v1066 = vsel %vm1034, %v970, 0.0
        %v1067 = vsel %vm1035, %v971, 0.0
        %v1068 = vsel %vm1036, %v972, 0.0
        %v1069 = vsel %vm1037, %v973, 0.0
        %v1070 = vsel %vm1038, %v974, 0.0
        %v1071 = vsel %vm1039, %v975, 0.0
        %v1072 = vsel %vm1040, %v976, 0.0
        %v1073 = vsel %vm1041, %v977, 0.0
        %v1074 = vsel %vm1042, %v978, 0.0
        %v1075 = vsel %vm1043, %v979, 0.0
        %v1076 = vsel %vm1044, %v980, 0.0
        %v1077 = vpack.c.bf16 %v1046, %v1045
        %v1078 = vpack.c.bf16 %v1048, %v1047
        %v1079 = vpack.c.bf16 %v1050, %v1049
        %v1080 = vpack.c.bf16 %v1052, %v1051
        %v1081 = vpack.c.bf16 %v1054, %v1053
        %v1082 = vpack.c.bf16 %v1056, %v1055
        %v1083 = vpack.c.bf16 %v1058, %v1057
        %v1084 = vpack.c.bf16 %v1060, %v1059
        %v1085 = vpack.c.bf16 %v1062, %v1061
        %v1086 = vpack.c.bf16 %v1064, %v1063
        %v1087 = vpack.c.bf16 %v1066, %v1065
        %v1088 = vpack.c.bf16 %v1068, %v1067
        %v1089 = vpack.c.bf16 %v1070, %v1069
        %v1090 = vpack.c.bf16 %v1072, %v1071
        %v1091 = vpack.c.bf16 %v1074, %v1073
        %v1092 = vpack.c.bf16 %v1076, %v1075
        %v1093 = vld [vmem:[%s1] sm:$0x3]
        %v1094 = vld [vmem:[#allocation2 + $0x1] sm:$0xff]
        %v1095 = vld [vmem:[#allocation2 + $0x9] sm:$0xff]
        %v1096 = vld [vmem:[#allocation2 + $0x11] sm:$0xff]
        %v1097 = vld [vmem:[#allocation2 + $0x19] sm:$0xff]
        %v1098 = vld [vmem:[#allocation2 + $0x21] sm:$0xff]
        %v1099 = vld [vmem:[#allocation2 + $0x29] sm:$0xff]
        %v1100 = vld [vmem:[#allocation2 + $0x31] sm:$0xff]
        %v1101 = vld [vmem:[#allocation2 + $0x39] sm:$0xff]
        %v1102 = vld [vmem:[#allocation2 + $0x41] sm:$0xff]
        %v1103 = vld [vmem:[#allocation2 + $0x49] sm:$0xff]
        %v1104 = vld [vmem:[#allocation2 + $0x51] sm:$0xff]
        %v1105 = vld [vmem:[#allocation2 + $0x59] sm:$0xff]
        %v1106 = vld [vmem:[#allocation2 + $0x61] sm:$0xff]
        %v1107 = vld [vmem:[#allocation2 + $0x69] sm:$0xff]
        %v1108 = vld [vmem:[#allocation2 + $0x71] sm:$0xff]
        %v1109 = vld [vmem:[#allocation2 + $0x79] sm:$0xff]
        %v1110 = vld [vmem:[#allocation2 + $0x81] sm:$0xff]
        %v1111 = vld [vmem:[#allocation2 + $0x89] sm:$0xff]
        %v1112 = vld [vmem:[#allocation2 + $0x91] sm:$0xff]
        %v1113 = vld [vmem:[#allocation2 + $0x99] sm:$0xff]
        %v1114 = vld [vmem:[#allocation2 + $0xa1] sm:$0xff]
        %v1115 = vld [vmem:[#allocation2 + $0xa9] sm:$0xff]
        %v1116 = vld [vmem:[#allocation2 + $0xb1] sm:$0xff]
        %v1117 = vld [vmem:[#allocation2 + $0xb9] sm:$0xff]
        %v1118 = vld [vmem:[#allocation2 + $0xc1] sm:$0xff]
        %v1119 = vld [vmem:[#allocation2 + $0xc9] sm:$0xff]
        %v1120 = vld [vmem:[#allocation2 + $0xd1] sm:$0xff]
        %v1121 = vld [vmem:[#allocation2 + $0xd9] sm:$0xff]
        %v1122 = vld [vmem:[#allocation2 + $0xe1] sm:$0xff]
        %v1123 = vld [vmem:[#allocation2 + $0xe9] sm:$0xff]
        %v1124 = vld [vmem:[#allocation2 + $0xf1] sm:$0xff]
        %v1125 = vld [vmem:[#allocation2 + $0xf9] sm:$0xff]
        %v1126 = vpack.c.bf16 %v1095, %v1094
        %v1127 = vpack.c.bf16 %v1097, %v1096
        %v1128 = vpack.c.bf16 %v1099, %v1098
        %v1129 = vpack.c.bf16 %v1101, %v1100
        %v1130 = vpack.c.bf16 %v1103, %v1102
        %v1131 = vpack.c.bf16 %v1105, %v1104
        %v1132 = vpack.c.bf16 %v1107, %v1106
        %v1133 = vpack.c.bf16 %v1109, %v1108
        %v1134 = vpack.c.bf16 %v1111, %v1110
        %v1135 = vpack.c.bf16 %v1113, %v1112
        %v1136 = vpack.c.bf16 %v1115, %v1114
        %v1137 = vpack.c.bf16 %v1117, %v1116
        %v1138 = vpack.c.bf16 %v1119, %v1118
        %v1139 = vpack.c.bf16 %v1121, %v1120
        %v1140 = vpack.c.bf16 %v1123, %v1122
        %v1141 = vpack.c.bf16 %v1125, %v1124
        %s1142 = scalar_lea.vmem %s1, 2
        %v1143 = vld [vmem:[%s1142] sm:$0x3]
        %v1145 = vsel %vm385, %v1126, 0
        %v1148 = vsel %vm385, %v1127, 0
        %v1151 = vsel %vm385, %v1128, 0
        %v1154 = vsel %vm385, %v1129, 0
        %v1157 = vsel %vm385, %v1130, 0
        %v1160 = vsel %vm385, %v1131, 0
        %v1163 = vsel %vm385, %v1132, 0
        %v1166 = vsel %vm385, %v1133, 0
        %v1169 = vsel %vm385, %v1134, 0
        %v1172 = vsel %vm385, %v1135, 0
        %v1175 = vsel %vm385, %v1136, 0
        %v1178 = vsel %vm385, %v1137, 0
        %v1181 = vsel %vm385, %v1138, 0
        %v1184 = vsel %vm385, %v1139, 0
        %v1187 = vsel %vm385, %v1140, 0
        %v1190 = vsel %vm385, %v1141, 0
        %vm1192 = vcmask 1040384
        %vm1193 = vcmask 1041408
        %v1194 = vsel %vm1192, 4294967295, 65535
        %v1195 = vsel %vm1193, %v1194, 0
        %v1197 = vand.u32 %v1143, %v1195
        %1199 = vmatprep.subr.bf16.mxu0 0
        %1200 = vmatpush1.bf16.msra.mxu0 0
        %1201 = vmatprep.subr.bf16.mxu0 0
        %1202 = vmatpush1.bf16.msra.mxu0 0
        %1203 = vmatprep.subr.bf16.mxu0 0
        %1204 = vmatpush1.bf16.msra.mxu0 0
        %1205 = vmatprep.subr.bf16.mxu0 0
        %1206 = vmatpush1.bf16.msra.mxu0 0
        %1207 = vmatprep.subr.bf16.mxu0 0
        %1208 = vmatpush1.bf16.msra.mxu0 0
        %1209 = vmatprep.subr.bf16.mxu0 0
        %1210 = vmatpush1.bf16.msra.mxu0 0
        %1211 = vmatprep.subr.bf16.mxu0 0
        %1212 = vmatpush1.bf16.msra.mxu0 0
        %1213 = vmatprep.subr.bf16.mxu0 0
        %1214 = vmatpush1.bf16.msra.mxu0 %v1197
        %1215 = vmatprep.subr.bf16.mxu0 0
        %1216 = vmatpush2.bf16.msra.mxu0 0
        %1217 = vmatprep.subr.bf16.mxu0 0
        %1218 = vmatpush2.bf16.msra.mxu0 0
        %1219 = vmatprep.subr.bf16.mxu0 0
        %1220 = vmatpush2.bf16.msra.mxu0 0
        %1221 = vmatprep.subr.bf16.mxu0 0
        %1222 = vmatpush2.bf16.msra.mxu0 0
        %1223 = vmatprep.subr.bf16.mxu0 0
        %1224 = vmatpush2.bf16.msra.mxu0 0
        %1225 = vmatprep.subr.bf16.mxu0 0
        %1226 = vmatpush2.bf16.msra.mxu0 0
        %1227 = vmatprep.subr.bf16.mxu0 0
        %1228 = vmatpush2.bf16.msra.mxu0 0
        %1229 = vmatprep.subr.bf16.mxu0 0
        %1230 = vmatpush2.bf16.msra.mxu0 0
        %1231 = vmatprep.mubr.bf16.mxu0 0
        %1232 = vmatmul.mubr.bf16.gmra.mxu0 %v1145
        %v1233 = vpop.f32.mrf.mxu0
        %v1234 = vadd.f32 0.0, %v1233
        %v1235 = vpop.f32.mrf.mxu0
        %v1236 = vpop.f32.mrf.mxu0
        %v1237 = vadd.f32 0.0, %v1236
        %v1238 = vpop.f32.mrf.mxu0
        %1239 = vmatprep.mubr.bf16.mxu0 0
        %1240 = vmatmul.mubr.bf16.gmra.mxu0 %v1148
        %v1241 = vpop.f32.mrf.mxu0
        %v1242 = vadd.f32 0.0, %v1241
        %v1243 = vpop.f32.mrf.mxu0
        %v1244 = vpop.f32.mrf.mxu0
        %v1245 = vadd.f32 0.0, %v1244
        %v1246 = vpop.f32.mrf.mxu0
        %1247 = vmatprep.mubr.bf16.mxu0 0
        %1248 = vmatmul.mubr.bf16.gmra.mxu0 %v1151
        %v1249 = vpop.f32.mrf.mxu0
        %v1250 = vadd.f32 0.0, %v1249
        %v1251 = vpop.f32.mrf.mxu0
        %v1252 = vpop.f32.mrf.mxu0
        %v1253 = vadd.f32 0.0, %v1252
        %v1254 = vpop.f32.mrf.mxu0
        %1255 = vmatprep.mubr.bf16.mxu0 0
        %1256 = vmatmul.mubr.bf16.gmra.mxu0 %v1154
        %v1257 = vpop.f32.mrf.mxu0
        %v1258 = vadd.f32 0.0, %v1257
        %v1259 = vpop.f32.mrf.mxu0
        %v1260 = vpop.f32.mrf.mxu0
        %v1261 = vadd.f32 0.0, %v1260
        %v1262 = vpop.f32.mrf.mxu0
        %1263 = vmatprep.mubr.bf16.mxu0 0
        %1264 = vmatmul.mubr.bf16.gmra.mxu0 %v1157
        %v1265 = vpop.f32.mrf.mxu0
        %v1266 = vadd.f32 0.0, %v1265
        %v1267 = vpop.f32.mrf.mxu0
        %v1268 = vpop.f32.mrf.mxu0
        %v1269 = vadd.f32 0.0, %v1268
        %v1270 = vpop.f32.mrf.mxu0
        %1271 = vmatprep.mubr.bf16.mxu0 0
        %1272 = vmatmul.mubr.bf16.gmra.mxu0 %v1160
        %v1273 = vpop.f32.mrf.mxu0
        %v1274 = vadd.f32 0.0, %v1273
        %v1275 = vpop.f32.mrf.mxu0
        %v1276 = vpop.f32.mrf.mxu0
        %v1277 = vadd.f32 0.0, %v1276
        %v1278 = vpop.f32.mrf.mxu0
        %1279 = vmatprep.mubr.bf16.mxu0 0
        %1280 = vmatmul.mubr.bf16.gmra.mxu0 %v1163
        %v1281 = vpop.f32.mrf.mxu0
        %v1282 = vadd.f32 0.0, %v1281
        %v1283 = vpop.f32.mrf.mxu0
        %v1284 = vpop.f32.mrf.mxu0
        %v1285 = vadd.f32 0.0, %v1284
        %v1286 = vpop.f32.mrf.mxu0
        %1287 = vmatprep.mubr.bf16.mxu0 0
        %1288 = vmatmul.mubr.bf16.gmra.mxu0 %v1166
        %v1289 = vpop.f32.mrf.mxu0
        %v1290 = vadd.f32 0.0, %v1289
        %v1291 = vpop.f32.mrf.mxu0
        %v1292 = vpop.f32.mrf.mxu0
        %v1293 = vadd.f32 0.0, %v1292
        %v1294 = vpop.f32.mrf.mxu0
        %1295 = vmatprep.mubr.bf16.mxu0 0
        %1296 = vmatmul.mubr.bf16.gmra.mxu0 %v1169
        %v1297 = vpop.f32.mrf.mxu0
        %v1298 = vadd.f32 0.0, %v1297
        %v1299 = vpop.f32.mrf.mxu0
        %v1300 = vpop.f32.mrf.mxu0
        %v1301 = vadd.f32 0.0, %v1300
        %v1302 = vpop.f32.mrf.mxu0
        %1303 = vmatprep.mubr.bf16.mxu0 0
        %1304 = vmatmul.mubr.bf16.gmra.mxu0 %v1172
        %v1305 = vpop.f32.mrf.mxu0
        %v1306 = vadd.f32 0.0, %v1305
        %v1307 = vpop.f32.mrf.mxu0
        %v1308 = vpop.f32.mrf.mxu0
        %v1309 = vadd.f32 0.0, %v1308
        %v1310 = vpop.f32.mrf.mxu0
        %1311 = vmatprep.mubr.bf16.mxu0 0
        %1312 = vmatmul.mubr.bf16.gmra.mxu0 %v1175
        %v1313 = vpop.f32.mrf.mxu0
        %v1314 = vadd.f32 0.0, %v1313
        %v1315 = vpop.f32.mrf.mxu0
        %v1316 = vpop.f32.mrf.mxu0
        %v1317 = vadd.f32 0.0, %v1316
        %v1318 = vpop.f32.mrf.mxu0
        %1319 = vmatprep.mubr.bf16.mxu0 0
        %1320 = vmatmul.mubr.bf16.gmra.mxu0 %v1178
        %v1321 = vpop.f32.mrf.mxu0
        %v1322 = vadd.f32 0.0, %v1321
        %v1323 = vpop.f32.mrf.mxu0
        %v1324 = vpop.f32.mrf.mxu0
        %v1325 = vadd.f32 0.0, %v1324
        %v1326 = vpop.f32.mrf.mxu0
        %1327 = vmatprep.mubr.bf16.mxu0 0
        %1328 = vmatmul.mubr.bf16.gmra.mxu0 %v1181
        %v1329 = vpop.f32.mrf.mxu0
        %v1330 = vadd.f32 0.0, %v1329
        %v1331 = vpop.f32.mrf.mxu0
        %v1332 = vpop.f32.mrf.mxu0
        %v1333 = vadd.f32 0.0, %v1332
        %v1334 = vpop.f32.mrf.mxu0
        %1335 = vmatprep.mubr.bf16.mxu0 0
        %1336 = vmatmul.mubr.bf16.gmra.mxu0 %v1184
        %v1337 = vpop.f32.mrf.mxu0
        %v1338 = vadd.f32 0.0, %v1337
        %v1339 = vpop.f32.mrf.mxu0
        %v1340 = vpop.f32.mrf.mxu0
        %v1341 = vadd.f32 0.0, %v1340
        %v1342 = vpop.f32.mrf.mxu0
        %1343 = vmatprep.mubr.bf16.mxu0 0
        %1344 = vmatmul.mubr.bf16.gmra.mxu0 %v1187
        %v1345 = vpop.f32.mrf.mxu0
        %v1346 = vadd.f32 0.0, %v1345
        %v1347 = vpop.f32.mrf.mxu0
        %v1348 = vpop.f32.mrf.mxu0
        %v1349 = vadd.f32 0.0, %v1348
        %v1350 = vpop.f32.mrf.mxu0
        %1351 = vmatprep.mubr.bf16.mxu0 0
        %1352 = vmatmul.mubr.bf16.gmra.mxu0 %v1190
        %v1353 = vpop.f32.mrf.mxu0
        %v1354 = vadd.f32 0.0, %v1353
        %v1355 = vpop.f32.mrf.mxu0
        %v1356 = vpop.f32.mrf.mxu0
        %v1357 = vadd.f32 0.0, %v1356
        %v1358 = vpop.f32.mrf.mxu0
        %1359 = vdwg.mxu0
        %v1361 = vsel %vm385, %v1077, 0
        %v1364 = vsel %vm385, %v1078, 0
        %v1367 = vsel %vm385, %v1079, 0
        %v1370 = vsel %vm385, %v1080, 0
        %v1373 = vsel %vm385, %v1081, 0
        %v1376 = vsel %vm385, %v1082, 0
        %v1379 = vsel %vm385, %v1083, 0
        %v1382 = vsel %vm385, %v1084, 0
        %v1385 = vsel %vm385, %v1085, 0
        %v1388 = vsel %vm385, %v1086, 0
        %v1391 = vsel %vm385, %v1087, 0
        %v1394 = vsel %vm385, %v1088, 0
        %v1397 = vsel %vm385, %v1089, 0
        %v1400 = vsel %vm385, %v1090, 0
        %v1403 = vsel %vm385, %v1091, 0
        %v1406 = vsel %vm385, %v1092, 0
        %v1409 = vand.u32 %v1093, %v1195
        %1411 = vmatprep.subr.bf16.mxu0 0
        %1412 = vmatpush1.bf16.msra.mxu0 0
        %1413 = vmatprep.subr.bf16.mxu0 0
        %1414 = vmatpush1.bf16.msra.mxu0 0
        %1415 = vmatprep.subr.bf16.mxu0 0
        %1416 = vmatpush1.bf16.msra.mxu0 0
        %1417 = vmatprep.subr.bf16.mxu0 0
        %1418 = vmatpush1.bf16.msra.mxu0 0
        %1419 = vmatprep.subr.bf16.mxu0 0
        %1420 = vmatpush1.bf16.msra.mxu0 0
        %1421 = vmatprep.subr.bf16.mxu0 0
        %1422 = vmatpush1.bf16.msra.mxu0 0
        %1423 = vmatprep.subr.bf16.mxu0 0
        %1424 = vmatpush1.bf16.msra.mxu0 0
        %1425 = vmatprep.subr.bf16.mxu0 0
        %1426 = vmatpush1.bf16.msra.mxu0 %v1409
        %1427 = vmatprep.subr.bf16.mxu0 0
        %1428 = vmatpush2.bf16.msra.mxu0 0
        %1429 = vmatprep.subr.bf16.mxu0 0
        %1430 = vmatpush2.bf16.msra.mxu0 0
        %1431 = vmatprep.subr.bf16.mxu0 0
        %1432 = vmatpush2.bf16.msra.mxu0 0
        %1433 = vmatprep.subr.bf16.mxu0 0
        %1434 = vmatpush2.bf16.msra.mxu0 0
        %1435 = vmatprep.subr.bf16.mxu0 0
        %1436 = vmatpush2.bf16.msra.mxu0 0
        %1437 = vmatprep.subr.bf16.mxu0 0
        %1438 = vmatpush2.bf16.msra.mxu0 0
        %1439 = vmatprep.subr.bf16.mxu0 0
        %1440 = vmatpush2.bf16.msra.mxu0 0
        %1441 = vmatprep.subr.bf16.mxu0 0
        %1442 = vmatpush2.bf16.msra.mxu0 0
        %1443 = vmatprep.mubr.bf16.mxu0 0
        %1444 = vmatmul.mubr.bf16.gmra.mxu0 %v1361
        %v1445 = vpop.f32.mrf.mxu0
        %v1446 = vadd.f32 %v1234, %v1445
        %v1447 = vpop.f32.mrf.mxu0
        %v1448 = vpop.f32.mrf.mxu0
        %v1449 = vadd.f32 %v1237, %v1448
        %v1450 = vpop.f32.mrf.mxu0
        %1451 = vmatprep.mubr.bf16.mxu0 0
        %1452 = vmatmul.mubr.bf16.gmra.mxu0 %v1364
        %v1453 = vpop.f32.mrf.mxu0
        %v1454 = vadd.f32 %v1242, %v1453
        %v1455 = vpop.f32.mrf.mxu0
        %v1456 = vpop.f32.mrf.mxu0
        %v1457 = vadd.f32 %v1245, %v1456
        %v1458 = vpop.f32.mrf.mxu0
        %1459 = vmatprep.mubr.bf16.mxu0 0
        %1460 = vmatmul.mubr.bf16.gmra.mxu0 %v1367
        %v1461 = vpop.f32.mrf.mxu0
        %v1462 = vadd.f32 %v1250, %v1461
        %v1463 = vpop.f32.mrf.mxu0
        %v1464 = vpop.f32.mrf.mxu0
        %v1465 = vadd.f32 %v1253, %v1464
        %v1466 = vpop.f32.mrf.mxu0
        %1467 = vmatprep.mubr.bf16.mxu0 0
        %1468 = vmatmul.mubr.bf16.gmra.mxu0 %v1370
        %v1469 = vpop.f32.mrf.mxu0
        %v1470 = vadd.f32 %v1258, %v1469
        %v1471 = vpop.f32.mrf.mxu0
        %v1472 = vpop.f32.mrf.mxu0
        %v1473 = vadd.f32 %v1261, %v1472
        %v1474 = vpop.f32.mrf.mxu0
        %1475 = vmatprep.mubr.bf16.mxu0 0
        %1476 = vmatmul.mubr.bf16.gmra.mxu0 %v1373
        %v1477 = vpop.f32.mrf.mxu0
        %v1478 = vadd.f32 %v1266, %v1477
        %v1479 = vpop.f32.mrf.mxu0
        %v1480 = vpop.f32.mrf.mxu0
        %v1481 = vadd.f32 %v1269, %v1480
        %v1482 = vpop.f32.mrf.mxu0
        %1483 = vmatprep.mubr.bf16.mxu0 0
        %1484 = vmatmul.mubr.bf16.gmra.mxu0 %v1376
        %v1485 = vpop.f32.mrf.mxu0
        %v1486 = vadd.f32 %v1274, %v1485
        %v1487 = vpop.f32.mrf.mxu0
        %v1488 = vpop.f32.mrf.mxu0
        %v1489 = vadd.f32 %v1277, %v1488
        %v1490 = vpop.f32.mrf.mxu0
        %1491 = vmatprep.mubr.bf16.mxu0 0
        %1492 = vmatmul.mubr.bf16.gmra.mxu0 %v1379
        %v1493 = vpop.f32.mrf.mxu0
        %v1494 = vadd.f32 %v1282, %v1493
        %v1495 = vpop.f32.mrf.mxu0
        %v1496 = vpop.f32.mrf.mxu0
        %v1497 = vadd.f32 %v1285, %v1496
        %v1498 = vpop.f32.mrf.mxu0
        %1499 = vmatprep.mubr.bf16.mxu0 0
        %1500 = vmatmul.mubr.bf16.gmra.mxu0 %v1382
        %v1501 = vpop.f32.mrf.mxu0
        %v1502 = vadd.f32 %v1290, %v1501
        %v1503 = vpop.f32.mrf.mxu0
        %v1504 = vpop.f32.mrf.mxu0
        %v1505 = vadd.f32 %v1293, %v1504
        %v1506 = vpop.f32.mrf.mxu0
        %1507 = vmatprep.mubr.bf16.mxu0 0
        %1508 = vmatmul.mubr.bf16.gmra.mxu0 %v1385
        %v1509 = vpop.f32.mrf.mxu0
        %v1510 = vadd.f32 %v1298, %v1509
        %v1511 = vpop.f32.mrf.mxu0
        %v1512 = vpop.f32.mrf.mxu0
        %v1513 = vadd.f32 %v1301, %v1512
        %v1514 = vpop.f32.mrf.mxu0
        %1515 = vmatprep.mubr.bf16.mxu0 0
        %1516 = vmatmul.mubr.bf16.gmra.mxu0 %v1388
        %v1517 = vpop.f32.mrf.mxu0
        %v1518 = vadd.f32 %v1306, %v1517
        %v1519 = vpop.f32.mrf.mxu0
        %v1520 = vpop.f32.mrf.mxu0
        %v1521 = vadd.f32 %v1309, %v1520
        %v1522 = vpop.f32.mrf.mxu0
        %1523 = vmatprep.mubr.bf16.mxu0 0
        %1524 = vmatmul.mubr.bf16.gmra.mxu0 %v1391
        %v1525 = vpop.f32.mrf.mxu0
        %v1526 = vadd.f32 %v1314, %v1525
        %v1527 = vpop.f32.mrf.mxu0
        %v1528 = vpop.f32.mrf.mxu0
        %v1529 = vadd.f32 %v1317, %v1528
        %v1530 = vpop.f32.mrf.mxu0
        %1531 = vmatprep.mubr.bf16.mxu0 0
        %1532 = vmatmul.mubr.bf16.gmra.mxu0 %v1394
        %v1533 = vpop.f32.mrf.mxu0
        %v1534 = vadd.f32 %v1322, %v1533
        %v1535 = vpop.f32.mrf.mxu0
        %v1536 = vpop.f32.mrf.mxu0
        %v1537 = vadd.f32 %v1325, %v1536
        %v1538 = vpop.f32.mrf.mxu0
        %1539 = vmatprep.mubr.bf16.mxu0 0
        %1540 = vmatmul.mubr.bf16.gmra.mxu0 %v1397
        %v1541 = vpop.f32.mrf.mxu0
        %v1542 = vadd.f32 %v1330, %v1541
        %v1543 = vpop.f32.mrf.mxu0
        %v1544 = vpop.f32.mrf.mxu0
        %v1545 = vadd.f32 %v1333, %v1544
        %v1546 = vpop.f32.mrf.mxu0
        %1547 = vmatprep.mubr.bf16.mxu0 0
        %1548 = vmatmul.mubr.bf16.gmra.mxu0 %v1400
        %v1549 = vpop.f32.mrf.mxu0
        %v1550 = vadd.f32 %v1338, %v1549
        %v1551 = vpop.f32.mrf.mxu0
        %v1552 = vpop.f32.mrf.mxu0
        %v1553 = vadd.f32 %v1341, %v1552
        %v1554 = vpop.f32.mrf.mxu0
        %1555 = vmatprep.mubr.bf16.mxu0 0
        %1556 = vmatmul.mubr.bf16.gmra.mxu0 %v1403
        %v1557 = vpop.f32.mrf.mxu0
        %v1558 = vadd.f32 %v1346, %v1557
        %v1559 = vpop.f32.mrf.mxu0
        %v1560 = vpop.f32.mrf.mxu0
        %v1561 = vadd.f32 %v1349, %v1560
        %v1562 = vpop.f32.mrf.mxu0
        %1563 = vmatprep.mubr.bf16.mxu0 0
        %1564 = vmatmul.mubr.bf16.gmra.mxu0 %v1406
        %v1565 = vpop.f32.mrf.mxu0
        %v1566 = vadd.f32 %v1354, %v1565
        %v1567 = vpop.f32.mrf.mxu0
        %v1568 = vpop.f32.mrf.mxu0
        %v1569 = vadd.f32 %v1357, %v1568
        %v1570 = vpop.f32.mrf.mxu0
        %1571 = vdwg.mxu0
        %v1572 = vld [vmem:[#allocation2 + $0x2] sm:$0xff]
        %v1573 = vld [vmem:[#allocation2 + $0xa] sm:$0xff]
        %v1574 = vld [vmem:[#allocation2 + $0x12] sm:$0xff]
        %v1575 = vld [vmem:[#allocation2 + $0x1a] sm:$0xff]
        %v1576 = vld [vmem:[#allocation2 + $0x22] sm:$0xff]
        %v1577 = vld [vmem:[#allocation2 + $0x2a] sm:$0xff]
        %v1578 = vld [vmem:[#allocation2 + $0x32] sm:$0xff]
        %v1579 = vld [vmem:[#allocation2 + $0x3a] sm:$0xff]
        %v1580 = vld [vmem:[#allocation2 + $0x42] sm:$0xff]
        %v1581 = vld [vmem:[#allocation2 + $0x4a] sm:$0xff]
        %v1582 = vld [vmem:[#allocation2 + $0x52] sm:$0xff]
        %v1583 = vld [vmem:[#allocation2 + $0x5a] sm:$0xff]
        %v1584 = vld [vmem:[#allocation2 + $0x62] sm:$0xff]
        %v1585 = vld [vmem:[#allocation2 + $0x6a] sm:$0xff]
        %v1586 = vld [vmem:[#allocation2 + $0x72] sm:$0xff]
        %v1587 = vld [vmem:[#allocation2 + $0x7a] sm:$0xff]
        %v1588 = vld [vmem:[#allocation2 + $0x82] sm:$0xff]
        %v1589 = vld [vmem:[#allocation2 + $0x8a] sm:$0xff]
        %v1590 = vld [vmem:[#allocation2 + $0x92] sm:$0xff]
        %v1591 = vld [vmem:[#allocation2 + $0x9a] sm:$0xff]
        %v1592 = vld [vmem:[#allocation2 + $0xa2] sm:$0xff]
        %v1593 = vld [vmem:[#allocation2 + $0xaa] sm:$0xff]
        %v1594 = vld [vmem:[#allocation2 + $0xb2] sm:$0xff]
        %v1595 = vld [vmem:[#allocation2 + $0xba] sm:$0xff]
        %v1596 = vld [vmem:[#allocation2 + $0xc2] sm:$0xff]
        %v1597 = vld [vmem:[#allocation2 + $0xca] sm:$0xff]
        %v1598 = vld [vmem:[#allocation2 + $0xd2] sm:$0xff]
        %v1599 = vld [vmem:[#allocation2 + $0xda] sm:$0xff]
        %v1600 = vld [vmem:[#allocation2 + $0xe2] sm:$0xff]
        %v1601 = vld [vmem:[#allocation2 + $0xea] sm:$0xff]
        %v1602 = vld [vmem:[#allocation2 + $0xf2] sm:$0xff]
        %v1603 = vld [vmem:[#allocation2 + $0xfa] sm:$0xff]
        %v1604 = vsel %vm917, 1, 0
        %v1605 = vsel %vm918, 1, 0
        %v1606 = vsel %vm919, 1, 0
        %v1607 = vsel %vm920, 1, 0
        %v1608 = vsel %vm921, 1, 0
        %v1609 = vsel %vm922, 1, 0
        %v1610 = vsel %vm923, 1, 0
        %v1611 = vsel %vm924, 1, 0
        %v1612 = vsel %vm925, 1, 0
        %v1613 = vsel %vm926, 1, 0
        %v1614 = vsel %vm927, 1, 0
        %v1615 = vsel %vm928, 1, 0
        %v1616 = vsel %vm929, 1, 0
        %v1617 = vsel %vm930, 1, 0
        %v1618 = vsel %vm931, 1, 0
        %v1619 = vsel %vm932, 1, 0
        %v1620 = vsel %vm933, 1, 0
        %v1621 = vsel %vm934, 1, 0
        %v1622 = vsel %vm935, 1, 0
        %v1623 = vsel %vm936, 1, 0
        %v1624 = vsel %vm937, 1, 0
        %v1625 = vsel %vm938, 1, 0
        %v1626 = vsel %vm939, 1, 0
        %v1627 = vsel %vm940, 1, 0
        %v1628 = vsel %vm941, 1, 0
        %v1629 = vsel %vm942, 1, 0
        %v1630 = vsel %vm943, 1, 0
        %v1631 = vsel %vm944, 1, 0
        %v1632 = vsel %vm945, 1, 0
        %v1633 = vsel %vm946, 1, 0
        %v1634 = vsel %vm947, 1, 0
        %v1635 = vsel %vm948, 1, 0
        %vm1636 = vcmp.eq.s32.totalorder %v1604, 1
        %vm1637 = vcmp.eq.s32.totalorder %v1605, 1
        %vm1638 = vcmp.eq.s32.totalorder %v1606, 1
        %vm1639 = vcmp.eq.s32.totalorder %v1607, 1
        %vm1640 = vcmp.eq.s32.totalorder %v1608, 1
        %vm1641 = vcmp.eq.s32.totalorder %v1609, 1
        %vm1642 = vcmp.eq.s32.totalorder %v1610, 1
        %vm1643 = vcmp.eq.s32.totalorder %v1611, 1
        %vm1644 = vcmp.eq.s32.totalorder %v1612, 1
        %vm1645 = vcmp.eq.s32.totalorder %v1613, 1
        %vm1646 = vcmp.eq.s32.totalorder %v1614, 1
        %vm1647 = vcmp.eq.s32.totalorder %v1615, 1
        %vm1648 = vcmp.eq.s32.totalorder %v1616, 1
        %vm1649 = vcmp.eq.s32.totalorder %v1617, 1
        %vm1650 = vcmp.eq.s32.totalorder %v1618, 1
        %vm1651 = vcmp.eq.s32.totalorder %v1619, 1
        %vm1652 = vcmp.eq.s32.totalorder %v1620, 1
        %vm1653 = vcmp.eq.s32.totalorder %v1621, 1
        %vm1654 = vcmp.eq.s32.totalorder %v1622, 1
        %vm1655 = vcmp.eq.s32.totalorder %v1623, 1
        %vm1656 = vcmp.eq.s32.totalorder %v1624, 1
        %vm1657 = vcmp.eq.s32.totalorder %v1625, 1
        %vm1658 = vcmp.eq.s32.totalorder %v1626, 1
        %vm1659 = vcmp.eq.s32.totalorder %v1627, 1
        %vm1660 = vcmp.eq.s32.totalorder %v1628, 1
        %vm1661 = vcmp.eq.s32.totalorder %v1629, 1
        %vm1662 = vcmp.eq.s32.totalorder %v1630, 1
        %vm1663 = vcmp.eq.s32.totalorder %v1631, 1
        %vm1664 = vcmp.eq.s32.totalorder %v1632, 1
        %vm1665 = vcmp.eq.s32.totalorder %v1633, 1
        %vm1666 = vcmp.eq.s32.totalorder %v1634, 1
        %vm1667 = vcmp.eq.s32.totalorder %v1635, 1
        %v1668 = vsel %vm1636, %v1572, 0.0
        %v1669 = vsel %vm1637, %v1573, 0.0
        %v1670 = vsel %vm1638, %v1574, 0.0
        %v1671 = vsel %vm1639, %v1575, 0.0
        %v1672 = vsel %vm1640, %v1576, 0.0
        %v1673 = vsel %vm1641, %v1577, 0.0
        %v1674 = vsel %vm1642, %v1578, 0.0
        %v1675 = vsel %vm1643, %v1579, 0.0
        %v1676 = vsel %vm1644, %v1580, 0.0
        %v1677 = vsel %vm1645, %v1581, 0.0
        %v1678 = vsel %vm1646, %v1582, 0.0
        %v1679 = vsel %vm1647, %v1583, 0.0
        %v1680 = vsel %vm1648, %v1584, 0.0
        %v1681 = vsel %vm1649, %v1585, 0.0
        %v1682 = vsel %vm1650, %v1586, 0.0
        %v1683 = vsel %vm1651, %v1587, 0.0
        %v1684 = vsel %vm1652, %v1588, 0.0
        %v1685 = vsel %vm1653, %v1589, 0.0
        %v1686 = vsel %vm1654, %v1590, 0.0
        %v1687 = vsel %vm1655, %v1591, 0.0
        %v1688 = vsel %vm1656, %v1592, 0.0
        %v1689 = vsel %vm1657, %v1593, 0.0
        %v1690 = vsel %vm1658, %v1594, 0.0
        %v1691 = vsel %vm1659, %v1595, 0.0
        %v1692 = vsel %vm1660, %v1596, 0.0
        %v1693 = vsel %vm1661, %v1597, 0.0
        %v1694 = vsel %vm1662, %v1598, 0.0
        %v1695 = vsel %vm1663, %v1599, 0.0
        %v1696 = vsel %vm1664, %v1600, 0.0
        %v1697 = vsel %vm1665, %v1601, 0.0
        %v1698 = vsel %vm1666, %v1602, 0.0
        %v1699 = vsel %vm1667, %v1603, 0.0
        %v1700 = vpack.c.bf16 %v1669, %v1668
        %v1701 = vpack.c.bf16 %v1671, %v1670
        %v1702 = vpack.c.bf16 %v1673, %v1672
        %v1703 = vpack.c.bf16 %v1675, %v1674
        %v1704 = vpack.c.bf16 %v1677, %v1676
        %v1705 = vpack.c.bf16 %v1679, %v1678
        %v1706 = vpack.c.bf16 %v1681, %v1680
        %v1707 = vpack.c.bf16 %v1683, %v1682
        %v1708 = vpack.c.bf16 %v1685, %v1684
        %v1709 = vpack.c.bf16 %v1687, %v1686
        %v1710 = vpack.c.bf16 %v1689, %v1688
        %v1711 = vpack.c.bf16 %v1691, %v1690
        %v1712 = vpack.c.bf16 %v1693, %v1692
        %v1713 = vpack.c.bf16 %v1695, %v1694
        %v1714 = vpack.c.bf16 %v1697, %v1696
        %v1715 = vpack.c.bf16 %v1699, %v1698
        %s1716 = scalar_lea.vmem %s1, 4
        %v1717 = vld [vmem:[%s1716] sm:$0x3]
        %v1719 = vsel %vm385, %v1700, 0
        %v1722 = vsel %vm385, %v1701, 0
        %v1725 = vsel %vm385, %v1702, 0
        %v1728 = vsel %vm385, %v1703, 0
        %v1731 = vsel %vm385, %v1704, 0
        %v1734 = vsel %vm385, %v1705, 0
        %v1737 = vsel %vm385, %v1706, 0
        %v1740 = vsel %vm385, %v1707, 0
        %v1743 = vsel %vm385, %v1708, 0
        %v1746 = vsel %vm385, %v1709, 0
        %v1749 = vsel %vm385, %v1710, 0
        %v1752 = vsel %vm385, %v1711, 0
        %v1755 = vsel %vm385, %v1712, 0
        %v1758 = vsel %vm385, %v1713, 0
        %v1761 = vsel %vm385, %v1714, 0
        %v1764 = vsel %vm385, %v1715, 0
        %v1767 = vand.u32 %v1717, %v1195
        %1769 = vmatprep.subr.bf16.mxu0 0
        %1770 = vmatpush1.bf16.msra.mxu0 0
        %1771 = vmatprep.subr.bf16.mxu0 0
        %1772 = vmatpush1.bf16.msra.mxu0 0
        %1773 = vmatprep.subr.bf16.mxu0 0
        %1774 = vmatpush1.bf16.msra.mxu0 0
        %1775 = vmatprep.subr.bf16.mxu0 0
        %1776 = vmatpush1.bf16.msra.mxu0 0
        %1777 = vmatprep.subr.bf16.mxu0 0
        %1778 = vmatpush1.bf16.msra.mxu0 0
        %1779 = vmatprep.subr.bf16.mxu0 0
        %1780 = vmatpush1.bf16.msra.mxu0 0
        %1781 = vmatprep.subr.bf16.mxu0 0
        %1782 = vmatpush1.bf16.msra.mxu0 0
        %1783 = vmatprep.subr.bf16.mxu0 0
        %1784 = vmatpush1.bf16.msra.mxu0 %v1767
        %1785 = vmatprep.subr.bf16.mxu0 0
        %1786 = vmatpush2.bf16.msra.mxu0 0
        %1787 = vmatprep.subr.bf16.mxu0 0
        %1788 = vmatpush2.bf16.msra.mxu0 0
        %1789 = vmatprep.subr.bf16.mxu0 0
        %1790 = vmatpush2.bf16.msra.mxu0 0
        %1791 = vmatprep.subr.bf16.mxu0 0
        %1792 = vmatpush2.bf16.msra.mxu0 0
        %1793 = vmatprep.subr.bf16.mxu0 0
        %1794 = vmatpush2.bf16.msra.mxu0 0
        %1795 = vmatprep.subr.bf16.mxu0 0
        %1796 = vmatpush2.bf16.msra.mxu0 0
        %1797 = vmatprep.subr.bf16.mxu0 0
        %1798 = vmatpush2.bf16.msra.mxu0 0
        %1799 = vmatprep.subr.bf16.mxu0 0
        %1800 = vmatpush2.bf16.msra.mxu0 0
        %1801 = vmatprep.mubr.bf16.mxu0 0
        %1802 = vmatmul.mubr.bf16.gmra.mxu0 %v1719
        %v1803 = vpop.f32.mrf.mxu0
        %v1804 = vadd.f32 0.0, %v1803
        %v1805 = vpop.f32.mrf.mxu0
        %v1806 = vpop.f32.mrf.mxu0
        %v1807 = vadd.f32 0.0, %v1806
        %v1808 = vpop.f32.mrf.mxu0
        %1809 = vmatprep.mubr.bf16.mxu0 0
        %1810 = vmatmul.mubr.bf16.gmra.mxu0 %v1722
        %v1811 = vpop.f32.mrf.mxu0
        %v1812 = vadd.f32 0.0, %v1811
        %v1813 = vpop.f32.mrf.mxu0
        %v1814 = vpop.f32.mrf.mxu0
        %v1815 = vadd.f32 0.0, %v1814
        %v1816 = vpop.f32.mrf.mxu0
        %1817 = vmatprep.mubr.bf16.mxu0 0
        %1818 = vmatmul.mubr.bf16.gmra.mxu0 %v1725
        %v1819 = vpop.f32.mrf.mxu0
        %v1820 = vadd.f32 0.0, %v1819
        %v1821 = vpop.f32.mrf.mxu0
        %v1822 = vpop.f32.mrf.mxu0
        %v1823 = vadd.f32 0.0, %v1822
        %v1824 = vpop.f32.mrf.mxu0
        %1825 = vmatprep.mubr.bf16.mxu0 0
        %1826 = vmatmul.mubr.bf16.gmra.mxu0 %v1728
        %v1827 = vpop.f32.mrf.mxu0
        %v1828 = vadd.f32 0.0, %v1827
        %v1829 = vpop.f32.mrf.mxu0
        %v1830 = vpop.f32.mrf.mxu0
        %v1831 = vadd.f32 0.0, %v1830
        %v1832 = vpop.f32.mrf.mxu0
        %1833 = vmatprep.mubr.bf16.mxu0 0
        %1834 = vmatmul.mubr.bf16.gmra.mxu0 %v1731
        %v1835 = vpop.f32.mrf.mxu0
        %v1836 = vadd.f32 0.0, %v1835
        %v1837 = vpop.f32.mrf.mxu0
        %v1838 = vpop.f32.mrf.mxu0
        %v1839 = vadd.f32 0.0, %v1838
        %v1840 = vpop.f32.mrf.mxu0
        %1841 = vmatprep.mubr.bf16.mxu0 0
        %1842 = vmatmul.mubr.bf16.gmra.mxu0 %v1734
        %v1843 = vpop.f32.mrf.mxu0
        %v1844 = vadd.f32 0.0, %v1843
        %v1845 = vpop.f32.mrf.mxu0
        %v1846 = vpop.f32.mrf.mxu0
        %v1847 = vadd.f32 0.0, %v1846
        %v1848 = vpop.f32.mrf.mxu0
        %1849 = vmatprep.mubr.bf16.mxu0 0
        %1850 = vmatmul.mubr.bf16.gmra.mxu0 %v1737
        %v1851 = vpop.f32.mrf.mxu0
        %v1852 = vadd.f32 0.0, %v1851
        %v1853 = vpop.f32.mrf.mxu0
        %v1854 = vpop.f32.mrf.mxu0
        %v1855 = vadd.f32 0.0, %v1854
        %v1856 = vpop.f32.mrf.mxu0
        %1857 = vmatprep.mubr.bf16.mxu0 0
        %1858 = vmatmul.mubr.bf16.gmra.mxu0 %v1740
        %v1859 = vpop.f32.mrf.mxu0
        %v1860 = vadd.f32 0.0, %v1859
        %v1861 = vpop.f32.mrf.mxu0
        %v1862 = vpop.f32.mrf.mxu0
        %v1863 = vadd.f32 0.0, %v1862
        %v1864 = vpop.f32.mrf.mxu0
        %1865 = vmatprep.mubr.bf16.mxu0 0
        %1866 = vmatmul.mubr.bf16.gmra.mxu0 %v1743
        %v1867 = vpop.f32.mrf.mxu0
        %v1868 = vadd.f32 0.0, %v1867
        %v1869 = vpop.f32.mrf.mxu0
        %v1870 = vpop.f32.mrf.mxu0
        %v1871 = vadd.f32 0.0, %v1870
        %v1872 = vpop.f32.mrf.mxu0
        %1873 = vmatprep.mubr.bf16.mxu0 0
        %1874 = vmatmul.mubr.bf16.gmra.mxu0 %v1746
        %v1875 = vpop.f32.mrf.mxu0
        %v1876 = vadd.f32 0.0, %v1875
        %v1877 = vpop.f32.mrf.mxu0
        %v1878 = vpop.f32.mrf.mxu0
        %v1879 = vadd.f32 0.0, %v1878
        %v1880 = vpop.f32.mrf.mxu0
        %1881 = vmatprep.mubr.bf16.mxu0 0
        %1882 = vmatmul.mubr.bf16.gmra.mxu0 %v1749
        %v1883 = vpop.f32.mrf.mxu0
        %v1884 = vadd.f32 0.0, %v1883
        %v1885 = vpop.f32.mrf.mxu0
        %v1886 = vpop.f32.mrf.mxu0
        %v1887 = vadd.f32 0.0, %v1886
        %v1888 = vpop.f32.mrf.mxu0
        %1889 = vmatprep.mubr.bf16.mxu0 0
        %1890 = vmatmul.mubr.bf16.gmra.mxu0 %v1752
        %v1891 = vpop.f32.mrf.mxu0
        %v1892 = vadd.f32 0.0, %v1891
        %v1893 = vpop.f32.mrf.mxu0
        %v1894 = vpop.f32.mrf.mxu0
        %v1895 = vadd.f32 0.0, %v1894
        %v1896 = vpop.f32.mrf.mxu0
        %1897 = vmatprep.mubr.bf16.mxu0 0
        %1898 = vmatmul.mubr.bf16.gmra.mxu0 %v1755
        %v1899 = vpop.f32.mrf.mxu0
        %v1900 = vadd.f32 0.0, %v1899
        %v1901 = vpop.f32.mrf.mxu0
        %v1902 = vpop.f32.mrf.mxu0
        %v1903 = vadd.f32 0.0, %v1902
        %v1904 = vpop.f32.mrf.mxu0
        %1905 = vmatprep.mubr.bf16.mxu0 0
        %1906 = vmatmul.mubr.bf16.gmra.mxu0 %v1758
        %v1907 = vpop.f32.mrf.mxu0
        %v1908 = vadd.f32 0.0, %v1907
        %v1909 = vpop.f32.mrf.mxu0
        %v1910 = vpop.f32.mrf.mxu0
        %v1911 = vadd.f32 0.0, %v1910
        %v1912 = vpop.f32.mrf.mxu0
        %1913 = vmatprep.mubr.bf16.mxu0 0
        %1914 = vmatmul.mubr.bf16.gmra.mxu0 %v1761
        %v1915 = vpop.f32.mrf.mxu0
        %v1916 = vadd.f32 0.0, %v1915
        %v1917 = vpop.f32.mrf.mxu0
        %v1918 = vpop.f32.mrf.mxu0
        %v1919 = vadd.f32 0.0, %v1918
        %v1920 = vpop.f32.mrf.mxu0
        %1921 = vmatprep.mubr.bf16.mxu0 0
        %1922 = vmatmul.mubr.bf16.gmra.mxu0 %v1764
        %v1923 = vpop.f32.mrf.mxu0
        %v1924 = vadd.f32 0.0, %v1923
        %v1925 = vpop.f32.mrf.mxu0
        %v1926 = vpop.f32.mrf.mxu0
        %v1927 = vadd.f32 0.0, %v1926
        %v1928 = vpop.f32.mrf.mxu0
        %1929 = vdwg.mxu0
        %v1930 = vadd.f32 %v1446, %v1804
        %v1931 = vadd.f32 %v1449, %v1807
        %v1932 = vadd.f32 %v1454, %v1812
        %v1933 = vadd.f32 %v1457, %v1815
        %v1934 = vadd.f32 %v1462, %v1820
        %v1935 = vadd.f32 %v1465, %v1823
        %v1936 = vadd.f32 %v1470, %v1828
        %v1937 = vadd.f32 %v1473, %v1831
        %v1938 = vadd.f32 %v1478, %v1836
        %v1939 = vadd.f32 %v1481, %v1839
        %v1940 = vadd.f32 %v1486, %v1844
        %v1941 = vadd.f32 %v1489, %v1847
        %v1942 = vadd.f32 %v1494, %v1852
        %v1943 = vadd.f32 %v1497, %v1855
        %v1944 = vadd.f32 %v1502, %v1860
        %v1945 = vadd.f32 %v1505, %v1863
        %v1946 = vadd.f32 %v1510, %v1868
        %v1947 = vadd.f32 %v1513, %v1871
        %v1948 = vadd.f32 %v1518, %v1876
        %v1949 = vadd.f32 %v1521, %v1879
        %v1950 = vadd.f32 %v1526, %v1884
        %v1951 = vadd.f32 %v1529, %v1887
        %v1952 = vadd.f32 %v1534, %v1892
        %v1953 = vadd.f32 %v1537, %v1895
        %v1954 = vadd.f32 %v1542, %v1900
        %v1955 = vadd.f32 %v1545, %v1903
        %v1956 = vadd.f32 %v1550, %v1908
        %v1957 = vadd.f32 %v1553, %v1911
        %v1958 = vadd.f32 %v1558, %v1916
        %v1959 = vadd.f32 %v1561, %v1919
        %v1960 = vadd.f32 %v1566, %v1924
        %v1961 = vadd.f32 %v1569, %v1927
        %v1962 = vld [vmem:[#allocation2 + $0x10] sm:$0xff]
        %v1963 = vld [vmem:[#allocation2 + $0x18] sm:$0xff]
        %v1964 = vld [vmem:[#allocation2 + $0x20] sm:$0xff]
        %v1965 = vld [vmem:[#allocation2 + $0x28] sm:$0xff]
        %v1966 = vld [vmem:[#allocation2 + $0x30] sm:$0xff]
        %v1967 = vld [vmem:[#allocation2 + $0x38] sm:$0xff]
        %v1968 = vld [vmem:[#allocation2 + $0x40] sm:$0xff]
        %v1969 = vld [vmem:[#allocation2 + $0x48] sm:$0xff]
        %v1970 = vld [vmem:[#allocation2 + $0x50] sm:$0xff]
        %v1971 = vld [vmem:[#allocation2 + $0x58] sm:$0xff]
        %v1972 = vld [vmem:[#allocation2 + $0x60] sm:$0xff]
        %v1973 = vld [vmem:[#allocation2 + $0x68] sm:$0xff]
        %v1974 = vld [vmem:[#allocation2 + $0x70] sm:$0xff]
        %v1975 = vld [vmem:[#allocation2 + $0x78] sm:$0xff]
        %v1976 = vld [vmem:[#allocation2 + $0x80] sm:$0xff]
        %v1977 = vld [vmem:[#allocation2 + $0x88] sm:$0xff]
        %v1978 = vld [vmem:[#allocation2 + $0x90] sm:$0xff]
        %v1979 = vld [vmem:[#allocation2 + $0x98] sm:$0xff]
        %v1980 = vld [vmem:[#allocation2 + $0xa0] sm:$0xff]
        %v1981 = vld [vmem:[#allocation2 + $0xa8] sm:$0xff]
        %v1982 = vld [vmem:[#allocation2 + $0xb0] sm:$0xff]
        %v1983 = vld [vmem:[#allocation2 + $0xb8] sm:$0xff]
        %v1984 = vld [vmem:[#allocation2 + $0xc0] sm:$0xff]
        %v1985 = vld [vmem:[#allocation2 + $0xc8] sm:$0xff]
        %v1986 = vld [vmem:[#allocation2 + $0xd0] sm:$0xff]
        %v1987 = vld [vmem:[#allocation2 + $0xd8] sm:$0xff]
        %v1988 = vld [vmem:[#allocation2 + $0xe0] sm:$0xff]
        %v1989 = vld [vmem:[#allocation2 + $0xe8] sm:$0xff]
        %v1990 = vld [vmem:[#allocation2 + $0xf0] sm:$0xff]
        %v1991 = vld [vmem:[#allocation2 + $0xf8] sm:$0xff]
        %v1992 = vld [vmem:[#allocation2 + $0x100] sm:$0xff]
        %v1993 = vld [vmem:[#allocation2 + $0x108] sm:$0xff]
        %v1994 = vsel %vm1013, %v1962, 0.0
        %v1995 = vsel %vm1014, %v1963, 0.0
        %v1996 = vsel %vm1015, %v1964, 0.0
        %v1997 = vsel %vm1016, %v1965, 0.0
        %v1998 = vsel %vm1017, %v1966, 0.0
        %v1999 = vsel %vm1018, %v1967, 0.0
        %v2000 = vsel %vm1019, %v1968, 0.0
        %v2001 = vsel %vm1020, %v1969, 0.0
        %v2002 = vsel %vm1021, %v1970, 0.0
        %v2003 = vsel %vm1022, %v1971, 0.0
        %v2004 = vsel %vm1023, %v1972, 0.0
        %v2005 = vsel %vm1024, %v1973, 0.0
        %v2006 = vsel %vm1025, %v1974, 0.0
        %v2007 = vsel %vm1026, %v1975, 0.0
        %v2008 = vsel %vm1027, %v1976, 0.0
        %v2009 = vsel %vm1028, %v1977, 0.0
        %v2010 = vsel %vm1029, %v1978, 0.0
        %v2011 = vsel %vm1030, %v1979, 0.0
        %v2012 = vsel %vm1031, %v1980, 0.0
        %v2013 = vsel %vm1032, %v1981, 0.0
        %v2014 = vsel %vm1033, %v1982, 0.0
        %v2015 = vsel %vm1034, %v1983, 0.0
        %v2016 = vsel %vm1035, %v1984, 0.0
        %v2017 = vsel %vm1036, %v1985, 0.0
        %v2018 = vsel %vm1037, %v1986, 0.0
        %v2019 = vsel %vm1038, %v1987, 0.0
        %v2020 = vsel %vm1039, %v1988, 0.0
        %v2021 = vsel %vm1040, %v1989, 0.0
        %v2022 = vsel %vm1041, %v1990, 0.0
        %v2023 = vsel %vm1042, %v1991, 0.0
        %v2024 = vsel %vm1043, %v1992, 0.0
        %v2025 = vsel %vm1044, %v1993, 0.0
        %v2026 = vpack.c.bf16 %v1995, %v1994
        %v2027 = vpack.c.bf16 %v1997, %v1996
        %v2028 = vpack.c.bf16 %v1999, %v1998
        %v2029 = vpack.c.bf16 %v2001, %v2000
        %v2030 = vpack.c.bf16 %v2003, %v2002
        %v2031 = vpack.c.bf16 %v2005, %v2004
        %v2032 = vpack.c.bf16 %v2007, %v2006
        %v2033 = vpack.c.bf16 %v2009, %v2008
        %v2034 = vpack.c.bf16 %v2011, %v2010
        %v2035 = vpack.c.bf16 %v2013, %v2012
        %v2036 = vpack.c.bf16 %v2015, %v2014
        %v2037 = vpack.c.bf16 %v2017, %v2016
        %v2038 = vpack.c.bf16 %v2019, %v2018
        %v2039 = vpack.c.bf16 %v2021, %v2020
        %v2040 = vpack.c.bf16 %v2023, %v2022
        %v2041 = vpack.c.bf16 %v2025, %v2024
        %s2042 = scalar_lea.vmem %s1, 6
        %v2043 = vld [vmem:[%s2042] sm:$0x3]
        %v2045 = vsel %vm385, %v2026, 0
        %v2048 = vsel %vm385, %v2027, 0
        %v2051 = vsel %vm385, %v2028, 0
        %v2054 = vsel %vm385, %v2029, 0
        %v2057 = vsel %vm385, %v2030, 0
        %v2060 = vsel %vm385, %v2031, 0
        %v2063 = vsel %vm385, %v2032, 0
        %v2066 = vsel %vm385, %v2033, 0
        %v2069 = vsel %vm385, %v2034, 0
        %v2072 = vsel %vm385, %v2035, 0
        %v2075 = vsel %vm385, %v2036, 0
        %v2078 = vsel %vm385, %v2037, 0
        %v2081 = vsel %vm385, %v2038, 0
        %v2084 = vsel %vm385, %v2039, 0
        %v2087 = vsel %vm385, %v2040, 0
        %v2090 = vsel %vm385, %v2041, 0
        %v2093 = vand.u32 %v2043, %v1195
        %2095 = vmatprep.subr.bf16.mxu0 0
        %2096 = vmatpush1.bf16.msra.mxu0 0
        %2097 = vmatprep.subr.bf16.mxu0 0
        %2098 = vmatpush1.bf16.msra.mxu0 0
        %2099 = vmatprep.subr.bf16.mxu0 0
        %2100 = vmatpush1.bf16.msra.mxu0 0
        %2101 = vmatprep.subr.bf16.mxu0 0
        %2102 = vmatpush1.bf16.msra.mxu0 0
        %2103 = vmatprep.subr.bf16.mxu0 0
        %2104 = vmatpush1.bf16.msra.mxu0 0
        %2105 = vmatprep.subr.bf16.mxu0 0
        %2106 = vmatpush1.bf16.msra.mxu0 0
        %2107 = vmatprep.subr.bf16.mxu0 0
        %2108 = vmatpush1.bf16.msra.mxu0 0
        %2109 = vmatprep.subr.bf16.mxu0 0
        %2110 = vmatpush1.bf16.msra.mxu0 %v2093
        %2111 = vmatprep.subr.bf16.mxu0 0
        %2112 = vmatpush2.bf16.msra.mxu0 0
        %2113 = vmatprep.subr.bf16.mxu0 0
        %2114 = vmatpush2.bf16.msra.mxu0 0
        %2115 = vmatprep.subr.bf16.mxu0 0
        %2116 = vmatpush2.bf16.msra.mxu0 0
        %2117 = vmatprep.subr.bf16.mxu0 0
        %2118 = vmatpush2.bf16.msra.mxu0 0
        %2119 = vmatprep.subr.bf16.mxu0 0
        %2120 = vmatpush2.bf16.msra.mxu0 0
        %2121 = vmatprep.subr.bf16.mxu0 0
        %2122 = vmatpush2.bf16.msra.mxu0 0
        %2123 = vmatprep.subr.bf16.mxu0 0
        %2124 = vmatpush2.bf16.msra.mxu0 0
        %2125 = vmatprep.subr.bf16.mxu0 0
        %2126 = vmatpush2.bf16.msra.mxu0 0
        %2127 = vmatprep.mubr.bf16.mxu0 0
        %2128 = vmatmul.mubr.bf16.gmra.mxu0 %v2045
        %v2129 = vpop.f32.mrf.mxu0
        %v2130 = vadd.f32 0.0, %v2129
        %v2131 = vpop.f32.mrf.mxu0
        %v2132 = vpop.f32.mrf.mxu0
        %v2133 = vadd.f32 0.0, %v2132
        %v2134 = vpop.f32.mrf.mxu0
        %2135 = vmatprep.mubr.bf16.mxu0 0
        %2136 = vmatmul.mubr.bf16.gmra.mxu0 %v2048
        %v2137 = vpop.f32.mrf.mxu0
        %v2138 = vadd.f32 0.0, %v2137
        %v2139 = vpop.f32.mrf.mxu0
        %v2140 = vpop.f32.mrf.mxu0
        %v2141 = vadd.f32 0.0, %v2140
        %v2142 = vpop.f32.mrf.mxu0
        %2143 = vmatprep.mubr.bf16.mxu0 0
        %2144 = vmatmul.mubr.bf16.gmra.mxu0 %v2051
        %v2145 = vpop.f32.mrf.mxu0
        %v2146 = vadd.f32 0.0, %v2145
        %v2147 = vpop.f32.mrf.mxu0
        %v2148 = vpop.f32.mrf.mxu0
        %v2149 = vadd.f32 0.0, %v2148
        %v2150 = vpop.f32.mrf.mxu0
        %2151 = vmatprep.mubr.bf16.mxu0 0
        %2152 = vmatmul.mubr.bf16.gmra.mxu0 %v2054
        %v2153 = vpop.f32.mrf.mxu0
        %v2154 = vadd.f32 0.0, %v2153
        %v2155 = vpop.f32.mrf.mxu0
        %v2156 = vpop.f32.mrf.mxu0
        %v2157 = vadd.f32 0.0, %v2156
        %v2158 = vpop.f32.mrf.mxu0
        %2159 = vmatprep.mubr.bf16.mxu0 0
        %2160 = vmatmul.mubr.bf16.gmra.mxu0 %v2057
        %v2161 = vpop.f32.mrf.mxu0
        %v2162 = vadd.f32 0.0, %v2161
        %v2163 = vpop.f32.mrf.mxu0
        %v2164 = vpop.f32.mrf.mxu0
        %v2165 = vadd.f32 0.0, %v2164
        %v2166 = vpop.f32.mrf.mxu0
        %2167 = vmatprep.mubr.bf16.mxu0 0
        %2168 = vmatmul.mubr.bf16.gmra.mxu0 %v2060
        %v2169 = vpop.f32.mrf.mxu0
        %v2170 = vadd.f32 0.0, %v2169
        %v2171 = vpop.f32.mrf.mxu0
        %v2172 = vpop.f32.mrf.mxu0
        %v2173 = vadd.f32 0.0, %v2172
        %v2174 = vpop.f32.mrf.mxu0
        %2175 = vmatprep.mubr.bf16.mxu0 0
        %2176 = vmatmul.mubr.bf16.gmra.mxu0 %v2063
        %v2177 = vpop.f32.mrf.mxu0
        %v2178 = vadd.f32 0.0, %v2177
        %v2179 = vpop.f32.mrf.mxu0
        %v2180 = vpop.f32.mrf.mxu0
        %v2181 = vadd.f32 0.0, %v2180
        %v2182 = vpop.f32.mrf.mxu0
        %2183 = vmatprep.mubr.bf16.mxu0 0
        %2184 = vmatmul.mubr.bf16.gmra.mxu0 %v2066
        %v2185 = vpop.f32.mrf.mxu0
        %v2186 = vadd.f32 0.0, %v2185
        %v2187 = vpop.f32.mrf.mxu0
        %v2188 = vpop.f32.mrf.mxu0
        %v2189 = vadd.f32 0.0, %v2188
        %v2190 = vpop.f32.mrf.mxu0
        %2191 = vmatprep.mubr.bf16.mxu0 0
        %2192 = vmatmul.mubr.bf16.gmra.mxu0 %v2069
        %v2193 = vpop.f32.mrf.mxu0
        %v2194 = vadd.f32 0.0, %v2193
        %v2195 = vpop.f32.mrf.mxu0
        %v2196 = vpop.f32.mrf.mxu0
        %v2197 = vadd.f32 0.0, %v2196
        %v2198 = vpop.f32.mrf.mxu0
        %2199 = vmatprep.mubr.bf16.mxu0 0
        %2200 = vmatmul.mubr.bf16.gmra.mxu0 %v2072
        %v2201 = vpop.f32.mrf.mxu0
        %v2202 = vadd.f32 0.0, %v2201
        %v2203 = vpop.f32.mrf.mxu0
        %v2204 = vpop.f32.mrf.mxu0
        %v2205 = vadd.f32 0.0, %v2204
        %v2206 = vpop.f32.mrf.mxu0
        %2207 = vmatprep.mubr.bf16.mxu0 0
        %2208 = vmatmul.mubr.bf16.gmra.mxu0 %v2075
        %v2209 = vpop.f32.mrf.mxu0
        %v2210 = vadd.f32 0.0, %v2209
        %v2211 = vpop.f32.mrf.mxu0
        %v2212 = vpop.f32.mrf.mxu0
        %v2213 = vadd.f32 0.0, %v2212
        %v2214 = vpop.f32.mrf.mxu0
        %2215 = vmatprep.mubr.bf16.mxu0 0
        %2216 = vmatmul.mubr.bf16.gmra.mxu0 %v2078
        %v2217 = vpop.f32.mrf.mxu0
        %v2218 = vadd.f32 0.0, %v2217
        %v2219 = vpop.f32.mrf.mxu0
        %v2220 = vpop.f32.mrf.mxu0
        %v2221 = vadd.f32 0.0, %v2220
        %v2222 = vpop.f32.mrf.mxu0
        %2223 = vmatprep.mubr.bf16.mxu0 0
        %2224 = vmatmul.mubr.bf16.gmra.mxu0 %v2081
        %v2225 = vpop.f32.mrf.mxu0
        %v2226 = vadd.f32 0.0, %v2225
        %v2227 = vpop.f32.mrf.mxu0
        %v2228 = vpop.f32.mrf.mxu0
        %v2229 = vadd.f32 0.0, %v2228
        %v2230 = vpop.f32.mrf.mxu0
        %2231 = vmatprep.mubr.bf16.mxu0 0
        %2232 = vmatmul.mubr.bf16.gmra.mxu0 %v2084
        %v2233 = vpop.f32.mrf.mxu0
        %v2234 = vadd.f32 0.0, %v2233
        %v2235 = vpop.f32.mrf.mxu0
        %v2236 = vpop.f32.mrf.mxu0
        %v2237 = vadd.f32 0.0, %v2236
        %v2238 = vpop.f32.mrf.mxu0
        %2239 = vmatprep.mubr.bf16.mxu0 0
        %2240 = vmatmul.mubr.bf16.gmra.mxu0 %v2087
        %v2241 = vpop.f32.mrf.mxu0
        %v2242 = vadd.f32 0.0, %v2241
        %v2243 = vpop.f32.mrf.mxu0
        %v2244 = vpop.f32.mrf.mxu0
        %v2245 = vadd.f32 0.0, %v2244
        %v2246 = vpop.f32.mrf.mxu0
        %2247 = vmatprep.mubr.bf16.mxu0 0
        %2248 = vmatmul.mubr.bf16.gmra.mxu0 %v2090
        %v2249 = vpop.f32.mrf.mxu0
        %v2250 = vadd.f32 0.0, %v2249
        %v2251 = vpop.f32.mrf.mxu0
        %v2252 = vpop.f32.mrf.mxu0
        %v2253 = vadd.f32 0.0, %v2252
        %v2254 = vpop.f32.mrf.mxu0
        %2255 = vdwg.mxu0
        %v2256 = vadd.f32 %v1930, %v2130
        %v2257 = vadd.f32 %v1931, %v2133
        %v2258 = vadd.f32 %v1932, %v2138
        %v2259 = vadd.f32 %v1933, %v2141
        %v2260 = vadd.f32 %v1934, %v2146
        %v2261 = vadd.f32 %v1935, %v2149
        %v2262 = vadd.f32 %v1936, %v2154
        %v2263 = vadd.f32 %v1937, %v2157
        %v2264 = vadd.f32 %v1938, %v2162
        %v2265 = vadd.f32 %v1939, %v2165
        %v2266 = vadd.f32 %v1940, %v2170
        %v2267 = vadd.f32 %v1941, %v2173
        %v2268 = vadd.f32 %v1942, %v2178
        %v2269 = vadd.f32 %v1943, %v2181
        %v2270 = vadd.f32 %v1944, %v2186
        %v2271 = vadd.f32 %v1945, %v2189
        %v2272 = vadd.f32 %v1946, %v2194
        %v2273 = vadd.f32 %v1947, %v2197
        %v2274 = vadd.f32 %v1948, %v2202
        %v2275 = vadd.f32 %v1949, %v2205
        %v2276 = vadd.f32 %v1950, %v2210
        %v2277 = vadd.f32 %v1951, %v2213
        %v2278 = vadd.f32 %v1952, %v2218
        %v2279 = vadd.f32 %v1953, %v2221
        %v2280 = vadd.f32 %v1954, %v2226
        %v2281 = vadd.f32 %v1955, %v2229
        %v2282 = vadd.f32 %v1956, %v2234
        %v2283 = vadd.f32 %v1957, %v2237
        %v2284 = vadd.f32 %v1958, %v2242
        %v2285 = vadd.f32 %v1959, %v2245
        %v2286 = vadd.f32 %v1960, %v2250
        %v2287 = vadd.f32 %v1961, %v2253
        %v2288 = vld [vmem:[#allocation2 + $0x11] sm:$0xff]
        %v2289 = vld [vmem:[#allocation2 + $0x19] sm:$0xff]
        %v2290 = vld [vmem:[#allocation2 + $0x21] sm:$0xff]
        %v2291 = vld [vmem:[#allocation2 + $0x29] sm:$0xff]
        %v2292 = vld [vmem:[#allocation2 + $0x31] sm:$0xff]
        %v2293 = vld [vmem:[#allocation2 + $0x39] sm:$0xff]
        %v2294 = vld [vmem:[#allocation2 + $0x41] sm:$0xff]
        %v2295 = vld [vmem:[#allocation2 + $0x49] sm:$0xff]
        %v2296 = vld [vmem:[#allocation2 + $0x51] sm:$0xff]
        %v2297 = vld [vmem:[#allocation2 + $0x59] sm:$0xff]
        %v2298 = vld [vmem:[#allocation2 + $0x61] sm:$0xff]
        %v2299 = vld [vmem:[#allocation2 + $0x69] sm:$0xff]
        %v2300 = vld [vmem:[#allocation2 + $0x71] sm:$0xff]
        %v2301 = vld [vmem:[#allocation2 + $0x79] sm:$0xff]
        %v2302 = vld [vmem:[#allocation2 + $0x81] sm:$0xff]
        %v2303 = vld [vmem:[#allocation2 + $0x89] sm:$0xff]
        %v2304 = vld [vmem:[#allocation2 + $0x91] sm:$0xff]
        %v2305 = vld [vmem:[#allocation2 + $0x99] sm:$0xff]
        %v2306 = vld [vmem:[#allocation2 + $0xa1] sm:$0xff]
        %v2307 = vld [vmem:[#allocation2 + $0xa9] sm:$0xff]
        %v2308 = vld [vmem:[#allocation2 + $0xb1] sm:$0xff]
        %v2309 = vld [vmem:[#allocation2 + $0xb9] sm:$0xff]
        %v2310 = vld [vmem:[#allocation2 + $0xc1] sm:$0xff]
        %v2311 = vld [vmem:[#allocation2 + $0xc9] sm:$0xff]
        %v2312 = vld [vmem:[#allocation2 + $0xd1] sm:$0xff]
        %v2313 = vld [vmem:[#allocation2 + $0xd9] sm:$0xff]
        %v2314 = vld [vmem:[#allocation2 + $0xe1] sm:$0xff]
        %v2315 = vld [vmem:[#allocation2 + $0xe9] sm:$0xff]
        %v2316 = vld [vmem:[#allocation2 + $0xf1] sm:$0xff]
        %v2317 = vld [vmem:[#allocation2 + $0xf9] sm:$0xff]
        %v2318 = vld [vmem:[#allocation2 + $0x101] sm:$0xff]
        %v2319 = vld [vmem:[#allocation2 + $0x109] sm:$0xff]
        %v2320 = vpack.c.bf16 %v2289, %v2288
        %v2321 = vpack.c.bf16 %v2291, %v2290
        %v2322 = vpack.c.bf16 %v2293, %v2292
        %v2323 = vpack.c.bf16 %v2295, %v2294
        %v2324 = vpack.c.bf16 %v2297, %v2296
        %v2325 = vpack.c.bf16 %v2299, %v2298
        %v2326 = vpack.c.bf16 %v2301, %v2300
        %v2327 = vpack.c.bf16 %v2303, %v2302
        %v2328 = vpack.c.bf16 %v2305, %v2304
        %v2329 = vpack.c.bf16 %v2307, %v2306
        %v2330 = vpack.c.bf16 %v2309, %v2308
        %v2331 = vpack.c.bf16 %v2311, %v2310
        %v2332 = vpack.c.bf16 %v2313, %v2312
        %v2333 = vpack.c.bf16 %v2315, %v2314
        %v2334 = vpack.c.bf16 %v2317, %v2316
        %v2335 = vpack.c.bf16 %v2319, %v2318
        %s2336 = scalar_lea.vmem %s1, 8
        %v2337 = vld [vmem:[%s2336] sm:$0x3]
        %v2339 = vsel %vm385, %v2320, 0
        %v2342 = vsel %vm385, %v2321, 0
        %v2345 = vsel %vm385, %v2322, 0
        %v2348 = vsel %vm385, %v2323, 0
        %v2351 = vsel %vm385, %v2324, 0
        %v2354 = vsel %vm385, %v2325, 0
        %v2357 = vsel %vm385, %v2326, 0
        %v2360 = vsel %vm385, %v2327, 0
        %v2363 = vsel %vm385, %v2328, 0
        %v2366 = vsel %vm385, %v2329, 0
        %v2369 = vsel %vm385, %v2330, 0
        %v2372 = vsel %vm385, %v2331, 0
        %v2375 = vsel %vm385, %v2332, 0
        %v2378 = vsel %vm385, %v2333, 0
        %v2381 = vsel %vm385, %v2334, 0
        %v2384 = vsel %vm385, %v2335, 0
        %v2387 = vand.u32 %v2337, %v1195
        %2389 = vmatprep.subr.bf16.mxu0 0
        %2390 = vmatpush1.bf16.msra.mxu0 0
        %2391 = vmatprep.subr.bf16.mxu0 0
        %2392 = vmatpush1.bf16.msra.mxu0 0
        %2393 = vmatprep.subr.bf16.mxu0 0
        %2394 = vmatpush1.bf16.msra.mxu0 0
        %2395 = vmatprep.subr.bf16.mxu0 0
        %2396 = vmatpush1.bf16.msra.mxu0 0
        %2397 = vmatprep.subr.bf16.mxu0 0
        %2398 = vmatpush1.bf16.msra.mxu0 0
        %2399 = vmatprep.subr.bf16.mxu0 0
        %2400 = vmatpush1.bf16.msra.mxu0 0
        %2401 = vmatprep.subr.bf16.mxu0 0
        %2402 = vmatpush1.bf16.msra.mxu0 0
        %2403 = vmatprep.subr.bf16.mxu0 0
        %2404 = vmatpush1.bf16.msra.mxu0 %v2387
        %2405 = vmatprep.subr.bf16.mxu0 0
        %2406 = vmatpush2.bf16.msra.mxu0 0
        %2407 = vmatprep.subr.bf16.mxu0 0
        %2408 = vmatpush2.bf16.msra.mxu0 0
        %2409 = vmatprep.subr.bf16.mxu0 0
        %2410 = vmatpush2.bf16.msra.mxu0 0
        %2411 = vmatprep.subr.bf16.mxu0 0
        %2412 = vmatpush2.bf16.msra.mxu0 0
        %2413 = vmatprep.subr.bf16.mxu0 0
        %2414 = vmatpush2.bf16.msra.mxu0 0
        %2415 = vmatprep.subr.bf16.mxu0 0
        %2416 = vmatpush2.bf16.msra.mxu0 0
        %2417 = vmatprep.subr.bf16.mxu0 0
        %2418 = vmatpush2.bf16.msra.mxu0 0
        %2419 = vmatprep.subr.bf16.mxu0 0
        %2420 = vmatpush2.bf16.msra.mxu0 0
        %2421 = vmatprep.mubr.bf16.mxu0 0
        %2422 = vmatmul.mubr.bf16.gmra.mxu0 %v2339
        %v2423 = vpop.f32.mrf.mxu0
        %v2424 = vadd.f32 0.0, %v2423
        %v2425 = vpop.f32.mrf.mxu0
        %v2426 = vpop.f32.mrf.mxu0
        %v2427 = vadd.f32 0.0, %v2426
        %v2428 = vpop.f32.mrf.mxu0
        %2429 = vmatprep.mubr.bf16.mxu0 0
        %2430 = vmatmul.mubr.bf16.gmra.mxu0 %v2342
        %v2431 = vpop.f32.mrf.mxu0
        %v2432 = vadd.f32 0.0, %v2431
        %v2433 = vpop.f32.mrf.mxu0
        %v2434 = vpop.f32.mrf.mxu0
        %v2435 = vadd.f32 0.0, %v2434
        %v2436 = vpop.f32.mrf.mxu0
        %2437 = vmatprep.mubr.bf16.mxu0 0
        %2438 = vmatmul.mubr.bf16.gmra.mxu0 %v2345
        %v2439 = vpop.f32.mrf.mxu0
        %v2440 = vadd.f32 0.0, %v2439
        %v2441 = vpop.f32.mrf.mxu0
        %v2442 = vpop.f32.mrf.mxu0
        %v2443 = vadd.f32 0.0, %v2442
        %v2444 = vpop.f32.mrf.mxu0
        %2445 = vmatprep.mubr.bf16.mxu0 0
        %2446 = vmatmul.mubr.bf16.gmra.mxu0 %v2348
        %v2447 = vpop.f32.mrf.mxu0
        %v2448 = vadd.f32 0.0, %v2447
        %v2449 = vpop.f32.mrf.mxu0
        %v2450 = vpop.f32.mrf.mxu0
        %v2451 = vadd.f32 0.0, %v2450
        %v2452 = vpop.f32.mrf.mxu0
        %2453 = vmatprep.mubr.bf16.mxu0 0
        %2454 = vmatmul.mubr.bf16.gmra.mxu0 %v2351
        %v2455 = vpop.f32.mrf.mxu0
        %v2456 = vadd.f32 0.0, %v2455
        %v2457 = vpop.f32.mrf.mxu0
        %v2458 = vpop.f32.mrf.mxu0
        %v2459 = vadd.f32 0.0, %v2458
        %v2460 = vpop.f32.mrf.mxu0
        %2461 = vmatprep.mubr.bf16.mxu0 0
        %2462 = vmatmul.mubr.bf16.gmra.mxu0 %v2354
        %v2463 = vpop.f32.mrf.mxu0
        %v2464 = vadd.f32 0.0, %v2463
        %v2465 = vpop.f32.mrf.mxu0
        %v2466 = vpop.f32.mrf.mxu0
        %v2467 = vadd.f32 0.0, %v2466
        %v2468 = vpop.f32.mrf.mxu0
        %2469 = vmatprep.mubr.bf16.mxu0 0
        %2470 = vmatmul.mubr.bf16.gmra.mxu0 %v2357
        %v2471 = vpop.f32.mrf.mxu0
        %v2472 = vadd.f32 0.0, %v2471
        %v2473 = vpop.f32.mrf.mxu0
        %v2474 = vpop.f32.mrf.mxu0
        %v2475 = vadd.f32 0.0, %v2474
        %v2476 = vpop.f32.mrf.mxu0
        %2477 = vmatprep.mubr.bf16.mxu0 0
        %2478 = vmatmul.mubr.bf16.gmra.mxu0 %v2360
        %v2479 = vpop.f32.mrf.mxu0
        %v2480 = vadd.f32 0.0, %v2479
        %v2481 = vpop.f32.mrf.mxu0
        %v2482 = vpop.f32.mrf.mxu0
        %v2483 = vadd.f32 0.0, %v2482
        %v2484 = vpop.f32.mrf.mxu0
        %2485 = vmatprep.mubr.bf16.mxu0 0
        %2486 = vmatmul.mubr.bf16.gmra.mxu0 %v2363
        %v2487 = vpop.f32.mrf.mxu0
        %v2488 = vadd.f32 0.0, %v2487
        %v2489 = vpop.f32.mrf.mxu0
        %v2490 = vpop.f32.mrf.mxu0
        %v2491 = vadd.f32 0.0, %v2490
        %v2492 = vpop.f32.mrf.mxu0
        %2493 = vmatprep.mubr.bf16.mxu0 0
        %2494 = vmatmul.mubr.bf16.gmra.mxu0 %v2366
        %v2495 = vpop.f32.mrf.mxu0
        %v2496 = vadd.f32 0.0, %v2495
        %v2497 = vpop.f32.mrf.mxu0
        %v2498 = vpop.f32.mrf.mxu0
        %v2499 = vadd.f32 0.0, %v2498
        %v2500 = vpop.f32.mrf.mxu0
        %2501 = vmatprep.mubr.bf16.mxu0 0
        %2502 = vmatmul.mubr.bf16.gmra.mxu0 %v2369
        %v2503 = vpop.f32.mrf.mxu0
        %v2504 = vadd.f32 0.0, %v2503
        %v2505 = vpop.f32.mrf.mxu0
        %v2506 = vpop.f32.mrf.mxu0
        %v2507 = vadd.f32 0.0, %v2506
        %v2508 = vpop.f32.mrf.mxu0
        %2509 = vmatprep.mubr.bf16.mxu0 0
        %2510 = vmatmul.mubr.bf16.gmra.mxu0 %v2372
        %v2511 = vpop.f32.mrf.mxu0
        %v2512 = vadd.f32 0.0, %v2511
        %v2513 = vpop.f32.mrf.mxu0
        %v2514 = vpop.f32.mrf.mxu0
        %v2515 = vadd.f32 0.0, %v2514
        %v2516 = vpop.f32.mrf.mxu0
        %2517 = vmatprep.mubr.bf16.mxu0 0
        %2518 = vmatmul.mubr.bf16.gmra.mxu0 %v2375
        %v2519 = vpop.f32.mrf.mxu0
        %v2520 = vadd.f32 0.0, %v2519
        %v2521 = vpop.f32.mrf.mxu0
        %v2522 = vpop.f32.mrf.mxu0
        %v2523 = vadd.f32 0.0, %v2522
        %v2524 = vpop.f32.mrf.mxu0
        %2525 = vmatprep.mubr.bf16.mxu0 0
        %2526 = vmatmul.mubr.bf16.gmra.mxu0 %v2378
        %v2527 = vpop.f32.mrf.mxu0
        %v2528 = vadd.f32 0.0, %v2527
        %v2529 = vpop.f32.mrf.mxu0
        %v2530 = vpop.f32.mrf.mxu0
        %v2531 = vadd.f32 0.0, %v2530
        %v2532 = vpop.f32.mrf.mxu0
        %2533 = vmatprep.mubr.bf16.mxu0 0
        %2534 = vmatmul.mubr.bf16.gmra.mxu0 %v2381
        %v2535 = vpop.f32.mrf.mxu0
        %v2536 = vadd.f32 0.0, %v2535
        %v2537 = vpop.f32.mrf.mxu0
        %v2538 = vpop.f32.mrf.mxu0
        %v2539 = vadd.f32 0.0, %v2538
        %v2540 = vpop.f32.mrf.mxu0
        %2541 = vmatprep.mubr.bf16.mxu0 0
        %2542 = vmatmul.mubr.bf16.gmra.mxu0 %v2384
        %v2543 = vpop.f32.mrf.mxu0
        %v2544 = vadd.f32 0.0, %v2543
        %v2545 = vpop.f32.mrf.mxu0
        %v2546 = vpop.f32.mrf.mxu0
        %v2547 = vadd.f32 0.0, %v2546
        %v2548 = vpop.f32.mrf.mxu0
        %2549 = vdwg.mxu0
        %v2550 = vadd.f32 %v2256, %v2424
        %v2551 = vadd.f32 %v2257, %v2427
        %v2552 = vadd.f32 %v2258, %v2432
        %v2553 = vadd.f32 %v2259, %v2435
        %v2554 = vadd.f32 %v2260, %v2440
        %v2555 = vadd.f32 %v2261, %v2443
        %v2556 = vadd.f32 %v2262, %v2448
        %v2557 = vadd.f32 %v2263, %v2451
        %v2558 = vadd.f32 %v2264, %v2456
        %v2559 = vadd.f32 %v2265, %v2459
        %v2560 = vadd.f32 %v2266, %v2464
        %v2561 = vadd.f32 %v2267, %v2467
        %v2562 = vadd.f32 %v2268, %v2472
        %v2563 = vadd.f32 %v2269, %v2475
        %v2564 = vadd.f32 %v2270, %v2480
        %v2565 = vadd.f32 %v2271, %v2483
        %v2566 = vadd.f32 %v2272, %v2488
        %v2567 = vadd.f32 %v2273, %v2491
        %v2568 = vadd.f32 %v2274, %v2496
        %v2569 = vadd.f32 %v2275, %v2499
        %v2570 = vadd.f32 %v2276, %v2504
        %v2571 = vadd.f32 %v2277, %v2507
        %v2572 = vadd.f32 %v2278, %v2512
        %v2573 = vadd.f32 %v2279, %v2515
        %v2574 = vadd.f32 %v2280, %v2520
        %v2575 = vadd.f32 %v2281, %v2523
        %v2576 = vadd.f32 %v2282, %v2528
        %v2577 = vadd.f32 %v2283, %v2531
        %v2578 = vadd.f32 %v2284, %v2536
        %v2579 = vadd.f32 %v2285, %v2539
        %v2580 = vadd.f32 %v2286, %v2544
        %v2581 = vadd.f32 %v2287, %v2547
        %v2582 = vld [vmem:[#allocation2 + $0x12] sm:$0xff]
        %v2583 = vld [vmem:[#allocation2 + $0x1a] sm:$0xff]
        %v2584 = vld [vmem:[#allocation2 + $0x22] sm:$0xff]
        %v2585 = vld [vmem:[#allocation2 + $0x2a] sm:$0xff]
        %v2586 = vld [vmem:[#allocation2 + $0x32] sm:$0xff]
        %v2587 = vld [vmem:[#allocation2 + $0x3a] sm:$0xff]
        %v2588 = vld [vmem:[#allocation2 + $0x42] sm:$0xff]
        %v2589 = vld [vmem:[#allocation2 + $0x4a] sm:$0xff]
        %v2590 = vld [vmem:[#allocation2 + $0x52] sm:$0xff]
        %v2591 = vld [vmem:[#allocation2 + $0x5a] sm:$0xff]
        %v2592 = vld [vmem:[#allocation2 + $0x62] sm:$0xff]
        %v2593 = vld [vmem:[#allocation2 + $0x6a] sm:$0xff]
        %v2594 = vld [vmem:[#allocation2 + $0x72] sm:$0xff]
        %v2595 = vld [vmem:[#allocation2 + $0x7a] sm:$0xff]
        %v2596 = vld [vmem:[#allocation2 + $0x82] sm:$0xff]
        %v2597 = vld [vmem:[#allocation2 + $0x8a] sm:$0xff]
        %v2598 = vld [vmem:[#allocation2 + $0x92] sm:$0xff]
        %v2599 = vld [vmem:[#allocation2 + $0x9a] sm:$0xff]
        %v2600 = vld [vmem:[#allocation2 + $0xa2] sm:$0xff]
        %v2601 = vld [vmem:[#allocation2 + $0xaa] sm:$0xff]
        %v2602 = vld [vmem:[#allocation2 + $0xb2] sm:$0xff]
        %v2603 = vld [vmem:[#allocation2 + $0xba] sm:$0xff]
        %v2604 = vld [vmem:[#allocation2 + $0xc2] sm:$0xff]
        %v2605 = vld [vmem:[#allocation2 + $0xca] sm:$0xff]
        %v2606 = vld [vmem:[#allocation2 + $0xd2] sm:$0xff]
        %v2607 = vld [vmem:[#allocation2 + $0xda] sm:$0xff]
        %v2608 = vld [vmem:[#allocation2 + $0xe2] sm:$0xff]
        %v2609 = vld [vmem:[#allocation2 + $0xea] sm:$0xff]
        %v2610 = vld [vmem:[#allocation2 + $0xf2] sm:$0xff]
        %v2611 = vld [vmem:[#allocation2 + $0xfa] sm:$0xff]
        %v2612 = vld [vmem:[#allocation2 + $0x102] sm:$0xff]
        %v2613 = vld [vmem:[#allocation2 + $0x10a] sm:$0xff]
        %v2614 = vsel %vm1636, %v2582, 0.0
        %v2615 = vsel %vm1637, %v2583, 0.0
        %v2616 = vsel %vm1638, %v2584, 0.0
        %v2617 = vsel %vm1639, %v2585, 0.0
        %v2618 = vsel %vm1640, %v2586, 0.0
        %v2619 = vsel %vm1641, %v2587, 0.0
        %v2620 = vsel %vm1642, %v2588, 0.0
        %v2621 = vsel %vm1643, %v2589, 0.0
        %v2622 = vsel %vm1644, %v2590, 0.0
        %v2623 = vsel %vm1645, %v2591, 0.0
        %v2624 = vsel %vm1646, %v2592, 0.0
        %v2625 = vsel %vm1647, %v2593, 0.0
        %v2626 = vsel %vm1648, %v2594, 0.0
        %v2627 = vsel %vm1649, %v2595, 0.0
        %v2628 = vsel %vm1650, %v2596, 0.0
        %v2629 = vsel %vm1651, %v2597, 0.0
        %v2630 = vsel %vm1652, %v2598, 0.0
        %v2631 = vsel %vm1653, %v2599, 0.0
        %v2632 = vsel %vm1654, %v2600, 0.0
        %v2633 = vsel %vm1655, %v2601, 0.0
        %v2634 = vsel %vm1656, %v2602, 0.0
        %v2635 = vsel %vm1657, %v2603, 0.0
        %v2636 = vsel %vm1658, %v2604, 0.0
        %v2637 = vsel %vm1659, %v2605, 0.0
        %v2638 = vsel %vm1660, %v2606, 0.0
        %v2639 = vsel %vm1661, %v2607, 0.0
        %v2640 = vsel %vm1662, %v2608, 0.0
        %v2641 = vsel %vm1663, %v2609, 0.0
        %v2642 = vsel %vm1664, %v2610, 0.0
        %v2643 = vsel %vm1665, %v2611, 0.0
        %v2644 = vsel %vm1666, %v2612, 0.0
        %v2645 = vsel %vm1667, %v2613, 0.0
        %v2646 = vpack.c.bf16 %v2615, %v2614
        %v2647 = vpack.c.bf16 %v2617, %v2616
        %v2648 = vpack.c.bf16 %v2619, %v2618
        %v2649 = vpack.c.bf16 %v2621, %v2620
        %v2650 = vpack.c.bf16 %v2623, %v2622
        %v2651 = vpack.c.bf16 %v2625, %v2624
        %v2652 = vpack.c.bf16 %v2627, %v2626
        %v2653 = vpack.c.bf16 %v2629, %v2628
        %v2654 = vpack.c.bf16 %v2631, %v2630
        %v2655 = vpack.c.bf16 %v2633, %v2632
        %v2656 = vpack.c.bf16 %v2635, %v2634
        %v2657 = vpack.c.bf16 %v2637, %v2636
        %v2658 = vpack.c.bf16 %v2639, %v2638
        %v2659 = vpack.c.bf16 %v2641, %v2640
        %v2660 = vpack.c.bf16 %v2643, %v2642
        %v2661 = vpack.c.bf16 %v2645, %v2644
        %s2662 = scalar_lea.vmem %s1, 10
        %v2663 = vld [vmem:[%s2662] sm:$0x3]
        %v2665 = vsel %vm385, %v2646, 0
        %v2668 = vsel %vm385, %v2647, 0
        %v2671 = vsel %vm385, %v2648, 0
        %v2674 = vsel %vm385, %v2649, 0
        %v2677 = vsel %vm385, %v2650, 0
        %v2680 = vsel %vm385, %v2651, 0
        %v2683 = vsel %vm385, %v2652, 0
        %v2686 = vsel %vm385, %v2653, 0
        %v2689 = vsel %vm385, %v2654, 0
        %v2692 = vsel %vm385, %v2655, 0
        %v2695 = vsel %vm385, %v2656, 0
        %v2698 = vsel %vm385, %v2657, 0
        %v2701 = vsel %vm385, %v2658, 0
        %v2704 = vsel %vm385, %v2659, 0
        %v2707 = vsel %vm385, %v2660, 0
        %v2710 = vsel %vm385, %v2661, 0
        %v2713 = vand.u32 %v2663, %v1195
        %2715 = vmatprep.subr.bf16.mxu0 0
        %2716 = vmatpush1.bf16.msra.mxu0 0
        %2717 = vmatprep.subr.bf16.mxu0 0
        %2718 = vmatpush1.bf16.msra.mxu0 0
        %2719 = vmatprep.subr.bf16.mxu0 0
        %2720 = vmatpush1.bf16.msra.mxu0 0
        %2721 = vmatprep.subr.bf16.mxu0 0
        %2722 = vmatpush1.bf16.msra.mxu0 0
        %2723 = vmatprep.subr.bf16.mxu0 0
        %2724 = vmatpush1.bf16.msra.mxu0 0
        %2725 = vmatprep.subr.bf16.mxu0 0
        %2726 = vmatpush1.bf16.msra.mxu0 0
        %2727 = vmatprep.subr.bf16.mxu0 0
        %2728 = vmatpush1.bf16.msra.mxu0 0
        %2729 = vmatprep.subr.bf16.mxu0 0
        %2730 = vmatpush1.bf16.msra.mxu0 %v2713
        %2731 = vmatprep.subr.bf16.mxu0 0
        %2732 = vmatpush2.bf16.msra.mxu0 0
        %2733 = vmatprep.subr.bf16.mxu0 0
        %2734 = vmatpush2.bf16.msra.mxu0 0
        %2735 = vmatprep.subr.bf16.mxu0 0
        %2736 = vmatpush2.bf16.msra.mxu0 0
        %2737 = vmatprep.subr.bf16.mxu0 0
        %2738 = vmatpush2.bf16.msra.mxu0 0
        %2739 = vmatprep.subr.bf16.mxu0 0
        %2740 = vmatpush2.bf16.msra.mxu0 0
        %2741 = vmatprep.subr.bf16.mxu0 0
        %2742 = vmatpush2.bf16.msra.mxu0 0
        %2743 = vmatprep.subr.bf16.mxu0 0
        %2744 = vmatpush2.bf16.msra.mxu0 0
        %2745 = vmatprep.subr.bf16.mxu0 0
        %2746 = vmatpush2.bf16.msra.mxu0 0
        %2747 = vmatprep.mubr.bf16.mxu0 0
        %2748 = vmatmul.mubr.bf16.gmra.mxu0 %v2665
        %v2749 = vpop.f32.mrf.mxu0
        %v2750 = vadd.f32 0.0, %v2749
        %v2751 = vpop.f32.mrf.mxu0
        %v2752 = vpop.f32.mrf.mxu0
        %v2753 = vadd.f32 0.0, %v2752
        %v2754 = vpop.f32.mrf.mxu0
        %2755 = vmatprep.mubr.bf16.mxu0 0
        %2756 = vmatmul.mubr.bf16.gmra.mxu0 %v2668
        %v2757 = vpop.f32.mrf.mxu0
        %v2758 = vadd.f32 0.0, %v2757
        %v2759 = vpop.f32.mrf.mxu0
        %v2760 = vpop.f32.mrf.mxu0
        %v2761 = vadd.f32 0.0, %v2760
        %v2762 = vpop.f32.mrf.mxu0
        %2763 = vmatprep.mubr.bf16.mxu0 0
        %2764 = vmatmul.mubr.bf16.gmra.mxu0 %v2671
        %v2765 = vpop.f32.mrf.mxu0
        %v2766 = vadd.f32 0.0, %v2765
        %v2767 = vpop.f32.mrf.mxu0
        %v2768 = vpop.f32.mrf.mxu0
        %v2769 = vadd.f32 0.0, %v2768
        %v2770 = vpop.f32.mrf.mxu0
        %2771 = vmatprep.mubr.bf16.mxu0 0
        %2772 = vmatmul.mubr.bf16.gmra.mxu0 %v2674
        %v2773 = vpop.f32.mrf.mxu0
        %v2774 = vadd.f32 0.0, %v2773
        %v2775 = vpop.f32.mrf.mxu0
        %v2776 = vpop.f32.mrf.mxu0
        %v2777 = vadd.f32 0.0, %v2776
        %v2778 = vpop.f32.mrf.mxu0
        %2779 = vmatprep.mubr.bf16.mxu0 0
        %2780 = vmatmul.mubr.bf16.gmra.mxu0 %v2677
        %v2781 = vpop.f32.mrf.mxu0
        %v2782 = vadd.f32 0.0, %v2781
        %v2783 = vpop.f32.mrf.mxu0
        %v2784 = vpop.f32.mrf.mxu0
        %v2785 = vadd.f32 0.0, %v2784
        %v2786 = vpop.f32.mrf.mxu0
        %2787 = vmatprep.mubr.bf16.mxu0 0
        %2788 = vmatmul.mubr.bf16.gmra.mxu0 %v2680
        %v2789 = vpop.f32.mrf.mxu0
        %v2790 = vadd.f32 0.0, %v2789
        %v2791 = vpop.f32.mrf.mxu0
        %v2792 = vpop.f32.mrf.mxu0
        %v2793 = vadd.f32 0.0, %v2792
        %v2794 = vpop.f32.mrf.mxu0
        %2795 = vmatprep.mubr.bf16.mxu0 0
        %2796 = vmatmul.mubr.bf16.gmra.mxu0 %v2683
        %v2797 = vpop.f32.mrf.mxu0
        %v2798 = vadd.f32 0.0, %v2797
        %v2799 = vpop.f32.mrf.mxu0
        %v2800 = vpop.f32.mrf.mxu0
        %v2801 = vadd.f32 0.0, %v2800
        %v2802 = vpop.f32.mrf.mxu0
        %2803 = vmatprep.mubr.bf16.mxu0 0
        %2804 = vmatmul.mubr.bf16.gmra.mxu0 %v2686
        %v2805 = vpop.f32.mrf.mxu0
        %v2806 = vadd.f32 0.0, %v2805
        %v2807 = vpop.f32.mrf.mxu0
        %v2808 = vpop.f32.mrf.mxu0
        %v2809 = vadd.f32 0.0, %v2808
        %v2810 = vpop.f32.mrf.mxu0
        %2811 = vmatprep.mubr.bf16.mxu0 0
        %2812 = vmatmul.mubr.bf16.gmra.mxu0 %v2689
        %v2813 = vpop.f32.mrf.mxu0
        %v2814 = vadd.f32 0.0, %v2813
        %v2815 = vpop.f32.mrf.mxu0
        %v2816 = vpop.f32.mrf.mxu0
        %v2817 = vadd.f32 0.0, %v2816
        %v2818 = vpop.f32.mrf.mxu0
        %2819 = vmatprep.mubr.bf16.mxu0 0
        %2820 = vmatmul.mubr.bf16.gmra.mxu0 %v2692
        %v2821 = vpop.f32.mrf.mxu0
        %v2822 = vadd.f32 0.0, %v2821
        %v2823 = vpop.f32.mrf.mxu0
        %v2824 = vpop.f32.mrf.mxu0
        %v2825 = vadd.f32 0.0, %v2824
        %v2826 = vpop.f32.mrf.mxu0
        %2827 = vmatprep.mubr.bf16.mxu0 0
        %2828 = vmatmul.mubr.bf16.gmra.mxu0 %v2695
        %v2829 = vpop.f32.mrf.mxu0
        %v2830 = vadd.f32 0.0, %v2829
        %v2831 = vpop.f32.mrf.mxu0
        %v2832 = vpop.f32.mrf.mxu0
        %v2833 = vadd.f32 0.0, %v2832
        %v2834 = vpop.f32.mrf.mxu0
        %2835 = vmatprep.mubr.bf16.mxu0 0
        %2836 = vmatmul.mubr.bf16.gmra.mxu0 %v2698
        %v2837 = vpop.f32.mrf.mxu0
        %v2838 = vadd.f32 0.0, %v2837
        %v2839 = vpop.f32.mrf.mxu0
        %v2840 = vpop.f32.mrf.mxu0
        %v2841 = vadd.f32 0.0, %v2840
        %v2842 = vpop.f32.mrf.mxu0
        %2843 = vmatprep.mubr.bf16.mxu0 0
        %2844 = vmatmul.mubr.bf16.gmra.mxu0 %v2701
        %v2845 = vpop.f32.mrf.mxu0
        %v2846 = vadd.f32 0.0, %v2845
        %v2847 = vpop.f32.mrf.mxu0
        %v2848 = vpop.f32.mrf.mxu0
        %v2849 = vadd.f32 0.0, %v2848
        %v2850 = vpop.f32.mrf.mxu0
        %2851 = vmatprep.mubr.bf16.mxu0 0
        %2852 = vmatmul.mubr.bf16.gmra.mxu0 %v2704
        %v2853 = vpop.f32.mrf.mxu0
        %v2854 = vadd.f32 0.0, %v2853
        %v2855 = vpop.f32.mrf.mxu0
        %v2856 = vpop.f32.mrf.mxu0
        %v2857 = vadd.f32 0.0, %v2856
        %v2858 = vpop.f32.mrf.mxu0
        %2859 = vmatprep.mubr.bf16.mxu0 0
        %2860 = vmatmul.mubr.bf16.gmra.mxu0 %v2707
        %v2861 = vpop.f32.mrf.mxu0
        %v2862 = vadd.f32 0.0, %v2861
        %v2863 = vpop.f32.mrf.mxu0
        %v2864 = vpop.f32.mrf.mxu0
        %v2865 = vadd.f32 0.0, %v2864
        %v2866 = vpop.f32.mrf.mxu0
        %2867 = vmatprep.mubr.bf16.mxu0 0
        %2868 = vmatmul.mubr.bf16.gmra.mxu0 %v2710
        %v2869 = vpop.f32.mrf.mxu0
        %v2870 = vadd.f32 0.0, %v2869
        %v2871 = vpop.f32.mrf.mxu0
        %v2872 = vpop.f32.mrf.mxu0
        %v2873 = vadd.f32 0.0, %v2872
        %v2874 = vpop.f32.mrf.mxu0
        %2875 = vdwg.mxu0
        %v2876 = vadd.f32 %v2550, %v2750
        %v2877 = vadd.f32 %v2551, %v2753
        %v2878 = vadd.f32 %v2552, %v2758
        %v2879 = vadd.f32 %v2553, %v2761
        %v2880 = vadd.f32 %v2554, %v2766
        %v2881 = vadd.f32 %v2555, %v2769
        %v2882 = vadd.f32 %v2556, %v2774
        %v2883 = vadd.f32 %v2557, %v2777
        %v2884 = vadd.f32 %v2558, %v2782
        %v2885 = vadd.f32 %v2559, %v2785
        %v2886 = vadd.f32 %v2560, %v2790
        %v2887 = vadd.f32 %v2561, %v2793
        %v2888 = vadd.f32 %v2562, %v2798
        %v2889 = vadd.f32 %v2563, %v2801
        %v2890 = vadd.f32 %v2564, %v2806
        %v2891 = vadd.f32 %v2565, %v2809
        %v2892 = vadd.f32 %v2566, %v2814
        %v2893 = vadd.f32 %v2567, %v2817
        %v2894 = vadd.f32 %v2568, %v2822
        %v2895 = vadd.f32 %v2569, %v2825
        %v2896 = vadd.f32 %v2570, %v2830
        %v2897 = vadd.f32 %v2571, %v2833
        %v2898 = vadd.f32 %v2572, %v2838
        %v2899 = vadd.f32 %v2573, %v2841
        %v2900 = vadd.f32 %v2574, %v2846
        %v2901 = vadd.f32 %v2575, %v2849
        %v2902 = vadd.f32 %v2576, %v2854
        %v2903 = vadd.f32 %v2577, %v2857
        %v2904 = vadd.f32 %v2578, %v2862
        %v2905 = vadd.f32 %v2579, %v2865
        %v2906 = vadd.f32 %v2580, %v2870
        %v2907 = vadd.f32 %v2581, %v2873
        %v2908 = vld [vmem:[#allocation2 + $0x20] sm:$0xff]
        %v2909 = vld [vmem:[#allocation2 + $0x28] sm:$0xff]
        %v2910 = vld [vmem:[#allocation2 + $0x30] sm:$0xff]
        %v2911 = vld [vmem:[#allocation2 + $0x38] sm:$0xff]
        %v2912 = vld [vmem:[#allocation2 + $0x40] sm:$0xff]
        %v2913 = vld [vmem:[#allocation2 + $0x48] sm:$0xff]
        %v2914 = vld [vmem:[#allocation2 + $0x50] sm:$0xff]
        %v2915 = vld [vmem:[#allocation2 + $0x58] sm:$0xff]
        %v2916 = vld [vmem:[#allocation2 + $0x60] sm:$0xff]
        %v2917 = vld [vmem:[#allocation2 + $0x68] sm:$0xff]
        %v2918 = vld [vmem:[#allocation2 + $0x70] sm:$0xff]
        %v2919 = vld [vmem:[#allocation2 + $0x78] sm:$0xff]
        %v2920 = vld [vmem:[#allocation2 + $0x80] sm:$0xff]
        %v2921 = vld [vmem:[#allocation2 + $0x88] sm:$0xff]
        %v2922 = vld [vmem:[#allocation2 + $0x90] sm:$0xff]
        %v2923 = vld [vmem:[#allocation2 + $0x98] sm:$0xff]
        %v2924 = vld [vmem:[#allocation2 + $0xa0] sm:$0xff]
        %v2925 = vld [vmem:[#allocation2 + $0xa8] sm:$0xff]
        %v2926 = vld [vmem:[#allocation2 + $0xb0] sm:$0xff]
        %v2927 = vld [vmem:[#allocation2 + $0xb8] sm:$0xff]
        %v2928 = vld [vmem:[#allocation2 + $0xc0] sm:$0xff]
        %v2929 = vld [vmem:[#allocation2 + $0xc8] sm:$0xff]
        %v2930 = vld [vmem:[#allocation2 + $0xd0] sm:$0xff]
        %v2931 = vld [vmem:[#allocation2 + $0xd8] sm:$0xff]
        %v2932 = vld [vmem:[#allocation2 + $0xe0] sm:$0xff]
        %v2933 = vld [vmem:[#allocation2 + $0xe8] sm:$0xff]
        %v2934 = vld [vmem:[#allocation2 + $0xf0] sm:$0xff]
        %v2935 = vld [vmem:[#allocation2 + $0xf8] sm:$0xff]
        %v2936 = vld [vmem:[#allocation2 + $0x100] sm:$0xff]
        %v2937 = vld [vmem:[#allocation2 + $0x108] sm:$0xff]
        %v2938 = vld [vmem:[#allocation2 + $0x110] sm:$0xff]
        %v2939 = vld [vmem:[#allocation2 + $0x118] sm:$0xff]
        %v2940 = vsel %vm1013, %v2908, 0.0
        %v2941 = vsel %vm1014, %v2909, 0.0
        %v2942 = vsel %vm1015, %v2910, 0.0
        %v2943 = vsel %vm1016, %v2911, 0.0
        %v2944 = vsel %vm1017, %v2912, 0.0
        %v2945 = vsel %vm1018, %v2913, 0.0
        %v2946 = vsel %vm1019, %v2914, 0.0
        %v2947 = vsel %vm1020, %v2915, 0.0
        %v2948 = vsel %vm1021, %v2916, 0.0
        %v2949 = vsel %vm1022, %v2917, 0.0
        %v2950 = vsel %vm1023, %v2918, 0.0
        %v2951 = vsel %vm1024, %v2919, 0.0
        %v2952 = vsel %vm1025, %v2920, 0.0
        %v2953 = vsel %vm1026, %v2921, 0.0
        %v2954 = vsel %vm1027, %v2922, 0.0
        %v2955 = vsel %vm1028, %v2923, 0.0
        %v2956 = vsel %vm1029, %v2924, 0.0
        %v2957 = vsel %vm1030, %v2925, 0.0
        %v2958 = vsel %vm1031, %v2926, 0.0
        %v2959 = vsel %vm1032, %v2927, 0.0
        %v2960 = vsel %vm1033, %v2928, 0.0
        %v2961 = vsel %vm1034, %v2929, 0.0
        %v2962 = vsel %vm1035, %v2930, 0.0
        %v2963 = vsel %vm1036, %v2931, 0.0
        %v2964 = vsel %vm1037, %v2932, 0.0
        %v2965 = vsel %vm1038, %v2933, 0.0
        %v2966 = vsel %vm1039, %v2934, 0.0
        %v2967 = vsel %vm1040, %v2935, 0.0
        %v2968 = vsel %vm1041, %v2936, 0.0
        %v2969 = vsel %vm1042, %v2937, 0.0
        %v2970 = vsel %vm1043, %v2938, 0.0
        %v2971 = vsel %vm1044, %v2939, 0.0
        %v2972 = vpack.c.bf16 %v2941, %v2940
        %v2973 = vpack.c.bf16 %v2943, %v2942
        %v2974 = vpack.c.bf16 %v2945, %v2944
        %v2975 = vpack.c.bf16 %v2947, %v2946
        %v2976 = vpack.c.bf16 %v2949, %v2948
        %v2977 = vpack.c.bf16 %v2951, %v2950
        %v2978 = vpack.c.bf16 %v2953, %v2952
        %v2979 = vpack.c.bf16 %v2955, %v2954
        %v2980 = vpack.c.bf16 %v2957, %v2956
        %v2981 = vpack.c.bf16 %v2959, %v2958
        %v2982 = vpack.c.bf16 %v2961, %v2960
        %v2983 = vpack.c.bf16 %v2963, %v2962
        %v2984 = vpack.c.bf16 %v2965, %v2964
        %v2985 = vpack.c.bf16 %v2967, %v2966
        %v2986 = vpack.c.bf16 %v2969, %v2968
        %v2987 = vpack.c.bf16 %v2971, %v2970
        %s2988 = scalar_lea.vmem %s1, 12
        %v2989 = vld [vmem:[%s2988] sm:$0x3]
        %v2991 = vsel %vm385, %v2972, 0
        %v2994 = vsel %vm385, %v2973, 0
        %v2997 = vsel %vm385, %v2974, 0
        %v3000 = vsel %vm385, %v2975, 0
        %v3003 = vsel %vm385, %v2976, 0
        %v3006 = vsel %vm385, %v2977, 0
        %v3009 = vsel %vm385, %v2978, 0
        %v3012 = vsel %vm385, %v2979, 0
        %v3015 = vsel %vm385, %v2980, 0
        %v3018 = vsel %vm385, %v2981, 0
        %v3021 = vsel %vm385, %v2982, 0
        %v3024 = vsel %vm385, %v2983, 0
        %v3027 = vsel %vm385, %v2984, 0
        %v3030 = vsel %vm385, %v2985, 0
        %v3033 = vsel %vm385, %v2986, 0
        %v3036 = vsel %vm385, %v2987, 0
        %v3039 = vand.u32 %v2989, %v1195
        %3041 = vmatprep.subr.bf16.mxu0 0
        %3042 = vmatpush1.bf16.msra.mxu0 0
        %3043 = vmatprep.subr.bf16.mxu0 0
        %3044 = vmatpush1.bf16.msra.mxu0 0
        %3045 = vmatprep.subr.bf16.mxu0 0
        %3046 = vmatpush1.bf16.msra.mxu0 0
        %3047 = vmatprep.subr.bf16.mxu0 0
        %3048 = vmatpush1.bf16.msra.mxu0 0
        %3049 = vmatprep.subr.bf16.mxu0 0
        %3050 = vmatpush1.bf16.msra.mxu0 0
        %3051 = vmatprep.subr.bf16.mxu0 0
        %3052 = vmatpush1.bf16.msra.mxu0 0
        %3053 = vmatprep.subr.bf16.mxu0 0
        %3054 = vmatpush1.bf16.msra.mxu0 0
        %3055 = vmatprep.subr.bf16.mxu0 0
        %3056 = vmatpush1.bf16.msra.mxu0 %v3039
        %3057 = vmatprep.subr.bf16.mxu0 0
        %3058 = vmatpush2.bf16.msra.mxu0 0
        %3059 = vmatprep.subr.bf16.mxu0 0
        %3060 = vmatpush2.bf16.msra.mxu0 0
        %3061 = vmatprep.subr.bf16.mxu0 0
        %3062 = vmatpush2.bf16.msra.mxu0 0
        %3063 = vmatprep.subr.bf16.mxu0 0
        %3064 = vmatpush2.bf16.msra.mxu0 0
        %3065 = vmatprep.subr.bf16.mxu0 0
        %3066 = vmatpush2.bf16.msra.mxu0 0
        %3067 = vmatprep.subr.bf16.mxu0 0
        %3068 = vmatpush2.bf16.msra.mxu0 0
        %3069 = vmatprep.subr.bf16.mxu0 0
        %3070 = vmatpush2.bf16.msra.mxu0 0
        %3071 = vmatprep.subr.bf16.mxu0 0
        %3072 = vmatpush2.bf16.msra.mxu0 0
        %3073 = vmatprep.mubr.bf16.mxu0 0
        %3074 = vmatmul.mubr.bf16.gmra.mxu0 %v2991
        %v3075 = vpop.f32.mrf.mxu0
        %v3076 = vadd.f32 0.0, %v3075
        %v3077 = vpop.f32.mrf.mxu0
        %v3078 = vpop.f32.mrf.mxu0
        %v3079 = vadd.f32 0.0, %v3078
        %v3080 = vpop.f32.mrf.mxu0
        %3081 = vmatprep.mubr.bf16.mxu0 0
        %3082 = vmatmul.mubr.bf16.gmra.mxu0 %v2994
        %v3083 = vpop.f32.mrf.mxu0
        %v3084 = vadd.f32 0.0, %v3083
        %v3085 = vpop.f32.mrf.mxu0
        %v3086 = vpop.f32.mrf.mxu0
        %v3087 = vadd.f32 0.0, %v3086
        %v3088 = vpop.f32.mrf.mxu0
        %3089 = vmatprep.mubr.bf16.mxu0 0
        %3090 = vmatmul.mubr.bf16.gmra.mxu0 %v2997
        %v3091 = vpop.f32.mrf.mxu0
        %v3092 = vadd.f32 0.0, %v3091
        %v3093 = vpop.f32.mrf.mxu0
        %v3094 = vpop.f32.mrf.mxu0
        %v3095 = vadd.f32 0.0, %v3094
        %v3096 = vpop.f32.mrf.mxu0
        %3097 = vmatprep.mubr.bf16.mxu0 0
        %3098 = vmatmul.mubr.bf16.gmra.mxu0 %v3000
        %v3099 = vpop.f32.mrf.mxu0
        %v3100 = vadd.f32 0.0, %v3099
        %v3101 = vpop.f32.mrf.mxu0
        %v3102 = vpop.f32.mrf.mxu0
        %v3103 = vadd.f32 0.0, %v3102
        %v3104 = vpop.f32.mrf.mxu0
        %3105 = vmatprep.mubr.bf16.mxu0 0
        %3106 = vmatmul.mubr.bf16.gmra.mxu0 %v3003
        %v3107 = vpop.f32.mrf.mxu0
        %v3108 = vadd.f32 0.0, %v3107
        %v3109 = vpop.f32.mrf.mxu0
        %v3110 = vpop.f32.mrf.mxu0
        %v3111 = vadd.f32 0.0, %v3110
        %v3112 = vpop.f32.mrf.mxu0
        %3113 = vmatprep.mubr.bf16.mxu0 0
        %3114 = vmatmul.mubr.bf16.gmra.mxu0 %v3006
        %v3115 = vpop.f32.mrf.mxu0
        %v3116 = vadd.f32 0.0, %v3115
        %v3117 = vpop.f32.mrf.mxu0
        %v3118 = vpop.f32.mrf.mxu0
        %v3119 = vadd.f32 0.0, %v3118
        %v3120 = vpop.f32.mrf.mxu0
        %3121 = vmatprep.mubr.bf16.mxu0 0
        %3122 = vmatmul.mubr.bf16.gmra.mxu0 %v3009
        %v3123 = vpop.f32.mrf.mxu0
        %v3124 = vadd.f32 0.0, %v3123
        %v3125 = vpop.f32.mrf.mxu0
        %v3126 = vpop.f32.mrf.mxu0
        %v3127 = vadd.f32 0.0, %v3126
        %v3128 = vpop.f32.mrf.mxu0
        %3129 = vmatprep.mubr.bf16.mxu0 0
        %3130 = vmatmul.mubr.bf16.gmra.mxu0 %v3012
        %v3131 = vpop.f32.mrf.mxu0
        %v3132 = vadd.f32 0.0, %v3131
        %v3133 = vpop.f32.mrf.mxu0
        %v3134 = vpop.f32.mrf.mxu0
        %v3135 = vadd.f32 0.0, %v3134
        %v3136 = vpop.f32.mrf.mxu0
        %3137 = vmatprep.mubr.bf16.mxu0 0
        %3138 = vmatmul.mubr.bf16.gmra.mxu0 %v3015
        %v3139 = vpop.f32.mrf.mxu0
        %v3140 = vadd.f32 0.0, %v3139
        %v3141 = vpop.f32.mrf.mxu0
        %v3142 = vpop.f32.mrf.mxu0
        %v3143 = vadd.f32 0.0, %v3142
        %v3144 = vpop.f32.mrf.mxu0
        %3145 = vmatprep.mubr.bf16.mxu0 0
        %3146 = vmatmul.mubr.bf16.gmra.mxu0 %v3018
        %v3147 = vpop.f32.mrf.mxu0
        %v3148 = vadd.f32 0.0, %v3147
        %v3149 = vpop.f32.mrf.mxu0
        %v3150 = vpop.f32.mrf.mxu0
        %v3151 = vadd.f32 0.0, %v3150
        %v3152 = vpop.f32.mrf.mxu0
        %3153 = vmatprep.mubr.bf16.mxu0 0
        %3154 = vmatmul.mubr.bf16.gmra.mxu0 %v3021
        %v3155 = vpop.f32.mrf.mxu0
        %v3156 = vadd.f32 0.0, %v3155
        %v3157 = vpop.f32.mrf.mxu0
        %v3158 = vpop.f32.mrf.mxu0
        %v3159 = vadd.f32 0.0, %v3158
        %v3160 = vpop.f32.mrf.mxu0
        %3161 = vmatprep.mubr.bf16.mxu0 0
        %3162 = vmatmul.mubr.bf16.gmra.mxu0 %v3024
        %v3163 = vpop.f32.mrf.mxu0
        %v3164 = vadd.f32 0.0, %v3163
        %v3165 = vpop.f32.mrf.mxu0
        %v3166 = vpop.f32.mrf.mxu0
        %v3167 = vadd.f32 0.0, %v3166
        %v3168 = vpop.f32.mrf.mxu0
        %3169 = vmatprep.mubr.bf16.mxu0 0
        %3170 = vmatmul.mubr.bf16.gmra.mxu0 %v3027
        %v3171 = vpop.f32.mrf.mxu0
        %v3172 = vadd.f32 0.0, %v3171
        %v3173 = vpop.f32.mrf.mxu0
        %v3174 = vpop.f32.mrf.mxu0
        %v3175 = vadd.f32 0.0, %v3174
        %v3176 = vpop.f32.mrf.mxu0
        %3177 = vmatprep.mubr.bf16.mxu0 0
        %3178 = vmatmul.mubr.bf16.gmra.mxu0 %v3030
        %v3179 = vpop.f32.mrf.mxu0
        %v3180 = vadd.f32 0.0, %v3179
        %v3181 = vpop.f32.mrf.mxu0
        %v3182 = vpop.f32.mrf.mxu0
        %v3183 = vadd.f32 0.0, %v3182
        %v3184 = vpop.f32.mrf.mxu0
        %3185 = vmatprep.mubr.bf16.mxu0 0
        %3186 = vmatmul.mubr.bf16.gmra.mxu0 %v3033
        %v3187 = vpop.f32.mrf.mxu0
        %v3188 = vadd.f32 0.0, %v3187
        %v3189 = vpop.f32.mrf.mxu0
        %v3190 = vpop.f32.mrf.mxu0
        %v3191 = vadd.f32 0.0, %v3190
        %v3192 = vpop.f32.mrf.mxu0
        %3193 = vmatprep.mubr.bf16.mxu0 0
        %3194 = vmatmul.mubr.bf16.gmra.mxu0 %v3036
        %v3195 = vpop.f32.mrf.mxu0
        %v3196 = vadd.f32 0.0, %v3195
        %v3197 = vpop.f32.mrf.mxu0
        %v3198 = vpop.f32.mrf.mxu0
        %v3199 = vadd.f32 0.0, %v3198
        %v3200 = vpop.f32.mrf.mxu0
        %3201 = vdwg.mxu0
        %v3202 = vadd.f32 %v2876, %v3076
        %v3203 = vadd.f32 %v2877, %v3079
        %v3204 = vadd.f32 %v2878, %v3084
        %v3205 = vadd.f32 %v2879, %v3087
        %v3206 = vadd.f32 %v2880, %v3092
        %v3207 = vadd.f32 %v2881, %v3095
        %v3208 = vadd.f32 %v2882, %v3100
        %v3209 = vadd.f32 %v2883, %v3103
        %v3210 = vadd.f32 %v2884, %v3108
        %v3211 = vadd.f32 %v2885, %v3111
        %v3212 = vadd.f32 %v2886, %v3116
        %v3213 = vadd.f32 %v2887, %v3119
        %v3214 = vadd.f32 %v2888, %v3124
        %v3215 = vadd.f32 %v2889, %v3127
        %v3216 = vadd.f32 %v2890, %v3132
        %v3217 = vadd.f32 %v2891, %v3135
        %v3218 = vadd.f32 %v2892, %v3140
        %v3219 = vadd.f32 %v2893, %v3143
        %v3220 = vadd.f32 %v2894, %v3148
        %v3221 = vadd.f32 %v2895, %v3151
        %v3222 = vadd.f32 %v2896, %v3156
        %v3223 = vadd.f32 %v2897, %v3159
        %v3224 = vadd.f32 %v2898, %v3164
        %v3225 = vadd.f32 %v2899, %v3167
        %v3226 = vadd.f32 %v2900, %v3172
        %v3227 = vadd.f32 %v2901, %v3175
        %v3228 = vadd.f32 %v2902, %v3180
        %v3229 = vadd.f32 %v2903, %v3183
        %v3230 = vadd.f32 %v2904, %v3188
        %v3231 = vadd.f32 %v2905, %v3191
        %v3232 = vadd.f32 %v2906, %v3196
        %v3233 = vadd.f32 %v2907, %v3199
        %v3234 = vld [vmem:[#allocation2 + $0x21] sm:$0xff]
        %v3235 = vld [vmem:[#allocation2 + $0x29] sm:$0xff]
        %v3236 = vld [vmem:[#allocation2 + $0x31] sm:$0xff]
        %v3237 = vld [vmem:[#allocation2 + $0x39] sm:$0xff]
        %v3238 = vld [vmem:[#allocation2 + $0x41] sm:$0xff]
        %v3239 = vld [vmem:[#allocation2 + $0x49] sm:$0xff]
        %v3240 = vld [vmem:[#allocation2 + $0x51] sm:$0xff]
        %v3241 = vld [vmem:[#allocation2 + $0x59] sm:$0xff]
        %v3242 = vld [vmem:[#allocation2 + $0x61] sm:$0xff]
        %v3243 = vld [vmem:[#allocation2 + $0x69] sm:$0xff]
        %v3244 = vld [vmem:[#allocation2 + $0x71] sm:$0xff]
        %v3245 = vld [vmem:[#allocation2 + $0x79] sm:$0xff]
        %v3246 = vld [vmem:[#allocation2 + $0x81] sm:$0xff]
        %v3247 = vld [vmem:[#allocation2 + $0x89] sm:$0xff]
        %v3248 = vld [vmem:[#allocation2 + $0x91] sm:$0xff]
        %v3249 = vld [vmem:[#allocation2 + $0x99] sm:$0xff]
        %v3250 = vld [vmem:[#allocation2 + $0xa1] sm:$0xff]
        %v3251 = vld [vmem:[#allocation2 + $0xa9] sm:$0xff]
        %v3252 = vld [vmem:[#allocation2 + $0xb1] sm:$0xff]
        %v3253 = vld [vmem:[#allocation2 + $0xb9] sm:$0xff]
        %v3254 = vld [vmem:[#allocation2 + $0xc1] sm:$0xff]
        %v3255 = vld [vmem:[#allocation2 + $0xc9] sm:$0xff]
        %v3256 = vld [vmem:[#allocation2 + $0xd1] sm:$0xff]
        %v3257 = vld [vmem:[#allocation2 + $0xd9] sm:$0xff]
        %v3258 = vld [vmem:[#allocation2 + $0xe1] sm:$0xff]
        %v3259 = vld [vmem:[#allocation2 + $0xe9] sm:$0xff]
        %v3260 = vld [vmem:[#allocation2 + $0xf1] sm:$0xff]
        %v3261 = vld [vmem:[#allocation2 + $0xf9] sm:$0xff]
        %v3262 = vld [vmem:[#allocation2 + $0x101] sm:$0xff]
        %v3263 = vld [vmem:[#allocation2 + $0x109] sm:$0xff]
        %v3264 = vld [vmem:[#allocation2 + $0x111] sm:$0xff]
        %v3265 = vld [vmem:[#allocation2 + $0x119] sm:$0xff]
        %v3266 = vpack.c.bf16 %v3235, %v3234
        %v3267 = vpack.c.bf16 %v3237, %v3236
        %v3268 = vpack.c.bf16 %v3239, %v3238
        %v3269 = vpack.c.bf16 %v3241, %v3240
        %v3270 = vpack.c.bf16 %v3243, %v3242
        %v3271 = vpack.c.bf16 %v3245, %v3244
        %v3272 = vpack.c.bf16 %v3247, %v3246
        %v3273 = vpack.c.bf16 %v3249, %v3248
        %v3274 = vpack.c.bf16 %v3251, %v3250
        %v3275 = vpack.c.bf16 %v3253, %v3252
        %v3276 = vpack.c.bf16 %v3255, %v3254
        %v3277 = vpack.c.bf16 %v3257, %v3256
        %v3278 = vpack.c.bf16 %v3259, %v3258
        %v3279 = vpack.c.bf16 %v3261, %v3260
        %v3280 = vpack.c.bf16 %v3263, %v3262
        %v3281 = vpack.c.bf16 %v3265, %v3264
        %s3282 = scalar_lea.vmem %s1, 14
        %v3283 = vld [vmem:[%s3282] sm:$0x3]
        %v3285 = vsel %vm385, %v3266, 0
        %v3288 = vsel %vm385, %v3267, 0
        %v3291 = vsel %vm385, %v3268, 0
        %v3294 = vsel %vm385, %v3269, 0
        %v3297 = vsel %vm385, %v3270, 0
        %v3300 = vsel %vm385, %v3271, 0
        %v3303 = vsel %vm385, %v3272, 0
        %v3306 = vsel %vm385, %v3273, 0
        %v3309 = vsel %vm385, %v3274, 0
        %v3312 = vsel %vm385, %v3275, 0
        %v3315 = vsel %vm385, %v3276, 0
        %v3318 = vsel %vm385, %v3277, 0
        %v3321 = vsel %vm385, %v3278, 0
        %v3324 = vsel %vm385, %v3279, 0
        %v3327 = vsel %vm385, %v3280, 0
        %v3330 = vsel %vm385, %v3281, 0
        %v3333 = vand.u32 %v3283, %v1195
        %3335 = vmatprep.subr.bf16.mxu0 0
        %3336 = vmatpush1.bf16.msra.mxu0 0
        %3337 = vmatprep.subr.bf16.mxu0 0
        %3338 = vmatpush1.bf16.msra.mxu0 0
        %3339 = vmatprep.subr.bf16.mxu0 0
        %3340 = vmatpush1.bf16.msra.mxu0 0
        %3341 = vmatprep.subr.bf16.mxu0 0
        %3342 = vmatpush1.bf16.msra.mxu0 0
        %3343 = vmatprep.subr.bf16.mxu0 0
        %3344 = vmatpush1.bf16.msra.mxu0 0
        %3345 = vmatprep.subr.bf16.mxu0 0
        %3346 = vmatpush1.bf16.msra.mxu0 0
        %3347 = vmatprep.subr.bf16.mxu0 0
        %3348 = vmatpush1.bf16.msra.mxu0 0
        %3349 = vmatprep.subr.bf16.mxu0 0
        %3350 = vmatpush1.bf16.msra.mxu0 %v3333
        %3351 = vmatprep.subr.bf16.mxu0 0
        %3352 = vmatpush2.bf16.msra.mxu0 0
        %3353 = vmatprep.subr.bf16.mxu0 0
        %3354 = vmatpush2.bf16.msra.mxu0 0
        %3355 = vmatprep.subr.bf16.mxu0 0
        %3356 = vmatpush2.bf16.msra.mxu0 0
        %3357 = vmatprep.subr.bf16.mxu0 0
        %3358 = vmatpush2.bf16.msra.mxu0 0
        %3359 = vmatprep.subr.bf16.mxu0 0
        %3360 = vmatpush2.bf16.msra.mxu0 0
        %3361 = vmatprep.subr.bf16.mxu0 0
        %3362 = vmatpush2.bf16.msra.mxu0 0
        %3363 = vmatprep.subr.bf16.mxu0 0
        %3364 = vmatpush2.bf16.msra.mxu0 0
        %3365 = vmatprep.subr.bf16.mxu0 0
        %3366 = vmatpush2.bf16.msra.mxu0 0
        %3367 = vmatprep.mubr.bf16.mxu0 0
        %3368 = vmatmul.mubr.bf16.gmra.mxu0 %v3285
        %v3369 = vpop.f32.mrf.mxu0
        %v3370 = vadd.f32 0.0, %v3369
        %v3371 = vpop.f32.mrf.mxu0
        %v3372 = vpop.f32.mrf.mxu0
        %v3373 = vadd.f32 0.0, %v3372
        %v3374 = vpop.f32.mrf.mxu0
        %3375 = vmatprep.mubr.bf16.mxu0 0
        %3376 = vmatmul.mubr.bf16.gmra.mxu0 %v3288
        %v3377 = vpop.f32.mrf.mxu0
        %v3378 = vadd.f32 0.0, %v3377
        %v3379 = vpop.f32.mrf.mxu0
        %v3380 = vpop.f32.mrf.mxu0
        %v3381 = vadd.f32 0.0, %v3380
        %v3382 = vpop.f32.mrf.mxu0
        %3383 = vmatprep.mubr.bf16.mxu0 0
        %3384 = vmatmul.mubr.bf16.gmra.mxu0 %v3291
        %v3385 = vpop.f32.mrf.mxu0
        %v3386 = vadd.f32 0.0, %v3385
        %v3387 = vpop.f32.mrf.mxu0
        %v3388 = vpop.f32.mrf.mxu0
        %v3389 = vadd.f32 0.0, %v3388
        %v3390 = vpop.f32.mrf.mxu0
        %3391 = vmatprep.mubr.bf16.mxu0 0
        %3392 = vmatmul.mubr.bf16.gmra.mxu0 %v3294
        %v3393 = vpop.f32.mrf.mxu0
        %v3394 = vadd.f32 0.0, %v3393
        %v3395 = vpop.f32.mrf.mxu0
        %v3396 = vpop.f32.mrf.mxu0
        %v3397 = vadd.f32 0.0, %v3396
        %v3398 = vpop.f32.mrf.mxu0
        %3399 = vmatprep.mubr.bf16.mxu0 0
        %3400 = vmatmul.mubr.bf16.gmra.mxu0 %v3297
        %v3401 = vpop.f32.mrf.mxu0
        %v3402 = vadd.f32 0.0, %v3401
        %v3403 = vpop.f32.mrf.mxu0
        %v3404 = vpop.f32.mrf.mxu0
        %v3405 = vadd.f32 0.0, %v3404
        %v3406 = vpop.f32.mrf.mxu0
        %3407 = vmatprep.mubr.bf16.mxu0 0
        %3408 = vmatmul.mubr.bf16.gmra.mxu0 %v3300
        %v3409 = vpop.f32.mrf.mxu0
        %v3410 = vadd.f32 0.0, %v3409
        %v3411 = vpop.f32.mrf.mxu0
        %v3412 = vpop.f32.mrf.mxu0
        %v3413 = vadd.f32 0.0, %v3412
        %v3414 = vpop.f32.mrf.mxu0
        %3415 = vmatprep.mubr.bf16.mxu0 0
        %3416 = vmatmul.mubr.bf16.gmra.mxu0 %v3303
        %v3417 = vpop.f32.mrf.mxu0
        %v3418 = vadd.f32 0.0, %v3417
        %v3419 = vpop.f32.mrf.mxu0
        %v3420 = vpop.f32.mrf.mxu0
        %v3421 = vadd.f32 0.0, %v3420
        %v3422 = vpop.f32.mrf.mxu0
        %3423 = vmatprep.mubr.bf16.mxu0 0
        %3424 = vmatmul.mubr.bf16.gmra.mxu0 %v3306
        %v3425 = vpop.f32.mrf.mxu0
        %v3426 = vadd.f32 0.0, %v3425
        %v3427 = vpop.f32.mrf.mxu0
        %v3428 = vpop.f32.mrf.mxu0
        %v3429 = vadd.f32 0.0, %v3428
        %v3430 = vpop.f32.mrf.mxu0
        %3431 = vmatprep.mubr.bf16.mxu0 0
        %3432 = vmatmul.mubr.bf16.gmra.mxu0 %v3309
        %v3433 = vpop.f32.mrf.mxu0
        %v3434 = vadd.f32 0.0, %v3433
        %v3435 = vpop.f32.mrf.mxu0
        %v3436 = vpop.f32.mrf.mxu0
        %v3437 = vadd.f32 0.0, %v3436
        %v3438 = vpop.f32.mrf.mxu0
        %3439 = vmatprep.mubr.bf16.mxu0 0
        %3440 = vmatmul.mubr.bf16.gmra.mxu0 %v3312
        %v3441 = vpop.f32.mrf.mxu0
        %v3442 = vadd.f32 0.0, %v3441
        %v3443 = vpop.f32.mrf.mxu0
        %v3444 = vpop.f32.mrf.mxu0
        %v3445 = vadd.f32 0.0, %v3444
        %v3446 = vpop.f32.mrf.mxu0
        %3447 = vmatprep.mubr.bf16.mxu0 0
        %3448 = vmatmul.mubr.bf16.gmra.mxu0 %v3315
        %v3449 = vpop.f32.mrf.mxu0
        %v3450 = vadd.f32 0.0, %v3449
        %v3451 = vpop.f32.mrf.mxu0
        %v3452 = vpop.f32.mrf.mxu0
        %v3453 = vadd.f32 0.0, %v3452
        %v3454 = vpop.f32.mrf.mxu0
        %3455 = vmatprep.mubr.bf16.mxu0 0
        %3456 = vmatmul.mubr.bf16.gmra.mxu0 %v3318
        %v3457 = vpop.f32.mrf.mxu0
        %v3458 = vadd.f32 0.0, %v3457
        %v3459 = vpop.f32.mrf.mxu0
        %v3460 = vpop.f32.mrf.mxu0
        %v3461 = vadd.f32 0.0, %v3460
        %v3462 = vpop.f32.mrf.mxu0
        %3463 = vmatprep.mubr.bf16.mxu0 0
        %3464 = vmatmul.mubr.bf16.gmra.mxu0 %v3321
        %v3465 = vpop.f32.mrf.mxu0
        %v3466 = vadd.f32 0.0, %v3465
        %v3467 = vpop.f32.mrf.mxu0
        %v3468 = vpop.f32.mrf.mxu0
        %v3469 = vadd.f32 0.0, %v3468
        %v3470 = vpop.f32.mrf.mxu0
        %3471 = vmatprep.mubr.bf16.mxu0 0
        %3472 = vmatmul.mubr.bf16.gmra.mxu0 %v3324
        %v3473 = vpop.f32.mrf.mxu0
        %v3474 = vadd.f32 0.0, %v3473
        %v3475 = vpop.f32.mrf.mxu0
        %v3476 = vpop.f32.mrf.mxu0
        %v3477 = vadd.f32 0.0, %v3476
        %v3478 = vpop.f32.mrf.mxu0
        %3479 = vmatprep.mubr.bf16.mxu0 0
        %3480 = vmatmul.mubr.bf16.gmra.mxu0 %v3327
        %v3481 = vpop.f32.mrf.mxu0
        %v3482 = vadd.f32 0.0, %v3481
        %v3483 = vpop.f32.mrf.mxu0
        %v3484 = vpop.f32.mrf.mxu0
        %v3485 = vadd.f32 0.0, %v3484
        %v3486 = vpop.f32.mrf.mxu0
        %3487 = vmatprep.mubr.bf16.mxu0 0
        %3488 = vmatmul.mubr.bf16.gmra.mxu0 %v3330
        %v3489 = vpop.f32.mrf.mxu0
        %v3490 = vadd.f32 0.0, %v3489
        %v3491 = vpop.f32.mrf.mxu0
        %v3492 = vpop.f32.mrf.mxu0
        %v3493 = vadd.f32 0.0, %v3492
        %v3494 = vpop.f32.mrf.mxu0
        %3495 = vdwg.mxu0
        %v3496 = vadd.f32 %v3202, %v3370
        %v3497 = vadd.f32 %v3203, %v3373
        %v3498 = vadd.f32 %v3204, %v3378
        %v3499 = vadd.f32 %v3205, %v3381
        %v3500 = vadd.f32 %v3206, %v3386
        %v3501 = vadd.f32 %v3207, %v3389
        %v3502 = vadd.f32 %v3208, %v3394
        %v3503 = vadd.f32 %v3209, %v3397
        %v3504 = vadd.f32 %v3210, %v3402
        %v3505 = vadd.f32 %v3211, %v3405
        %v3506 = vadd.f32 %v3212, %v3410
        %v3507 = vadd.f32 %v3213, %v3413
        %v3508 = vadd.f32 %v3214, %v3418
        %v3509 = vadd.f32 %v3215, %v3421
        %v3510 = vadd.f32 %v3216, %v3426
        %v3511 = vadd.f32 %v3217, %v3429
        %v3512 = vadd.f32 %v3218, %v3434
        %v3513 = vadd.f32 %v3219, %v3437
        %v3514 = vadd.f32 %v3220, %v3442
        %v3515 = vadd.f32 %v3221, %v3445
        %v3516 = vadd.f32 %v3222, %v3450
        %v3517 = vadd.f32 %v3223, %v3453
        %v3518 = vadd.f32 %v3224, %v3458
        %v3519 = vadd.f32 %v3225, %v3461
        %v3520 = vadd.f32 %v3226, %v3466
        %v3521 = vadd.f32 %v3227, %v3469
        %v3522 = vadd.f32 %v3228, %v3474
        %v3523 = vadd.f32 %v3229, %v3477
        %v3524 = vadd.f32 %v3230, %v3482
        %v3525 = vadd.f32 %v3231, %v3485
        %v3526 = vadd.f32 %v3232, %v3490
        %v3527 = vadd.f32 %v3233, %v3493
        %v3528 = vld [vmem:[#allocation2 + $0x22] sm:$0xff]
        %v3529 = vld [vmem:[#allocation2 + $0x2a] sm:$0xff]
        %v3530 = vld [vmem:[#allocation2 + $0x32] sm:$0xff]
        %v3531 = vld [vmem:[#allocation2 + $0x3a] sm:$0xff]
        %v3532 = vld [vmem:[#allocation2 + $0x42] sm:$0xff]
        %v3533 = vld [vmem:[#allocation2 + $0x4a] sm:$0xff]
        %v3534 = vld [vmem:[#allocation2 + $0x52] sm:$0xff]
        %v3535 = vld [vmem:[#allocation2 + $0x5a] sm:$0xff]
        %v3536 = vld [vmem:[#allocation2 + $0x62] sm:$0xff]
        %v3537 = vld [vmem:[#allocation2 + $0x6a] sm:$0xff]
        %v3538 = vld [vmem:[#allocation2 + $0x72] sm:$0xff]
        %v3539 = vld [vmem:[#allocation2 + $0x7a] sm:$0xff]
        %v3540 = vld [vmem:[#allocation2 + $0x82] sm:$0xff]
        %v3541 = vld [vmem:[#allocation2 + $0x8a] sm:$0xff]
        %v3542 = vld [vmem:[#allocation2 + $0x92] sm:$0xff]
        %v3543 = vld [vmem:[#allocation2 + $0x9a] sm:$0xff]
        %v3544 = vld [vmem:[#allocation2 + $0xa2] sm:$0xff]
        %v3545 = vld [vmem:[#allocation2 + $0xaa] sm:$0xff]
        %v3546 = vld [vmem:[#allocation2 + $0xb2] sm:$0xff]
        %v3547 = vld [vmem:[#allocation2 + $0xba] sm:$0xff]
        %v3548 = vld [vmem:[#allocation2 + $0xc2] sm:$0xff]
        %v3549 = vld [vmem:[#allocation2 + $0xca] sm:$0xff]
        %v3550 = vld [vmem:[#allocation2 + $0xd2] sm:$0xff]
        %v3551 = vld [vmem:[#allocation2 + $0xda] sm:$0xff]
        %v3552 = vld [vmem:[#allocation2 + $0xe2] sm:$0xff]
        %v3553 = vld [vmem:[#allocation2 + $0xea] sm:$0xff]
        %v3554 = vld [vmem:[#allocation2 + $0xf2] sm:$0xff]
        %v3555 = vld [vmem:[#allocation2 + $0xfa] sm:$0xff]
        %v3556 = vld [vmem:[#allocation2 + $0x102] sm:$0xff]
        %v3557 = vld [vmem:[#allocation2 + $0x10a] sm:$0xff]
        %v3558 = vld [vmem:[#allocation2 + $0x112] sm:$0xff]
        %v3559 = vld [vmem:[#allocation2 + $0x11a] sm:$0xff]
        %v3560 = vsel %vm1636, %v3528, 0.0
        %v3561 = vsel %vm1637, %v3529, 0.0
        %v3562 = vsel %vm1638, %v3530, 0.0
        %v3563 = vsel %vm1639, %v3531, 0.0
        %v3564 = vsel %vm1640, %v3532, 0.0
        %v3565 = vsel %vm1641, %v3533, 0.0
        %v3566 = vsel %vm1642, %v3534, 0.0
        %v3567 = vsel %vm1643, %v3535, 0.0
        %v3568 = vsel %vm1644, %v3536, 0.0
        %v3569 = vsel %vm1645, %v3537, 0.0
        %v3570 = vsel %vm1646, %v3538, 0.0
        %v3571 = vsel %vm1647, %v3539, 0.0
        %v3572 = vsel %vm1648, %v3540, 0.0
        %v3573 = vsel %vm1649, %v3541, 0.0
        %v3574 = vsel %vm1650, %v3542, 0.0
        %v3575 = vsel %vm1651, %v3543, 0.0
        %v3576 = vsel %vm1652, %v3544, 0.0
        %v3577 = vsel %vm1653, %v3545, 0.0
        %v3578 = vsel %vm1654, %v3546, 0.0
        %v3579 = vsel %vm1655, %v3547, 0.0
        %v3580 = vsel %vm1656, %v3548, 0.0
        %v3581 = vsel %vm1657, %v3549, 0.0
        %v3582 = vsel %vm1658, %v3550, 0.0
        %v3583 = vsel %vm1659, %v3551, 0.0
        %v3584 = vsel %vm1660, %v3552, 0.0
        %v3585 = vsel %vm1661, %v3553, 0.0
        %v3586 = vsel %vm1662, %v3554, 0.0
        %v3587 = vsel %vm1663, %v3555, 0.0
        %v3588 = vsel %vm1664, %v3556, 0.0
        %v3589 = vsel %vm1665, %v3557, 0.0
        %v3590 = vsel %vm1666, %v3558, 0.0
        %v3591 = vsel %vm1667, %v3559, 0.0
        %v3592 = vpack.c.bf16 %v3561, %v3560
        %v3593 = vpack.c.bf16 %v3563, %v3562
        %v3594 = vpack.c.bf16 %v3565, %v3564
        %v3595 = vpack.c.bf16 %v3567, %v3566
        %v3596 = vpack.c.bf16 %v3569, %v3568
        %v3597 = vpack.c.bf16 %v3571, %v3570
        %v3598 = vpack.c.bf16 %v3573, %v3572
        %v3599 = vpack.c.bf16 %v3575, %v3574
        %v3600 = vpack.c.bf16 %v3577, %v3576
        %v3601 = vpack.c.bf16 %v3579, %v3578
        %v3602 = vpack.c.bf16 %v3581, %v3580
        %v3603 = vpack.c.bf16 %v3583, %v3582
        %v3604 = vpack.c.bf16 %v3585, %v3584
        %v3605 = vpack.c.bf16 %v3587, %v3586
        %v3606 = vpack.c.bf16 %v3589, %v3588
        %v3607 = vpack.c.bf16 %v3591, %v3590
        %s3608 = scalar_lea.vmem %s1, 16
        %v3609 = vld [vmem:[%s3608] sm:$0x3]
        %v3611 = vsel %vm385, %v3592, 0
        %v3614 = vsel %vm385, %v3593, 0
        %v3617 = vsel %vm385, %v3594, 0
        %v3620 = vsel %vm385, %v3595, 0
        %v3623 = vsel %vm385, %v3596, 0
        %v3626 = vsel %vm385, %v3597, 0
        %v3629 = vsel %vm385, %v3598, 0
        %v3632 = vsel %vm385, %v3599, 0
        %v3635 = vsel %vm385, %v3600, 0
        %v3638 = vsel %vm385, %v3601, 0
        %v3641 = vsel %vm385, %v3602, 0
        %v3644 = vsel %vm385, %v3603, 0
        %v3647 = vsel %vm385, %v3604, 0
        %v3650 = vsel %vm385, %v3605, 0
        %v3653 = vsel %vm385, %v3606, 0
        %v3656 = vsel %vm385, %v3607, 0
        %v3659 = vand.u32 %v3609, %v1195
        %3661 = vmatprep.subr.bf16.mxu0 0
        %3662 = vmatpush1.bf16.msra.mxu0 0
        %3663 = vmatprep.subr.bf16.mxu0 0
        %3664 = vmatpush1.bf16.msra.mxu0 0
        %3665 = vmatprep.subr.bf16.mxu0 0
        %3666 = vmatpush1.bf16.msra.mxu0 0
        %3667 = vmatprep.subr.bf16.mxu0 0
        %3668 = vmatpush1.bf16.msra.mxu0 0
        %3669 = vmatprep.subr.bf16.mxu0 0
        %3670 = vmatpush1.bf16.msra.mxu0 0
        %3671 = vmatprep.subr.bf16.mxu0 0
        %3672 = vmatpush1.bf16.msra.mxu0 0
        %3673 = vmatprep.subr.bf16.mxu0 0
        %3674 = vmatpush1.bf16.msra.mxu0 0
        %3675 = vmatprep.subr.bf16.mxu0 0
        %3676 = vmatpush1.bf16.msra.mxu0 %v3659
        %3677 = vmatprep.subr.bf16.mxu0 0
        %3678 = vmatpush2.bf16.msra.mxu0 0
        %3679 = vmatprep.subr.bf16.mxu0 0
        %3680 = vmatpush2.bf16.msra.mxu0 0
        %3681 = vmatprep.subr.bf16.mxu0 0
        %3682 = vmatpush2.bf16.msra.mxu0 0
        %3683 = vmatprep.subr.bf16.mxu0 0
        %3684 = vmatpush2.bf16.msra.mxu0 0
        %3685 = vmatprep.subr.bf16.mxu0 0
        %3686 = vmatpush2.bf16.msra.mxu0 0
        %3687 = vmatprep.subr.bf16.mxu0 0
        %3688 = vmatpush2.bf16.msra.mxu0 0
        %3689 = vmatprep.subr.bf16.mxu0 0
        %3690 = vmatpush2.bf16.msra.mxu0 0
        %3691 = vmatprep.subr.bf16.mxu0 0
        %3692 = vmatpush2.bf16.msra.mxu0 0
        %3693 = vmatprep.mubr.bf16.mxu0 0
        %3694 = vmatmul.mubr.bf16.gmra.mxu0 %v3611
        %v3695 = vpop.f32.mrf.mxu0
        %v3696 = vadd.f32 0.0, %v3695
        %v3697 = vpop.f32.mrf.mxu0
        %v3698 = vpop.f32.mrf.mxu0
        %v3699 = vadd.f32 0.0, %v3698
        %v3700 = vpop.f32.mrf.mxu0
        %3701 = vmatprep.mubr.bf16.mxu0 0
        %3702 = vmatmul.mubr.bf16.gmra.mxu0 %v3614
        %v3703 = vpop.f32.mrf.mxu0
        %v3704 = vadd.f32 0.0, %v3703
        %v3705 = vpop.f32.mrf.mxu0
        %v3706 = vpop.f32.mrf.mxu0
        %v3707 = vadd.f32 0.0, %v3706
        %v3708 = vpop.f32.mrf.mxu0
        %3709 = vmatprep.mubr.bf16.mxu0 0
        %3710 = vmatmul.mubr.bf16.gmra.mxu0 %v3617
        %v3711 = vpop.f32.mrf.mxu0
        %v3712 = vadd.f32 0.0, %v3711
        %v3713 = vpop.f32.mrf.mxu0
        %v3714 = vpop.f32.mrf.mxu0
        %v3715 = vadd.f32 0.0, %v3714
        %v3716 = vpop.f32.mrf.mxu0
        %3717 = vmatprep.mubr.bf16.mxu0 0
        %3718 = vmatmul.mubr.bf16.gmra.mxu0 %v3620
        %v3719 = vpop.f32.mrf.mxu0
        %v3720 = vadd.f32 0.0, %v3719
        %v3721 = vpop.f32.mrf.mxu0
        %v3722 = vpop.f32.mrf.mxu0
        %v3723 = vadd.f32 0.0, %v3722
        %v3724 = vpop.f32.mrf.mxu0
        %3725 = vmatprep.mubr.bf16.mxu0 0
        %3726 = vmatmul.mubr.bf16.gmra.mxu0 %v3623
        %v3727 = vpop.f32.mrf.mxu0
        %v3728 = vadd.f32 0.0, %v3727
        %v3729 = vpop.f32.mrf.mxu0
        %v3730 = vpop.f32.mrf.mxu0
        %v3731 = vadd.f32 0.0, %v3730
        %v3732 = vpop.f32.mrf.mxu0
        %3733 = vmatprep.mubr.bf16.mxu0 0
        %3734 = vmatmul.mubr.bf16.gmra.mxu0 %v3626
        %v3735 = vpop.f32.mrf.mxu0
        %v3736 = vadd.f32 0.0, %v3735
        %v3737 = vpop.f32.mrf.mxu0
        %v3738 = vpop.f32.mrf.mxu0
        %v3739 = vadd.f32 0.0, %v3738
        %v3740 = vpop.f32.mrf.mxu0
        %3741 = vmatprep.mubr.bf16.mxu0 0
        %3742 = vmatmul.mubr.bf16.gmra.mxu0 %v3629
        %v3743 = vpop.f32.mrf.mxu0
        %v3744 = vadd.f32 0.0, %v3743
        %v3745 = vpop.f32.mrf.mxu0
        %v3746 = vpop.f32.mrf.mxu0
        %v3747 = vadd.f32 0.0, %v3746
        %v3748 = vpop.f32.mrf.mxu0
        %3749 = vmatprep.mubr.bf16.mxu0 0
        %3750 = vmatmul.mubr.bf16.gmra.mxu0 %v3632
        %v3751 = vpop.f32.mrf.mxu0
        %v3752 = vadd.f32 0.0, %v3751
        %v3753 = vpop.f32.mrf.mxu0
        %v3754 = vpop.f32.mrf.mxu0
        %v3755 = vadd.f32 0.0, %v3754
        %v3756 = vpop.f32.mrf.mxu0
        %3757 = vmatprep.mubr.bf16.mxu0 0
        %3758 = vmatmul.mubr.bf16.gmra.mxu0 %v3635
        %v3759 = vpop.f32.mrf.mxu0
        %v3760 = vadd.f32 0.0, %v3759
        %v3761 = vpop.f32.mrf.mxu0
        %v3762 = vpop.f32.mrf.mxu0
        %v3763 = vadd.f32 0.0, %v3762
        %v3764 = vpop.f32.mrf.mxu0
        %3765 = vmatprep.mubr.bf16.mxu0 0
        %3766 = vmatmul.mubr.bf16.gmra.mxu0 %v3638
        %v3767 = vpop.f32.mrf.mxu0
        %v3768 = vadd.f32 0.0, %v3767
        %v3769 = vpop.f32.mrf.mxu0
        %v3770 = vpop.f32.mrf.mxu0
        %v3771 = vadd.f32 0.0, %v3770
        %v3772 = vpop.f32.mrf.mxu0
        %3773 = vmatprep.mubr.bf16.mxu0 0
        %3774 = vmatmul.mubr.bf16.gmra.mxu0 %v3641
        %v3775 = vpop.f32.mrf.mxu0
        %v3776 = vadd.f32 0.0, %v3775
        %v3777 = vpop.f32.mrf.mxu0
        %v3778 = vpop.f32.mrf.mxu0
        %v3779 = vadd.f32 0.0, %v3778
        %v3780 = vpop.f32.mrf.mxu0
        %3781 = vmatprep.mubr.bf16.mxu0 0
        %3782 = vmatmul.mubr.bf16.gmra.mxu0 %v3644
        %v3783 = vpop.f32.mrf.mxu0
        %v3784 = vadd.f32 0.0, %v3783
        %v3785 = vpop.f32.mrf.mxu0
        %v3786 = vpop.f32.mrf.mxu0
        %v3787 = vadd.f32 0.0, %v3786
        %v3788 = vpop.f32.mrf.mxu0
        %3789 = vmatprep.mubr.bf16.mxu0 0
        %3790 = vmatmul.mubr.bf16.gmra.mxu0 %v3647
        %v3791 = vpop.f32.mrf.mxu0
        %v3792 = vadd.f32 0.0, %v3791
        %v3793 = vpop.f32.mrf.mxu0
        %v3794 = vpop.f32.mrf.mxu0
        %v3795 = vadd.f32 0.0, %v3794
        %v3796 = vpop.f32.mrf.mxu0
        %3797 = vmatprep.mubr.bf16.mxu0 0
        %3798 = vmatmul.mubr.bf16.gmra.mxu0 %v3650
        %v3799 = vpop.f32.mrf.mxu0
        %v3800 = vadd.f32 0.0, %v3799
        %v3801 = vpop.f32.mrf.mxu0
        %v3802 = vpop.f32.mrf.mxu0
        %v3803 = vadd.f32 0.0, %v3802
        %v3804 = vpop.f32.mrf.mxu0
        %3805 = vmatprep.mubr.bf16.mxu0 0
        %3806 = vmatmul.mubr.bf16.gmra.mxu0 %v3653
        %v3807 = vpop.f32.mrf.mxu0
        %v3808 = vadd.f32 0.0, %v3807
        %v3809 = vpop.f32.mrf.mxu0
        %v3810 = vpop.f32.mrf.mxu0
        %v3811 = vadd.f32 0.0, %v3810
        %v3812 = vpop.f32.mrf.mxu0
        %3813 = vmatprep.mubr.bf16.mxu0 0
        %3814 = vmatmul.mubr.bf16.gmra.mxu0 %v3656
        %v3815 = vpop.f32.mrf.mxu0
        %v3816 = vadd.f32 0.0, %v3815
        %v3817 = vpop.f32.mrf.mxu0
        %v3818 = vpop.f32.mrf.mxu0
        %v3819 = vadd.f32 0.0, %v3818
        %v3820 = vpop.f32.mrf.mxu0
        %3821 = vdwg.mxu0
        %v3822 = vadd.f32 %v3496, %v3696
        %v3823 = vadd.f32 %v3497, %v3699
        %v3824 = vadd.f32 %v3498, %v3704
        %v3825 = vadd.f32 %v3499, %v3707
        %v3826 = vadd.f32 %v3500, %v3712
        %v3827 = vadd.f32 %v3501, %v3715
        %v3828 = vadd.f32 %v3502, %v3720
        %v3829 = vadd.f32 %v3503, %v3723
        %v3830 = vadd.f32 %v3504, %v3728
        %v3831 = vadd.f32 %v3505, %v3731
        %v3832 = vadd.f32 %v3506, %v3736
        %v3833 = vadd.f32 %v3507, %v3739
        %v3834 = vadd.f32 %v3508, %v3744
        %v3835 = vadd.f32 %v3509, %v3747
        %v3836 = vadd.f32 %v3510, %v3752
        %v3837 = vadd.f32 %v3511, %v3755
        %v3838 = vadd.f32 %v3512, %v3760
        %v3839 = vadd.f32 %v3513, %v3763
        %v3840 = vadd.f32 %v3514, %v3768
        %v3841 = vadd.f32 %v3515, %v3771
        %v3842 = vadd.f32 %v3516, %v3776
        %v3843 = vadd.f32 %v3517, %v3779
        %v3844 = vadd.f32 %v3518, %v3784
        %v3845 = vadd.f32 %v3519, %v3787
        %v3846 = vadd.f32 %v3520, %v3792
        %v3847 = vadd.f32 %v3521, %v3795
        %v3848 = vadd.f32 %v3522, %v3800
        %v3849 = vadd.f32 %v3523, %v3803
        %v3850 = vadd.f32 %v3524, %v3808
        %v3851 = vadd.f32 %v3525, %v3811
        %v3852 = vadd.f32 %v3526, %v3816
        %v3853 = vadd.f32 %v3527, %v3819
        %v3854 = vld [vmem:[%s2] sm:$0x1]
        %v3856 = vlaneseq
        %v3857 = vshrl.u32 %v3856, 7
        %v3858 = vsub.s32 0, %v3857
        %v3859 = vrot.slane %v3854, %v3858
        %v3861 = vadd.f32 %v3822, %v3859
        %v3862 = vadd.f32 %v3823, %v3859
        %v3863 = vadd.f32 %v3824, %v3859
        %v3864 = vadd.f32 %v3825, %v3859
        %v3865 = vadd.f32 %v3826, %v3859
        %v3866 = vadd.f32 %v3827, %v3859
        %v3867 = vadd.f32 %v3828, %v3859
        %v3868 = vadd.f32 %v3829, %v3859
        %v3869 = vadd.f32 %v3830, %v3859
        %v3870 = vadd.f32 %v3831, %v3859
        %v3871 = vadd.f32 %v3832, %v3859
        %v3872 = vadd.f32 %v3833, %v3859
        %v3873 = vadd.f32 %v3834, %v3859
        %v3874 = vadd.f32 %v3835, %v3859
        %v3875 = vadd.f32 %v3836, %v3859
        %v3876 = vadd.f32 %v3837, %v3859
        %v3877 = vadd.f32 %v3838, %v3859
        %v3878 = vadd.f32 %v3839, %v3859
        %v3879 = vadd.f32 %v3840, %v3859
        %v3880 = vadd.f32 %v3841, %v3859
        %v3881 = vadd.f32 %v3842, %v3859
        %v3882 = vadd.f32 %v3843, %v3859
        %v3883 = vadd.f32 %v3844, %v3859
        %v3884 = vadd.f32 %v3845, %v3859
        %v3885 = vadd.f32 %v3846, %v3859
        %v3886 = vadd.f32 %v3847, %v3859
        %v3887 = vadd.f32 %v3848, %v3859
        %v3888 = vadd.f32 %v3849, %v3859
        %v3889 = vadd.f32 %v3850, %v3859
        %v3890 = vadd.f32 %v3851, %v3859
        %v3891 = vadd.f32 %v3852, %v3859
        %v3892 = vadd.f32 %v3853, %v3859
        %v3893 = vmax.f32 %v3861, 0.0
        %v3894 = vmax.f32 %v3862, 0.0
        %v3895 = vmax.f32 %v3863, 0.0
        %v3896 = vmax.f32 %v3864, 0.0
        %v3897 = vmax.f32 %v3865, 0.0
        %v3898 = vmax.f32 %v3866, 0.0
        %v3899 = vmax.f32 %v3867, 0.0
        %v3900 = vmax.f32 %v3868, 0.0
        %v3901 = vmax.f32 %v3869, 0.0
        %v3902 = vmax.f32 %v3870, 0.0
        %v3903 = vmax.f32 %v3871, 0.0
        %v3904 = vmax.f32 %v3872, 0.0
        %v3905 = vmax.f32 %v3873, 0.0
        %v3906 = vmax.f32 %v3874, 0.0
        %v3907 = vmax.f32 %v3875, 0.0
        %v3908 = vmax.f32 %v3876, 0.0
        %v3909 = vmax.f32 %v3877, 0.0
        %v3910 = vmax.f32 %v3878, 0.0
        %v3911 = vmax.f32 %v3879, 0.0
        %v3912 = vmax.f32 %v3880, 0.0
        %v3913 = vmax.f32 %v3881, 0.0
        %v3914 = vmax.f32 %v3882, 0.0
        %v3915 = vmax.f32 %v3883, 0.0
        %v3916 = vmax.f32 %v3884, 0.0
        %v3917 = vmax.f32 %v3885, 0.0
        %v3918 = vmax.f32 %v3886, 0.0
        %v3919 = vmax.f32 %v3887, 0.0
        %v3920 = vmax.f32 %v3888, 0.0
        %v3921 = vmax.f32 %v3889, 0.0
        %v3922 = vmax.f32 %v3890, 0.0
        %v3923 = vmax.f32 %v3891, 0.0
        %v3924 = vmax.f32 %v3892, 0.0
        %3925 = vst.msk [vmem:[#allocation3] sm:$0xff] %vm393, %v3893
        %3926 = vst.msk [vmem:[#allocation3 + $0x8] sm:$0xff] %vm393, %v3894
        %3927 = vst.msk [vmem:[#allocation3 + $0x10] sm:$0xff] %vm393, %v3895
        %3928 = vst.msk [vmem:[#allocation3 + $0x18] sm:$0xff] %vm393, %v3896
        %3929 = vst.msk [vmem:[#allocation3 + $0x20] sm:$0xff] %vm393, %v3897
        %3930 = vst.msk [vmem:[#allocation3 + $0x28] sm:$0xff] %vm393, %v3898
        %3931 = vst.msk [vmem:[#allocation3 + $0x30] sm:$0xff] %vm393, %v3899
        %3932 = vst.msk [vmem:[#allocation3 + $0x38] sm:$0xff] %vm393, %v3900
        %3933 = vst.msk [vmem:[#allocation3 + $0x40] sm:$0xff] %vm393, %v3901
        %3934 = vst.msk [vmem:[#allocation3 + $0x48] sm:$0xff] %vm393, %v3902
        %3935 = vst.msk [vmem:[#allocation3 + $0x50] sm:$0xff] %vm393, %v3903
        %3936 = vst.msk [vmem:[#allocation3 + $0x58] sm:$0xff] %vm393, %v3904
        %3937 = vst.msk [vmem:[#allocation3 + $0x60] sm:$0xff] %vm393, %v3905
        %3938 = vst.msk [vmem:[#allocation3 + $0x68] sm:$0xff] %vm393, %v3906
        %3939 = vst.msk [vmem:[#allocation3 + $0x70] sm:$0xff] %vm393, %v3907
        %3940 = vst.msk [vmem:[#allocation3 + $0x78] sm:$0xff] %vm393, %v3908
        %3941 = vst.msk [vmem:[#allocation3 + $0x80] sm:$0xff] %vm393, %v3909
        %3942 = vst.msk [vmem:[#allocation3 + $0x88] sm:$0xff] %vm393, %v3910
        %3943 = vst.msk [vmem:[#allocation3 + $0x90] sm:$0xff] %vm393, %v3911
        %3944 = vst.msk [vmem:[#allocation3 + $0x98] sm:$0xff] %vm393, %v3912
        %3945 = vst.msk [vmem:[#allocation3 + $0xa0] sm:$0xff] %vm393, %v3913
        %3946 = vst.msk [vmem:[#allocation3 + $0xa8] sm:$0xff] %vm393, %v3914
        %3947 = vst.msk [vmem:[#allocation3 + $0xb0] sm:$0xff] %vm393, %v3915
        %3948 = vst.msk [vmem:[#allocation3 + $0xb8] sm:$0xff] %vm393, %v3916
        %3949 = vst.msk [vmem:[#allocation3 + $0xc0] sm:$0xff] %vm393, %v3917
        %3950 = vst.msk [vmem:[#allocation3 + $0xc8] sm:$0xff] %vm393, %v3918
        %3951 = vst.msk [vmem:[#allocation3 + $0xd0] sm:$0xff] %vm393, %v3919
        %3952 = vst.msk [vmem:[#allocation3 + $0xd8] sm:$0xff] %vm393, %v3920
        %3953 = vst.msk [vmem:[#allocation3 + $0xe0] sm:$0xff] %vm393, %v3921
        %3954 = vst.msk [vmem:[#allocation3 + $0xe8] sm:$0xff] %vm393, %v3922
        %3955 = vst.msk [vmem:[#allocation3 + $0xf0] sm:$0xff] %vm393, %v3923
        %3956 = vst.msk [vmem:[#allocation3 + $0xf8] sm:$0xff] %vm393, %v3924
        %v3957 = vld [vmem:[#allocation3] ss:$2 sm:$0xff]
        %s3958 = scalar_lea.vmem [#allocation3], 1
        %v3959 = vld [vmem:[%s3958] ss:$2 sm:$0xff]
        %s3960 = scalar_lea.vmem [#allocation3], 16
        %v3961 = vld [vmem:[%s3960] ss:$2 sm:$0xff]
        %s3962 = scalar_lea.vmem [#allocation3], 17
        %v3963 = vld [vmem:[%s3962] ss:$2 sm:$0xff]
        %v3964 = vmax.f32 %v3957, %v3959
        %v3965 = vmax.f32 %v3961, %v3963
        %v3966 = vmax.f32 %v3964, %v3965
        %3967 = vst.msk [vmem:[#allocation4 + $0x9] sm:$0xff] %vm393, %v3966
        %s3968 = scalar_lea.vmem [#allocation3], 32
        %v3969 = vld [vmem:[%s3968] ss:$2 sm:$0xff]
        %s3970 = scalar_lea.vmem [#allocation3], 33
        %v3971 = vld [vmem:[%s3970] ss:$2 sm:$0xff]
        %s3972 = scalar_lea.vmem [#allocation3], 48
        %v3973 = vld [vmem:[%s3972] ss:$2 sm:$0xff]
        %s3974 = scalar_lea.vmem [#allocation3], 49
        %v3975 = vld [vmem:[%s3974] ss:$2 sm:$0xff]
        %v3976 = vmax.f32 %v3969, %v3971
        %v3977 = vmax.f32 %v3973, %v3975
        %v3978 = vmax.f32 %v3976, %v3977
        %3979 = vst.msk [vmem:[#allocation4 + $0x11] sm:$0xff] %vm393, %v3978
        %s3980 = scalar_lea.vmem [#allocation3], 64
        %v3981 = vld [vmem:[%s3980] ss:$2 sm:$0xff]
        %s3982 = scalar_lea.vmem [#allocation3], 65
        %v3983 = vld [vmem:[%s3982] ss:$2 sm:$0xff]
        %s3984 = scalar_lea.vmem [#allocation3], 80
        %v3985 = vld [vmem:[%s3984] ss:$2 sm:$0xff]
        %s3986 = scalar_lea.vmem [#allocation3], 81
        %v3987 = vld [vmem:[%s3986] ss:$2 sm:$0xff]
        %v3988 = vmax.f32 %v3981, %v3983
        %v3989 = vmax.f32 %v3985, %v3987
        %v3990 = vmax.f32 %v3988, %v3989
        %3991 = vst.msk [vmem:[#allocation4 + $0x19] sm:$0xff] %vm393, %v3990
        %s3992 = scalar_lea.vmem [#allocation3], 96
        %v3993 = vld [vmem:[%s3992] ss:$2 sm:$0xff]
        %s3994 = scalar_lea.vmem [#allocation3], 97
        %v3995 = vld [vmem:[%s3994] ss:$2 sm:$0xff]
        %s3996 = scalar_lea.vmem [#allocation3], 112
        %v3997 = vld [vmem:[%s3996] ss:$2 sm:$0xff]
        %s3998 = scalar_lea.vmem [#allocation3], 113
        %v3999 = vld [vmem:[%s3998] ss:$2 sm:$0xff]
        %v4000 = vmax.f32 %v3993, %v3995
        %v4001 = vmax.f32 %v3997, %v3999
        %v4002 = vmax.f32 %v4000, %v4001
        %4003 = vst.msk [vmem:[#allocation4 + $0x21] sm:$0xff] %vm393, %v4002
        %s4004 = scalar_lea.vmem [#allocation3], 128
        %v4005 = vld [vmem:[%s4004] ss:$2 sm:$0xff]
        %s4006 = scalar_lea.vmem [#allocation3], 129
        %v4007 = vld [vmem:[%s4006] ss:$2 sm:$0xff]
        %s4008 = scalar_lea.vmem [#allocation3], 144
        %v4009 = vld [vmem:[%s4008] ss:$2 sm:$0xff]
        %s4010 = scalar_lea.vmem [#allocation3], 145
        %v4011 = vld [vmem:[%s4010] ss:$2 sm:$0xff]
        %v4012 = vmax.f32 %v4005, %v4007
        %v4013 = vmax.f32 %v4009, %v4011
        %v4014 = vmax.f32 %v4012, %v4013
        %4015 = vst.msk [vmem:[#allocation4 + $0x29] sm:$0xff] %vm393, %v4014
        %s4016 = scalar_lea.vmem [#allocation3], 160
        %v4017 = vld [vmem:[%s4016] ss:$2 sm:$0xff]
        %s4018 = scalar_lea.vmem [#allocation3], 161
        %v4019 = vld [vmem:[%s4018] ss:$2 sm:$0xff]
        %s4020 = scalar_lea.vmem [#allocation3], 176
        %v4021 = vld [vmem:[%s4020] ss:$2 sm:$0xff]
        %s4022 = scalar_lea.vmem [#allocation3], 177
        %v4023 = vld [vmem:[%s4022] ss:$2 sm:$0xff]
        %v4024 = vmax.f32 %v4017, %v4019
        %v4025 = vmax.f32 %v4021, %v4023
        %v4026 = vmax.f32 %v4024, %v4025
        %4027 = vst.msk [vmem:[#allocation4 + $0x31] sm:$0xff] %vm393, %v4026
        %s4028 = scalar_lea.vmem [#allocation3], 192
        %v4029 = vld [vmem:[%s4028] ss:$2 sm:$0xff]
        %s4030 = scalar_lea.vmem [#allocation3], 193
        %v4031 = vld [vmem:[%s4030] ss:$2 sm:$0xff]
        %s4032 = scalar_lea.vmem [#allocation3], 208
        %v4033 = vld [vmem:[%s4032] ss:$2 sm:$0xff]
        %s4034 = scalar_lea.vmem [#allocation3], 209
        %v4035 = vld [vmem:[%s4034] ss:$2 sm:$0xff]
        %v4036 = vmax.f32 %v4029, %v4031
        %v4037 = vmax.f32 %v4033, %v4035
        %v4038 = vmax.f32 %v4036, %v4037
        %4039 = vst.msk [vmem:[#allocation4 + $0x39] sm:$0xff] %vm393, %v4038
        %s4040 = scalar_lea.vmem [#allocation3], 224
        %v4041 = vld [vmem:[%s4040] ss:$2 sm:$0xff]
        %s4042 = scalar_lea.vmem [#allocation3], 225
        %v4043 = vld [vmem:[%s4042] ss:$2 sm:$0xff]
        %s4044 = scalar_lea.vmem [#allocation3], 240
        %v4045 = vld [vmem:[%s4044] ss:$2 sm:$0xff]
        %s4046 = scalar_lea.vmem [#allocation3], 241
        %v4047 = vld [vmem:[%s4046] ss:$2 sm:$0xff]
        %v4048 = vmax.f32 %v4041, %v4043
        %v4049 = vmax.f32 %v4045, %v4047
        %v4050 = vmax.f32 %v4048, %v4049
        %4051 = vst.msk [vmem:[#allocation4 + $0x41] sm:$0xff] %vm393, %v4050
        %vm4052 = vcmp.lt.s32.totalorder %v469, 0
        %v4053 = vsub.s32 0, %v469
        %v4054 = vsel %vm4052, %v4053, %v469
        %v4055 = vshrl.u32 %v4054, 3
        %v4056 = vand.u32 %v4054, 7
        %v4057 = vsub.s32 0, %v4056
        %v4058 = vsel %vm4052, %v4057, %v4056
        %vm4059 = vcmp.lt.s32.totalorder %v470, 0
        %v4060 = vsub.s32 0, %v470
        %v4061 = vsel %vm4059, %v4060, %v470
        %v4062 = vshrl.u32 %v4061, 3
        %v4063 = vand.u32 %v4061, 7
        %v4064 = vsub.s32 0, %v4063
        %v4065 = vsel %vm4059, %v4064, %v4063
        %vm4066 = vcmp.lt.s32.totalorder %v471, 0
        %v4067 = vsub.s32 0, %v471
        %v4068 = vsel %vm4066, %v4067, %v471
        %v4069 = vshrl.u32 %v4068, 3
        %v4070 = vand.u32 %v4068, 7
        %v4071 = vsub.s32 0, %v4070
        %v4072 = vsel %vm4066, %v4071, %v4070
        %vm4073 = vcmp.lt.s32.totalorder %v472, 0
        %v4074 = vsub.s32 0, %v472
        %v4075 = vsel %vm4073, %v4074, %v472
        %v4076 = vshrl.u32 %v4075, 3
        %v4077 = vand.u32 %v4075, 7
        %v4078 = vsub.s32 0, %v4077
        %v4079 = vsel %vm4073, %v4078, %v4077
        %vm4080 = vcmp.lt.s32.totalorder %v473, 0
        %v4081 = vsub.s32 0, %v473
        %v4082 = vsel %vm4080, %v4081, %v473
        %v4083 = vshrl.u32 %v4082, 3
        %v4084 = vand.u32 %v4082, 7
        %v4085 = vsub.s32 0, %v4084
        %v4086 = vsel %vm4080, %v4085, %v4084
        %vm4087 = vcmp.lt.s32.totalorder %v474, 0
        %v4088 = vsub.s32 0, %v474
        %v4089 = vsel %vm4087, %v4088, %v474
        %v4090 = vshrl.u32 %v4089, 3
        %v4091 = vand.u32 %v4089, 7
        %v4092 = vsub.s32 0, %v4091
        %v4093 = vsel %vm4087, %v4092, %v4091
        %vm4094 = vcmp.lt.s32.totalorder %v475, 0
        %v4095 = vsub.s32 0, %v475
        %v4096 = vsel %vm4094, %v4095, %v475
        %v4097 = vshrl.u32 %v4096, 3
        %v4098 = vand.u32 %v4096, 7
        %v4099 = vsub.s32 0, %v4098
        %v4100 = vsel %vm4094, %v4099, %v4098
        %vm4101 = vcmp.lt.s32.totalorder %v476, 0
        %v4102 = vsub.s32 0, %v476
        %v4103 = vsel %vm4101, %v4102, %v476
        %v4104 = vshrl.u32 %v4103, 3
        %v4105 = vand.u32 %v4103, 7
        %v4106 = vsub.s32 0, %v4105
        %v4107 = vsel %vm4101, %v4106, %v4105
        %vm4108 = vcmp.ne.s32.totalorder %v4058, 0
        %vm4109 = vcmp.ne.s32.totalorder %v4065, 0
        %vm4110 = vcmp.ne.s32.totalorder %v4072, 0
        %vm4111 = vcmp.ne.s32.totalorder %v4079, 0
        %vm4112 = vcmp.ne.s32.totalorder %v4086, 0
        %vm4113 = vcmp.ne.s32.totalorder %v4093, 0
        %vm4114 = vcmp.ne.s32.totalorder %v4100, 0
        %vm4115 = vcmp.ne.s32.totalorder %v4107, 0
        %vm4116 = vcmp.lt.s32.totalorder %v4058, 0
        %vm4117 = vcmp.lt.s32.totalorder %v4065, 0
        %vm4118 = vcmp.lt.s32.totalorder %v4072, 0
        %vm4119 = vcmp.lt.s32.totalorder %v4079, 0
        %vm4120 = vcmp.lt.s32.totalorder %v4086, 0
        %vm4121 = vcmp.lt.s32.totalorder %v4093, 0
        %vm4122 = vcmp.lt.s32.totalorder %v4100, 0
        %vm4123 = vcmp.lt.s32.totalorder %v4107, 0
        %vm4124 = vmand %vm4116, %vm4108
        %vm4125 = vmand %vm4117, %vm4109
        %vm4126 = vmand %vm4118, %vm4110
        %vm4127 = vmand %vm4119, %vm4111
        %vm4128 = vmand %vm4120, %vm4112
        %vm4129 = vmand %vm4121, %vm4113
        %vm4130 = vmand %vm4122, %vm4114
        %vm4131 = vmand %vm4123, %vm4115
        %v4132 = vadd.s32 %v4058, 8
        %v4133 = vadd.s32 %v4065, 8
        %v4134 = vadd.s32 %v4072, 8
        %v4135 = vadd.s32 %v4079, 8
        %v4136 = vadd.s32 %v4086, 8
        %v4137 = vadd.s32 %v4093, 8
        %v4138 = vadd.s32 %v4100, 8
        %v4139 = vadd.s32 %v4107, 8
        %v4140 = vsel %vm4124, %v4132, %v4058
        %v4141 = vsel %vm4125, %v4133, %v4065
        %v4142 = vsel %vm4126, %v4134, %v4072
        %v4143 = vsel %vm4127, %v4135, %v4079
        %v4144 = vsel %vm4128, %v4136, %v4086
        %v4145 = vsel %vm4129, %v4137, %v4093
        %v4146 = vsel %vm4130, %v4138, %v4100
        %v4147 = vsel %vm4131, %v4139, %v4107
        %vm4148 = vcmp.ne.s32.totalorder %v4140, 0
        %vm4149 = vcmp.ne.s32.totalorder %v4141, 0
        %vm4150 = vcmp.ne.s32.totalorder %v4142, 0
        %vm4151 = vcmp.ne.s32.totalorder %v4143, 0
        %vm4152 = vcmp.ne.s32.totalorder %v4144, 0
        %vm4153 = vcmp.ne.s32.totalorder %v4145, 0
        %vm4154 = vcmp.ne.s32.totalorder %v4146, 0
        %vm4155 = vcmp.ne.s32.totalorder %v4147, 0
        %vm4156 = vcmp.ne.s32.totalorder %v4140, 7
        %vm4157 = vcmp.ne.s32.totalorder %v4141, 7
        %vm4158 = vcmp.ne.s32.totalorder %v4142, 7
        %vm4159 = vcmp.ne.s32.totalorder %v4143, 7
        %vm4160 = vcmp.ne.s32.totalorder %v4144, 7
        %vm4161 = vcmp.ne.s32.totalorder %v4145, 7
        %vm4162 = vcmp.ne.s32.totalorder %v4146, 7
        %vm4163 = vcmp.ne.s32.totalorder %v4147, 7
        %v4164 = vld [vmem:[#allocation4] sm:$0xff]
        %v4165 = vld [vmem:[#allocation4 + $0x8] sm:$0xff]
        %v4166 = vld [vmem:[#allocation4 + $0x10] sm:$0xff]
        %v4167 = vld [vmem:[#allocation4 + $0x18] sm:$0xff]
        %v4168 = vld [vmem:[#allocation4 + $0x20] sm:$0xff]
        %v4169 = vld [vmem:[#allocation4 + $0x28] sm:$0xff]
        %v4170 = vld [vmem:[#allocation4 + $0x30] sm:$0xff]
        %v4171 = vld [vmem:[#allocation4 + $0x38] sm:$0xff]
        %v4172 = vsel %vm4148, 1, 0
        %v4173 = vsel %vm4149, 1, 0
        %v4174 = vsel %vm4150, 1, 0
        %v4175 = vsel %vm4151, 1, 0
        %v4176 = vsel %vm4152, 1, 0
        %v4177 = vsel %vm4153, 1, 0
        %v4178 = vsel %vm4154, 1, 0
        %v4179 = vsel %vm4155, 1, 0
        %vm4180 = vcmp.eq.s32.totalorder %v4172, 1
        %vm4181 = vcmp.eq.s32.totalorder %v4173, 1
        %vm4182 = vcmp.eq.s32.totalorder %v4174, 1
        %vm4183 = vcmp.eq.s32.totalorder %v4175, 1
        %vm4184 = vcmp.eq.s32.totalorder %v4176, 1
        %vm4185 = vcmp.eq.s32.totalorder %v4177, 1
        %vm4186 = vcmp.eq.s32.totalorder %v4178, 1
        %vm4187 = vcmp.eq.s32.totalorder %v4179, 1
        %v4188 = vsel %vm4180, %v4164, 0.0
        %v4189 = vsel %vm4181, %v4165, 0.0
        %v4190 = vsel %vm4182, %v4166, 0.0
        %v4191 = vsel %vm4183, %v4167, 0.0
        %v4192 = vsel %vm4184, %v4168, 0.0
        %v4193 = vsel %vm4185, %v4169, 0.0
        %v4194 = vsel %vm4186, %v4170, 0.0
        %v4195 = vsel %vm4187, %v4171, 0.0
        %v4196 = vpack.c.bf16 %v4189, %v4188
        %v4197 = vpack.c.bf16 %v4191, %v4190
        %v4198 = vpack.c.bf16 %v4193, %v4192
        %v4199 = vpack.c.bf16 %v4195, %v4194
        %v4200 = vld [vmem:[%s3] sm:$0xf]
        %v4201 = vld [vmem:[%s3 + $0x4] sm:$0xf]
        %v4202 = vld [vmem:[%s3 + $0x8] sm:$0xf]
        %v4203 = vld [vmem:[%s3 + $0xc] sm:$0xf]
        %v4204 = vld [vmem:[#allocation4 + $0x1] sm:$0xff]
        %v4205 = vld [vmem:[#allocation4 + $0x9] sm:$0xff]
        %v4206 = vld [vmem:[#allocation4 + $0x11] sm:$0xff]
        %v4207 = vld [vmem:[#allocation4 + $0x19] sm:$0xff]
        %v4208 = vld [vmem:[#allocation4 + $0x21] sm:$0xff]
        %v4209 = vld [vmem:[#allocation4 + $0x29] sm:$0xff]
        %v4210 = vld [vmem:[#allocation4 + $0x31] sm:$0xff]
        %v4211 = vld [vmem:[#allocation4 + $0x39] sm:$0xff]
        %v4212 = vpack.c.bf16 %v4205, %v4204
        %v4213 = vpack.c.bf16 %v4207, %v4206
        %v4214 = vpack.c.bf16 %v4209, %v4208
        %v4215 = vpack.c.bf16 %v4211, %v4210
        %s4216 = scalar_lea.vmem %s3, 16
        %v4217 = vld [vmem:[%s4216] sm:$0xf]
        %v4218 = vld [vmem:[%s4216 + $0x4] sm:$0xf]
        %v4219 = vld [vmem:[%s4216 + $0x8] sm:$0xf]
        %v4220 = vld [vmem:[%s4216 + $0xc] sm:$0xf]
        %v4225 = vunpack.c.l.b16 %v4217
        %v4226 = vunpack.c.l.b16 %v4218
        %v4227 = vunpack.c.l.b16 %v4219
        %v4228 = vunpack.c.l.b16 %v4220
        %v4229 = vpack.c.b16 %v4226, %v4225
        %v4230 = vpack.c.b16 %v4228, %v4227
        %v4234 = vsel %vm393, %v4212, 0
        %v4237 = vsel %vm393, %v4213, 0
        %v4240 = vsel %vm393, %v4214, 0
        %v4243 = vsel %vm393, %v4215, 0
        %4245 = vmatprep.subr.bf16.mxu0 0
        %4246 = vmatpush1.bf16.msra.mxu0 0
        %4247 = vmatprep.subr.bf16.mxu0 0
        %4248 = vmatpush1.bf16.msra.mxu0 0
        %4249 = vmatprep.subr.bf16.mxu0 0
        %4250 = vmatpush1.bf16.msra.mxu0 0
        %4251 = vmatprep.subr.bf16.mxu0 0
        %4252 = vmatpush1.bf16.msra.mxu0 0
        %4253 = vmatprep.subr.bf16.mxu0 0
        %4254 = vmatpush1.bf16.msra.mxu0 0
        %4255 = vmatprep.subr.bf16.mxu0 0
        %4256 = vmatpush1.bf16.msra.mxu0 0
        %4257 = vmatprep.subr.bf16.mxu0 0
        %4258 = vmatpush1.bf16.msra.mxu0 %v4230
        %4259 = vmatprep.subr.bf16.mxu0 0
        %4260 = vmatpush1.bf16.msra.mxu0 %v4229
        %4261 = vmatprep.subr.bf16.mxu0 0
        %4262 = vmatpush2.bf16.msra.mxu0 0
        %4263 = vmatprep.subr.bf16.mxu0 0
        %4264 = vmatpush2.bf16.msra.mxu0 0
        %4265 = vmatprep.subr.bf16.mxu0 0
        %4266 = vmatpush2.bf16.msra.mxu0 0
        %4267 = vmatprep.subr.bf16.mxu0 0
        %4268 = vmatpush2.bf16.msra.mxu0 0
        %4269 = vmatprep.subr.bf16.mxu0 0
        %4270 = vmatpush2.bf16.msra.mxu0 0
        %4271 = vmatprep.subr.bf16.mxu0 0
        %4272 = vmatpush2.bf16.msra.mxu0 0
        %4273 = vmatprep.subr.bf16.mxu0 0
        %4274 = vmatpush2.bf16.msra.mxu0 0
        %4275 = vmatprep.subr.bf16.mxu0 0
        %4276 = vmatpush2.bf16.msra.mxu0 0
        %4277 = vmatprep.mubr.bf16.mxu0 0
        %4278 = vmatmul.mubr.bf16.gmra.mxu0 %v4234
        %v4279 = vpop.f32.mrf.mxu0
        %v4280 = vadd.f32 0.0, %v4279
        %v4281 = vpop.f32.mrf.mxu0
        %v4282 = vpop.f32.mrf.mxu0
        %v4283 = vadd.f32 0.0, %v4282
        %v4284 = vpop.f32.mrf.mxu0
        %4285 = vmatprep.mubr.bf16.mxu0 0
        %4286 = vmatmul.mubr.bf16.gmra.mxu0 %v4237
        %v4287 = vpop.f32.mrf.mxu0
        %v4288 = vadd.f32 0.0, %v4287
        %v4289 = vpop.f32.mrf.mxu0
        %v4290 = vpop.f32.mrf.mxu0
        %v4291 = vadd.f32 0.0, %v4290
        %v4292 = vpop.f32.mrf.mxu0
        %4293 = vmatprep.mubr.bf16.mxu0 0
        %4294 = vmatmul.mubr.bf16.gmra.mxu0 %v4240
        %v4295 = vpop.f32.mrf.mxu0
        %v4296 = vadd.f32 0.0, %v4295
        %v4297 = vpop.f32.mrf.mxu0
        %v4298 = vpop.f32.mrf.mxu0
        %v4299 = vadd.f32 0.0, %v4298
        %v4300 = vpop.f32.mrf.mxu0
        %4301 = vmatprep.mubr.bf16.mxu0 0
        %4302 = vmatmul.mubr.bf16.gmra.mxu0 %v4243
        %v4303 = vpop.f32.mrf.mxu0
        %v4304 = vadd.f32 0.0, %v4303
        %v4305 = vpop.f32.mrf.mxu0
        %v4306 = vpop.f32.mrf.mxu0
        %v4307 = vadd.f32 0.0, %v4306
        %v4308 = vpop.f32.mrf.mxu0
        %4309 = vdwg.mxu0
        %v4314 = vunpack.c.l.b16 %v4200
        %v4315 = vunpack.c.l.b16 %v4201
        %v4316 = vunpack.c.l.b16 %v4202
        %v4317 = vunpack.c.l.b16 %v4203
        %v4318 = vpack.c.b16 %v4315, %v4314
        %v4319 = vpack.c.b16 %v4317, %v4316
        %v4323 = vsel %vm393, %v4196, 0
        %v4326 = vsel %vm393, %v4197, 0
        %v4329 = vsel %vm393, %v4198, 0
        %v4332 = vsel %vm393, %v4199, 0
        %4334 = vmatprep.subr.bf16.mxu0 0
        %4335 = vmatpush1.bf16.msra.mxu0 0
        %4336 = vmatprep.subr.bf16.mxu0 0
        %4337 = vmatpush1.bf16.msra.mxu0 0
        %4338 = vmatprep.subr.bf16.mxu0 0
        %4339 = vmatpush1.bf16.msra.mxu0 0
        %4340 = vmatprep.subr.bf16.mxu0 0
        %4341 = vmatpush1.bf16.msra.mxu0 0
        %4342 = vmatprep.subr.bf16.mxu0 0
        %4343 = vmatpush1.bf16.msra.mxu0 0
        %4344 = vmatprep.subr.bf16.mxu0 0
        %4345 = vmatpush1.bf16.msra.mxu0 0
        %4346 = vmatprep.subr.bf16.mxu0 0
        %4347 = vmatpush1.bf16.msra.mxu0 %v4319
        %4348 = vmatprep.subr.bf16.mxu0 0
        %4349 = vmatpush1.bf16.msra.mxu0 %v4318
        %4350 = vmatprep.subr.bf16.mxu0 0
        %4351 = vmatpush2.bf16.msra.mxu0 0
        %4352 = vmatprep.subr.bf16.mxu0 0
        %4353 = vmatpush2.bf16.msra.mxu0 0
        %4354 = vmatprep.subr.bf16.mxu0 0
        %4355 = vmatpush2.bf16.msra.mxu0 0
        %4356 = vmatprep.subr.bf16.mxu0 0
        %4357 = vmatpush2.bf16.msra.mxu0 0
        %4358 = vmatprep.subr.bf16.mxu0 0
        %4359 = vmatpush2.bf16.msra.mxu0 0
        %4360 = vmatprep.subr.bf16.mxu0 0
        %4361 = vmatpush2.bf16.msra.mxu0 0
        %4362 = vmatprep.subr.bf16.mxu0 0
        %4363 = vmatpush2.bf16.msra.mxu0 0
        %4364 = vmatprep.subr.bf16.mxu0 0
        %4365 = vmatpush2.bf16.msra.mxu0 0
        %4366 = vmatprep.mubr.bf16.mxu0 0
        %4367 = vmatmul.mubr.bf16.gmra.mxu0 %v4323
        %v4368 = vpop.f32.mrf.mxu0
        %v4369 = vadd.f32 %v4280, %v4368
        %v4370 = vpop.f32.mrf.mxu0
        %v4371 = vpop.f32.mrf.mxu0
        %v4372 = vadd.f32 %v4283, %v4371
        %v4373 = vpop.f32.mrf.mxu0
        %4374 = vmatprep.mubr.bf16.mxu0 0
        %4375 = vmatmul.mubr.bf16.gmra.mxu0 %v4326
        %v4376 = vpop.f32.mrf.mxu0
        %v4377 = vadd.f32 %v4288, %v4376
        %v4378 = vpop.f32.mrf.mxu0
        %v4379 = vpop.f32.mrf.mxu0
        %v4380 = vadd.f32 %v4291, %v4379
        %v4381 = vpop.f32.mrf.mxu0
        %4382 = vmatprep.mubr.bf16.mxu0 0
        %4383 = vmatmul.mubr.bf16.gmra.mxu0 %v4329
        %v4384 = vpop.f32.mrf.mxu0
        %v4385 = vadd.f32 %v4296, %v4384
        %v4386 = vpop.f32.mrf.mxu0
        %v4387 = vpop.f32.mrf.mxu0
        %v4388 = vadd.f32 %v4299, %v4387
        %v4389 = vpop.f32.mrf.mxu0
        %4390 = vmatprep.mubr.bf16.mxu0 0
        %4391 = vmatmul.mubr.bf16.gmra.mxu0 %v4332
        %v4392 = vpop.f32.mrf.mxu0
        %v4393 = vadd.f32 %v4304, %v4392
        %v4394 = vpop.f32.mrf.mxu0
        %v4395 = vpop.f32.mrf.mxu0
        %v4396 = vadd.f32 %v4307, %v4395
        %v4397 = vpop.f32.mrf.mxu0
        %4398 = vdwg.mxu0
        %v4399 = vld [vmem:[#allocation4 + $0x2] sm:$0xff]
        %v4400 = vld [vmem:[#allocation4 + $0xa] sm:$0xff]
        %v4401 = vld [vmem:[#allocation4 + $0x12] sm:$0xff]
        %v4402 = vld [vmem:[#allocation4 + $0x1a] sm:$0xff]
        %v4403 = vld [vmem:[#allocation4 + $0x22] sm:$0xff]
        %v4404 = vld [vmem:[#allocation4 + $0x2a] sm:$0xff]
        %v4405 = vld [vmem:[#allocation4 + $0x32] sm:$0xff]
        %v4406 = vld [vmem:[#allocation4 + $0x3a] sm:$0xff]
        %v4407 = vsel %vm4156, 1, 0
        %v4408 = vsel %vm4157, 1, 0
        %v4409 = vsel %vm4158, 1, 0
        %v4410 = vsel %vm4159, 1, 0
        %v4411 = vsel %vm4160, 1, 0
        %v4412 = vsel %vm4161, 1, 0
        %v4413 = vsel %vm4162, 1, 0
        %v4414 = vsel %vm4163, 1, 0
        %vm4415 = vcmp.eq.s32.totalorder %v4407, 1
        %vm4416 = vcmp.eq.s32.totalorder %v4408, 1
        %vm4417 = vcmp.eq.s32.totalorder %v4409, 1
        %vm4418 = vcmp.eq.s32.totalorder %v4410, 1
        %vm4419 = vcmp.eq.s32.totalorder %v4411, 1
        %vm4420 = vcmp.eq.s32.totalorder %v4412, 1
        %vm4421 = vcmp.eq.s32.totalorder %v4413, 1
        %vm4422 = vcmp.eq.s32.totalorder %v4414, 1
        %v4423 = vsel %vm4415, %v4399, 0.0
        %v4424 = vsel %vm4416, %v4400, 0.0
        %v4425 = vsel %vm4417, %v4401, 0.0
        %v4426 = vsel %vm4418, %v4402, 0.0
        %v4427 = vsel %vm4419, %v4403, 0.0
        %v4428 = vsel %vm4420, %v4404, 0.0
        %v4429 = vsel %vm4421, %v4405, 0.0
        %v4430 = vsel %vm4422, %v4406, 0.0
        %v4431 = vpack.c.bf16 %v4424, %v4423
        %v4432 = vpack.c.bf16 %v4426, %v4425
        %v4433 = vpack.c.bf16 %v4428, %v4427
        %v4434 = vpack.c.bf16 %v4430, %v4429
        %s4435 = scalar_lea.vmem %s3, 32
        %v4436 = vld [vmem:[%s4435] sm:$0xf]
        %v4437 = vld [vmem:[%s4435 + $0x4] sm:$0xf]
        %v4438 = vld [vmem:[%s4435 + $0x8] sm:$0xf]
        %v4439 = vld [vmem:[%s4435 + $0xc] sm:$0xf]
        %v4444 = vunpack.c.l.b16 %v4436
        %v4445 = vunpack.c.l.b16 %v4437
        %v4446 = vunpack.c.l.b16 %v4438
        %v4447 = vunpack.c.l.b16 %v4439
        %v4448 = vpack.c.b16 %v4445, %v4444
        %v4449 = vpack.c.b16 %v4447, %v4446
        %v4453 = vsel %vm393, %v4431, 0
        %v4456 = vsel %vm393, %v4432, 0
        %v4459 = vsel %vm393, %v4433, 0
        %v4462 = vsel %vm393, %v4434, 0
        %4464 = vmatprep.subr.bf16.mxu0 0
        %4465 = vmatpush1.bf16.msra.mxu0 0
        %4466 = vmatprep.subr.bf16.mxu0 0
        %4467 = vmatpush1.bf16.msra.mxu0 0
        %4468 = vmatprep.subr.bf16.mxu0 0
        %4469 = vmatpush1.bf16.msra.mxu0 0
        %4470 = vmatprep.subr.bf16.mxu0 0
        %4471 = vmatpush1.bf16.msra.mxu0 0
        %4472 = vmatprep.subr.bf16.mxu0 0
        %4473 = vmatpush1.bf16.msra.mxu0 0
        %4474 = vmatprep.subr.bf16.mxu0 0
        %4475 = vmatpush1.bf16.msra.mxu0 0
        %4476 = vmatprep.subr.bf16.mxu0 0
        %4477 = vmatpush1.bf16.msra.mxu0 %v4449
        %4478 = vmatprep.subr.bf16.mxu0 0
        %4479 = vmatpush1.bf16.msra.mxu0 %v4448
        %4480 = vmatprep.subr.bf16.mxu0 0
        %4481 = vmatpush2.bf16.msra.mxu0 0
        %4482 = vmatprep.subr.bf16.mxu0 0
        %4483 = vmatpush2.bf16.msra.mxu0 0
        %4484 = vmatprep.subr.bf16.mxu0 0
        %4485 = vmatpush2.bf16.msra.mxu0 0
        %4486 = vmatprep.subr.bf16.mxu0 0
        %4487 = vmatpush2.bf16.msra.mxu0 0
        %4488 = vmatprep.subr.bf16.mxu0 0
        %4489 = vmatpush2.bf16.msra.mxu0 0
        %4490 = vmatprep.subr.bf16.mxu0 0
        %4491 = vmatpush2.bf16.msra.mxu0 0
        %4492 = vmatprep.subr.bf16.mxu0 0
        %4493 = vmatpush2.bf16.msra.mxu0 0
        %4494 = vmatprep.subr.bf16.mxu0 0
        %4495 = vmatpush2.bf16.msra.mxu0 0
        %4496 = vmatprep.mubr.bf16.mxu0 0
        %4497 = vmatmul.mubr.bf16.gmra.mxu0 %v4453
        %v4498 = vpop.f32.mrf.mxu0
        %v4499 = vadd.f32 0.0, %v4498
        %v4500 = vpop.f32.mrf.mxu0
        %v4501 = vpop.f32.mrf.mxu0
        %v4502 = vadd.f32 0.0, %v4501
        %v4503 = vpop.f32.mrf.mxu0
        %4504 = vmatprep.mubr.bf16.mxu0 0
        %4505 = vmatmul.mubr.bf16.gmra.mxu0 %v4456
        %v4506 = vpop.f32.mrf.mxu0
        %v4507 = vadd.f32 0.0, %v4506
        %v4508 = vpop.f32.mrf.mxu0
        %v4509 = vpop.f32.mrf.mxu0
        %v4510 = vadd.f32 0.0, %v4509
        %v4511 = vpop.f32.mrf.mxu0
        %4512 = vmatprep.mubr.bf16.mxu0 0
        %4513 = vmatmul.mubr.bf16.gmra.mxu0 %v4459
        %v4514 = vpop.f32.mrf.mxu0
        %v4515 = vadd.f32 0.0, %v4514
        %v4516 = vpop.f32.mrf.mxu0
        %v4517 = vpop.f32.mrf.mxu0
        %v4518 = vadd.f32 0.0, %v4517
        %v4519 = vpop.f32.mrf.mxu0
        %4520 = vmatprep.mubr.bf16.mxu0 0
        %4521 = vmatmul.mubr.bf16.gmra.mxu0 %v4462
        %v4522 = vpop.f32.mrf.mxu0
        %v4523 = vadd.f32 0.0, %v4522
        %v4524 = vpop.f32.mrf.mxu0
        %v4525 = vpop.f32.mrf.mxu0
        %v4526 = vadd.f32 0.0, %v4525
        %v4527 = vpop.f32.mrf.mxu0
        %4528 = vdwg.mxu0
        %v4529 = vadd.f32 %v4369, %v4499
        %v4530 = vadd.f32 %v4372, %v4502
        %v4531 = vadd.f32 %v4377, %v4507
        %v4532 = vadd.f32 %v4380, %v4510
        %v4533 = vadd.f32 %v4385, %v4515
        %v4534 = vadd.f32 %v4388, %v4518
        %v4535 = vadd.f32 %v4393, %v4523
        %v4536 = vadd.f32 %v4396, %v4526
        %v4537 = vld [vmem:[#allocation4 + $0x8] sm:$0xff]
        %v4538 = vld [vmem:[#allocation4 + $0x10] sm:$0xff]
        %v4539 = vld [vmem:[#allocation4 + $0x18] sm:$0xff]
        %v4540 = vld [vmem:[#allocation4 + $0x20] sm:$0xff]
        %v4541 = vld [vmem:[#allocation4 + $0x28] sm:$0xff]
        %v4542 = vld [vmem:[#allocation4 + $0x30] sm:$0xff]
        %v4543 = vld [vmem:[#allocation4 + $0x38] sm:$0xff]
        %v4544 = vld [vmem:[#allocation4 + $0x40] sm:$0xff]
        %v4545 = vsel %vm4180, %v4537, 0.0
        %v4546 = vsel %vm4181, %v4538, 0.0
        %v4547 = vsel %vm4182, %v4539, 0.0
        %v4548 = vsel %vm4183, %v4540, 0.0
        %v4549 = vsel %vm4184, %v4541, 0.0
        %v4550 = vsel %vm4185, %v4542, 0.0
        %v4551 = vsel %vm4186, %v4543, 0.0
        %v4552 = vsel %vm4187, %v4544, 0.0
        %v4553 = vpack.c.bf16 %v4546, %v4545
        %v4554 = vpack.c.bf16 %v4548, %v4547
        %v4555 = vpack.c.bf16 %v4550, %v4549
        %v4556 = vpack.c.bf16 %v4552, %v4551
        %s4557 = scalar_lea.vmem %s3, 48
        %v4558 = vld [vmem:[%s4557] sm:$0xf]
        %v4559 = vld [vmem:[%s4557 + $0x4] sm:$0xf]
        %v4560 = vld [vmem:[%s4557 + $0x8] sm:$0xf]
        %v4561 = vld [vmem:[%s4557 + $0xc] sm:$0xf]
        %v4566 = vunpack.c.l.b16 %v4558
        %v4567 = vunpack.c.l.b16 %v4559
        %v4568 = vunpack.c.l.b16 %v4560
        %v4569 = vunpack.c.l.b16 %v4561
        %v4570 = vpack.c.b16 %v4567, %v4566
        %v4571 = vpack.c.b16 %v4569, %v4568
        %v4575 = vsel %vm393, %v4553, 0
        %v4578 = vsel %vm393, %v4554, 0
        %v4581 = vsel %vm393, %v4555, 0
        %v4584 = vsel %vm393, %v4556, 0
        %4586 = vmatprep.subr.bf16.mxu0 0
        %4587 = vmatpush1.bf16.msra.mxu0 0
        %4588 = vmatprep.subr.bf16.mxu0 0
        %4589 = vmatpush1.bf16.msra.mxu0 0
        %4590 = vmatprep.subr.bf16.mxu0 0
        %4591 = vmatpush1.bf16.msra.mxu0 0
        %4592 = vmatprep.subr.bf16.mxu0 0
        %4593 = vmatpush1.bf16.msra.mxu0 0
        %4594 = vmatprep.subr.bf16.mxu0 0
        %4595 = vmatpush1.bf16.msra.mxu0 0
        %4596 = vmatprep.subr.bf16.mxu0 0
        %4597 = vmatpush1.bf16.msra.mxu0 0
        %4598 = vmatprep.subr.bf16.mxu0 0
        %4599 = vmatpush1.bf16.msra.mxu0 %v4571
        %4600 = vmatprep.subr.bf16.mxu0 0
        %4601 = vmatpush1.bf16.msra.mxu0 %v4570
        %4602 = vmatprep.subr.bf16.mxu0 0
        %4603 = vmatpush2.bf16.msra.mxu0 0
        %4604 = vmatprep.subr.bf16.mxu0 0
        %4605 = vmatpush2.bf16.msra.mxu0 0
        %4606 = vmatprep.subr.bf16.mxu0 0
        %4607 = vmatpush2.bf16.msra.mxu0 0
        %4608 = vmatprep.subr.bf16.mxu0 0
        %4609 = vmatpush2.bf16.msra.mxu0 0
        %4610 = vmatprep.subr.bf16.mxu0 0
        %4611 = vmatpush2.bf16.msra.mxu0 0
        %4612 = vmatprep.subr.bf16.mxu0 0
        %4613 = vmatpush2.bf16.msra.mxu0 0
        %4614 = vmatprep.subr.bf16.mxu0 0
        %4615 = vmatpush2.bf16.msra.mxu0 0
        %4616 = vmatprep.subr.bf16.mxu0 0
        %4617 = vmatpush2.bf16.msra.mxu0 0
        %4618 = vmatprep.mubr.bf16.mxu0 0
        %4619 = vmatmul.mubr.bf16.gmra.mxu0 %v4575
        %v4620 = vpop.f32.mrf.mxu0
        %v4621 = vadd.f32 0.0, %v4620
        %v4622 = vpop.f32.mrf.mxu0
        %v4623 = vpop.f32.mrf.mxu0
        %v4624 = vadd.f32 0.0, %v4623
        %v4625 = vpop.f32.mrf.mxu0
        %4626 = vmatprep.mubr.bf16.mxu0 0
        %4627 = vmatmul.mubr.bf16.gmra.mxu0 %v4578
        %v4628 = vpop.f32.mrf.mxu0
        %v4629 = vadd.f32 0.0, %v4628
        %v4630 = vpop.f32.mrf.mxu0
        %v4631 = vpop.f32.mrf.mxu0
        %v4632 = vadd.f32 0.0, %v4631
        %v4633 = vpop.f32.mrf.mxu0
        %4634 = vmatprep.mubr.bf16.mxu0 0
        %4635 = vmatmul.mubr.bf16.gmra.mxu0 %v4581
        %v4636 = vpop.f32.mrf.mxu0
        %v4637 = vadd.f32 0.0, %v4636
        %v4638 = vpop.f32.mrf.mxu0
        %v4639 = vpop.f32.mrf.mxu0
        %v4640 = vadd.f32 0.0, %v4639
        %v4641 = vpop.f32.mrf.mxu0
        %4642 = vmatprep.mubr.bf16.mxu0 0
        %4643 = vmatmul.mubr.bf16.gmra.mxu0 %v4584
        %v4644 = vpop.f32.mrf.mxu0
        %v4645 = vadd.f32 0.0, %v4644
        %v4646 = vpop.f32.mrf.mxu0
        %v4647 = vpop.f32.mrf.mxu0
        %v4648 = vadd.f32 0.0, %v4647
        %v4649 = vpop.f32.mrf.mxu0
        %4650 = vdwg.mxu0
        %v4651 = vadd.f32 %v4529, %v4621
        %v4652 = vadd.f32 %v4530, %v4624
        %v4653 = vadd.f32 %v4531, %v4629
        %v4654 = vadd.f32 %v4532, %v4632
        %v4655 = vadd.f32 %v4533, %v4637
        %v4656 = vadd.f32 %v4534, %v4640
        %v4657 = vadd.f32 %v4535, %v4645
        %v4658 = vadd.f32 %v4536, %v4648
        %v4659 = vld [vmem:[#allocation4 + $0x9] sm:$0xff]
        %v4660 = vld [vmem:[#allocation4 + $0x11] sm:$0xff]
        %v4661 = vld [vmem:[#allocation4 + $0x19] sm:$0xff]
        %v4662 = vld [vmem:[#allocation4 + $0x21] sm:$0xff]
        %v4663 = vld [vmem:[#allocation4 + $0x29] sm:$0xff]
        %v4664 = vld [vmem:[#allocation4 + $0x31] sm:$0xff]
        %v4665 = vld [vmem:[#allocation4 + $0x39] sm:$0xff]
        %v4666 = vld [vmem:[#allocation4 + $0x41] sm:$0xff]
        %v4667 = vpack.c.bf16 %v4660, %v4659
        %v4668 = vpack.c.bf16 %v4662, %v4661
        %v4669 = vpack.c.bf16 %v4664, %v4663
        %v4670 = vpack.c.bf16 %v4666, %v4665
        %s4671 = scalar_lea.vmem %s3, 64
        %v4672 = vld [vmem:[%s4671] sm:$0xf]
        %v4673 = vld [vmem:[%s4671 + $0x4] sm:$0xf]
        %v4674 = vld [vmem:[%s4671 + $0x8] sm:$0xf]
        %v4675 = vld [vmem:[%s4671 + $0xc] sm:$0xf]
        %v4680 = vunpack.c.l.b16 %v4672
        %v4681 = vunpack.c.l.b16 %v4673
        %v4682 = vunpack.c.l.b16 %v4674
        %v4683 = vunpack.c.l.b16 %v4675
        %v4684 = vpack.c.b16 %v4681, %v4680
        %v4685 = vpack.c.b16 %v4683, %v4682
        %v4689 = vsel %vm393, %v4667, 0
        %v4692 = vsel %vm393, %v4668, 0
        %v4695 = vsel %vm393, %v4669, 0
        %v4698 = vsel %vm393, %v4670, 0
        %4700 = vmatprep.subr.bf16.mxu0 0
        %4701 = vmatpush1.bf16.msra.mxu0 0
        %4702 = vmatprep.subr.bf16.mxu0 0
        %4703 = vmatpush1.bf16.msra.mxu0 0
        %4704 = vmatprep.subr.bf16.mxu0 0
        %4705 = vmatpush1.bf16.msra.mxu0 0
        %4706 = vmatprep.subr.bf16.mxu0 0
        %4707 = vmatpush1.bf16.msra.mxu0 0
        %4708 = vmatprep.subr.bf16.mxu0 0
        %4709 = vmatpush1.bf16.msra.mxu0 0
        %4710 = vmatprep.subr.bf16.mxu0 0
        %4711 = vmatpush1.bf16.msra.mxu0 0
        %4712 = vmatprep.subr.bf16.mxu0 0
        %4713 = vmatpush1.bf16.msra.mxu0 %v4685
        %4714 = vmatprep.subr.bf16.mxu0 0
        %4715 = vmatpush1.bf16.msra.mxu0 %v4684
        %4716 = vmatprep.subr.bf16.mxu0 0
        %4717 = vmatpush2.bf16.msra.mxu0 0
        %4718 = vmatprep.subr.bf16.mxu0 0
        %4719 = vmatpush2.bf16.msra.mxu0 0
        %4720 = vmatprep.subr.bf16.mxu0 0
        %4721 = vmatpush2.bf16.msra.mxu0 0
        %4722 = vmatprep.subr.bf16.mxu0 0
        %4723 = vmatpush2.bf16.msra.mxu0 0
        %4724 = vmatprep.subr.bf16.mxu0 0
        %4725 = vmatpush2.bf16.msra.mxu0 0
        %4726 = vmatprep.subr.bf16.mxu0 0
        %4727 = vmatpush2.bf16.msra.mxu0 0
        %4728 = vmatprep.subr.bf16.mxu0 0
        %4729 = vmatpush2.bf16.msra.mxu0 0
        %4730 = vmatprep.subr.bf16.mxu0 0
        %4731 = vmatpush2.bf16.msra.mxu0 0
        %4732 = vmatprep.mubr.bf16.mxu0 0
        %4733 = vmatmul.mubr.bf16.gmra.mxu0 %v4689
        %v4734 = vpop.f32.mrf.mxu0
        %v4735 = vadd.f32 0.0, %v4734
        %v4736 = vpop.f32.mrf.mxu0
        %v4737 = vpop.f32.mrf.mxu0
        %v4738 = vadd.f32 0.0, %v4737
        %v4739 = vpop.f32.mrf.mxu0
        %4740 = vmatprep.mubr.bf16.mxu0 0
        %4741 = vmatmul.mubr.bf16.gmra.mxu0 %v4692
        %v4742 = vpop.f32.mrf.mxu0
        %v4743 = vadd.f32 0.0, %v4742
        %v4744 = vpop.f32.mrf.mxu0
        %v4745 = vpop.f32.mrf.mxu0
        %v4746 = vadd.f32 0.0, %v4745
        %v4747 = vpop.f32.mrf.mxu0
        %4748 = vmatprep.mubr.bf16.mxu0 0
        %4749 = vmatmul.mubr.bf16.gmra.mxu0 %v4695
        %v4750 = vpop.f32.mrf.mxu0
        %v4751 = vadd.f32 0.0, %v4750
        %v4752 = vpop.f32.mrf.mxu0
        %v4753 = vpop.f32.mrf.mxu0
        %v4754 = vadd.f32 0.0, %v4753
        %v4755 = vpop.f32.mrf.mxu0
        %4756 = vmatprep.mubr.bf16.mxu0 0
        %4757 = vmatmul.mubr.bf16.gmra.mxu0 %v4698
        %v4758 = vpop.f32.mrf.mxu0
        %v4759 = vadd.f32 0.0, %v4758
        %v4760 = vpop.f32.mrf.mxu0
        %v4761 = vpop.f32.mrf.mxu0
        %v4762 = vadd.f32 0.0, %v4761
        %v4763 = vpop.f32.mrf.mxu0
        %4764 = vdwg.mxu0
        %v4765 = vadd.f32 %v4651, %v4735
        %v4766 = vadd.f32 %v4652, %v4738
        %v4767 = vadd.f32 %v4653, %v4743
        %v4768 = vadd.f32 %v4654, %v4746
        %v4769 = vadd.f32 %v4655, %v4751
        %v4770 = vadd.f32 %v4656, %v4754
        %v4771 = vadd.f32 %v4657, %v4759
        %v4772 = vadd.f32 %v4658, %v4762
        %v4773 = vld [vmem:[#allocation4 + $0xa] sm:$0xff]
        %v4774 = vld [vmem:[#allocation4 + $0x12] sm:$0xff]
        %v4775 = vld [vmem:[#allocation4 + $0x1a] sm:$0xff]
        %v4776 = vld [vmem:[#allocation4 + $0x22] sm:$0xff]
        %v4777 = vld [vmem:[#allocation4 + $0x2a] sm:$0xff]
        %v4778 = vld [vmem:[#allocation4 + $0x32] sm:$0xff]
        %v4779 = vld [vmem:[#allocation4 + $0x3a] sm:$0xff]
        %v4780 = vld [vmem:[#allocation4 + $0x42] sm:$0xff]
        %v4781 = vsel %vm4415, %v4773, 0.0
        %v4782 = vsel %vm4416, %v4774, 0.0
        %v4783 = vsel %vm4417, %v4775, 0.0
        %v4784 = vsel %vm4418, %v4776, 0.0
        %v4785 = vsel %vm4419, %v4777, 0.0
        %v4786 = vsel %vm4420, %v4778, 0.0
        %v4787 = vsel %vm4421, %v4779, 0.0
        %v4788 = vsel %vm4422, %v4780, 0.0
        %v4789 = vpack.c.bf16 %v4782, %v4781
        %v4790 = vpack.c.bf16 %v4784, %v4783
        %v4791 = vpack.c.bf16 %v4786, %v4785
        %v4792 = vpack.c.bf16 %v4788, %v4787
        %s4793 = scalar_lea.vmem %s3, 80
        %v4794 = vld [vmem:[%s4793] sm:$0xf]
        %v4795 = vld [vmem:[%s4793 + $0x4] sm:$0xf]
        %v4796 = vld [vmem:[%s4793 + $0x8] sm:$0xf]
        %v4797 = vld [vmem:[%s4793 + $0xc] sm:$0xf]
        %v4802 = vunpack.c.l.b16 %v4794
        %v4803 = vunpack.c.l.b16 %v4795
        %v4804 = vunpack.c.l.b16 %v4796
        %v4805 = vunpack.c.l.b16 %v4797
        %v4806 = vpack.c.b16 %v4803, %v4802
        %v4807 = vpack.c.b16 %v4805, %v4804
        %v4811 = vsel %vm393, %v4789, 0
        %v4814 = vsel %vm393, %v4790, 0
        %v4817 = vsel %vm393, %v4791, 0
        %v4820 = vsel %vm393, %v4792, 0
        %4822 = vmatprep.subr.bf16.mxu0 0
        %4823 = vmatpush1.bf16.msra.mxu0 0
        %4824 = vmatprep.subr.bf16.mxu0 0
        %4825 = vmatpush1.bf16.msra.mxu0 0
        %4826 = vmatprep.subr.bf16.mxu0 0
        %4827 = vmatpush1.bf16.msra.mxu0 0
        %4828 = vmatprep.subr.bf16.mxu0 0
        %4829 = vmatpush1.bf16.msra.mxu0 0
        %4830 = vmatprep.subr.bf16.mxu0 0
        %4831 = vmatpush1.bf16.msra.mxu0 0
        %4832 = vmatprep.subr.bf16.mxu0 0
        %4833 = vmatpush1.bf16.msra.mxu0 0
        %4834 = vmatprep.subr.bf16.mxu0 0
        %4835 = vmatpush1.bf16.msra.mxu0 %v4807
        %4836 = vmatprep.subr.bf16.mxu0 0
        %4837 = vmatpush1.bf16.msra.mxu0 %v4806
        %4838 = vmatprep.subr.bf16.mxu0 0
        %4839 = vmatpush2.bf16.msra.mxu0 0
        %4840 = vmatprep.subr.bf16.mxu0 0
        %4841 = vmatpush2.bf16.msra.mxu0 0
        %4842 = vmatprep.subr.bf16.mxu0 0
        %4843 = vmatpush2.bf16.msra.mxu0 0
        %4844 = vmatprep.subr.bf16.mxu0 0
        %4845 = vmatpush2.bf16.msra.mxu0 0
        %4846 = vmatprep.subr.bf16.mxu0 0
        %4847 = vmatpush2.bf16.msra.mxu0 0
        %4848 = vmatprep.subr.bf16.mxu0 0
        %4849 = vmatpush2.bf16.msra.mxu0 0
        %4850 = vmatprep.subr.bf16.mxu0 0
        %4851 = vmatpush2.bf16.msra.mxu0 0
        %4852 = vmatprep.subr.bf16.mxu0 0
        %4853 = vmatpush2.bf16.msra.mxu0 0
        %4854 = vmatprep.mubr.bf16.mxu0 0
        %4855 = vmatmul.mubr.bf16.gmra.mxu0 %v4811
        %v4856 = vpop.f32.mrf.mxu0
        %v4857 = vadd.f32 0.0, %v4856
        %v4858 = vpop.f32.mrf.mxu0
        %v4859 = vpop.f32.mrf.mxu0
        %v4860 = vadd.f32 0.0, %v4859
        %v4861 = vpop.f32.mrf.mxu0
        %4862 = vmatprep.mubr.bf16.mxu0 0
        %4863 = vmatmul.mubr.bf16.gmra.mxu0 %v4814
        %v4864 = vpop.f32.mrf.mxu0
        %v4865 = vadd.f32 0.0, %v4864
        %v4866 = vpop.f32.mrf.mxu0
        %v4867 = vpop.f32.mrf.mxu0
        %v4868 = vadd.f32 0.0, %v4867
        %v4869 = vpop.f32.mrf.mxu0
        %4870 = vmatprep.mubr.bf16.mxu0 0
        %4871 = vmatmul.mubr.bf16.gmra.mxu0 %v4817
        %v4872 = vpop.f32.mrf.mxu0
        %v4873 = vadd.f32 0.0, %v4872
        %v4874 = vpop.f32.mrf.mxu0
        %v4875 = vpop.f32.mrf.mxu0
        %v4876 = vadd.f32 0.0, %v4875
        %v4877 = vpop.f32.mrf.mxu0
        %4878 = vmatprep.mubr.bf16.mxu0 0
        %4879 = vmatmul.mubr.bf16.gmra.mxu0 %v4820
        %v4880 = vpop.f32.mrf.mxu0
        %v4881 = vadd.f32 0.0, %v4880
        %v4882 = vpop.f32.mrf.mxu0
        %v4883 = vpop.f32.mrf.mxu0
        %v4884 = vadd.f32 0.0, %v4883
        %v4885 = vpop.f32.mrf.mxu0
        %4886 = vdwg.mxu0
        %v4887 = vadd.f32 %v4765, %v4857
        %v4888 = vadd.f32 %v4766, %v4860
        %v4889 = vadd.f32 %v4767, %v4865
        %v4890 = vadd.f32 %v4768, %v4868
        %v4891 = vadd.f32 %v4769, %v4873
        %v4892 = vadd.f32 %v4770, %v4876
        %v4893 = vadd.f32 %v4771, %v4881
        %v4894 = vadd.f32 %v4772, %v4884
        %v4895 = vld [vmem:[#allocation4 + $0x10] sm:$0xff]
        %v4896 = vld [vmem:[#allocation4 + $0x18] sm:$0xff]
        %v4897 = vld [vmem:[#allocation4 + $0x20] sm:$0xff]
        %v4898 = vld [vmem:[#allocation4 + $0x28] sm:$0xff]
        %v4899 = vld [vmem:[#allocation4 + $0x30] sm:$0xff]
        %v4900 = vld [vmem:[#allocation4 + $0x38] sm:$0xff]
        %v4901 = vld [vmem:[#allocation4 + $0x40] sm:$0xff]
        %v4902 = vld [vmem:[#allocation4 + $0x48] sm:$0xff]
        %v4903 = vsel %vm4180, %v4895, 0.0
        %v4904 = vsel %vm4181, %v4896, 0.0
        %v4905 = vsel %vm4182, %v4897, 0.0
        %v4906 = vsel %vm4183, %v4898, 0.0
        %v4907 = vsel %vm4184, %v4899, 0.0
        %v4908 = vsel %vm4185, %v4900, 0.0
        %v4909 = vsel %vm4186, %v4901, 0.0
        %v4910 = vsel %vm4187, %v4902, 0.0
        %v4911 = vpack.c.bf16 %v4904, %v4903
        %v4912 = vpack.c.bf16 %v4906, %v4905
        %v4913 = vpack.c.bf16 %v4908, %v4907
        %v4914 = vpack.c.bf16 %v4910, %v4909
        %s4915 = scalar_lea.vmem %s3, 96
        %v4916 = vld [vmem:[%s4915] sm:$0xf]
        %v4917 = vld [vmem:[%s4915 + $0x4] sm:$0xf]
        %v4918 = vld [vmem:[%s4915 + $0x8] sm:$0xf]
        %v4919 = vld [vmem:[%s4915 + $0xc] sm:$0xf]
        %v4924 = vunpack.c.l.b16 %v4916
        %v4925 = vunpack.c.l.b16 %v4917
        %v4926 = vunpack.c.l.b16 %v4918
        %v4927 = vunpack.c.l.b16 %v4919
        %v4928 = vpack.c.b16 %v4925, %v4924
        %v4929 = vpack.c.b16 %v4927, %v4926
        %v4933 = vsel %vm393, %v4911, 0
        %v4936 = vsel %vm393, %v4912, 0
        %v4939 = vsel %vm393, %v4913, 0
        %v4942 = vsel %vm393, %v4914, 0
        %4944 = vmatprep.subr.bf16.mxu0 0
        %4945 = vmatpush1.bf16.msra.mxu0 0
        %4946 = vmatprep.subr.bf16.mxu0 0
        %4947 = vmatpush1.bf16.msra.mxu0 0
        %4948 = vmatprep.subr.bf16.mxu0 0
        %4949 = vmatpush1.bf16.msra.mxu0 0
        %4950 = vmatprep.subr.bf16.mxu0 0
        %4951 = vmatpush1.bf16.msra.mxu0 0
        %4952 = vmatprep.subr.bf16.mxu0 0
        %4953 = vmatpush1.bf16.msra.mxu0 0
        %4954 = vmatprep.subr.bf16.mxu0 0
        %4955 = vmatpush1.bf16.msra.mxu0 0
        %4956 = vmatprep.subr.bf16.mxu0 0
        %4957 = vmatpush1.bf16.msra.mxu0 %v4929
        %4958 = vmatprep.subr.bf16.mxu0 0
        %4959 = vmatpush1.bf16.msra.mxu0 %v4928
        %4960 = vmatprep.subr.bf16.mxu0 0
        %4961 = vmatpush2.bf16.msra.mxu0 0
        %4962 = vmatprep.subr.bf16.mxu0 0
        %4963 = vmatpush2.bf16.msra.mxu0 0
        %4964 = vmatprep.subr.bf16.mxu0 0
        %4965 = vmatpush2.bf16.msra.mxu0 0
        %4966 = vmatprep.subr.bf16.mxu0 0
        %4967 = vmatpush2.bf16.msra.mxu0 0
        %4968 = vmatprep.subr.bf16.mxu0 0
        %4969 = vmatpush2.bf16.msra.mxu0 0
        %4970 = vmatprep.subr.bf16.mxu0 0
        %4971 = vmatpush2.bf16.msra.mxu0 0
        %4972 = vmatprep.subr.bf16.mxu0 0
        %4973 = vmatpush2.bf16.msra.mxu0 0
        %4974 = vmatprep.subr.bf16.mxu0 0
        %4975 = vmatpush2.bf16.msra.mxu0 0
        %4976 = vmatprep.mubr.bf16.mxu0 0
        %4977 = vmatmul.mubr.bf16.gmra.mxu0 %v4933
        %v4978 = vpop.f32.mrf.mxu0
        %v4979 = vadd.f32 0.0, %v4978
        %v4980 = vpop.f32.mrf.mxu0
        %v4981 = vpop.f32.mrf.mxu0
        %v4982 = vadd.f32 0.0, %v4981
        %v4983 = vpop.f32.mrf.mxu0
        %4984 = vmatprep.mubr.bf16.mxu0 0
        %4985 = vmatmul.mubr.bf16.gmra.mxu0 %v4936
        %v4986 = vpop.f32.mrf.mxu0
        %v4987 = vadd.f32 0.0, %v4986
        %v4988 = vpop.f32.mrf.mxu0
        %v4989 = vpop.f32.mrf.mxu0
        %v4990 = vadd.f32 0.0, %v4989
        %v4991 = vpop.f32.mrf.mxu0
        %4992 = vmatprep.mubr.bf16.mxu0 0
        %4993 = vmatmul.mubr.bf16.gmra.mxu0 %v4939
        %v4994 = vpop.f32.mrf.mxu0
        %v4995 = vadd.f32 0.0, %v4994
        %v4996 = vpop.f32.mrf.mxu0
        %v4997 = vpop.f32.mrf.mxu0
        %v4998 = vadd.f32 0.0, %v4997
        %v4999 = vpop.f32.mrf.mxu0
        %5000 = vmatprep.mubr.bf16.mxu0 0
        %5001 = vmatmul.mubr.bf16.gmra.mxu0 %v4942
        %v5002 = vpop.f32.mrf.mxu0
        %v5003 = vadd.f32 0.0, %v5002
        %v5004 = vpop.f32.mrf.mxu0
        %v5005 = vpop.f32.mrf.mxu0
        %v5006 = vadd.f32 0.0, %v5005
        %v5007 = vpop.f32.mrf.mxu0
        %5008 = vdwg.mxu0
        %v5009 = vadd.f32 %v4887, %v4979
        %v5010 = vadd.f32 %v4888, %v4982
        %v5011 = vadd.f32 %v4889, %v4987
        %v5012 = vadd.f32 %v4890, %v4990
        %v5013 = vadd.f32 %v4891, %v4995
        %v5014 = vadd.f32 %v4892, %v4998
        %v5015 = vadd.f32 %v4893, %v5003
        %v5016 = vadd.f32 %v4894, %v5006
        %v5017 = vld [vmem:[#allocation4 + $0x11] sm:$0xff]
        %v5018 = vld [vmem:[#allocation4 + $0x19] sm:$0xff]
        %v5019 = vld [vmem:[#allocation4 + $0x21] sm:$0xff]
        %v5020 = vld [vmem:[#allocation4 + $0x29] sm:$0xff]
        %v5021 = vld [vmem:[#allocation4 + $0x31] sm:$0xff]
        %v5022 = vld [vmem:[#allocation4 + $0x39] sm:$0xff]
        %v5023 = vld [vmem:[#allocation4 + $0x41] sm:$0xff]
        %v5024 = vld [vmem:[#allocation4 + $0x49] sm:$0xff]
        %v5025 = vpack.c.bf16 %v5018, %v5017
        %v5026 = vpack.c.bf16 %v5020, %v5019
        %v5027 = vpack.c.bf16 %v5022, %v5021
        %v5028 = vpack.c.bf16 %v5024, %v5023
        %s5029 = scalar_lea.vmem %s3, 112
        %v5030 = vld [vmem:[%s5029] sm:$0xf]
        %v5031 = vld [vmem:[%s5029 + $0x4] sm:$0xf]
        %v5032 = vld [vmem:[%s5029 + $0x8] sm:$0xf]
        %v5033 = vld [vmem:[%s5029 + $0xc] sm:$0xf]
        %v5038 = vunpack.c.l.b16 %v5030
        %v5039 = vunpack.c.l.b16 %v5031
        %v5040 = vunpack.c.l.b16 %v5032
        %v5041 = vunpack.c.l.b16 %v5033
        %v5042 = vpack.c.b16 %v5039, %v5038
        %v5043 = vpack.c.b16 %v5041, %v5040
        %v5047 = vsel %vm393, %v5025, 0
        %v5050 = vsel %vm393, %v5026, 0
        %v5053 = vsel %vm393, %v5027, 0
        %v5056 = vsel %vm393, %v5028, 0
        %5058 = vmatprep.subr.bf16.mxu0 0
        %5059 = vmatpush1.bf16.msra.mxu0 0
        %5060 = vmatprep.subr.bf16.mxu0 0
        %5061 = vmatpush1.bf16.msra.mxu0 0
        %5062 = vmatprep.subr.bf16.mxu0 0
        %5063 = vmatpush1.bf16.msra.mxu0 0
        %5064 = vmatprep.subr.bf16.mxu0 0
        %5065 = vmatpush1.bf16.msra.mxu0 0
        %5066 = vmatprep.subr.bf16.mxu0 0
        %5067 = vmatpush1.bf16.msra.mxu0 0
        %5068 = vmatprep.subr.bf16.mxu0 0
        %5069 = vmatpush1.bf16.msra.mxu0 0
        %5070 = vmatprep.subr.bf16.mxu0 0
        %5071 = vmatpush1.bf16.msra.mxu0 %v5043
        %5072 = vmatprep.subr.bf16.mxu0 0
        %5073 = vmatpush1.bf16.msra.mxu0 %v5042
        %5074 = vmatprep.subr.bf16.mxu0 0
        %5075 = vmatpush2.bf16.msra.mxu0 0
        %5076 = vmatprep.subr.bf16.mxu0 0
        %5077 = vmatpush2.bf16.msra.mxu0 0
        %5078 = vmatprep.subr.bf16.mxu0 0
        %5079 = vmatpush2.bf16.msra.mxu0 0
        %5080 = vmatprep.subr.bf16.mxu0 0
        %5081 = vmatpush2.bf16.msra.mxu0 0
        %5082 = vmatprep.subr.bf16.mxu0 0
        %5083 = vmatpush2.bf16.msra.mxu0 0
        %5084 = vmatprep.subr.bf16.mxu0 0
        %5085 = vmatpush2.bf16.msra.mxu0 0
        %5086 = vmatprep.subr.bf16.mxu0 0
        %5087 = vmatpush2.bf16.msra.mxu0 0
        %5088 = vmatprep.subr.bf16.mxu0 0
        %5089 = vmatpush2.bf16.msra.mxu0 0
        %5090 = vmatprep.mubr.bf16.mxu0 0
        %5091 = vmatmul.mubr.bf16.gmra.mxu0 %v5047
        %v5092 = vpop.f32.mrf.mxu0
        %v5093 = vadd.f32 0.0, %v5092
        %v5094 = vpop.f32.mrf.mxu0
        %v5095 = vpop.f32.mrf.mxu0
        %v5096 = vadd.f32 0.0, %v5095
        %v5097 = vpop.f32.mrf.mxu0
        %5098 = vmatprep.mubr.bf16.mxu0 0
        %5099 = vmatmul.mubr.bf16.gmra.mxu0 %v5050
        %v5100 = vpop.f32.mrf.mxu0
        %v5101 = vadd.f32 0.0, %v5100
        %v5102 = vpop.f32.mrf.mxu0
        %v5103 = vpop.f32.mrf.mxu0
        %v5104 = vadd.f32 0.0, %v5103
        %v5105 = vpop.f32.mrf.mxu0
        %5106 = vmatprep.mubr.bf16.mxu0 0
        %5107 = vmatmul.mubr.bf16.gmra.mxu0 %v5053
        %v5108 = vpop.f32.mrf.mxu0
        %v5109 = vadd.f32 0.0, %v5108
        %v5110 = vpop.f32.mrf.mxu0
        %v5111 = vpop.f32.mrf.mxu0
        %v5112 = vadd.f32 0.0, %v5111
        %v5113 = vpop.f32.mrf.mxu0
        %5114 = vmatprep.mubr.bf16.mxu0 0
        %5115 = vmatmul.mubr.bf16.gmra.mxu0 %v5056
        %v5116 = vpop.f32.mrf.mxu0
        %v5117 = vadd.f32 0.0, %v5116
        %v5118 = vpop.f32.mrf.mxu0
        %v5119 = vpop.f32.mrf.mxu0
        %v5120 = vadd.f32 0.0, %v5119
        %v5121 = vpop.f32.mrf.mxu0
        %5122 = vdwg.mxu0
        %v5123 = vadd.f32 %v5009, %v5093
        %v5124 = vadd.f32 %v5010, %v5096
        %v5125 = vadd.f32 %v5011, %v5101
        %v5126 = vadd.f32 %v5012, %v5104
        %v5127 = vadd.f32 %v5013, %v5109
        %v5128 = vadd.f32 %v5014, %v5112
        %v5129 = vadd.f32 %v5015, %v5117
        %v5130 = vadd.f32 %v5016, %v5120
        %v5131 = vld [vmem:[#allocation4 + $0x12] sm:$0xff]
        %v5132 = vld [vmem:[#allocation4 + $0x1a] sm:$0xff]
        %v5133 = vld [vmem:[#allocation4 + $0x22] sm:$0xff]
        %v5134 = vld [vmem:[#allocation4 + $0x2a] sm:$0xff]
        %v5135 = vld [vmem:[#allocation4 + $0x32] sm:$0xff]
        %v5136 = vld [vmem:[#allocation4 + $0x3a] sm:$0xff]
        %v5137 = vld [vmem:[#allocation4 + $0x42] sm:$0xff]
        %v5138 = vld [vmem:[#allocation4 + $0x4a] sm:$0xff]
        %v5139 = vsel %vm4415, %v5131, 0.0
        %v5140 = vsel %vm4416, %v5132, 0.0
        %v5141 = vsel %vm4417, %v5133, 0.0
        %v5142 = vsel %vm4418, %v5134, 0.0
        %v5143 = vsel %vm4419, %v5135, 0.0
        %v5144 = vsel %vm4420, %v5136, 0.0
        %v5145 = vsel %vm4421, %v5137, 0.0
        %v5146 = vsel %vm4422, %v5138, 0.0
        %v5147 = vpack.c.bf16 %v5140, %v5139
        %v5148 = vpack.c.bf16 %v5142, %v5141
        %v5149 = vpack.c.bf16 %v5144, %v5143
        %v5150 = vpack.c.bf16 %v5146, %v5145
        %s5151 = scalar_lea.vmem %s3, 128
        %v5152 = vld [vmem:[%s5151] sm:$0xf]
        %v5153 = vld [vmem:[%s5151 + $0x4] sm:$0xf]
        %v5154 = vld [vmem:[%s5151 + $0x8] sm:$0xf]
        %v5155 = vld [vmem:[%s5151 + $0xc] sm:$0xf]
        %v5160 = vunpack.c.l.b16 %v5152
        %v5161 = vunpack.c.l.b16 %v5153
        %v5162 = vunpack.c.l.b16 %v5154
        %v5163 = vunpack.c.l.b16 %v5155
        %v5164 = vpack.c.b16 %v5161, %v5160
        %v5165 = vpack.c.b16 %v5163, %v5162
        %v5169 = vsel %vm393, %v5147, 0
        %v5172 = vsel %vm393, %v5148, 0
        %v5175 = vsel %vm393, %v5149, 0
        %v5178 = vsel %vm393, %v5150, 0
        %5180 = vmatprep.subr.bf16.mxu0 0
        %5181 = vmatpush1.bf16.msra.mxu0 0
        %5182 = vmatprep.subr.bf16.mxu0 0
        %5183 = vmatpush1.bf16.msra.mxu0 0
        %5184 = vmatprep.subr.bf16.mxu0 0
        %5185 = vmatpush1.bf16.msra.mxu0 0
        %5186 = vmatprep.subr.bf16.mxu0 0
        %5187 = vmatpush1.bf16.msra.mxu0 0
        %5188 = vmatprep.subr.bf16.mxu0 0
        %5189 = vmatpush1.bf16.msra.mxu0 0
        %5190 = vmatprep.subr.bf16.mxu0 0
        %5191 = vmatpush1.bf16.msra.mxu0 0
        %5192 = vmatprep.subr.bf16.mxu0 0
        %5193 = vmatpush1.bf16.msra.mxu0 %v5165
        %5194 = vmatprep.subr.bf16.mxu0 0
        %5195 = vmatpush1.bf16.msra.mxu0 %v5164
        %5196 = vmatprep.subr.bf16.mxu0 0
        %5197 = vmatpush2.bf16.msra.mxu0 0
        %5198 = vmatprep.subr.bf16.mxu0 0
        %5199 = vmatpush2.bf16.msra.mxu0 0
        %5200 = vmatprep.subr.bf16.mxu0 0
        %5201 = vmatpush2.bf16.msra.mxu0 0
        %5202 = vmatprep.subr.bf16.mxu0 0
        %5203 = vmatpush2.bf16.msra.mxu0 0
        %5204 = vmatprep.subr.bf16.mxu0 0
        %5205 = vmatpush2.bf16.msra.mxu0 0
        %5206 = vmatprep.subr.bf16.mxu0 0
        %5207 = vmatpush2.bf16.msra.mxu0 0
        %5208 = vmatprep.subr.bf16.mxu0 0
        %5209 = vmatpush2.bf16.msra.mxu0 0
        %5210 = vmatprep.subr.bf16.mxu0 0
        %5211 = vmatpush2.bf16.msra.mxu0 0
        %5212 = vmatprep.mubr.bf16.mxu0 0
        %5213 = vmatmul.mubr.bf16.gmra.mxu0 %v5169
        %v5214 = vpop.f32.mrf.mxu0
        %v5215 = vadd.f32 0.0, %v5214
        %v5216 = vpop.f32.mrf.mxu0
        %v5217 = vpop.f32.mrf.mxu0
        %v5218 = vadd.f32 0.0, %v5217
        %v5219 = vpop.f32.mrf.mxu0
        %5220 = vmatprep.mubr.bf16.mxu0 0
        %5221 = vmatmul.mubr.bf16.gmra.mxu0 %v5172
        %v5222 = vpop.f32.mrf.mxu0
        %v5223 = vadd.f32 0.0, %v5222
        %v5224 = vpop.f32.mrf.mxu0
        %v5225 = vpop.f32.mrf.mxu0
        %v5226 = vadd.f32 0.0, %v5225
        %v5227 = vpop.f32.mrf.mxu0
        %5228 = vmatprep.mubr.bf16.mxu0 0
        %5229 = vmatmul.mubr.bf16.gmra.mxu0 %v5175
        %v5230 = vpop.f32.mrf.mxu0
        %v5231 = vadd.f32 0.0, %v5230
        %v5232 = vpop.f32.mrf.mxu0
        %v5233 = vpop.f32.mrf.mxu0
        %v5234 = vadd.f32 0.0, %v5233
        %v5235 = vpop.f32.mrf.mxu0
        %5236 = vmatprep.mubr.bf16.mxu0 0
        %5237 = vmatmul.mubr.bf16.gmra.mxu0 %v5178
        %v5238 = vpop.f32.mrf.mxu0
        %v5239 = vadd.f32 0.0, %v5238
        %v5240 = vpop.f32.mrf.mxu0
        %v5241 = vpop.f32.mrf.mxu0
        %v5242 = vadd.f32 0.0, %v5241
        %v5243 = vpop.f32.mrf.mxu0
        %5244 = vdwg.mxu0
        %v5245 = vadd.f32 %v5123, %v5215
        %v5246 = vadd.f32 %v5124, %v5218
        %v5247 = vadd.f32 %v5125, %v5223
        %v5248 = vadd.f32 %v5126, %v5226
        %v5249 = vadd.f32 %v5127, %v5231
        %v5250 = vadd.f32 %v5128, %v5234
        %v5251 = vadd.f32 %v5129, %v5239
        %v5252 = vadd.f32 %v5130, %v5242
        %v5253 = vld [vmem:[%s4] sm:$0x1]
        %v5255 = vlaneseq
        %v5256 = vshrl.u32 %v5255, 7
        %v5257 = vsub.s32 0, %v5256
        %v5258 = vrot.slane %v5253, %v5257
        %v5260 = vadd.f32 %v5245, %v5258
        %v5261 = vadd.f32 %v5246, %v5258
        %v5262 = vadd.f32 %v5247, %v5258
        %v5263 = vadd.f32 %v5248, %v5258
        %v5264 = vadd.f32 %v5249, %v5258
        %v5265 = vadd.f32 %v5250, %v5258
        %v5266 = vadd.f32 %v5251, %v5258
        %v5267 = vadd.f32 %v5252, %v5258
        %v5268 = vmax.f32 %v5260, 0.0
        %v5269 = vmax.f32 %v5261, 0.0
        %v5270 = vmax.f32 %v5262, 0.0
        %v5271 = vmax.f32 %v5263, 0.0
        %v5272 = vmax.f32 %v5264, 0.0
        %v5273 = vmax.f32 %v5265, 0.0
        %v5274 = vmax.f32 %v5266, 0.0
        %v5275 = vmax.f32 %v5267, 0.0
        %vm5276 = vcmask 523264
        %5277 = vst.msk [vmem:[#allocation5] sm:$0xff] %vm5276, %v5268
        %5278 = vst.msk [vmem:[#allocation5 + $0x8] sm:$0xff] %vm5276, %v5269
        %5279 = vst.msk [vmem:[#allocation5 + $0x10] sm:$0xff] %vm5276, %v5270
        %5280 = vst.msk [vmem:[#allocation5 + $0x18] sm:$0xff] %vm5276, %v5271
        %5281 = vst.msk [vmem:[#allocation5 + $0x20] sm:$0xff] %vm5276, %v5272
        %5282 = vst.msk [vmem:[#allocation5 + $0x28] sm:$0xff] %vm5276, %v5273
        %5283 = vst.msk [vmem:[#allocation5 + $0x30] sm:$0xff] %vm5276, %v5274
        %5284 = vst.msk [vmem:[#allocation5 + $0x38] sm:$0xff] %vm5276, %v5275
        %v5285 = vld [vmem:[#allocation5] ss:$2 sm:$0xf]
        %s5286 = scalar_lea.vmem [#allocation5], 1
        %v5287 = vld [vmem:[%s5286] ss:$2 sm:$0xf]
        %s5288 = scalar_lea.vmem [#allocation5], 8
        %v5289 = vld [vmem:[%s5288] ss:$2 sm:$0xf]
        %s5290 = scalar_lea.vmem [#allocation5], 9
        %v5291 = vld [vmem:[%s5290] ss:$2 sm:$0xf]
        %v5292 = vmax.f32 %v5285, %v5287
        %v5293 = vmax.f32 %v5289, %v5291
        %v5294 = vmax.f32 %v5292, %v5293
        %vm5295 = vcmask 519168
        %5296 = vst.msk [vmem:[#allocation6 + $0x5] sm:$0xf] %vm5295, %v5294
        %s5297 = scalar_lea.vmem [#allocation5], 16
        %v5298 = vld [vmem:[%s5297] ss:$2 sm:$0xf]
        %s5299 = scalar_lea.vmem [#allocation5], 17
        %v5300 = vld [vmem:[%s5299] ss:$2 sm:$0xf]
        %s5301 = scalar_lea.vmem [#allocation5], 24
        %v5302 = vld [vmem:[%s5301] ss:$2 sm:$0xf]
        %s5303 = scalar_lea.vmem [#allocation5], 25
        %v5304 = vld [vmem:[%s5303] ss:$2 sm:$0xf]
        %v5305 = vmax.f32 %v5298, %v5300
        %v5306 = vmax.f32 %v5302, %v5304
        %v5307 = vmax.f32 %v5305, %v5306
        %5308 = vst.msk [vmem:[#allocation6 + $0x9] sm:$0xf] %vm5295, %v5307
        %s5309 = scalar_lea.vmem [#allocation5], 32
        %v5310 = vld [vmem:[%s5309] ss:$2 sm:$0xf]
        %s5311 = scalar_lea.vmem [#allocation5], 33
        %v5312 = vld [vmem:[%s5311] ss:$2 sm:$0xf]
        %s5313 = scalar_lea.vmem [#allocation5], 40
        %v5314 = vld [vmem:[%s5313] ss:$2 sm:$0xf]
        %s5315 = scalar_lea.vmem [#allocation5], 41
        %v5316 = vld [vmem:[%s5315] ss:$2 sm:$0xf]
        %v5317 = vmax.f32 %v5310, %v5312
        %v5318 = vmax.f32 %v5314, %v5316
        %v5319 = vmax.f32 %v5317, %v5318
        %5320 = vst.msk [vmem:[#allocation6 + $0xd] sm:$0xf] %vm5295, %v5319
        %s5321 = scalar_lea.vmem [#allocation5], 48
        %v5322 = vld [vmem:[%s5321] ss:$2 sm:$0xf]
        %s5323 = scalar_lea.vmem [#allocation5], 49
        %v5324 = vld [vmem:[%s5323] ss:$2 sm:$0xf]
        %s5325 = scalar_lea.vmem [#allocation5], 56
        %v5326 = vld [vmem:[%s5325] ss:$2 sm:$0xf]
        %s5327 = scalar_lea.vmem [#allocation5], 57
        %v5328 = vld [vmem:[%s5327] ss:$2 sm:$0xf]
        %v5329 = vmax.f32 %v5322, %v5324
        %v5330 = vmax.f32 %v5326, %v5328
        %v5331 = vmax.f32 %v5329, %v5330
        %5332 = vst.msk [vmem:[#allocation6 + $0x11] sm:$0xf] %vm5295, %v5331
        %vm5333 = vcmp.lt.s32.totalorder %v469, 0
        %v5334 = vsub.s32 0, %v469
        %v5335 = vsel %vm5333, %v5334, %v469
        %v5336 = vshrl.u32 %v5335, 2
        %v5337 = vand.u32 %v5335, 3
        %v5338 = vsub.s32 0, %v5337
        %v5339 = vsel %vm5333, %v5338, %v5337
        %vm5340 = vcmp.lt.s32.totalorder %v470, 0
        %v5341 = vsub.s32 0, %v470
        %v5342 = vsel %vm5340, %v5341, %v470
        %v5343 = vshrl.u32 %v5342, 2
        %v5344 = vand.u32 %v5342, 3
        %v5345 = vsub.s32 0, %v5344
        %v5346 = vsel %vm5340, %v5345, %v5344
        %vm5347 = vcmp.ne.s32.totalorder %v5339, 0
        %vm5348 = vcmp.ne.s32.totalorder %v5346, 0
        %vm5349 = vcmp.lt.s32.totalorder %v5339, 0
        %vm5350 = vcmp.lt.s32.totalorder %v5346, 0
        %vm5351 = vmand %vm5349, %vm5347
        %vm5352 = vmand %vm5350, %vm5348
        %v5353 = vadd.s32 %v5339, 4
        %v5354 = vadd.s32 %v5346, 4
        %v5355 = vsel %vm5351, %v5353, %v5339
        %v5356 = vsel %vm5352, %v5354, %v5346
        %vm5357 = vcmp.ne.s32.totalorder %v5355, 0
        %vm5358 = vcmp.ne.s32.totalorder %v5356, 0
        %vm5359 = vcmp.ne.s32.totalorder %v5355, 3
        %vm5360 = vcmp.ne.s32.totalorder %v5356, 3
        %v5361 = vld [vmem:[#allocation6] sm:$0xff]
        %v5362 = vld [vmem:[#allocation6 + $0x8] sm:$0xff]
        %v5363 = vsel %vm5357, 1, 0
        %v5364 = vsel %vm5358, 1, 0
        %vm5365 = vcmp.eq.s32.totalorder %v5363, 1
        %vm5366 = vcmp.eq.s32.totalorder %v5364, 1
        %v5367 = vsel %vm5365, %v5361, 0.0
        %v5368 = vsel %vm5366, %v5362, 0.0
        %v5369 = vpack.c.bf16 %v5368, %v5367
        %v5370 = vld [vmem:[%s5] sm:$0xf]
        %v5371 = vld [vmem:[%s5 + $0x4] sm:$0xf]
        %v5372 = vld [vmem:[%s5 + $0x8] sm:$0xf]
        %v5373 = vld [vmem:[%s5 + $0xc] sm:$0xf]
        %v5374 = vld [vmem:[%s5 + $0x10] sm:$0xf]
        %v5375 = vld [vmem:[%s5 + $0x14] sm:$0xf]
        %v5376 = vld [vmem:[%s5 + $0x18] sm:$0xf]
        %v5377 = vld [vmem:[%s5 + $0x1c] sm:$0xf]
        %v5378 = vld [vmem:[#allocation6 + $0x1] sm:$0xff]
        %v5379 = vld [vmem:[#allocation6 + $0x9] sm:$0xff]
        %v5380 = vpack.c.bf16 %v5379, %v5378
        %s5381 = scalar_lea.vmem %s5, 32
        %v5382 = vld [vmem:[%s5381] sm:$0xf]
        %v5383 = vld [vmem:[%s5381 + $0x4] sm:$0xf]
        %v5384 = vld [vmem:[%s5381 + $0x8] sm:$0xf]
        %v5385 = vld [vmem:[%s5381 + $0xc] sm:$0xf]
        %v5386 = vld [vmem:[%s5381 + $0x10] sm:$0xf]
        %v5387 = vld [vmem:[%s5381 + $0x14] sm:$0xf]
        %v5388 = vld [vmem:[%s5381 + $0x18] sm:$0xf]
        %v5389 = vld [vmem:[%s5381 + $0x1c] sm:$0xf]
        %v5398 = vunpack.c.l.b16 %v5382
        %v5399 = vunpack.c.l.b16 %v5383
        %v5400 = vunpack.c.l.b16 %v5384
        %v5401 = vunpack.c.l.b16 %v5385
        %v5402 = vunpack.c.l.b16 %v5386
        %v5403 = vunpack.c.l.b16 %v5387
        %v5404 = vunpack.c.l.b16 %v5388
        %v5405 = vunpack.c.l.b16 %v5389
        %v5406 = vpack.c.b16 %v5399, %v5398
        %v5407 = vpack.c.b16 %v5401, %v5400
        %v5408 = vpack.c.b16 %v5403, %v5402
        %v5409 = vpack.c.b16 %v5405, %v5404
        %v5415 = vsel %vm5276, %v5380, 0
        %5417 = vmatprep.subr.bf16.mxu0 0
        %5418 = vmatpush1.bf16.msra.mxu0 0
        %5419 = vmatprep.subr.bf16.mxu0 0
        %5420 = vmatpush1.bf16.msra.mxu0 0
        %5421 = vmatprep.subr.bf16.mxu0 0
        %5422 = vmatpush1.bf16.msra.mxu0 0
        %5423 = vmatprep.subr.bf16.mxu0 0
        %5424 = vmatpush1.bf16.msra.mxu0 0
        %5425 = vmatprep.subr.bf16.mxu0 0
        %5426 = vmatpush1.bf16.msra.mxu0 %v5409
        %5427 = vmatprep.subr.bf16.mxu0 0
        %5428 = vmatpush1.bf16.msra.mxu0 %v5408
        %5429 = vmatprep.subr.bf16.mxu0 0
        %5430 = vmatpush1.bf16.msra.mxu0 %v5407
        %5431 = vmatprep.subr.bf16.mxu0 0
        %5432 = vmatpush1.bf16.msra.mxu0 %v5406
        %5433 = vmatprep.subr.bf16.mxu0 0
        %5434 = vmatpush2.bf16.msra.mxu0 0
        %5435 = vmatprep.subr.bf16.mxu0 0
        %5436 = vmatpush2.bf16.msra.mxu0 0
        %5437 = vmatprep.subr.bf16.mxu0 0
        %5438 = vmatpush2.bf16.msra.mxu0 0
        %5439 = vmatprep.subr.bf16.mxu0 0
        %5440 = vmatpush2.bf16.msra.mxu0 0
        %5441 = vmatprep.subr.bf16.mxu0 0
        %5442 = vmatpush2.bf16.msra.mxu0 0
        %5443 = vmatprep.subr.bf16.mxu0 0
        %5444 = vmatpush2.bf16.msra.mxu0 0
        %5445 = vmatprep.subr.bf16.mxu0 0
        %5446 = vmatpush2.bf16.msra.mxu0 0
        %5447 = vmatprep.subr.bf16.mxu0 0
        %5448 = vmatpush2.bf16.msra.mxu0 0
        %5449 = vmatprep.mubr.bf16.mxu0 0
        %5450 = vmatmul.mubr.bf16.gmra.mxu0 %v5415
        %v5451 = vpop.f32.mrf.mxu0
        %v5452 = vadd.f32 0.0, %v5451
        %v5453 = vpop.f32.mrf.mxu0
        %v5454 = vpop.f32.mrf.mxu0
        %v5455 = vadd.f32 0.0, %v5454
        %v5456 = vpop.f32.mrf.mxu0
        %5457 = vdwg.mxu0
        %v5466 = vunpack.c.l.b16 %v5370
        %v5467 = vunpack.c.l.b16 %v5371
        %v5468 = vunpack.c.l.b16 %v5372
        %v5469 = vunpack.c.l.b16 %v5373
        %v5470 = vunpack.c.l.b16 %v5374
        %v5471 = vunpack.c.l.b16 %v5375
        %v5472 = vunpack.c.l.b16 %v5376
        %v5473 = vunpack.c.l.b16 %v5377
        %v5474 = vpack.c.b16 %v5467, %v5466
        %v5475 = vpack.c.b16 %v5469, %v5468
        %v5476 = vpack.c.b16 %v5471, %v5470
        %v5477 = vpack.c.b16 %v5473, %v5472
        %v5483 = vsel %vm5276, %v5369, 0
        %5485 = vmatprep.subr.bf16.mxu0 0
        %5486 = vmatpush1.bf16.msra.mxu0 0
        %5487 = vmatprep.subr.bf16.mxu0 0
        %5488 = vmatpush1.bf16.msra.mxu0 0
        %5489 = vmatprep.subr.bf16.mxu0 0
        %5490 = vmatpush1.bf16.msra.mxu0 0
        %5491 = vmatprep.subr.bf16.mxu0 0
        %5492 = vmatpush1.bf16.msra.mxu0 0
        %5493 = vmatprep.subr.bf16.mxu0 0
        %5494 = vmatpush1.bf16.msra.mxu0 %v5477
        %5495 = vmatprep.subr.bf16.mxu0 0
        %5496 = vmatpush1.bf16.msra.mxu0 %v5476
        %5497 = vmatprep.subr.bf16.mxu0 0
        %5498 = vmatpush1.bf16.msra.mxu0 %v5475
        %5499 = vmatprep.subr.bf16.mxu0 0
        %5500 = vmatpush1.bf16.msra.mxu0 %v5474
        %5501 = vmatprep.subr.bf16.mxu0 0
        %5502 = vmatpush2.bf16.msra.mxu0 0
        %5503 = vmatprep.subr.bf16.mxu0 0
        %5504 = vmatpush2.bf16.msra.mxu0 0
        %5505 = vmatprep.subr.bf16.mxu0 0
        %5506 = vmatpush2.bf16.msra.mxu0 0
        %5507 = vmatprep.subr.bf16.mxu0 0
        %5508 = vmatpush2.bf16.msra.mxu0 0
        %5509 = vmatprep.subr.bf16.mxu0 0
        %5510 = vmatpush2.bf16.msra.mxu0 0
        %5511 = vmatprep.subr.bf16.mxu0 0
        %5512 = vmatpush2.bf16.msra.mxu0 0
        %5513 = vmatprep.subr.bf16.mxu0 0
        %5514 = vmatpush2.bf16.msra.mxu0 0
        %5515 = vmatprep.subr.bf16.mxu0 0
        %5516 = vmatpush2.bf16.msra.mxu0 0
        %5517 = vmatprep.mubr.bf16.mxu0 0
        %5518 = vmatmul.mubr.bf16.gmra.mxu0 %v5483
        %v5519 = vpop.f32.mrf.mxu0
        %v5520 = vadd.f32 %v5452, %v5519
        %v5521 = vpop.f32.mrf.mxu0
        %v5522 = vpop.f32.mrf.mxu0
        %v5523 = vadd.f32 %v5455, %v5522
        %v5524 = vpop.f32.mrf.mxu0
        %5525 = vdwg.mxu0
        %v5526 = vld [vmem:[#allocation6 + $0x2] sm:$0xff]
        %v5527 = vld [vmem:[#allocation6 + $0xa] sm:$0xff]
        %v5528 = vsel %vm5359, 1, 0
        %v5529 = vsel %vm5360, 1, 0
        %vm5530 = vcmp.eq.s32.totalorder %v5528, 1
        %vm5531 = vcmp.eq.s32.totalorder %v5529, 1
        %v5532 = vsel %vm5530, %v5526, 0.0
        %v5533 = vsel %vm5531, %v5527, 0.0
        %v5534 = vpack.c.bf16 %v5533, %v5532
        %s5535 = scalar_lea.vmem %s5, 64
        %v5536 = vld [vmem:[%s5535] sm:$0xf]
        %v5537 = vld [vmem:[%s5535 + $0x4] sm:$0xf]
        %v5538 = vld [vmem:[%s5535 + $0x8] sm:$0xf]
        %v5539 = vld [vmem:[%s5535 + $0xc] sm:$0xf]
        %v5540 = vld [vmem:[%s5535 + $0x10] sm:$0xf]
        %v5541 = vld [vmem:[%s5535 + $0x14] sm:$0xf]
        %v5542 = vld [vmem:[%s5535 + $0x18] sm:$0xf]
        %v5543 = vld [vmem:[%s5535 + $0x1c] sm:$0xf]
        %v5552 = vunpack.c.l.b16 %v5536
        %v5553 = vunpack.c.l.b16 %v5537
        %v5554 = vunpack.c.l.b16 %v5538
        %v5555 = vunpack.c.l.b16 %v5539
        %v5556 = vunpack.c.l.b16 %v5540
        %v5557 = vunpack.c.l.b16 %v5541
        %v5558 = vunpack.c.l.b16 %v5542
        %v5559 = vunpack.c.l.b16 %v5543
        %v5560 = vpack.c.b16 %v5553, %v5552
        %v5561 = vpack.c.b16 %v5555, %v5554
        %v5562 = vpack.c.b16 %v5557, %v5556
        %v5563 = vpack.c.b16 %v5559, %v5558
        %v5569 = vsel %vm5276, %v5534, 0
        %5571 = vmatprep.subr.bf16.mxu0 0
        %5572 = vmatpush1.bf16.msra.mxu0 0
        %5573 = vmatprep.subr.bf16.mxu0 0
        %5574 = vmatpush1.bf16.msra.mxu0 0
        %5575 = vmatprep.subr.bf16.mxu0 0
        %5576 = vmatpush1.bf16.msra.mxu0 0
        %5577 = vmatprep.subr.bf16.mxu0 0
        %5578 = vmatpush1.bf16.msra.mxu0 0
        %5579 = vmatprep.subr.bf16.mxu0 0
        %5580 = vmatpush1.bf16.msra.mxu0 %v5563
        %5581 = vmatprep.subr.bf16.mxu0 0
        %5582 = vmatpush1.bf16.msra.mxu0 %v5562
        %5583 = vmatprep.subr.bf16.mxu0 0
        %5584 = vmatpush1.bf16.msra.mxu0 %v5561
        %5585 = vmatprep.subr.bf16.mxu0 0
        %5586 = vmatpush1.bf16.msra.mxu0 %v5560
        %5587 = vmatprep.subr.bf16.mxu0 0
        %5588 = vmatpush2.bf16.msra.mxu0 0
        %5589 = vmatprep.subr.bf16.mxu0 0
        %5590 = vmatpush2.bf16.msra.mxu0 0
        %5591 = vmatprep.subr.bf16.mxu0 0
        %5592 = vmatpush2.bf16.msra.mxu0 0
        %5593 = vmatprep.subr.bf16.mxu0 0
        %5594 = vmatpush2.bf16.msra.mxu0 0
        %5595 = vmatprep.subr.bf16.mxu0 0
        %5596 = vmatpush2.bf16.msra.mxu0 0
        %5597 = vmatprep.subr.bf16.mxu0 0
        %5598 = vmatpush2.bf16.msra.mxu0 0
        %5599 = vmatprep.subr.bf16.mxu0 0
        %5600 = vmatpush2.bf16.msra.mxu0 0
        %5601 = vmatprep.subr.bf16.mxu0 0
        %5602 = vmatpush2.bf16.msra.mxu0 0
        %5603 = vmatprep.mubr.bf16.mxu0 0
        %5604 = vmatmul.mubr.bf16.gmra.mxu0 %v5569
        %v5605 = vpop.f32.mrf.mxu0
        %v5606 = vadd.f32 0.0, %v5605
        %v5607 = vpop.f32.mrf.mxu0
        %v5608 = vpop.f32.mrf.mxu0
        %v5609 = vadd.f32 0.0, %v5608
        %v5610 = vpop.f32.mrf.mxu0
        %5611 = vdwg.mxu0
        %v5612 = vadd.f32 %v5520, %v5606
        %v5613 = vadd.f32 %v5523, %v5609
        %v5614 = vld [vmem:[#allocation6 + $0x4] sm:$0xff]
        %v5615 = vld [vmem:[#allocation6 + $0xc] sm:$0xff]
        %v5616 = vsel %vm5365, %v5614, 0.0
        %v5617 = vsel %vm5366, %v5615, 0.0
        %v5618 = vpack.c.bf16 %v5617, %v5616
        %s5619 = scalar_lea.vmem %s5, 96
        %v5620 = vld [vmem:[%s5619] sm:$0xf]
        %v5621 = vld [vmem:[%s5619 + $0x4] sm:$0xf]
        %v5622 = vld [vmem:[%s5619 + $0x8] sm:$0xf]
        %v5623 = vld [vmem:[%s5619 + $0xc] sm:$0xf]
        %v5624 = vld [vmem:[%s5619 + $0x10] sm:$0xf]
        %v5625 = vld [vmem:[%s5619 + $0x14] sm:$0xf]
        %v5626 = vld [vmem:[%s5619 + $0x18] sm:$0xf]
        %v5627 = vld [vmem:[%s5619 + $0x1c] sm:$0xf]
        %v5636 = vunpack.c.l.b16 %v5620
        %v5637 = vunpack.c.l.b16 %v5621
        %v5638 = vunpack.c.l.b16 %v5622
        %v5639 = vunpack.c.l.b16 %v5623
        %v5640 = vunpack.c.l.b16 %v5624
        %v5641 = vunpack.c.l.b16 %v5625
        %v5642 = vunpack.c.l.b16 %v5626
        %v5643 = vunpack.c.l.b16 %v5627
        %v5644 = vpack.c.b16 %v5637, %v5636
        %v5645 = vpack.c.b16 %v5639, %v5638
        %v5646 = vpack.c.b16 %v5641, %v5640
        %v5647 = vpack.c.b16 %v5643, %v5642
        %v5653 = vsel %vm5276, %v5618, 0
        %5655 = vmatprep.subr.bf16.mxu0 0
        %5656 = vmatpush1.bf16.msra.mxu0 0
        %5657 = vmatprep.subr.bf16.mxu0 0
        %5658 = vmatpush1.bf16.msra.mxu0 0
        %5659 = vmatprep.subr.bf16.mxu0 0
        %5660 = vmatpush1.bf16.msra.mxu0 0
        %5661 = vmatprep.subr.bf16.mxu0 0
        %5662 = vmatpush1.bf16.msra.mxu0 0
        %5663 = vmatprep.subr.bf16.mxu0 0
        %5664 = vmatpush1.bf16.msra.mxu0 %v5647
        %5665 = vmatprep.subr.bf16.mxu0 0
        %5666 = vmatpush1.bf16.msra.mxu0 %v5646
        %5667 = vmatprep.subr.bf16.mxu0 0
        %5668 = vmatpush1.bf16.msra.mxu0 %v5645
        %5669 = vmatprep.subr.bf16.mxu0 0
        %5670 = vmatpush1.bf16.msra.mxu0 %v5644
        %5671 = vmatprep.subr.bf16.mxu0 0
        %5672 = vmatpush2.bf16.msra.mxu0 0
        %5673 = vmatprep.subr.bf16.mxu0 0
        %5674 = vmatpush2.bf16.msra.mxu0 0
        %5675 = vmatprep.subr.bf16.mxu0 0
        %5676 = vmatpush2.bf16.msra.mxu0 0
        %5677 = vmatprep.subr.bf16.mxu0 0
        %5678 = vmatpush2.bf16.msra.mxu0 0
        %5679 = vmatprep.subr.bf16.mxu0 0
        %5680 = vmatpush2.bf16.msra.mxu0 0
        %5681 = vmatprep.subr.bf16.mxu0 0
        %5682 = vmatpush2.bf16.msra.mxu0 0
        %5683 = vmatprep.subr.bf16.mxu0 0
        %5684 = vmatpush2.bf16.msra.mxu0 0
        %5685 = vmatprep.subr.bf16.mxu0 0
        %5686 = vmatpush2.bf16.msra.mxu0 0
        %5687 = vmatprep.mubr.bf16.mxu0 0
        %5688 = vmatmul.mubr.bf16.gmra.mxu0 %v5653
        %v5689 = vpop.f32.mrf.mxu0
        %v5690 = vadd.f32 0.0, %v5689
        %v5691 = vpop.f32.mrf.mxu0
        %v5692 = vpop.f32.mrf.mxu0
        %v5693 = vadd.f32 0.0, %v5692
        %v5694 = vpop.f32.mrf.mxu0
        %5695 = vdwg.mxu0
        %v5696 = vadd.f32 %v5612, %v5690
        %v5697 = vadd.f32 %v5613, %v5693
        %v5698 = vld [vmem:[#allocation6 + $0x5] sm:$0xff]
        %v5699 = vld [vmem:[#allocation6 + $0xd] sm:$0xff]
        %v5700 = vpack.c.bf16 %v5699, %v5698
        %s5701 = scalar_lea.vmem %s5, 128
        %v5702 = vld [vmem:[%s5701] sm:$0xf]
        %v5703 = vld [vmem:[%s5701 + $0x4] sm:$0xf]
        %v5704 = vld [vmem:[%s5701 + $0x8] sm:$0xf]
        %v5705 = vld [vmem:[%s5701 + $0xc] sm:$0xf]
        %v5706 = vld [vmem:[%s5701 + $0x10] sm:$0xf]
        %v5707 = vld [vmem:[%s5701 + $0x14] sm:$0xf]
        %v5708 = vld [vmem:[%s5701 + $0x18] sm:$0xf]
        %v5709 = vld [vmem:[%s5701 + $0x1c] sm:$0xf]
        %v5718 = vunpack.c.l.b16 %v5702
        %v5719 = vunpack.c.l.b16 %v5703
        %v5720 = vunpack.c.l.b16 %v5704
        %v5721 = vunpack.c.l.b16 %v5705
        %v5722 = vunpack.c.l.b16 %v5706
        %v5723 = vunpack.c.l.b16 %v5707
        %v5724 = vunpack.c.l.b16 %v5708
        %v5725 = vunpack.c.l.b16 %v5709
        %v5726 = vpack.c.b16 %v5719, %v5718
        %v5727 = vpack.c.b16 %v5721, %v5720
        %v5728 = vpack.c.b16 %v5723, %v5722
        %v5729 = vpack.c.b16 %v5725, %v5724
        %v5735 = vsel %vm5276, %v5700, 0
        %5737 = vmatprep.subr.bf16.mxu0 0
        %5738 = vmatpush1.bf16.msra.mxu0 0
        %5739 = vmatprep.subr.bf16.mxu0 0
        %5740 = vmatpush1.bf16.msra.mxu0 0
        %5741 = vmatprep.subr.bf16.mxu0 0
        %5742 = vmatpush1.bf16.msra.mxu0 0
        %5743 = vmatprep.subr.bf16.mxu0 0
        %5744 = vmatpush1.bf16.msra.mxu0 0
        %5745 = vmatprep.subr.bf16.mxu0 0
        %5746 = vmatpush1.bf16.msra.mxu0 %v5729
        %5747 = vmatprep.subr.bf16.mxu0 0
        %5748 = vmatpush1.bf16.msra.mxu0 %v5728
        %5749 = vmatprep.subr.bf16.mxu0 0
        %5750 = vmatpush1.bf16.msra.mxu0 %v5727
        %5751 = vmatprep.subr.bf16.mxu0 0
        %5752 = vmatpush1.bf16.msra.mxu0 %v5726
        %5753 = vmatprep.subr.bf16.mxu0 0
        %5754 = vmatpush2.bf16.msra.mxu0 0
        %5755 = vmatprep.subr.bf16.mxu0 0
        %5756 = vmatpush2.bf16.msra.mxu0 0
        %5757 = vmatprep.subr.bf16.mxu0 0
        %5758 = vmatpush2.bf16.msra.mxu0 0
        %5759 = vmatprep.subr.bf16.mxu0 0
        %5760 = vmatpush2.bf16.msra.mxu0 0
        %5761 = vmatprep.subr.bf16.mxu0 0
        %5762 = vmatpush2.bf16.msra.mxu0 0
        %5763 = vmatprep.subr.bf16.mxu0 0
        %5764 = vmatpush2.bf16.msra.mxu0 0
        %5765 = vmatprep.subr.bf16.mxu0 0
        %5766 = vmatpush2.bf16.msra.mxu0 0
        %5767 = vmatprep.subr.bf16.mxu0 0
        %5768 = vmatpush2.bf16.msra.mxu0 0
        %5769 = vmatprep.mubr.bf16.mxu0 0
        %5770 = vmatmul.mubr.bf16.gmra.mxu0 %v5735
        %v5771 = vpop.f32.mrf.mxu0
        %v5772 = vadd.f32 0.0, %v5771
        %v5773 = vpop.f32.mrf.mxu0
        %v5774 = vpop.f32.mrf.mxu0
        %v5775 = vadd.f32 0.0, %v5774
        %v5776 = vpop.f32.mrf.mxu0
        %5777 = vdwg.mxu0
        %v5778 = vadd.f32 %v5696, %v5772
        %v5779 = vadd.f32 %v5697, %v5775
        %v5780 = vld [vmem:[#allocation6 + $0x6] sm:$0xff]
        %v5781 = vld [vmem:[#allocation6 + $0xe] sm:$0xff]
        %v5782 = vsel %vm5530, %v5780, 0.0
        %v5783 = vsel %vm5531, %v5781, 0.0
        %v5784 = vpack.c.bf16 %v5783, %v5782
        %s5785 = scalar_lea.vmem %s5, 160
        %v5786 = vld [vmem:[%s5785] sm:$0xf]
        %v5787 = vld [vmem:[%s5785 + $0x4] sm:$0xf]
        %v5788 = vld [vmem:[%s5785 + $0x8] sm:$0xf]
        %v5789 = vld [vmem:[%s5785 + $0xc] sm:$0xf]
        %v5790 = vld [vmem:[%s5785 + $0x10] sm:$0xf]
        %v5791 = vld [vmem:[%s5785 + $0x14] sm:$0xf]
        %v5792 = vld [vmem:[%s5785 + $0x18] sm:$0xf]
        %v5793 = vld [vmem:[%s5785 + $0x1c] sm:$0xf]
        %v5802 = vunpack.c.l.b16 %v5786
        %v5803 = vunpack.c.l.b16 %v5787
        %v5804 = vunpack.c.l.b16 %v5788
        %v5805 = vunpack.c.l.b16 %v5789
        %v5806 = vunpack.c.l.b16 %v5790
        %v5807 = vunpack.c.l.b16 %v5791
        %v5808 = vunpack.c.l.b16 %v5792
        %v5809 = vunpack.c.l.b16 %v5793
        %v5810 = vpack.c.b16 %v5803, %v5802
        %v5811 = vpack.c.b16 %v5805, %v5804
        %v5812 = vpack.c.b16 %v5807, %v5806
        %v5813 = vpack.c.b16 %v5809, %v5808
        %v5819 = vsel %vm5276, %v5784, 0
        %5821 = vmatprep.subr.bf16.mxu0 0
        %5822 = vmatpush1.bf16.msra.mxu0 0
        %5823 = vmatprep.subr.bf16.mxu0 0
        %5824 = vmatpush1.bf16.msra.mxu0 0
        %5825 = vmatprep.subr.bf16.mxu0 0
        %5826 = vmatpush1.bf16.msra.mxu0 0
        %5827 = vmatprep.subr.bf16.mxu0 0
        %5828 = vmatpush1.bf16.msra.mxu0 0
        %5829 = vmatprep.subr.bf16.mxu0 0
        %5830 = vmatpush1.bf16.msra.mxu0 %v5813
        %5831 = vmatprep.subr.bf16.mxu0 0
        %5832 = vmatpush1.bf16.msra.mxu0 %v5812
        %5833 = vmatprep.subr.bf16.mxu0 0
        %5834 = vmatpush1.bf16.msra.mxu0 %v5811
        %5835 = vmatprep.subr.bf16.mxu0 0
        %5836 = vmatpush1.bf16.msra.mxu0 %v5810
        %5837 = vmatprep.subr.bf16.mxu0 0
        %5838 = vmatpush2.bf16.msra.mxu0 0
        %5839 = vmatprep.subr.bf16.mxu0 0
        %5840 = vmatpush2.bf16.msra.mxu0 0
        %5841 = vmatprep.subr.bf16.mxu0 0
        %5842 = vmatpush2.bf16.msra.mxu0 0
        %5843 = vmatprep.subr.bf16.mxu0 0
        %5844 = vmatpush2.bf16.msra.mxu0 0
        %5845 = vmatprep.subr.bf16.mxu0 0
        %5846 = vmatpush2.bf16.msra.mxu0 0
        %5847 = vmatprep.subr.bf16.mxu0 0
        %5848 = vmatpush2.bf16.msra.mxu0 0
        %5849 = vmatprep.subr.bf16.mxu0 0
        %5850 = vmatpush2.bf16.msra.mxu0 0
        %5851 = vmatprep.subr.bf16.mxu0 0
        %5852 = vmatpush2.bf16.msra.mxu0 0
        %5853 = vmatprep.mubr.bf16.mxu0 0
        %5854 = vmatmul.mubr.bf16.gmra.mxu0 %v5819
        %v5855 = vpop.f32.mrf.mxu0
        %v5856 = vadd.f32 0.0, %v5855
        %v5857 = vpop.f32.mrf.mxu0
        %v5858 = vpop.f32.mrf.mxu0
        %v5859 = vadd.f32 0.0, %v5858
        %v5860 = vpop.f32.mrf.mxu0
        %5861 = vdwg.mxu0
        %v5862 = vadd.f32 %v5778, %v5856
        %v5863 = vadd.f32 %v5779, %v5859
        %v5864 = vld [vmem:[#allocation6 + $0x8] sm:$0xff]
        %v5865 = vld [vmem:[#allocation6 + $0x10] sm:$0xff]
        %v5866 = vsel %vm5365, %v5864, 0.0
        %v5867 = vsel %vm5366, %v5865, 0.0
        %v5868 = vpack.c.bf16 %v5867, %v5866
        %s5869 = scalar_lea.vmem %s5, 192
        %v5870 = vld [vmem:[%s5869] sm:$0xf]
        %v5871 = vld [vmem:[%s5869 + $0x4] sm:$0xf]
        %v5872 = vld [vmem:[%s5869 + $0x8] sm:$0xf]
        %v5873 = vld [vmem:[%s5869 + $0xc] sm:$0xf]
        %v5874 = vld [vmem:[%s5869 + $0x10] sm:$0xf]
        %v5875 = vld [vmem:[%s5869 + $0x14] sm:$0xf]
        %v5876 = vld [vmem:[%s5869 + $0x18] sm:$0xf]
        %v5877 = vld [vmem:[%s5869 + $0x1c] sm:$0xf]
        %v5886 = vunpack.c.l.b16 %v5870
        %v5887 = vunpack.c.l.b16 %v5871
        %v5888 = vunpack.c.l.b16 %v5872
        %v5889 = vunpack.c.l.b16 %v5873
        %v5890 = vunpack.c.l.b16 %v5874
        %v5891 = vunpack.c.l.b16 %v5875
        %v5892 = vunpack.c.l.b16 %v5876
        %v5893 = vunpack.c.l.b16 %v5877
        %v5894 = vpack.c.b16 %v5887, %v5886
        %v5895 = vpack.c.b16 %v5889, %v5888
        %v5896 = vpack.c.b16 %v5891, %v5890
        %v5897 = vpack.c.b16 %v5893, %v5892
        %v5903 = vsel %vm5276, %v5868, 0
        %5905 = vmatprep.subr.bf16.mxu0 0
        %5906 = vmatpush1.bf16.msra.mxu0 0
        %5907 = vmatprep.subr.bf16.mxu0 0
        %5908 = vmatpush1.bf16.msra.mxu0 0
        %5909 = vmatprep.subr.bf16.mxu0 0
        %5910 = vmatpush1.bf16.msra.mxu0 0
        %5911 = vmatprep.subr.bf16.mxu0 0
        %5912 = vmatpush1.bf16.msra.mxu0 0
        %5913 = vmatprep.subr.bf16.mxu0 0
        %5914 = vmatpush1.bf16.msra.mxu0 %v5897
        %5915 = vmatprep.subr.bf16.mxu0 0
        %5916 = vmatpush1.bf16.msra.mxu0 %v5896
        %5917 = vmatprep.subr.bf16.mxu0 0
        %5918 = vmatpush1.bf16.msra.mxu0 %v5895
        %5919 = vmatprep.subr.bf16.mxu0 0
        %5920 = vmatpush1.bf16.msra.mxu0 %v5894
        %5921 = vmatprep.subr.bf16.mxu0 0
        %5922 = vmatpush2.bf16.msra.mxu0 0
        %5923 = vmatprep.subr.bf16.mxu0 0
        %5924 = vmatpush2.bf16.msra.mxu0 0
        %5925 = vmatprep.subr.bf16.mxu0 0
        %5926 = vmatpush2.bf16.msra.mxu0 0
        %5927 = vmatprep.subr.bf16.mxu0 0
        %5928 = vmatpush2.bf16.msra.mxu0 0
        %5929 = vmatprep.subr.bf16.mxu0 0
        %5930 = vmatpush2.bf16.msra.mxu0 0
        %5931 = vmatprep.subr.bf16.mxu0 0
        %5932 = vmatpush2.bf16.msra.mxu0 0
        %5933 = vmatprep.subr.bf16.mxu0 0
        %5934 = vmatpush2.bf16.msra.mxu0 0
        %5935 = vmatprep.subr.bf16.mxu0 0
        %5936 = vmatpush2.bf16.msra.mxu0 0
        %5937 = vmatprep.mubr.bf16.mxu0 0
        %5938 = vmatmul.mubr.bf16.gmra.mxu0 %v5903
        %v5939 = vpop.f32.mrf.mxu0
        %v5940 = vadd.f32 0.0, %v5939
        %v5941 = vpop.f32.mrf.mxu0
        %v5942 = vpop.f32.mrf.mxu0
        %v5943 = vadd.f32 0.0, %v5942
        %v5944 = vpop.f32.mrf.mxu0
        %5945 = vdwg.mxu0
        %v5946 = vadd.f32 %v5862, %v5940
        %v5947 = vadd.f32 %v5863, %v5943
        %v5948 = vld [vmem:[#allocation6 + $0x9] sm:$0xff]
        %v5949 = vld [vmem:[#allocation6 + $0x11] sm:$0xff]
        %v5950 = vpack.c.bf16 %v5949, %v5948
        %s5951 = scalar_lea.vmem %s5, 224
        %v5952 = vld [vmem:[%s5951] sm:$0xf]
        %v5953 = vld [vmem:[%s5951 + $0x4] sm:$0xf]
        %v5954 = vld [vmem:[%s5951 + $0x8] sm:$0xf]
        %v5955 = vld [vmem:[%s5951 + $0xc] sm:$0xf]
        %v5956 = vld [vmem:[%s5951 + $0x10] sm:$0xf]
        %v5957 = vld [vmem:[%s5951 + $0x14] sm:$0xf]
        %v5958 = vld [vmem:[%s5951 + $0x18] sm:$0xf]
        %v5959 = vld [vmem:[%s5951 + $0x1c] sm:$0xf]
        %v5968 = vunpack.c.l.b16 %v5952
        %v5969 = vunpack.c.l.b16 %v5953
        %v5970 = vunpack.c.l.b16 %v5954
        %v5971 = vunpack.c.l.b16 %v5955
        %v5972 = vunpack.c.l.b16 %v5956
        %v5973 = vunpack.c.l.b16 %v5957
        %v5974 = vunpack.c.l.b16 %v5958
        %v5975 = vunpack.c.l.b16 %v5959
        %v5976 = vpack.c.b16 %v5969, %v5968
        %v5977 = vpack.c.b16 %v5971, %v5970
        %v5978 = vpack.c.b16 %v5973, %v5972
        %v5979 = vpack.c.b16 %v5975, %v5974
        %v5985 = vsel %vm5276, %v5950, 0
        %5987 = vmatprep.subr.bf16.mxu0 0
        %5988 = vmatpush1.bf16.msra.mxu0 0
        %5989 = vmatprep.subr.bf16.mxu0 0
        %5990 = vmatpush1.bf16.msra.mxu0 0
        %5991 = vmatprep.subr.bf16.mxu0 0
        %5992 = vmatpush1.bf16.msra.mxu0 0
        %5993 = vmatprep.subr.bf16.mxu0 0
        %5994 = vmatpush1.bf16.msra.mxu0 0
        %5995 = vmatprep.subr.bf16.mxu0 0
        %5996 = vmatpush1.bf16.msra.mxu0 %v5979
        %5997 = vmatprep.subr.bf16.mxu0 0
        %5998 = vmatpush1.bf16.msra.mxu0 %v5978
        %5999 = vmatprep.subr.bf16.mxu0 0
        %6000 = vmatpush1.bf16.msra.mxu0 %v5977
        %6001 = vmatprep.subr.bf16.mxu0 0
        %6002 = vmatpush1.bf16.msra.mxu0 %v5976
        %6003 = vmatprep.subr.bf16.mxu0 0
        %6004 = vmatpush2.bf16.msra.mxu0 0
        %6005 = vmatprep.subr.bf16.mxu0 0
        %6006 = vmatpush2.bf16.msra.mxu0 0
        %6007 = vmatprep.subr.bf16.mxu0 0
        %6008 = vmatpush2.bf16.msra.mxu0 0
        %6009 = vmatprep.subr.bf16.mxu0 0
        %6010 = vmatpush2.bf16.msra.mxu0 0
        %6011 = vmatprep.subr.bf16.mxu0 0
        %6012 = vmatpush2.bf16.msra.mxu0 0
        %6013 = vmatprep.subr.bf16.mxu0 0
        %6014 = vmatpush2.bf16.msra.mxu0 0
        %6015 = vmatprep.subr.bf16.mxu0 0
        %6016 = vmatpush2.bf16.msra.mxu0 0
        %6017 = vmatprep.subr.bf16.mxu0 0
        %6018 = vmatpush2.bf16.msra.mxu0 0
        %6019 = vmatprep.mubr.bf16.mxu0 0
        %6020 = vmatmul.mubr.bf16.gmra.mxu0 %v5985
        %v6021 = vpop.f32.mrf.mxu0
        %v6022 = vadd.f32 0.0, %v6021
        %v6023 = vpop.f32.mrf.mxu0
        %v6024 = vpop.f32.mrf.mxu0
        %v6025 = vadd.f32 0.0, %v6024
        %v6026 = vpop.f32.mrf.mxu0
        %6027 = vdwg.mxu0
        %v6028 = vadd.f32 %v5946, %v6022
        %v6029 = vadd.f32 %v5947, %v6025
        %v6030 = vld [vmem:[#allocation6 + $0xa] sm:$0xff]
        %v6031 = vld [vmem:[#allocation6 + $0x12] sm:$0xff]
        %v6032 = vsel %vm5530, %v6030, 0.0
        %v6033 = vsel %vm5531, %v6031, 0.0
        %v6034 = vpack.c.bf16 %v6033, %v6032
        %s6035 = scalar_lea.vmem %s5, 256
        %v6036 = vld [vmem:[%s6035] sm:$0xf]
        %v6037 = vld [vmem:[%s6035 + $0x4] sm:$0xf]
        %v6038 = vld [vmem:[%s6035 + $0x8] sm:$0xf]
        %v6039 = vld [vmem:[%s6035 + $0xc] sm:$0xf]
        %v6040 = vld [vmem:[%s6035 + $0x10] sm:$0xf]
        %v6041 = vld [vmem:[%s6035 + $0x14] sm:$0xf]
        %v6042 = vld [vmem:[%s6035 + $0x18] sm:$0xf]
        %v6043 = vld [vmem:[%s6035 + $0x1c] sm:$0xf]
        %v6052 = vunpack.c.l.b16 %v6036
        %v6053 = vunpack.c.l.b16 %v6037
        %v6054 = vunpack.c.l.b16 %v6038
        %v6055 = vunpack.c.l.b16 %v6039
        %v6056 = vunpack.c.l.b16 %v6040
        %v6057 = vunpack.c.l.b16 %v6041
        %v6058 = vunpack.c.l.b16 %v6042
        %v6059 = vunpack.c.l.b16 %v6043
        %v6060 = vpack.c.b16 %v6053, %v6052
        %v6061 = vpack.c.b16 %v6055, %v6054
        %v6062 = vpack.c.b16 %v6057, %v6056
        %v6063 = vpack.c.b16 %v6059, %v6058
        %v6069 = vsel %vm5276, %v6034, 0
        %6071 = vmatprep.subr.bf16.mxu0 0
        %6072 = vmatpush1.bf16.msra.mxu0 0
        %6073 = vmatprep.subr.bf16.mxu0 0
        %6074 = vmatpush1.bf16.msra.mxu0 0
        %6075 = vmatprep.subr.bf16.mxu0 0
        %6076 = vmatpush1.bf16.msra.mxu0 0
        %6077 = vmatprep.subr.bf16.mxu0 0
        %6078 = vmatpush1.bf16.msra.mxu0 0
        %6079 = vmatprep.subr.bf16.mxu0 0
        %6080 = vmatpush1.bf16.msra.mxu0 %v6063
        %6081 = vmatprep.subr.bf16.mxu0 0
        %6082 = vmatpush1.bf16.msra.mxu0 %v6062
        %6083 = vmatprep.subr.bf16.mxu0 0
        %6084 = vmatpush1.bf16.msra.mxu0 %v6061
        %6085 = vmatprep.subr.bf16.mxu0 0
        %6086 = vmatpush1.bf16.msra.mxu0 %v6060
        %6087 = vmatprep.subr.bf16.mxu0 0
        %6088 = vmatpush2.bf16.msra.mxu0 0
        %6089 = vmatprep.subr.bf16.mxu0 0
        %6090 = vmatpush2.bf16.msra.mxu0 0
        %6091 = vmatprep.subr.bf16.mxu0 0
        %6092 = vmatpush2.bf16.msra.mxu0 0
        %6093 = vmatprep.subr.bf16.mxu0 0
        %6094 = vmatpush2.bf16.msra.mxu0 0
        %6095 = vmatprep.subr.bf16.mxu0 0
        %6096 = vmatpush2.bf16.msra.mxu0 0
        %6097 = vmatprep.subr.bf16.mxu0 0
        %6098 = vmatpush2.bf16.msra.mxu0 0
        %6099 = vmatprep.subr.bf16.mxu0 0
        %6100 = vmatpush2.bf16.msra.mxu0 0
        %6101 = vmatprep.subr.bf16.mxu0 0
        %6102 = vmatpush2.bf16.msra.mxu0 0
        %6103 = vmatprep.mubr.bf16.mxu0 0
        %6104 = vmatmul.mubr.bf16.gmra.mxu0 %v6069
        %v6105 = vpop.f32.mrf.mxu0
        %v6106 = vadd.f32 0.0, %v6105
        %v6107 = vpop.f32.mrf.mxu0
        %v6108 = vpop.f32.mrf.mxu0
        %v6109 = vadd.f32 0.0, %v6108
        %v6110 = vpop.f32.mrf.mxu0
        %6111 = vdwg.mxu0
        %v6112 = vadd.f32 %v6028, %v6106
        %v6113 = vadd.f32 %v6029, %v6109
        %v6114 = vld [vmem:[%s6] sm:$0x1]
        %v6116 = vlaneseq
        %v6117 = vshrl.u32 %v6116, 7
        %v6118 = vsub.s32 0, %v6117
        %v6119 = vrot.slane %v6114, %v6118
        %v6121 = vadd.f32 %v6112, %v6119
        %v6122 = vadd.f32 %v6113, %v6119
        %v6123 = vmax.f32 %v6121, 0.0
        %v6124 = vmax.f32 %v6122, 0.0
        %6125 = vst [vmem:[#allocation7] sm:$0xff] %v6123
        %6126 = vst [vmem:[#allocation7 + $0x8] sm:$0xff] %v6124
        %v6127 = vld [vmem:[#allocation7] ss:$2 sm:$0x3]
        %s6128 = scalar_lea.vmem [#allocation7], 1
        %v6129 = vld [vmem:[%s6128] ss:$2 sm:$0x3]
        %s6130 = scalar_lea.vmem [#allocation7], 4
        %v6131 = vld [vmem:[%s6130] ss:$2 sm:$0x3]
        %s6132 = scalar_lea.vmem [#allocation7], 5
        %v6133 = vld [vmem:[%s6132] ss:$2 sm:$0x3]
        %v6134 = vmax.f32 %v6127, %v6129
        %v6135 = vmax.f32 %v6131, %v6133
        %v6136 = vmax.f32 %v6134, %v6135
        %6137 = vst [vmem:[#allocation8 + $0x3] sm:$0x3] %v6136
        %s6138 = scalar_lea.vmem [#allocation7], 8
        %v6139 = vld [vmem:[%s6138] ss:$2 sm:$0x3]
        %s6140 = scalar_lea.vmem [#allocation7], 9
        %v6141 = vld [vmem:[%s6140] ss:$2 sm:$0x3]
        %s6142 = scalar_lea.vmem [#allocation7], 12
        %v6143 = vld [vmem:[%s6142] ss:$2 sm:$0x3]
        %s6144 = scalar_lea.vmem [#allocation7], 13
        %v6145 = vld [vmem:[%s6144] ss:$2 sm:$0x3]
        %v6146 = vmax.f32 %v6139, %v6141
        %v6147 = vmax.f32 %v6143, %v6145
        %v6148 = vmax.f32 %v6146, %v6147
        %6149 = vst [vmem:[#allocation8 + $0x5] sm:$0x3] %v6148
        %vm6150 = vcmp.lt.s32.totalorder %v469, 0
        %v6151 = vsub.s32 0, %v469
        %v6152 = vsel %vm6150, %v6151, %v469
        %v6153 = vshrl.u32 %v6152, 1
        %v6154 = vand.u32 %v6152, 1
        %v6155 = vsub.s32 0, %v6154
        %v6156 = vsel %vm6150, %v6155, %v6154
        %vm6157 = vcmp.ne.s32.totalorder %v6156, 0
        %vm6158 = vcmp.lt.s32.totalorder %v6156, 0
        %vm6159 = vmand %vm6158, %vm6157
        %v6160 = vadd.s32 %v6156, 2
        %v6161 = vsel %vm6159, %v6160, %v6156
        %vm6162 = vcmp.ne.s32.totalorder %v6161, 0
        %vm6163 = vcmp.ne.s32.totalorder %v6161, 1
        %v6164 = vld [vmem:[#allocation8] sm:$0xf]
        %v6165 = vsel %vm6162, 1, 0
        %vm6166 = vcmp.eq.s32.totalorder %v6165, 1
        %v6167 = vsel %vm6166, %v6164, 0.0
        %v6168 = vpack.c.bf16 %v6167, %v6167
        %v6169 = vld [vmem:[%s7] sm:$0xff]
        %v6170 = vld [vmem:[%s7 + $0x8] sm:$0xff]
        %v6171 = vld [vmem:[%s7 + $0x10] sm:$0xff]
        %v6172 = vld [vmem:[%s7 + $0x18] sm:$0xff]
        %v6173 = vld [vmem:[%s7 + $0x20] sm:$0xff]
        %v6174 = vld [vmem:[%s7 + $0x28] sm:$0xff]
        %v6175 = vld [vmem:[%s7 + $0x30] sm:$0xff]
        %v6176 = vld [vmem:[%s7 + $0x38] sm:$0xff]
        %v6177 = vld [vmem:[%s7 + $0x40] sm:$0xff]
        %v6178 = vld [vmem:[%s7 + $0x48] sm:$0xff]
        %v6179 = vld [vmem:[%s7 + $0x50] sm:$0xff]
        %v6180 = vld [vmem:[%s7 + $0x58] sm:$0xff]
        %v6181 = vld [vmem:[%s7 + $0x60] sm:$0xff]
        %v6182 = vld [vmem:[%s7 + $0x68] sm:$0xff]
        %v6183 = vld [vmem:[%s7 + $0x70] sm:$0xff]
        %v6184 = vld [vmem:[%s7 + $0x78] sm:$0xff]
        %v6185 = vld [vmem:[%s7 + $0x80] sm:$0xff]
        %v6186 = vld [vmem:[%s7 + $0x88] sm:$0xff]
        %v6187 = vld [vmem:[%s7 + $0x90] sm:$0xff]
        %v6188 = vld [vmem:[%s7 + $0x98] sm:$0xff]
        %v6189 = vld [vmem:[%s7 + $0xa0] sm:$0xff]
        %v6190 = vld [vmem:[%s7 + $0xa8] sm:$0xff]
        %v6191 = vld [vmem:[%s7 + $0xb0] sm:$0xff]
        %v6192 = vld [vmem:[%s7 + $0xb8] sm:$0xff]
        %v6193 = vld [vmem:[%s7 + $0xc0] sm:$0xff]
        %v6194 = vld [vmem:[%s7 + $0xc8] sm:$0xff]
        %v6195 = vld [vmem:[%s7 + $0xd0] sm:$0xff]
        %v6196 = vld [vmem:[%s7 + $0xd8] sm:$0xff]
        %v6197 = vld [vmem:[%s7 + $0xe0] sm:$0xff]
        %v6198 = vld [vmem:[%s7 + $0xe8] sm:$0xff]
        %v6199 = vld [vmem:[%s7 + $0xf0] sm:$0xff]
        %v6200 = vld [vmem:[%s7 + $0xf8] sm:$0xff]
        %v6201 = vld [vmem:[#allocation8 + $0x1] sm:$0xf]
        %v6202 = vpack.c.bf16 %v6201, %v6201
        %s6203 = scalar_lea.vmem %s7, 256
        %v6204 = vld [vmem:[%s6203] sm:$0xff]
        %v6205 = vld [vmem:[%s6203 + $0x8] sm:$0xff]
        %v6206 = vld [vmem:[%s6203 + $0x10] sm:$0xff]
        %v6207 = vld [vmem:[%s6203 + $0x18] sm:$0xff]
        %v6208 = vld [vmem:[%s6203 + $0x20] sm:$0xff]
        %v6209 = vld [vmem:[%s6203 + $0x28] sm:$0xff]
        %v6210 = vld [vmem:[%s6203 + $0x30] sm:$0xff]
        %v6211 = vld [vmem:[%s6203 + $0x38] sm:$0xff]
        %v6212 = vld [vmem:[%s6203 + $0x40] sm:$0xff]
        %v6213 = vld [vmem:[%s6203 + $0x48] sm:$0xff]
        %v6214 = vld [vmem:[%s6203 + $0x50] sm:$0xff]
        %v6215 = vld [vmem:[%s6203 + $0x58] sm:$0xff]
        %v6216 = vld [vmem:[%s6203 + $0x60] sm:$0xff]
        %v6217 = vld [vmem:[%s6203 + $0x68] sm:$0xff]
        %v6218 = vld [vmem:[%s6203 + $0x70] sm:$0xff]
        %v6219 = vld [vmem:[%s6203 + $0x78] sm:$0xff]
        %v6220 = vld [vmem:[%s6203 + $0x80] sm:$0xff]
        %v6221 = vld [vmem:[%s6203 + $0x88] sm:$0xff]
        %v6222 = vld [vmem:[%s6203 + $0x90] sm:$0xff]
        %v6223 = vld [vmem:[%s6203 + $0x98] sm:$0xff]
        %v6224 = vld [vmem:[%s6203 + $0xa0] sm:$0xff]
        %v6225 = vld [vmem:[%s6203 + $0xa8] sm:$0xff]
        %v6226 = vld [vmem:[%s6203 + $0xb0] sm:$0xff]
        %v6227 = vld [vmem:[%s6203 + $0xb8] sm:$0xff]
        %v6228 = vld [vmem:[%s6203 + $0xc0] sm:$0xff]
        %v6229 = vld [vmem:[%s6203 + $0xc8] sm:$0xff]
        %v6230 = vld [vmem:[%s6203 + $0xd0] sm:$0xff]
        %v6231 = vld [vmem:[%s6203 + $0xd8] sm:$0xff]
        %v6232 = vld [vmem:[%s6203 + $0xe0] sm:$0xff]
        %v6233 = vld [vmem:[%s6203 + $0xe8] sm:$0xff]
        %v6234 = vld [vmem:[%s6203 + $0xf0] sm:$0xff]
        %v6235 = vld [vmem:[%s6203 + $0xf8] sm:$0xff]
        %v6268 = vunpack.c.l.b16 %v6204
        %v6269 = vunpack.c.h.b16 %v6204
        %v6270 = vunpack.c.l.b16 %v6205
        %v6271 = vunpack.c.h.b16 %v6205
        %v6272 = vunpack.c.l.b16 %v6206
        %v6273 = vunpack.c.h.b16 %v6206
        %v6274 = vunpack.c.l.b16 %v6207
        %v6275 = vunpack.c.h.b16 %v6207
        %v6276 = vunpack.c.l.b16 %v6208
        %v6277 = vunpack.c.h.b16 %v6208
        %v6278 = vunpack.c.l.b16 %v6209
        %v6279 = vunpack.c.h.b16 %v6209
        %v6280 = vunpack.c.l.b16 %v6210
        %v6281 = vunpack.c.h.b16 %v6210
        %v6282 = vunpack.c.l.b16 %v6211
        %v6283 = vunpack.c.h.b16 %v6211
        %v6284 = vunpack.c.l.b16 %v6212
        %v6285 = vunpack.c.h.b16 %v6212
        %v6286 = vunpack.c.l.b16 %v6213
        %v6287 = vunpack.c.h.b16 %v6213
        %v6288 = vunpack.c.l.b16 %v6214
        %v6289 = vunpack.c.h.b16 %v6214
        %v6290 = vunpack.c.l.b16 %v6215
        %v6291 = vunpack.c.h.b16 %v6215
        %v6292 = vunpack.c.l.b16 %v6216
        %v6293 = vunpack.c.h.b16 %v6216
        %v6294 = vunpack.c.l.b16 %v6217
        %v6295 = vunpack.c.h.b16 %v6217
        %v6296 = vunpack.c.l.b16 %v6218
        %v6297 = vunpack.c.h.b16 %v6218
        %v6298 = vunpack.c.l.b16 %v6219
        %v6299 = vunpack.c.h.b16 %v6219
        %v6300 = vunpack.c.l.b16 %v6220
        %v6301 = vunpack.c.h.b16 %v6220
        %v6302 = vunpack.c.l.b16 %v6221
        %v6303 = vunpack.c.h.b16 %v6221
        %v6304 = vunpack.c.l.b16 %v6222
        %v6305 = vunpack.c.h.b16 %v6222
        %v6306 = vunpack.c.l.b16 %v6223
        %v6307 = vunpack.c.h.b16 %v6223
        %v6308 = vunpack.c.l.b16 %v6224
        %v6309 = vunpack.c.h.b16 %v6224
        %v6310 = vunpack.c.l.b16 %v6225
        %v6311 = vunpack.c.h.b16 %v6225
        %v6312 = vunpack.c.l.b16 %v6226
        %v6313 = vunpack.c.h.b16 %v6226
        %v6314 = vunpack.c.l.b16 %v6227
        %v6315 = vunpack.c.h.b16 %v6227
        %v6316 = vunpack.c.l.b16 %v6228
        %v6317 = vunpack.c.h.b16 %v6228
        %v6318 = vunpack.c.l.b16 %v6229
        %v6319 = vunpack.c.h.b16 %v6229
        %v6320 = vunpack.c.l.b16 %v6230
        %v6321 = vunpack.c.h.b16 %v6230
        %v6322 = vunpack.c.l.b16 %v6231
        %v6323 = vunpack.c.h.b16 %v6231
        %v6324 = vunpack.c.l.b16 %v6232
        %v6325 = vunpack.c.h.b16 %v6232
        %v6326 = vunpack.c.l.b16 %v6233
        %v6327 = vunpack.c.h.b16 %v6233
        %v6328 = vunpack.c.l.b16 %v6234
        %v6329 = vunpack.c.h.b16 %v6234
        %v6330 = vunpack.c.l.b16 %v6235
        %v6331 = vunpack.c.h.b16 %v6235
        %v6332 = vpack.c.b16 %v6272, %v6268
        %v6333 = vpack.c.b16 %v6273, %v6269
        %v6334 = vpack.c.b16 %v6274, %v6270
        %v6335 = vpack.c.b16 %v6275, %v6271
        %v6336 = vpack.c.b16 %v6280, %v6276
        %v6337 = vpack.c.b16 %v6281, %v6277
        %v6338 = vpack.c.b16 %v6282, %v6278
        %v6339 = vpack.c.b16 %v6283, %v6279
        %v6340 = vpack.c.b16 %v6288, %v6284
        %v6341 = vpack.c.b16 %v6289, %v6285
        %v6342 = vpack.c.b16 %v6290, %v6286
        %v6343 = vpack.c.b16 %v6291, %v6287
        %v6344 = vpack.c.b16 %v6296, %v6292
        %v6345 = vpack.c.b16 %v6297, %v6293
        %v6346 = vpack.c.b16 %v6298, %v6294
        %v6347 = vpack.c.b16 %v6299, %v6295
        %v6348 = vpack.c.b16 %v6304, %v6300
        %v6349 = vpack.c.b16 %v6305, %v6301
        %v6350 = vpack.c.b16 %v6306, %v6302
        %v6351 = vpack.c.b16 %v6307, %v6303
        %v6352 = vpack.c.b16 %v6312, %v6308
        %v6353 = vpack.c.b16 %v6313, %v6309
        %v6354 = vpack.c.b16 %v6314, %v6310
        %v6355 = vpack.c.b16 %v6315, %v6311
        %v6356 = vpack.c.b16 %v6320, %v6316
        %v6357 = vpack.c.b16 %v6321, %v6317
        %v6358 = vpack.c.b16 %v6322, %v6318
        %v6359 = vpack.c.b16 %v6323, %v6319
        %v6360 = vpack.c.b16 %v6328, %v6324
        %v6361 = vpack.c.b16 %v6329, %v6325
        %v6362 = vpack.c.b16 %v6330, %v6326
        %v6363 = vpack.c.b16 %v6331, %v6327
        %6396 = vmatprep.subr.bf16.mxu0 %v6361
        %6397 = vmatpush1.bf16.msra.mxu0 %v6360
        %6398 = vmatprep.subr.bf16.mxu0 %v6357
        %6399 = vmatpush1.bf16.msra.mxu0 %v6356
        %6400 = vmatprep.subr.bf16.mxu0 %v6353
        %6401 = vmatpush1.bf16.msra.mxu0 %v6352
        %6402 = vmatprep.subr.bf16.mxu0 %v6349
        %6403 = vmatpush1.bf16.msra.mxu0 %v6348
        %6404 = vmatprep.subr.bf16.mxu0 %v6345
        %6405 = vmatpush1.bf16.msra.mxu0 %v6344
        %6406 = vmatprep.subr.bf16.mxu0 %v6341
        %6407 = vmatpush1.bf16.msra.mxu0 %v6340
        %6408 = vmatprep.subr.bf16.mxu0 %v6337
        %6409 = vmatpush1.bf16.msra.mxu0 %v6336
        %6410 = vmatprep.subr.bf16.mxu0 %v6333
        %6411 = vmatpush1.bf16.msra.mxu0 %v6332
        %6412 = vmatprep.subr.bf16.mxu0 0
        %6413 = vmatpush2.bf16.msra.mxu0 0
        %6414 = vmatprep.subr.bf16.mxu0 0
        %6415 = vmatpush2.bf16.msra.mxu0 0
        %6416 = vmatprep.subr.bf16.mxu0 0
        %6417 = vmatpush2.bf16.msra.mxu0 0
        %6418 = vmatprep.subr.bf16.mxu0 0
        %6419 = vmatpush2.bf16.msra.mxu0 0
        %6420 = vmatprep.subr.bf16.mxu0 0
        %6421 = vmatpush2.bf16.msra.mxu0 0
        %6422 = vmatprep.subr.bf16.mxu0 0
        %6423 = vmatpush2.bf16.msra.mxu0 0
        %6424 = vmatprep.subr.bf16.mxu0 0
        %6425 = vmatpush2.bf16.msra.mxu0 0
        %6426 = vmatprep.subr.bf16.mxu0 0
        %6427 = vmatpush2.bf16.msra.mxu0 0
        %6428 = vmatprep.mubr.bf16.mxu0 0
        %6429 = vmatmul.mubr.bf16.gmra.mxu0 %v6202
        %v6430 = vpop.f32.mrf.mxu0
        %v6431 = vadd.f32 0.0, %v6430
        %v6432 = vpop.f32.mrf.mxu0
        %v6433 = vadd.f32 0.0, %v6432
        %v6434 = vpop.f32.mrf.mxu0
        %v6435 = vpop.f32.mrf.mxu0
        %6436 = vdwg.mxu0
        %6437 = vmatprep.subr.bf16.mxu0 %v6363
        %6438 = vmatpush1.bf16.msra.mxu0 %v6362
        %6439 = vmatprep.subr.bf16.mxu0 %v6359
        %6440 = vmatpush1.bf16.msra.mxu0 %v6358
        %6441 = vmatprep.subr.bf16.mxu0 %v6355
        %6442 = vmatpush1.bf16.msra.mxu0 %v6354
        %6443 = vmatprep.subr.bf16.mxu0 %v6351
        %6444 = vmatpush1.bf16.msra.mxu0 %v6350
        %6445 = vmatprep.subr.bf16.mxu0 %v6347
        %6446 = vmatpush1.bf16.msra.mxu0 %v6346
        %6447 = vmatprep.subr.bf16.mxu0 %v6343
        %6448 = vmatpush1.bf16.msra.mxu0 %v6342
        %6449 = vmatprep.subr.bf16.mxu0 %v6339
        %6450 = vmatpush1.bf16.msra.mxu0 %v6338
        %6451 = vmatprep.subr.bf16.mxu0 %v6335
        %6452 = vmatpush1.bf16.msra.mxu0 %v6334
        %6453 = vmatprep.subr.bf16.mxu0 0
        %6454 = vmatpush2.bf16.msra.mxu0 0
        %6455 = vmatprep.subr.bf16.mxu0 0
        %6456 = vmatpush2.bf16.msra.mxu0 0
        %6457 = vmatprep.subr.bf16.mxu0 0
        %6458 = vmatpush2.bf16.msra.mxu0 0
        %6459 = vmatprep.subr.bf16.mxu0 0
        %6460 = vmatpush2.bf16.msra.mxu0 0
        %6461 = vmatprep.subr.bf16.mxu0 0
        %6462 = vmatpush2.bf16.msra.mxu0 0
        %6463 = vmatprep.subr.bf16.mxu0 0
        %6464 = vmatpush2.bf16.msra.mxu0 0
        %6465 = vmatprep.subr.bf16.mxu0 0
        %6466 = vmatpush2.bf16.msra.mxu0 0
        %6467 = vmatprep.subr.bf16.mxu0 0
        %6468 = vmatpush2.bf16.msra.mxu0 0
        %6469 = vmatprep.mubr.bf16.mxu0 0
        %6470 = vmatmul.mubr.bf16.gmra.mxu0 %v6202
        %v6471 = vpop.f32.mrf.mxu0
        %v6472 = vadd.f32 0.0, %v6471
        %v6473 = vpop.f32.mrf.mxu0
        %v6474 = vadd.f32 0.0, %v6473
        %v6475 = vpop.f32.mrf.mxu0
        %v6476 = vpop.f32.mrf.mxu0
        %6477 = vdwg.mxu0
        %v6510 = vunpack.c.l.b16 %v6169
        %v6511 = vunpack.c.h.b16 %v6169
        %v6512 = vunpack.c.l.b16 %v6170
        %v6513 = vunpack.c.h.b16 %v6170
        %v6514 = vunpack.c.l.b16 %v6171
        %v6515 = vunpack.c.h.b16 %v6171
        %v6516 = vunpack.c.l.b16 %v6172
        %v6517 = vunpack.c.h.b16 %v6172
        %v6518 = vunpack.c.l.b16 %v6173
        %v6519 = vunpack.c.h.b16 %v6173
        %v6520 = vunpack.c.l.b16 %v6174
        %v6521 = vunpack.c.h.b16 %v6174
        %v6522 = vunpack.c.l.b16 %v6175
        %v6523 = vunpack.c.h.b16 %v6175
        %v6524 = vunpack.c.l.b16 %v6176
        %v6525 = vunpack.c.h.b16 %v6176
        %v6526 = vunpack.c.l.b16 %v6177
        %v6527 = vunpack.c.h.b16 %v6177
        %v6528 = vunpack.c.l.b16 %v6178
        %v6529 = vunpack.c.h.b16 %v6178
        %v6530 = vunpack.c.l.b16 %v6179
        %v6531 = vunpack.c.h.b16 %v6179
        %v6532 = vunpack.c.l.b16 %v6180
        %v6533 = vunpack.c.h.b16 %v6180
        %v6534 = vunpack.c.l.b16 %v6181
        %v6535 = vunpack.c.h.b16 %v6181
        %v6536 = vunpack.c.l.b16 %v6182
        %v6537 = vunpack.c.h.b16 %v6182
        %v6538 = vunpack.c.l.b16 %v6183
        %v6539 = vunpack.c.h.b16 %v6183
        %v6540 = vunpack.c.l.b16 %v6184
        %v6541 = vunpack.c.h.b16 %v6184
        %v6542 = vunpack.c.l.b16 %v6185
        %v6543 = vunpack.c.h.b16 %v6185
        %v6544 = vunpack.c.l.b16 %v6186
        %v6545 = vunpack.c.h.b16 %v6186
        %v6546 = vunpack.c.l.b16 %v6187
        %v6547 = vunpack.c.h.b16 %v6187
        %v6548 = vunpack.c.l.b16 %v6188
        %v6549 = vunpack.c.h.b16 %v6188
        %v6550 = vunpack.c.l.b16 %v6189
        %v6551 = vunpack.c.h.b16 %v6189
        %v6552 = vunpack.c.l.b16 %v6190
        %v6553 = vunpack.c.h.b16 %v6190
        %v6554 = vunpack.c.l.b16 %v6191
        %v6555 = vunpack.c.h.b16 %v6191
        %v6556 = vunpack.c.l.b16 %v6192
        %v6557 = vunpack.c.h.b16 %v6192
        %v6558 = vunpack.c.l.b16 %v6193
        %v6559 = vunpack.c.h.b16 %v6193
        %v6560 = vunpack.c.l.b16 %v6194
        %v6561 = vunpack.c.h.b16 %v6194
        %v6562 = vunpack.c.l.b16 %v6195
        %v6563 = vunpack.c.h.b16 %v6195
        %v6564 = vunpack.c.l.b16 %v6196
        %v6565 = vunpack.c.h.b16 %v6196
        %v6566 = vunpack.c.l.b16 %v6197
        %v6567 = vunpack.c.h.b16 %v6197
        %v6568 = vunpack.c.l.b16 %v6198
        %v6569 = vunpack.c.h.b16 %v6198
        %v6570 = vunpack.c.l.b16 %v6199
        %v6571 = vunpack.c.h.b16 %v6199
        %v6572 = vunpack.c.l.b16 %v6200
        %v6573 = vunpack.c.h.b16 %v6200
        %v6574 = vpack.c.b16 %v6514, %v6510
        %v6575 = vpack.c.b16 %v6515, %v6511
        %v6576 = vpack.c.b16 %v6516, %v6512
        %v6577 = vpack.c.b16 %v6517, %v6513
        %v6578 = vpack.c.b16 %v6522, %v6518
        %v6579 = vpack.c.b16 %v6523, %v6519
        %v6580 = vpack.c.b16 %v6524, %v6520
        %v6581 = vpack.c.b16 %v6525, %v6521
        %v6582 = vpack.c.b16 %v6530, %v6526
        %v6583 = vpack.c.b16 %v6531, %v6527
        %v6584 = vpack.c.b16 %v6532, %v6528
        %v6585 = vpack.c.b16 %v6533, %v6529
        %v6586 = vpack.c.b16 %v6538, %v6534
        %v6587 = vpack.c.b16 %v6539, %v6535
        %v6588 = vpack.c.b16 %v6540, %v6536
        %v6589 = vpack.c.b16 %v6541, %v6537
        %v6590 = vpack.c.b16 %v6546, %v6542
        %v6591 = vpack.c.b16 %v6547, %v6543
        %v6592 = vpack.c.b16 %v6548, %v6544
        %v6593 = vpack.c.b16 %v6549, %v6545
        %v6594 = vpack.c.b16 %v6554, %v6550
        %v6595 = vpack.c.b16 %v6555, %v6551
        %v6596 = vpack.c.b16 %v6556, %v6552
        %v6597 = vpack.c.b16 %v6557, %v6553
        %v6598 = vpack.c.b16 %v6562, %v6558
        %v6599 = vpack.c.b16 %v6563, %v6559
        %v6600 = vpack.c.b16 %v6564, %v6560
        %v6601 = vpack.c.b16 %v6565, %v6561
        %v6602 = vpack.c.b16 %v6570, %v6566
        %v6603 = vpack.c.b16 %v6571, %v6567
        %v6604 = vpack.c.b16 %v6572, %v6568
        %v6605 = vpack.c.b16 %v6573, %v6569
        %6638 = vmatprep.subr.bf16.mxu0 %v6603
        %6639 = vmatpush1.bf16.msra.mxu0 %v6602
        %6640 = vmatprep.subr.bf16.mxu0 %v6599
        %6641 = vmatpush1.bf16.msra.mxu0 %v6598
        %6642 = vmatprep.subr.bf16.mxu0 %v6595
        %6643 = vmatpush1.bf16.msra.mxu0 %v6594
        %6644 = vmatprep.subr.bf16.mxu0 %v6591
        %6645 = vmatpush1.bf16.msra.mxu0 %v6590
        %6646 = vmatprep.subr.bf16.mxu0 %v6587
        %6647 = vmatpush1.bf16.msra.mxu0 %v6586
        %6648 = vmatprep.subr.bf16.mxu0 %v6583
        %6649 = vmatpush1.bf16.msra.mxu0 %v6582
        %6650 = vmatprep.subr.bf16.mxu0 %v6579
        %6651 = vmatpush1.bf16.msra.mxu0 %v6578
        %6652 = vmatprep.subr.bf16.mxu0 %v6575
        %6653 = vmatpush1.bf16.msra.mxu0 %v6574
        %6654 = vmatprep.subr.bf16.mxu0 0
        %6655 = vmatpush2.bf16.msra.mxu0 0
        %6656 = vmatprep.subr.bf16.mxu0 0
        %6657 = vmatpush2.bf16.msra.mxu0 0
        %6658 = vmatprep.subr.bf16.mxu0 0
        %6659 = vmatpush2.bf16.msra.mxu0 0
        %6660 = vmatprep.subr.bf16.mxu0 0
        %6661 = vmatpush2.bf16.msra.mxu0 0
        %6662 = vmatprep.subr.bf16.mxu0 0
        %6663 = vmatpush2.bf16.msra.mxu0 0
        %6664 = vmatprep.subr.bf16.mxu0 0
        %6665 = vmatpush2.bf16.msra.mxu0 0
        %6666 = vmatprep.subr.bf16.mxu0 0
        %6667 = vmatpush2.bf16.msra.mxu0 0
        %6668 = vmatprep.subr.bf16.mxu0 0
        %6669 = vmatpush2.bf16.msra.mxu0 0
        %6670 = vmatprep.mubr.bf16.mxu0 0
        %6671 = vmatmul.mubr.bf16.gmra.mxu0 %v6168
        %v6672 = vpop.f32.mrf.mxu0
        %v6673 = vadd.f32 %v6431, %v6672
        %v6674 = vpop.f32.mrf.mxu0
        %v6675 = vadd.f32 %v6433, %v6674
        %v6676 = vpop.f32.mrf.mxu0
        %v6677 = vpop.f32.mrf.mxu0
        %6678 = vdwg.mxu0
        %6679 = vmatprep.subr.bf16.mxu0 %v6605
        %6680 = vmatpush1.bf16.msra.mxu0 %v6604
        %6681 = vmatprep.subr.bf16.mxu0 %v6601
        %6682 = vmatpush1.bf16.msra.mxu0 %v6600
        %6683 = vmatprep.subr.bf16.mxu0 %v6597
        %6684 = vmatpush1.bf16.msra.mxu0 %v6596
        %6685 = vmatprep.subr.bf16.mxu0 %v6593
        %6686 = vmatpush1.bf16.msra.mxu0 %v6592
        %6687 = vmatprep.subr.bf16.mxu0 %v6589
        %6688 = vmatpush1.bf16.msra.mxu0 %v6588
        %6689 = vmatprep.subr.bf16.mxu0 %v6585
        %6690 = vmatpush1.bf16.msra.mxu0 %v6584
        %6691 = vmatprep.subr.bf16.mxu0 %v6581
        %6692 = vmatpush1.bf16.msra.mxu0 %v6580
        %6693 = vmatprep.subr.bf16.mxu0 %v6577
        %6694 = vmatpush1.bf16.msra.mxu0 %v6576
        %6695 = vmatprep.subr.bf16.mxu0 0
        %6696 = vmatpush2.bf16.msra.mxu0 0
        %6697 = vmatprep.subr.bf16.mxu0 0
        %6698 = vmatpush2.bf16.msra.mxu0 0
        %6699 = vmatprep.subr.bf16.mxu0 0
        %6700 = vmatpush2.bf16.msra.mxu0 0
        %6701 = vmatprep.subr.bf16.mxu0 0
        %6702 = vmatpush2.bf16.msra.mxu0 0
        %6703 = vmatprep.subr.bf16.mxu0 0
        %6704 = vmatpush2.bf16.msra.mxu0 0
        %6705 = vmatprep.subr.bf16.mxu0 0
        %6706 = vmatpush2.bf16.msra.mxu0 0
        %6707 = vmatprep.subr.bf16.mxu0 0
        %6708 = vmatpush2.bf16.msra.mxu0 0
        %6709 = vmatprep.subr.bf16.mxu0 0
        %6710 = vmatpush2.bf16.msra.mxu0 0
        %6711 = vmatprep.mubr.bf16.mxu0 0
        %6712 = vmatmul.mubr.bf16.gmra.mxu0 %v6168
        %v6713 = vpop.f32.mrf.mxu0
        %v6714 = vadd.f32 %v6472, %v6713
        %v6715 = vpop.f32.mrf.mxu0
        %v6716 = vadd.f32 %v6474, %v6715
        %v6717 = vpop.f32.mrf.mxu0
        %v6718 = vpop.f32.mrf.mxu0
        %6719 = vdwg.mxu0
        %v6720 = vld [vmem:[#allocation8 + $0x2] sm:$0xf]
        %v6721 = vsel %vm6163, 1, 0
        %vm6722 = vcmp.eq.s32.totalorder %v6721, 1
        %v6723 = vsel %vm6722, %v6720, 0.0
        %v6724 = vpack.c.bf16 %v6723, %v6723
        %s6725 = scalar_lea.vmem %s7, 512
        %v6726 = vld [vmem:[%s6725] sm:$0xff]
        %v6727 = vld [vmem:[%s6725 + $0x8] sm:$0xff]
        %v6728 = vld [vmem:[%s6725 + $0x10] sm:$0xff]
        %v6729 = vld [vmem:[%s6725 + $0x18] sm:$0xff]
        %v6730 = vld [vmem:[%s6725 + $0x20] sm:$0xff]
        %v6731 = vld [vmem:[%s6725 + $0x28] sm:$0xff]
        %v6732 = vld [vmem:[%s6725 + $0x30] sm:$0xff]
        %v6733 = vld [vmem:[%s6725 + $0x38] sm:$0xff]
        %v6734 = vld [vmem:[%s6725 + $0x40] sm:$0xff]
        %v6735 = vld [vmem:[%s6725 + $0x48] sm:$0xff]
        %v6736 = vld [vmem:[%s6725 + $0x50] sm:$0xff]
        %v6737 = vld [vmem:[%s6725 + $0x58] sm:$0xff]
        %v6738 = vld [vmem:[%s6725 + $0x60] sm:$0xff]
        %v6739 = vld [vmem:[%s6725 + $0x68] sm:$0xff]
        %v6740 = vld [vmem:[%s6725 + $0x70] sm:$0xff]
        %v6741 = vld [vmem:[%s6725 + $0x78] sm:$0xff]
        %v6742 = vld [vmem:[%s6725 + $0x80] sm:$0xff]
        %v6743 = vld [vmem:[%s6725 + $0x88] sm:$0xff]
        %v6744 = vld [vmem:[%s6725 + $0x90] sm:$0xff]
        %v6745 = vld [vmem:[%s6725 + $0x98] sm:$0xff]
        %v6746 = vld [vmem:[%s6725 + $0xa0] sm:$0xff]
        %v6747 = vld [vmem:[%s6725 + $0xa8] sm:$0xff]
        %v6748 = vld [vmem:[%s6725 + $0xb0] sm:$0xff]
        %v6749 = vld [vmem:[%s6725 + $0xb8] sm:$0xff]
        %v6750 = vld [vmem:[%s6725 + $0xc0] sm:$0xff]
        %v6751 = vld [vmem:[%s6725 + $0xc8] sm:$0xff]
        %v6752 = vld [vmem:[%s6725 + $0xd0] sm:$0xff]
        %v6753 = vld [vmem:[%s6725 + $0xd8] sm:$0xff]
        %v6754 = vld [vmem:[%s6725 + $0xe0] sm:$0xff]
        %v6755 = vld [vmem:[%s6725 + $0xe8] sm:$0xff]
        %v6756 = vld [vmem:[%s6725 + $0xf0] sm:$0xff]
        %v6757 = vld [vmem:[%s6725 + $0xf8] sm:$0xff]
        %v6790 = vunpack.c.l.b16 %v6726
        %v6791 = vunpack.c.h.b16 %v6726
        %v6792 = vunpack.c.l.b16 %v6727
        %v6793 = vunpack.c.h.b16 %v6727
        %v6794 = vunpack.c.l.b16 %v6728
        %v6795 = vunpack.c.h.b16 %v6728
        %v6796 = vunpack.c.l.b16 %v6729
        %v6797 = vunpack.c.h.b16 %v6729
        %v6798 = vunpack.c.l.b16 %v6730
        %v6799 = vunpack.c.h.b16 %v6730
        %v6800 = vunpack.c.l.b16 %v6731
        %v6801 = vunpack.c.h.b16 %v6731
        %v6802 = vunpack.c.l.b16 %v6732
        %v6803 = vunpack.c.h.b16 %v6732
        %v6804 = vunpack.c.l.b16 %v6733
        %v6805 = vunpack.c.h.b16 %v6733
        %v6806 = vunpack.c.l.b16 %v6734
        %v6807 = vunpack.c.h.b16 %v6734
        %v6808 = vunpack.c.l.b16 %v6735
        %v6809 = vunpack.c.h.b16 %v6735
        %v6810 = vunpack.c.l.b16 %v6736
        %v6811 = vunpack.c.h.b16 %v6736
        %v6812 = vunpack.c.l.b16 %v6737
        %v6813 = vunpack.c.h.b16 %v6737
        %v6814 = vunpack.c.l.b16 %v6738
        %v6815 = vunpack.c.h.b16 %v6738
        %v6816 = vunpack.c.l.b16 %v6739
        %v6817 = vunpack.c.h.b16 %v6739
        %v6818 = vunpack.c.l.b16 %v6740
        %v6819 = vunpack.c.h.b16 %v6740
        %v6820 = vunpack.c.l.b16 %v6741
        %v6821 = vunpack.c.h.b16 %v6741
        %v6822 = vunpack.c.l.b16 %v6742
        %v6823 = vunpack.c.h.b16 %v6742
        %v6824 = vunpack.c.l.b16 %v6743
        %v6825 = vunpack.c.h.b16 %v6743
        %v6826 = vunpack.c.l.b16 %v6744
        %v6827 = vunpack.c.h.b16 %v6744
        %v6828 = vunpack.c.l.b16 %v6745
        %v6829 = vunpack.c.h.b16 %v6745
        %v6830 = vunpack.c.l.b16 %v6746
        %v6831 = vunpack.c.h.b16 %v6746
        %v6832 = vunpack.c.l.b16 %v6747
        %v6833 = vunpack.c.h.b16 %v6747
        %v6834 = vunpack.c.l.b16 %v6748
        %v6835 = vunpack.c.h.b16 %v6748
        %v6836 = vunpack.c.l.b16 %v6749
        %v6837 = vunpack.c.h.b16 %v6749
        %v6838 = vunpack.c.l.b16 %v6750
        %v6839 = vunpack.c.h.b16 %v6750
        %v6840 = vunpack.c.l.b16 %v6751
        %v6841 = vunpack.c.h.b16 %v6751
        %v6842 = vunpack.c.l.b16 %v6752
        %v6843 = vunpack.c.h.b16 %v6752
        %v6844 = vunpack.c.l.b16 %v6753
        %v6845 = vunpack.c.h.b16 %v6753
        %v6846 = vunpack.c.l.b16 %v6754
        %v6847 = vunpack.c.h.b16 %v6754
        %v6848 = vunpack.c.l.b16 %v6755
        %v6849 = vunpack.c.h.b16 %v6755
        %v6850 = vunpack.c.l.b16 %v6756
        %v6851 = vunpack.c.h.b16 %v6756
        %v6852 = vunpack.c.l.b16 %v6757
        %v6853 = vunpack.c.h.b16 %v6757
        %v6854 = vpack.c.b16 %v6794, %v6790
        %v6855 = vpack.c.b16 %v6795, %v6791
        %v6856 = vpack.c.b16 %v6796, %v6792
        %v6857 = vpack.c.b16 %v6797, %v6793
        %v6858 = vpack.c.b16 %v6802, %v6798
        %v6859 = vpack.c.b16 %v6803, %v6799
        %v6860 = vpack.c.b16 %v6804, %v6800
        %v6861 = vpack.c.b16 %v6805, %v6801
        %v6862 = vpack.c.b16 %v6810, %v6806
        %v6863 = vpack.c.b16 %v6811, %v6807
        %v6864 = vpack.c.b16 %v6812, %v6808
        %v6865 = vpack.c.b16 %v6813, %v6809
        %v6866 = vpack.c.b16 %v6818, %v6814
        %v6867 = vpack.c.b16 %v6819, %v6815
        %v6868 = vpack.c.b16 %v6820, %v6816
        %v6869 = vpack.c.b16 %v6821, %v6817
        %v6870 = vpack.c.b16 %v6826, %v6822
        %v6871 = vpack.c.b16 %v6827, %v6823
        %v6872 = vpack.c.b16 %v6828, %v6824
        %v6873 = vpack.c.b16 %v6829, %v6825
        %v6874 = vpack.c.b16 %v6834, %v6830
        %v6875 = vpack.c.b16 %v6835, %v6831
        %v6876 = vpack.c.b16 %v6836, %v6832
        %v6877 = vpack.c.b16 %v6837, %v6833
        %v6878 = vpack.c.b16 %v6842, %v6838
        %v6879 = vpack.c.b16 %v6843, %v6839
        %v6880 = vpack.c.b16 %v6844, %v6840
        %v6881 = vpack.c.b16 %v6845, %v6841
        %v6882 = vpack.c.b16 %v6850, %v6846
        %v6883 = vpack.c.b16 %v6851, %v6847
        %v6884 = vpack.c.b16 %v6852, %v6848
        %v6885 = vpack.c.b16 %v6853, %v6849
        %6918 = vmatprep.subr.bf16.mxu0 %v6883
        %6919 = vmatpush1.bf16.msra.mxu0 %v6882
        %6920 = vmatprep.subr.bf16.mxu0 %v6879
        %6921 = vmatpush1.bf16.msra.mxu0 %v6878
        %6922 = vmatprep.subr.bf16.mxu0 %v6875
        %6923 = vmatpush1.bf16.msra.mxu0 %v6874
        %6924 = vmatprep.subr.bf16.mxu0 %v6871
        %6925 = vmatpush1.bf16.msra.mxu0 %v6870
        %6926 = vmatprep.subr.bf16.mxu0 %v6867
        %6927 = vmatpush1.bf16.msra.mxu0 %v6866
        %6928 = vmatprep.subr.bf16.mxu0 %v6863
        %6929 = vmatpush1.bf16.msra.mxu0 %v6862
        %6930 = vmatprep.subr.bf16.mxu0 %v6859
        %6931 = vmatpush1.bf16.msra.mxu0 %v6858
        %6932 = vmatprep.subr.bf16.mxu0 %v6855
        %6933 = vmatpush1.bf16.msra.mxu0 %v6854
        %6934 = vmatprep.subr.bf16.mxu0 0
        %6935 = vmatpush2.bf16.msra.mxu0 0
        %6936 = vmatprep.subr.bf16.mxu0 0
        %6937 = vmatpush2.bf16.msra.mxu0 0
        %6938 = vmatprep.subr.bf16.mxu0 0
        %6939 = vmatpush2.bf16.msra.mxu0 0
        %6940 = vmatprep.subr.bf16.mxu0 0
        %6941 = vmatpush2.bf16.msra.mxu0 0
        %6942 = vmatprep.subr.bf16.mxu0 0
        %6943 = vmatpush2.bf16.msra.mxu0 0
        %6944 = vmatprep.subr.bf16.mxu0 0
        %6945 = vmatpush2.bf16.msra.mxu0 0
        %6946 = vmatprep.subr.bf16.mxu0 0
        %6947 = vmatpush2.bf16.msra.mxu0 0
        %6948 = vmatprep.subr.bf16.mxu0 0
        %6949 = vmatpush2.bf16.msra.mxu0 0
        %6950 = vmatprep.mubr.bf16.mxu0 0
        %6951 = vmatmul.mubr.bf16.gmra.mxu0 %v6724
        %v6952 = vpop.f32.mrf.mxu0
        %v6953 = vadd.f32 0.0, %v6952
        %v6954 = vpop.f32.mrf.mxu0
        %v6955 = vadd.f32 0.0, %v6954
        %v6956 = vpop.f32.mrf.mxu0
        %v6957 = vpop.f32.mrf.mxu0
        %6958 = vdwg.mxu0
        %6959 = vmatprep.subr.bf16.mxu0 %v6885
        %6960 = vmatpush1.bf16.msra.mxu0 %v6884
        %6961 = vmatprep.subr.bf16.mxu0 %v6881
        %6962 = vmatpush1.bf16.msra.mxu0 %v6880
        %6963 = vmatprep.subr.bf16.mxu0 %v6877
        %6964 = vmatpush1.bf16.msra.mxu0 %v6876
        %6965 = vmatprep.subr.bf16.mxu0 %v6873
        %6966 = vmatpush1.bf16.msra.mxu0 %v6872
        %6967 = vmatprep.subr.bf16.mxu0 %v6869
        %6968 = vmatpush1.bf16.msra.mxu0 %v6868
        %6969 = vmatprep.subr.bf16.mxu0 %v6865
        %6970 = vmatpush1.bf16.msra.mxu0 %v6864
        %6971 = vmatprep.subr.bf16.mxu0 %v6861
        %6972 = vmatpush1.bf16.msra.mxu0 %v6860
        %6973 = vmatprep.subr.bf16.mxu0 %v6857
        %6974 = vmatpush1.bf16.msra.mxu0 %v6856
        %6975 = vmatprep.subr.bf16.mxu0 0
        %6976 = vmatpush2.bf16.msra.mxu0 0
        %6977 = vmatprep.subr.bf16.mxu0 0
        %6978 = vmatpush2.bf16.msra.mxu0 0
        %6979 = vmatprep.subr.bf16.mxu0 0
        %6980 = vmatpush2.bf16.msra.mxu0 0
        %6981 = vmatprep.subr.bf16.mxu0 0
        %6982 = vmatpush2.bf16.msra.mxu0 0
        %6983 = vmatprep.subr.bf16.mxu0 0
        %6984 = vmatpush2.bf16.msra.mxu0 0
        %6985 = vmatprep.subr.bf16.mxu0 0
        %6986 = vmatpush2.bf16.msra.mxu0 0
        %6987 = vmatprep.subr.bf16.mxu0 0
        %6988 = vmatpush2.bf16.msra.mxu0 0
        %6989 = vmatprep.subr.bf16.mxu0 0
        %6990 = vmatpush2.bf16.msra.mxu0 0
        %6991 = vmatprep.mubr.bf16.mxu0 0
        %6992 = vmatmul.mubr.bf16.gmra.mxu0 %v6724
        %v6993 = vpop.f32.mrf.mxu0
        %v6994 = vadd.f32 0.0, %v6993
        %v6995 = vpop.f32.mrf.mxu0
        %v6996 = vadd.f32 0.0, %v6995
        %v6997 = vpop.f32.mrf.mxu0
        %v6998 = vpop.f32.mrf.mxu0
        %6999 = vdwg.mxu0
        %v7000 = vadd.f32 %v6673, %v6953
        %v7001 = vadd.f32 %v6675, %v6955
        %v7002 = vadd.f32 %v6714, %v6994
        %v7003 = vadd.f32 %v6716, %v6996
        %v7004 = vsel %vm6166, %v6720, 0.0
        %v7005 = vpack.c.bf16 %v7004, %v7004
        %s7006 = scalar_lea.vmem %s7, 768
        %v7007 = vld [vmem:[%s7006] sm:$0xff]
        %v7008 = vld [vmem:[%s7006 + $0x8] sm:$0xff]
        %v7009 = vld [vmem:[%s7006 + $0x10] sm:$0xff]
        %v7010 = vld [vmem:[%s7006 + $0x18] sm:$0xff]
        %v7011 = vld [vmem:[%s7006 + $0x20] sm:$0xff]
        %v7012 = vld [vmem:[%s7006 + $0x28] sm:$0xff]
        %v7013 = vld [vmem:[%s7006 + $0x30] sm:$0xff]
        %v7014 = vld [vmem:[%s7006 + $0x38] sm:$0xff]
        %v7015 = vld [vmem:[%s7006 + $0x40] sm:$0xff]
        %v7016 = vld [vmem:[%s7006 + $0x48] sm:$0xff]
        %v7017 = vld [vmem:[%s7006 + $0x50] sm:$0xff]
        %v7018 = vld [vmem:[%s7006 + $0x58] sm:$0xff]
        %v7019 = vld [vmem:[%s7006 + $0x60] sm:$0xff]
        %v7020 = vld [vmem:[%s7006 + $0x68] sm:$0xff]
        %v7021 = vld [vmem:[%s7006 + $0x70] sm:$0xff]
        %v7022 = vld [vmem:[%s7006 + $0x78] sm:$0xff]
        %v7023 = vld [vmem:[%s7006 + $0x80] sm:$0xff]
        %v7024 = vld [vmem:[%s7006 + $0x88] sm:$0xff]
        %v7025 = vld [vmem:[%s7006 + $0x90] sm:$0xff]
        %v7026 = vld [vmem:[%s7006 + $0x98] sm:$0xff]
        %v7027 = vld [vmem:[%s7006 + $0xa0] sm:$0xff]
        %v7028 = vld [vmem:[%s7006 + $0xa8] sm:$0xff]
        %v7029 = vld [vmem:[%s7006 + $0xb0] sm:$0xff]
        %v7030 = vld [vmem:[%s7006 + $0xb8] sm:$0xff]
        %v7031 = vld [vmem:[%s7006 + $0xc0] sm:$0xff]
        %v7032 = vld [vmem:[%s7006 + $0xc8] sm:$0xff]
        %v7033 = vld [vmem:[%s7006 + $0xd0] sm:$0xff]
        %v7034 = vld [vmem:[%s7006 + $0xd8] sm:$0xff]
        %v7035 = vld [vmem:[%s7006 + $0xe0] sm:$0xff]
        %v7036 = vld [vmem:[%s7006 + $0xe8] sm:$0xff]
        %v7037 = vld [vmem:[%s7006 + $0xf0] sm:$0xff]
        %v7038 = vld [vmem:[%s7006 + $0xf8] sm:$0xff]
        %v7071 = vunpack.c.l.b16 %v7007
        %v7072 = vunpack.c.h.b16 %v7007
        %v7073 = vunpack.c.l.b16 %v7008
        %v7074 = vunpack.c.h.b16 %v7008
        %v7075 = vunpack.c.l.b16 %v7009
        %v7076 = vunpack.c.h.b16 %v7009
        %v7077 = vunpack.c.l.b16 %v7010
        %v7078 = vunpack.c.h.b16 %v7010
        %v7079 = vunpack.c.l.b16 %v7011
        %v7080 = vunpack.c.h.b16 %v7011
        %v7081 = vunpack.c.l.b16 %v7012
        %v7082 = vunpack.c.h.b16 %v7012
        %v7083 = vunpack.c.l.b16 %v7013
        %v7084 = vunpack.c.h.b16 %v7013
        %v7085 = vunpack.c.l.b16 %v7014
        %v7086 = vunpack.c.h.b16 %v7014
        %v7087 = vunpack.c.l.b16 %v7015
        %v7088 = vunpack.c.h.b16 %v7015
        %v7089 = vunpack.c.l.b16 %v7016
        %v7090 = vunpack.c.h.b16 %v7016
        %v7091 = vunpack.c.l.b16 %v7017
        %v7092 = vunpack.c.h.b16 %v7017
        %v7093 = vunpack.c.l.b16 %v7018
        %v7094 = vunpack.c.h.b16 %v7018
        %v7095 = vunpack.c.l.b16 %v7019
        %v7096 = vunpack.c.h.b16 %v7019
        %v7097 = vunpack.c.l.b16 %v7020
        %v7098 = vunpack.c.h.b16 %v7020
        %v7099 = vunpack.c.l.b16 %v7021
        %v7100 = vunpack.c.h.b16 %v7021
        %v7101 = vunpack.c.l.b16 %v7022
        %v7102 = vunpack.c.h.b16 %v7022
        %v7103 = vunpack.c.l.b16 %v7023
        %v7104 = vunpack.c.h.b16 %v7023
        %v7105 = vunpack.c.l.b16 %v7024
        %v7106 = vunpack.c.h.b16 %v7024
        %v7107 = vunpack.c.l.b16 %v7025
        %v7108 = vunpack.c.h.b16 %v7025
        %v7109 = vunpack.c.l.b16 %v7026
        %v7110 = vunpack.c.h.b16 %v7026
        %v7111 = vunpack.c.l.b16 %v7027
        %v7112 = vunpack.c.h.b16 %v7027
        %v7113 = vunpack.c.l.b16 %v7028
        %v7114 = vunpack.c.h.b16 %v7028
        %v7115 = vunpack.c.l.b16 %v7029
        %v7116 = vunpack.c.h.b16 %v7029
        %v7117 = vunpack.c.l.b16 %v7030
        %v7118 = vunpack.c.h.b16 %v7030
        %v7119 = vunpack.c.l.b16 %v7031
        %v7120 = vunpack.c.h.b16 %v7031
        %v7121 = vunpack.c.l.b16 %v7032
        %v7122 = vunpack.c.h.b16 %v7032
        %v7123 = vunpack.c.l.b16 %v7033
        %v7124 = vunpack.c.h.b16 %v7033
        %v7125 = vunpack.c.l.b16 %v7034
        %v7126 = vunpack.c.h.b16 %v7034
        %v7127 = vunpack.c.l.b16 %v7035
        %v7128 = vunpack.c.h.b16 %v7035
        %v7129 = vunpack.c.l.b16 %v7036
        %v7130 = vunpack.c.h.b16 %v7036
        %v7131 = vunpack.c.l.b16 %v7037
        %v7132 = vunpack.c.h.b16 %v7037
        %v7133 = vunpack.c.l.b16 %v7038
        %v7134 = vunpack.c.h.b16 %v7038
        %v7135 = vpack.c.b16 %v7075, %v7071
        %v7136 = vpack.c.b16 %v7076, %v7072
        %v7137 = vpack.c.b16 %v7077, %v7073
        %v7138 = vpack.c.b16 %v7078, %v7074
        %v7139 = vpack.c.b16 %v7083, %v7079
        %v7140 = vpack.c.b16 %v7084, %v7080
        %v7141 = vpack.c.b16 %v7085, %v7081
        %v7142 = vpack.c.b16 %v7086, %v7082
        %v7143 = vpack.c.b16 %v7091, %v7087
        %v7144 = vpack.c.b16 %v7092, %v7088
        %v7145 = vpack.c.b16 %v7093, %v7089
        %v7146 = vpack.c.b16 %v7094, %v7090
        %v7147 = vpack.c.b16 %v7099, %v7095
        %v7148 = vpack.c.b16 %v7100, %v7096
        %v7149 = vpack.c.b16 %v7101, %v7097
        %v7150 = vpack.c.b16 %v7102, %v7098
        %v7151 = vpack.c.b16 %v7107, %v7103
        %v7152 = vpack.c.b16 %v7108, %v7104
        %v7153 = vpack.c.b16 %v7109, %v7105
        %v7154 = vpack.c.b16 %v7110, %v7106
        %v7155 = vpack.c.b16 %v7115, %v7111
        %v7156 = vpack.c.b16 %v7116, %v7112
        %v7157 = vpack.c.b16 %v7117, %v7113
        %v7158 = vpack.c.b16 %v7118, %v7114
        %v7159 = vpack.c.b16 %v7123, %v7119
        %v7160 = vpack.c.b16 %v7124, %v7120
        %v7161 = vpack.c.b16 %v7125, %v7121
        %v7162 = vpack.c.b16 %v7126, %v7122
        %v7163 = vpack.c.b16 %v7131, %v7127
        %v7164 = vpack.c.b16 %v7132, %v7128
        %v7165 = vpack.c.b16 %v7133, %v7129
        %v7166 = vpack.c.b16 %v7134, %v7130
        %7199 = vmatprep.subr.bf16.mxu0 %v7164
        %7200 = vmatpush1.bf16.msra.mxu0 %v7163
        %7201 = vmatprep.subr.bf16.mxu0 %v7160
        %7202 = vmatpush1.bf16.msra.mxu0 %v7159
        %7203 = vmatprep.subr.bf16.mxu0 %v7156
        %7204 = vmatpush1.bf16.msra.mxu0 %v7155
        %7205 = vmatprep.subr.bf16.mxu0 %v7152
        %7206 = vmatpush1.bf16.msra.mxu0 %v7151
        %7207 = vmatprep.subr.bf16.mxu0 %v7148
        %7208 = vmatpush1.bf16.msra.mxu0 %v7147
        %7209 = vmatprep.subr.bf16.mxu0 %v7144
        %7210 = vmatpush1.bf16.msra.mxu0 %v7143
        %7211 = vmatprep.subr.bf16.mxu0 %v7140
        %7212 = vmatpush1.bf16.msra.mxu0 %v7139
        %7213 = vmatprep.subr.bf16.mxu0 %v7136
        %7214 = vmatpush1.bf16.msra.mxu0 %v7135
        %7215 = vmatprep.subr.bf16.mxu0 0
        %7216 = vmatpush2.bf16.msra.mxu0 0
        %7217 = vmatprep.subr.bf16.mxu0 0
        %7218 = vmatpush2.bf16.msra.mxu0 0
        %7219 = vmatprep.subr.bf16.mxu0 0
        %7220 = vmatpush2.bf16.msra.mxu0 0
        %7221 = vmatprep.subr.bf16.mxu0 0
        %7222 = vmatpush2.bf16.msra.mxu0 0
        %7223 = vmatprep.subr.bf16.mxu0 0
        %7224 = vmatpush2.bf16.msra.mxu0 0
        %7225 = vmatprep.subr.bf16.mxu0 0
        %7226 = vmatpush2.bf16.msra.mxu0 0
        %7227 = vmatprep.subr.bf16.mxu0 0
        %7228 = vmatpush2.bf16.msra.mxu0 0
        %7229 = vmatprep.subr.bf16.mxu0 0
        %7230 = vmatpush2.bf16.msra.mxu0 0
        %7231 = vmatprep.mubr.bf16.mxu0 0
        %7232 = vmatmul.mubr.bf16.gmra.mxu0 %v7005
        %v7233 = vpop.f32.mrf.mxu0
        %v7234 = vadd.f32 0.0, %v7233
        %v7235 = vpop.f32.mrf.mxu0
        %v7236 = vadd.f32 0.0, %v7235
        %v7237 = vpop.f32.mrf.mxu0
        %v7238 = vpop.f32.mrf.mxu0
        %7239 = vdwg.mxu0
        %7240 = vmatprep.subr.bf16.mxu0 %v7166
        %7241 = vmatpush1.bf16.msra.mxu0 %v7165
        %7242 = vmatprep.subr.bf16.mxu0 %v7162
        %7243 = vmatpush1.bf16.msra.mxu0 %v7161
        %7244 = vmatprep.subr.bf16.mxu0 %v7158
        %7245 = vmatpush1.bf16.msra.mxu0 %v7157
        %7246 = vmatprep.subr.bf16.mxu0 %v7154
        %7247 = vmatpush1.bf16.msra.mxu0 %v7153
        %7248 = vmatprep.subr.bf16.mxu0 %v7150
        %7249 = vmatpush1.bf16.msra.mxu0 %v7149
        %7250 = vmatprep.subr.bf16.mxu0 %v7146
        %7251 = vmatpush1.bf16.msra.mxu0 %v7145
        %7252 = vmatprep.subr.bf16.mxu0 %v7142
        %7253 = vmatpush1.bf16.msra.mxu0 %v7141
        %7254 = vmatprep.subr.bf16.mxu0 %v7138
        %7255 = vmatpush1.bf16.msra.mxu0 %v7137
        %7256 = vmatprep.subr.bf16.mxu0 0
        %7257 = vmatpush2.bf16.msra.mxu0 0
        %7258 = vmatprep.subr.bf16.mxu0 0
        %7259 = vmatpush2.bf16.msra.mxu0 0
        %7260 = vmatprep.subr.bf16.mxu0 0
        %7261 = vmatpush2.bf16.msra.mxu0 0
        %7262 = vmatprep.subr.bf16.mxu0 0
        %7263 = vmatpush2.bf16.msra.mxu0 0
        %7264 = vmatprep.subr.bf16.mxu0 0
        %7265 = vmatpush2.bf16.msra.mxu0 0
        %7266 = vmatprep.subr.bf16.mxu0 0
        %7267 = vmatpush2.bf16.msra.mxu0 0
        %7268 = vmatprep.subr.bf16.mxu0 0
        %7269 = vmatpush2.bf16.msra.mxu0 0
        %7270 = vmatprep.subr.bf16.mxu0 0
        %7271 = vmatpush2.bf16.msra.mxu0 0
        %7272 = vmatprep.mubr.bf16.mxu0 0
        %7273 = vmatmul.mubr.bf16.gmra.mxu0 %v7005
        %v7274 = vpop.f32.mrf.mxu0
        %v7275 = vadd.f32 0.0, %v7274
        %v7276 = vpop.f32.mrf.mxu0
        %v7277 = vadd.f32 0.0, %v7276
        %v7278 = vpop.f32.mrf.mxu0
        %v7279 = vpop.f32.mrf.mxu0
        %7280 = vdwg.mxu0
        %v7281 = vadd.f32 %v7000, %v7234
        %v7282 = vadd.f32 %v7001, %v7236
        %v7283 = vadd.f32 %v7002, %v7275
        %v7284 = vadd.f32 %v7003, %v7277
        %v7285 = vld [vmem:[#allocation8 + $0x3] sm:$0xf]
        %v7286 = vpack.c.bf16 %v7285, %v7285
        %s7287 = scalar_lea.vmem %s7, 1024
        %v7288 = vld [vmem:[%s7287] sm:$0xff]
        %v7289 = vld [vmem:[%s7287 + $0x8] sm:$0xff]
        %v7290 = vld [vmem:[%s7287 + $0x10] sm:$0xff]
        %v7291 = vld [vmem:[%s7287 + $0x18] sm:$0xff]
        %v7292 = vld [vmem:[%s7287 + $0x20] sm:$0xff]
        %v7293 = vld [vmem:[%s7287 + $0x28] sm:$0xff]
        %v7294 = vld [vmem:[%s7287 + $0x30] sm:$0xff]
        %v7295 = vld [vmem:[%s7287 + $0x38] sm:$0xff]
        %v7296 = vld [vmem:[%s7287 + $0x40] sm:$0xff]
        %v7297 = vld [vmem:[%s7287 + $0x48] sm:$0xff]
        %v7298 = vld [vmem:[%s7287 + $0x50] sm:$0xff]
        %v7299 = vld [vmem:[%s7287 + $0x58] sm:$0xff]
        %v7300 = vld [vmem:[%s7287 + $0x60] sm:$0xff]
        %v7301 = vld [vmem:[%s7287 + $0x68] sm:$0xff]
        %v7302 = vld [vmem:[%s7287 + $0x70] sm:$0xff]
        %v7303 = vld [vmem:[%s7287 + $0x78] sm:$0xff]
        %v7304 = vld [vmem:[%s7287 + $0x80] sm:$0xff]
        %v7305 = vld [vmem:[%s7287 + $0x88] sm:$0xff]
        %v7306 = vld [vmem:[%s7287 + $0x90] sm:$0xff]
        %v7307 = vld [vmem:[%s7287 + $0x98] sm:$0xff]
        %v7308 = vld [vmem:[%s7287 + $0xa0] sm:$0xff]
        %v7309 = vld [vmem:[%s7287 + $0xa8] sm:$0xff]
        %v7310 = vld [vmem:[%s7287 + $0xb0] sm:$0xff]
        %v7311 = vld [vmem:[%s7287 + $0xb8] sm:$0xff]
        %v7312 = vld [vmem:[%s7287 + $0xc0] sm:$0xff]
        %v7313 = vld [vmem:[%s7287 + $0xc8] sm:$0xff]
        %v7314 = vld [vmem:[%s7287 + $0xd0] sm:$0xff]
        %v7315 = vld [vmem:[%s7287 + $0xd8] sm:$0xff]
        %v7316 = vld [vmem:[%s7287 + $0xe0] sm:$0xff]
        %v7317 = vld [vmem:[%s7287 + $0xe8] sm:$0xff]
        %v7318 = vld [vmem:[%s7287 + $0xf0] sm:$0xff]
        %v7319 = vld [vmem:[%s7287 + $0xf8] sm:$0xff]
        %v7352 = vunpack.c.l.b16 %v7288
        %v7353 = vunpack.c.h.b16 %v7288
        %v7354 = vunpack.c.l.b16 %v7289
        %v7355 = vunpack.c.h.b16 %v7289
        %v7356 = vunpack.c.l.b16 %v7290
        %v7357 = vunpack.c.h.b16 %v7290
        %v7358 = vunpack.c.l.b16 %v7291
        %v7359 = vunpack.c.h.b16 %v7291
        %v7360 = vunpack.c.l.b16 %v7292
        %v7361 = vunpack.c.h.b16 %v7292
        %v7362 = vunpack.c.l.b16 %v7293
        %v7363 = vunpack.c.h.b16 %v7293
        %v7364 = vunpack.c.l.b16 %v7294
        %v7365 = vunpack.c.h.b16 %v7294
        %v7366 = vunpack.c.l.b16 %v7295
        %v7367 = vunpack.c.h.b16 %v7295
        %v7368 = vunpack.c.l.b16 %v7296
        %v7369 = vunpack.c.h.b16 %v7296
        %v7370 = vunpack.c.l.b16 %v7297
        %v7371 = vunpack.c.h.b16 %v7297
        %v7372 = vunpack.c.l.b16 %v7298
        %v7373 = vunpack.c.h.b16 %v7298
        %v7374 = vunpack.c.l.b16 %v7299
        %v7375 = vunpack.c.h.b16 %v7299
        %v7376 = vunpack.c.l.b16 %v7300
        %v7377 = vunpack.c.h.b16 %v7300
        %v7378 = vunpack.c.l.b16 %v7301
        %v7379 = vunpack.c.h.b16 %v7301
        %v7380 = vunpack.c.l.b16 %v7302
        %v7381 = vunpack.c.h.b16 %v7302
        %v7382 = vunpack.c.l.b16 %v7303
        %v7383 = vunpack.c.h.b16 %v7303
        %v7384 = vunpack.c.l.b16 %v7304
        %v7385 = vunpack.c.h.b16 %v7304
        %v7386 = vunpack.c.l.b16 %v7305
        %v7387 = vunpack.c.h.b16 %v7305
        %v7388 = vunpack.c.l.b16 %v7306
        %v7389 = vunpack.c.h.b16 %v7306
        %v7390 = vunpack.c.l.b16 %v7307
        %v7391 = vunpack.c.h.b16 %v7307
        %v7392 = vunpack.c.l.b16 %v7308
        %v7393 = vunpack.c.h.b16 %v7308
        %v7394 = vunpack.c.l.b16 %v7309
        %v7395 = vunpack.c.h.b16 %v7309
        %v7396 = vunpack.c.l.b16 %v7310
        %v7397 = vunpack.c.h.b16 %v7310
        %v7398 = vunpack.c.l.b16 %v7311
        %v7399 = vunpack.c.h.b16 %v7311
        %v7400 = vunpack.c.l.b16 %v7312
        %v7401 = vunpack.c.h.b16 %v7312
        %v7402 = vunpack.c.l.b16 %v7313
        %v7403 = vunpack.c.h.b16 %v7313
        %v7404 = vunpack.c.l.b16 %v7314
        %v7405 = vunpack.c.h.b16 %v7314
        %v7406 = vunpack.c.l.b16 %v7315
        %v7407 = vunpack.c.h.b16 %v7315
        %v7408 = vunpack.c.l.b16 %v7316
        %v7409 = vunpack.c.h.b16 %v7316
        %v7410 = vunpack.c.l.b16 %v7317
        %v7411 = vunpack.c.h.b16 %v7317
        %v7412 = vunpack.c.l.b16 %v7318
        %v7413 = vunpack.c.h.b16 %v7318
        %v7414 = vunpack.c.l.b16 %v7319
        %v7415 = vunpack.c.h.b16 %v7319
        %v7416 = vpack.c.b16 %v7356, %v7352
        %v7417 = vpack.c.b16 %v7357, %v7353
        %v7418 = vpack.c.b16 %v7358, %v7354
        %v7419 = vpack.c.b16 %v7359, %v7355
        %v7420 = vpack.c.b16 %v7364, %v7360
        %v7421 = vpack.c.b16 %v7365, %v7361
        %v7422 = vpack.c.b16 %v7366, %v7362
        %v7423 = vpack.c.b16 %v7367, %v7363
        %v7424 = vpack.c.b16 %v7372, %v7368
        %v7425 = vpack.c.b16 %v7373, %v7369
        %v7426 = vpack.c.b16 %v7374, %v7370
        %v7427 = vpack.c.b16 %v7375, %v7371
        %v7428 = vpack.c.b16 %v7380, %v7376
        %v7429 = vpack.c.b16 %v7381, %v7377
        %v7430 = vpack.c.b16 %v7382, %v7378
        %v7431 = vpack.c.b16 %v7383, %v7379
        %v7432 = vpack.c.b16 %v7388, %v7384
        %v7433 = vpack.c.b16 %v7389, %v7385
        %v7434 = vpack.c.b16 %v7390, %v7386
        %v7435 = vpack.c.b16 %v7391, %v7387
        %v7436 = vpack.c.b16 %v7396, %v7392
        %v7437 = vpack.c.b16 %v7397, %v7393
        %v7438 = vpack.c.b16 %v7398, %v7394
        %v7439 = vpack.c.b16 %v7399, %v7395
        %v7440 = vpack.c.b16 %v7404, %v7400
        %v7441 = vpack.c.b16 %v7405, %v7401
        %v7442 = vpack.c.b16 %v7406, %v7402
        %v7443 = vpack.c.b16 %v7407, %v7403
        %v7444 = vpack.c.b16 %v7412, %v7408
        %v7445 = vpack.c.b16 %v7413, %v7409
        %v7446 = vpack.c.b16 %v7414, %v7410
        %v7447 = vpack.c.b16 %v7415, %v7411
        %7480 = vmatprep.subr.bf16.mxu0 %v7445
        %7481 = vmatpush1.bf16.msra.mxu0 %v7444
        %7482 = vmatprep.subr.bf16.mxu0 %v7441
        %7483 = vmatpush1.bf16.msra.mxu0 %v7440
        %7484 = vmatprep.subr.bf16.mxu0 %v7437
        %7485 = vmatpush1.bf16.msra.mxu0 %v7436
        %7486 = vmatprep.subr.bf16.mxu0 %v7433
        %7487 = vmatpush1.bf16.msra.mxu0 %v7432
        %7488 = vmatprep.subr.bf16.mxu0 %v7429
        %7489 = vmatpush1.bf16.msra.mxu0 %v7428
        %7490 = vmatprep.subr.bf16.mxu0 %v7425
        %7491 = vmatpush1.bf16.msra.mxu0 %v7424
        %7492 = vmatprep.subr.bf16.mxu0 %v7421
        %7493 = vmatpush1.bf16.msra.mxu0 %v7420
        %7494 = vmatprep.subr.bf16.mxu0 %v7417
        %7495 = vmatpush1.bf16.msra.mxu0 %v7416
        %7496 = vmatprep.subr.bf16.mxu0 0
        %7497 = vmatpush2.bf16.msra.mxu0 0
        %7498 = vmatprep.subr.bf16.mxu0 0
        %7499 = vmatpush2.bf16.msra.mxu0 0
        %7500 = vmatprep.subr.bf16.mxu0 0
        %7501 = vmatpush2.bf16.msra.mxu0 0
        %7502 = vmatprep.subr.bf16.mxu0 0
        %7503 = vmatpush2.bf16.msra.mxu0 0
        %7504 = vmatprep.subr.bf16.mxu0 0
        %7505 = vmatpush2.bf16.msra.mxu0 0
        %7506 = vmatprep.subr.bf16.mxu0 0
        %7507 = vmatpush2.bf16.msra.mxu0 0
        %7508 = vmatprep.subr.bf16.mxu0 0
        %7509 = vmatpush2.bf16.msra.mxu0 0
        %7510 = vmatprep.subr.bf16.mxu0 0
        %7511 = vmatpush2.bf16.msra.mxu0 0
        %7512 = vmatprep.mubr.bf16.mxu0 0
        %7513 = vmatmul.mubr.bf16.gmra.mxu0 %v7286
        %v7514 = vpop.f32.mrf.mxu0
        %v7515 = vadd.f32 0.0, %v7514
        %v7516 = vpop.f32.mrf.mxu0
        %v7517 = vadd.f32 0.0, %v7516
        %v7518 = vpop.f32.mrf.mxu0
        %v7519 = vpop.f32.mrf.mxu0
        %7520 = vdwg.mxu0
        %7521 = vmatprep.subr.bf16.mxu0 %v7447
        %7522 = vmatpush1.bf16.msra.mxu0 %v7446
        %7523 = vmatprep.subr.bf16.mxu0 %v7443
        %7524 = vmatpush1.bf16.msra.mxu0 %v7442
        %7525 = vmatprep.subr.bf16.mxu0 %v7439
        %7526 = vmatpush1.bf16.msra.mxu0 %v7438
        %7527 = vmatprep.subr.bf16.mxu0 %v7435
        %7528 = vmatpush1.bf16.msra.mxu0 %v7434
        %7529 = vmatprep.subr.bf16.mxu0 %v7431
        %7530 = vmatpush1.bf16.msra.mxu0 %v7430
        %7531 = vmatprep.subr.bf16.mxu0 %v7427
        %7532 = vmatpush1.bf16.msra.mxu0 %v7426
        %7533 = vmatprep.subr.bf16.mxu0 %v7423
        %7534 = vmatpush1.bf16.msra.mxu0 %v7422
        %7535 = vmatprep.subr.bf16.mxu0 %v7419
        %7536 = vmatpush1.bf16.msra.mxu0 %v7418
        %7537 = vmatprep.subr.bf16.mxu0 0
        %7538 = vmatpush2.bf16.msra.mxu0 0
        %7539 = vmatprep.subr.bf16.mxu0 0
        %7540 = vmatpush2.bf16.msra.mxu0 0
        %7541 = vmatprep.subr.bf16.mxu0 0
        %7542 = vmatpush2.bf16.msra.mxu0 0
        %7543 = vmatprep.subr.bf16.mxu0 0
        %7544 = vmatpush2.bf16.msra.mxu0 0
        %7545 = vmatprep.subr.bf16.mxu0 0
        %7546 = vmatpush2.bf16.msra.mxu0 0
        %7547 = vmatprep.subr.bf16.mxu0 0
        %7548 = vmatpush2.bf16.msra.mxu0 0
        %7549 = vmatprep.subr.bf16.mxu0 0
        %7550 = vmatpush2.bf16.msra.mxu0 0
        %7551 = vmatprep.subr.bf16.mxu0 0
        %7552 = vmatpush2.bf16.msra.mxu0 0
        %7553 = vmatprep.mubr.bf16.mxu0 0
        %7554 = vmatmul.mubr.bf16.gmra.mxu0 %v7286
        %v7555 = vpop.f32.mrf.mxu0
        %v7556 = vadd.f32 0.0, %v7555
        %v7557 = vpop.f32.mrf.mxu0
        %v7558 = vadd.f32 0.0, %v7557
        %v7559 = vpop.f32.mrf.mxu0
        %v7560 = vpop.f32.mrf.mxu0
        %7561 = vdwg.mxu0
        %v7562 = vadd.f32 %v7281, %v7515
        %v7563 = vadd.f32 %v7282, %v7517
        %v7564 = vadd.f32 %v7283, %v7556
        %v7565 = vadd.f32 %v7284, %v7558
        %v7566 = vld [vmem:[#allocation8 + $0x4] sm:$0xf]
        %v7567 = vsel %vm6722, %v7566, 0.0
        %v7568 = vpack.c.bf16 %v7567, %v7567
        %s7569 = scalar_lea.vmem %s7, 1280
        %v7570 = vld [vmem:[%s7569] sm:$0xff]
        %v7571 = vld [vmem:[%s7569 + $0x8] sm:$0xff]
        %v7572 = vld [vmem:[%s7569 + $0x10] sm:$0xff]
        %v7573 = vld [vmem:[%s7569 + $0x18] sm:$0xff]
        %v7574 = vld [vmem:[%s7569 + $0x20] sm:$0xff]
        %v7575 = vld [vmem:[%s7569 + $0x28] sm:$0xff]
        %v7576 = vld [vmem:[%s7569 + $0x30] sm:$0xff]
        %v7577 = vld [vmem:[%s7569 + $0x38] sm:$0xff]
        %v7578 = vld [vmem:[%s7569 + $0x40] sm:$0xff]
        %v7579 = vld [vmem:[%s7569 + $0x48] sm:$0xff]
        %v7580 = vld [vmem:[%s7569 + $0x50] sm:$0xff]
        %v7581 = vld [vmem:[%s7569 + $0x58] sm:$0xff]
        %v7582 = vld [vmem:[%s7569 + $0x60] sm:$0xff]
        %v7583 = vld [vmem:[%s7569 + $0x68] sm:$0xff]
        %v7584 = vld [vmem:[%s7569 + $0x70] sm:$0xff]
        %v7585 = vld [vmem:[%s7569 + $0x78] sm:$0xff]
        %v7586 = vld [vmem:[%s7569 + $0x80] sm:$0xff]
        %v7587 = vld [vmem:[%s7569 + $0x88] sm:$0xff]
        %v7588 = vld [vmem:[%s7569 + $0x90] sm:$0xff]
        %v7589 = vld [vmem:[%s7569 + $0x98] sm:$0xff]
        %v7590 = vld [vmem:[%s7569 + $0xa0] sm:$0xff]
        %v7591 = vld [vmem:[%s7569 + $0xa8] sm:$0xff]
        %v7592 = vld [vmem:[%s7569 + $0xb0] sm:$0xff]
        %v7593 = vld [vmem:[%s7569 + $0xb8] sm:$0xff]
        %v7594 = vld [vmem:[%s7569 + $0xc0] sm:$0xff]
        %v7595 = vld [vmem:[%s7569 + $0xc8] sm:$0xff]
        %v7596 = vld [vmem:[%s7569 + $0xd0] sm:$0xff]
        %v7597 = vld [vmem:[%s7569 + $0xd8] sm:$0xff]
        %v7598 = vld [vmem:[%s7569 + $0xe0] sm:$0xff]
        %v7599 = vld [vmem:[%s7569 + $0xe8] sm:$0xff]
        %v7600 = vld [vmem:[%s7569 + $0xf0] sm:$0xff]
        %v7601 = vld [vmem:[%s7569 + $0xf8] sm:$0xff]
        %v7634 = vunpack.c.l.b16 %v7570
        %v7635 = vunpack.c.h.b16 %v7570
        %v7636 = vunpack.c.l.b16 %v7571
        %v7637 = vunpack.c.h.b16 %v7571
        %v7638 = vunpack.c.l.b16 %v7572
        %v7639 = vunpack.c.h.b16 %v7572
        %v7640 = vunpack.c.l.b16 %v7573
        %v7641 = vunpack.c.h.b16 %v7573
        %v7642 = vunpack.c.l.b16 %v7574
        %v7643 = vunpack.c.h.b16 %v7574
        %v7644 = vunpack.c.l.b16 %v7575
        %v7645 = vunpack.c.h.b16 %v7575
        %v7646 = vunpack.c.l.b16 %v7576
        %v7647 = vunpack.c.h.b16 %v7576
        %v7648 = vunpack.c.l.b16 %v7577
        %v7649 = vunpack.c.h.b16 %v7577
        %v7650 = vunpack.c.l.b16 %v7578
        %v7651 = vunpack.c.h.b16 %v7578
        %v7652 = vunpack.c.l.b16 %v7579
        %v7653 = vunpack.c.h.b16 %v7579
        %v7654 = vunpack.c.l.b16 %v7580
        %v7655 = vunpack.c.h.b16 %v7580
        %v7656 = vunpack.c.l.b16 %v7581
        %v7657 = vunpack.c.h.b16 %v7581
        %v7658 = vunpack.c.l.b16 %v7582
        %v7659 = vunpack.c.h.b16 %v7582
        %v7660 = vunpack.c.l.b16 %v7583
        %v7661 = vunpack.c.h.b16 %v7583
        %v7662 = vunpack.c.l.b16 %v7584
        %v7663 = vunpack.c.h.b16 %v7584
        %v7664 = vunpack.c.l.b16 %v7585
        %v7665 = vunpack.c.h.b16 %v7585
        %v7666 = vunpack.c.l.b16 %v7586
        %v7667 = vunpack.c.h.b16 %v7586
        %v7668 = vunpack.c.l.b16 %v7587
        %v7669 = vunpack.c.h.b16 %v7587
        %v7670 = vunpack.c.l.b16 %v7588
        %v7671 = vunpack.c.h.b16 %v7588
        %v7672 = vunpack.c.l.b16 %v7589
        %v7673 = vunpack.c.h.b16 %v7589
        %v7674 = vunpack.c.l.b16 %v7590
        %v7675 = vunpack.c.h.b16 %v7590
        %v7676 = vunpack.c.l.b16 %v7591
        %v7677 = vunpack.c.h.b16 %v7591
        %v7678 = vunpack.c.l.b16 %v7592
        %v7679 = vunpack.c.h.b16 %v7592
        %v7680 = vunpack.c.l.b16 %v7593
        %v7681 = vunpack.c.h.b16 %v7593
        %v7682 = vunpack.c.l.b16 %v7594
        %v7683 = vunpack.c.h.b16 %v7594
        %v7684 = vunpack.c.l.b16 %v7595
        %v7685 = vunpack.c.h.b16 %v7595
        %v7686 = vunpack.c.l.b16 %v7596
        %v7687 = vunpack.c.h.b16 %v7596
        %v7688 = vunpack.c.l.b16 %v7597
        %v7689 = vunpack.c.h.b16 %v7597
        %v7690 = vunpack.c.l.b16 %v7598
        %v7691 = vunpack.c.h.b16 %v7598
        %v7692 = vunpack.c.l.b16 %v7599
        %v7693 = vunpack.c.h.b16 %v7599
        %v7694 = vunpack.c.l.b16 %v7600
        %v7695 = vunpack.c.h.b16 %v7600
        %v7696 = vunpack.c.l.b16 %v7601
        %v7697 = vunpack.c.h.b16 %v7601
        %v7698 = vpack.c.b16 %v7638, %v7634
        %v7699 = vpack.c.b16 %v7639, %v7635
        %v7700 = vpack.c.b16 %v7640, %v7636
        %v7701 = vpack.c.b16 %v7641, %v7637
        %v7702 = vpack.c.b16 %v7646, %v7642
        %v7703 = vpack.c.b16 %v7647, %v7643
        %v7704 = vpack.c.b16 %v7648, %v7644
        %v7705 = vpack.c.b16 %v7649, %v7645
        %v7706 = vpack.c.b16 %v7654, %v7650
        %v7707 = vpack.c.b16 %v7655, %v7651
        %v7708 = vpack.c.b16 %v7656, %v7652
        %v7709 = vpack.c.b16 %v7657, %v7653
        %v7710 = vpack.c.b16 %v7662, %v7658
        %v7711 = vpack.c.b16 %v7663, %v7659
        %v7712 = vpack.c.b16 %v7664, %v7660
        %v7713 = vpack.c.b16 %v7665, %v7661
        %v7714 = vpack.c.b16 %v7670, %v7666
        %v7715 = vpack.c.b16 %v7671, %v7667
        %v7716 = vpack.c.b16 %v7672, %v7668
        %v7717 = vpack.c.b16 %v7673, %v7669
        %v7718 = vpack.c.b16 %v7678, %v7674
        %v7719 = vpack.c.b16 %v7679, %v7675
        %v7720 = vpack.c.b16 %v7680, %v7676
        %v7721 = vpack.c.b16 %v7681, %v7677
        %v7722 = vpack.c.b16 %v7686, %v7682
        %v7723 = vpack.c.b16 %v7687, %v7683
        %v7724 = vpack.c.b16 %v7688, %v7684
        %v7725 = vpack.c.b16 %v7689, %v7685
        %v7726 = vpack.c.b16 %v7694, %v7690
        %v7727 = vpack.c.b16 %v7695, %v7691
        %v7728 = vpack.c.b16 %v7696, %v7692
        %v7729 = vpack.c.b16 %v7697, %v7693
        %7762 = vmatprep.subr.bf16.mxu0 %v7727
        %7763 = vmatpush1.bf16.msra.mxu0 %v7726
        %7764 = vmatprep.subr.bf16.mxu0 %v7723
        %7765 = vmatpush1.bf16.msra.mxu0 %v7722
        %7766 = vmatprep.subr.bf16.mxu0 %v7719
        %7767 = vmatpush1.bf16.msra.mxu0 %v7718
        %7768 = vmatprep.subr.bf16.mxu0 %v7715
        %7769 = vmatpush1.bf16.msra.mxu0 %v7714
        %7770 = vmatprep.subr.bf16.mxu0 %v7711
        %7771 = vmatpush1.bf16.msra.mxu0 %v7710
        %7772 = vmatprep.subr.bf16.mxu0 %v7707
        %7773 = vmatpush1.bf16.msra.mxu0 %v7706
        %7774 = vmatprep.subr.bf16.mxu0 %v7703
        %7775 = vmatpush1.bf16.msra.mxu0 %v7702
        %7776 = vmatprep.subr.bf16.mxu0 %v7699
        %7777 = vmatpush1.bf16.msra.mxu0 %v7698
        %7778 = vmatprep.subr.bf16.mxu0 0
        %7779 = vmatpush2.bf16.msra.mxu0 0
        %7780 = vmatprep.subr.bf16.mxu0 0
        %7781 = vmatpush2.bf16.msra.mxu0 0
        %7782 = vmatprep.subr.bf16.mxu0 0
        %7783 = vmatpush2.bf16.msra.mxu0 0
        %7784 = vmatprep.subr.bf16.mxu0 0
        %7785 = vmatpush2.bf16.msra.mxu0 0
        %7786 = vmatprep.subr.bf16.mxu0 0
        %7787 = vmatpush2.bf16.msra.mxu0 0
        %7788 = vmatprep.subr.bf16.mxu0 0
        %7789 = vmatpush2.bf16.msra.mxu0 0
        %7790 = vmatprep.subr.bf16.mxu0 0
        %7791 = vmatpush2.bf16.msra.mxu0 0
        %7792 = vmatprep.subr.bf16.mxu0 0
        %7793 = vmatpush2.bf16.msra.mxu0 0
        %7794 = vmatprep.mubr.bf16.mxu0 0
        %7795 = vmatmul.mubr.bf16.gmra.mxu0 %v7568
        %v7796 = vpop.f32.mrf.mxu0
        %v7797 = vadd.f32 0.0, %v7796
        %v7798 = vpop.f32.mrf.mxu0
        %v7799 = vadd.f32 0.0, %v7798
        %v7800 = vpop.f32.mrf.mxu0
        %v7801 = vpop.f32.mrf.mxu0
        %7802 = vdwg.mxu0
        %7803 = vmatprep.subr.bf16.mxu0 %v7729
        %7804 = vmatpush1.bf16.msra.mxu0 %v7728
        %7805 = vmatprep.subr.bf16.mxu0 %v7725
        %7806 = vmatpush1.bf16.msra.mxu0 %v7724
        %7807 = vmatprep.subr.bf16.mxu0 %v7721
        %7808 = vmatpush1.bf16.msra.mxu0 %v7720
        %7809 = vmatprep.subr.bf16.mxu0 %v7717
        %7810 = vmatpush1.bf16.msra.mxu0 %v7716
        %7811 = vmatprep.subr.bf16.mxu0 %v7713
        %7812 = vmatpush1.bf16.msra.mxu0 %v7712
        %7813 = vmatprep.subr.bf16.mxu0 %v7709
        %7814 = vmatpush1.bf16.msra.mxu0 %v7708
        %7815 = vmatprep.subr.bf16.mxu0 %v7705
        %7816 = vmatpush1.bf16.msra.mxu0 %v7704
        %7817 = vmatprep.subr.bf16.mxu0 %v7701
        %7818 = vmatpush1.bf16.msra.mxu0 %v7700
        %7819 = vmatprep.subr.bf16.mxu0 0
        %7820 = vmatpush2.bf16.msra.mxu0 0
        %7821 = vmatprep.subr.bf16.mxu0 0
        %7822 = vmatpush2.bf16.msra.mxu0 0
        %7823 = vmatprep.subr.bf16.mxu0 0
        %7824 = vmatpush2.bf16.msra.mxu0 0
        %7825 = vmatprep.subr.bf16.mxu0 0
        %7826 = vmatpush2.bf16.msra.mxu0 0
        %7827 = vmatprep.subr.bf16.mxu0 0
        %7828 = vmatpush2.bf16.msra.mxu0 0
        %7829 = vmatprep.subr.bf16.mxu0 0
        %7830 = vmatpush2.bf16.msra.mxu0 0
        %7831 = vmatprep.subr.bf16.mxu0 0
        %7832 = vmatpush2.bf16.msra.mxu0 0
        %7833 = vmatprep.subr.bf16.mxu0 0
        %7834 = vmatpush2.bf16.msra.mxu0 0
        %7835 = vmatprep.mubr.bf16.mxu0 0
        %7836 = vmatmul.mubr.bf16.gmra.mxu0 %v7568
        %v7837 = vpop.f32.mrf.mxu0
        %v7838 = vadd.f32 0.0, %v7837
        %v7839 = vpop.f32.mrf.mxu0
        %v7840 = vadd.f32 0.0, %v7839
        %v7841 = vpop.f32.mrf.mxu0
        %v7842 = vpop.f32.mrf.mxu0
        %7843 = vdwg.mxu0
        %v7844 = vadd.f32 %v7562, %v7797
        %v7845 = vadd.f32 %v7563, %v7799
        %v7846 = vadd.f32 %v7564, %v7838
        %v7847 = vadd.f32 %v7565, %v7840
        %v7848 = vsel %vm6166, %v7566, 0.0
        %v7849 = vpack.c.bf16 %v7848, %v7848
        %s7850 = scalar_lea.vmem %s7, 1536
        %v7851 = vld [vmem:[%s7850] sm:$0xff]
        %v7852 = vld [vmem:[%s7850 + $0x8] sm:$0xff]
        %v7853 = vld [vmem:[%s7850 + $0x10] sm:$0xff]
        %v7854 = vld [vmem:[%s7850 + $0x18] sm:$0xff]
        %v7855 = vld [vmem:[%s7850 + $0x20] sm:$0xff]
        %v7856 = vld [vmem:[%s7850 + $0x28] sm:$0xff]
        %v7857 = vld [vmem:[%s7850 + $0x30] sm:$0xff]
        %v7858 = vld [vmem:[%s7850 + $0x38] sm:$0xff]
        %v7859 = vld [vmem:[%s7850 + $0x40] sm:$0xff]
        %v7860 = vld [vmem:[%s7850 + $0x48] sm:$0xff]
        %v7861 = vld [vmem:[%s7850 + $0x50] sm:$0xff]
        %v7862 = vld [vmem:[%s7850 + $0x58] sm:$0xff]
        %v7863 = vld [vmem:[%s7850 + $0x60] sm:$0xff]
        %v7864 = vld [vmem:[%s7850 + $0x68] sm:$0xff]
        %v7865 = vld [vmem:[%s7850 + $0x70] sm:$0xff]
        %v7866 = vld [vmem:[%s7850 + $0x78] sm:$0xff]
        %v7867 = vld [vmem:[%s7850 + $0x80] sm:$0xff]
        %v7868 = vld [vmem:[%s7850 + $0x88] sm:$0xff]
        %v7869 = vld [vmem:[%s7850 + $0x90] sm:$0xff]
        %v7870 = vld [vmem:[%s7850 + $0x98] sm:$0xff]
        %v7871 = vld [vmem:[%s7850 + $0xa0] sm:$0xff]
        %v7872 = vld [vmem:[%s7850 + $0xa8] sm:$0xff]
        %v7873 = vld [vmem:[%s7850 + $0xb0] sm:$0xff]
        %v7874 = vld [vmem:[%s7850 + $0xb8] sm:$0xff]
        %v7875 = vld [vmem:[%s7850 + $0xc0] sm:$0xff]
        %v7876 = vld [vmem:[%s7850 + $0xc8] sm:$0xff]
        %v7877 = vld [vmem:[%s7850 + $0xd0] sm:$0xff]
        %v7878 = vld [vmem:[%s7850 + $0xd8] sm:$0xff]
        %v7879 = vld [vmem:[%s7850 + $0xe0] sm:$0xff]
        %v7880 = vld [vmem:[%s7850 + $0xe8] sm:$0xff]
        %v7881 = vld [vmem:[%s7850 + $0xf0] sm:$0xff]
        %v7882 = vld [vmem:[%s7850 + $0xf8] sm:$0xff]
        %v7915 = vunpack.c.l.b16 %v7851
        %v7916 = vunpack.c.h.b16 %v7851
        %v7917 = vunpack.c.l.b16 %v7852
        %v7918 = vunpack.c.h.b16 %v7852
        %v7919 = vunpack.c.l.b16 %v7853
        %v7920 = vunpack.c.h.b16 %v7853
        %v7921 = vunpack.c.l.b16 %v7854
        %v7922 = vunpack.c.h.b16 %v7854
        %v7923 = vunpack.c.l.b16 %v7855
        %v7924 = vunpack.c.h.b16 %v7855
        %v7925 = vunpack.c.l.b16 %v7856
        %v7926 = vunpack.c.h.b16 %v7856
        %v7927 = vunpack.c.l.b16 %v7857
        %v7928 = vunpack.c.h.b16 %v7857
        %v7929 = vunpack.c.l.b16 %v7858
        %v7930 = vunpack.c.h.b16 %v7858
        %v7931 = vunpack.c.l.b16 %v7859
        %v7932 = vunpack.c.h.b16 %v7859
        %v7933 = vunpack.c.l.b16 %v7860
        %v7934 = vunpack.c.h.b16 %v7860
        %v7935 = vunpack.c.l.b16 %v7861
        %v7936 = vunpack.c.h.b16 %v7861
        %v7937 = vunpack.c.l.b16 %v7862
        %v7938 = vunpack.c.h.b16 %v7862
        %v7939 = vunpack.c.l.b16 %v7863
        %v7940 = vunpack.c.h.b16 %v7863
        %v7941 = vunpack.c.l.b16 %v7864
        %v7942 = vunpack.c.h.b16 %v7864
        %v7943 = vunpack.c.l.b16 %v7865
        %v7944 = vunpack.c.h.b16 %v7865
        %v7945 = vunpack.c.l.b16 %v7866
        %v7946 = vunpack.c.h.b16 %v7866
        %v7947 = vunpack.c.l.b16 %v7867
        %v7948 = vunpack.c.h.b16 %v7867
        %v7949 = vunpack.c.l.b16 %v7868
        %v7950 = vunpack.c.h.b16 %v7868
        %v7951 = vunpack.c.l.b16 %v7869
        %v7952 = vunpack.c.h.b16 %v7869
        %v7953 = vunpack.c.l.b16 %v7870
        %v7954 = vunpack.c.h.b16 %v7870
        %v7955 = vunpack.c.l.b16 %v7871
        %v7956 = vunpack.c.h.b16 %v7871
        %v7957 = vunpack.c.l.b16 %v7872
        %v7958 = vunpack.c.h.b16 %v7872
        %v7959 = vunpack.c.l.b16 %v7873
        %v7960 = vunpack.c.h.b16 %v7873
        %v7961 = vunpack.c.l.b16 %v7874
        %v7962 = vunpack.c.h.b16 %v7874
        %v7963 = vunpack.c.l.b16 %v7875
        %v7964 = vunpack.c.h.b16 %v7875
        %v7965 = vunpack.c.l.b16 %v7876
        %v7966 = vunpack.c.h.b16 %v7876
        %v7967 = vunpack.c.l.b16 %v7877
        %v7968 = vunpack.c.h.b16 %v7877
        %v7969 = vunpack.c.l.b16 %v7878
        %v7970 = vunpack.c.h.b16 %v7878
        %v7971 = vunpack.c.l.b16 %v7879
        %v7972 = vunpack.c.h.b16 %v7879
        %v7973 = vunpack.c.l.b16 %v7880
        %v7974 = vunpack.c.h.b16 %v7880
        %v7975 = vunpack.c.l.b16 %v7881
        %v7976 = vunpack.c.h.b16 %v7881
        %v7977 = vunpack.c.l.b16 %v7882
        %v7978 = vunpack.c.h.b16 %v7882
        %v7979 = vpack.c.b16 %v7919, %v7915
        %v7980 = vpack.c.b16 %v7920, %v7916
        %v7981 = vpack.c.b16 %v7921, %v7917
        %v7982 = vpack.c.b16 %v7922, %v7918
        %v7983 = vpack.c.b16 %v7927, %v7923
        %v7984 = vpack.c.b16 %v7928, %v7924
        %v7985 = vpack.c.b16 %v7929, %v7925
        %v7986 = vpack.c.b16 %v7930, %v7926
        %v7987 = vpack.c.b16 %v7935, %v7931
        %v7988 = vpack.c.b16 %v7936, %v7932
        %v7989 = vpack.c.b16 %v7937, %v7933
        %v7990 = vpack.c.b16 %v7938, %v7934
        %v7991 = vpack.c.b16 %v7943, %v7939
        %v7992 = vpack.c.b16 %v7944, %v7940
        %v7993 = vpack.c.b16 %v7945, %v7941
        %v7994 = vpack.c.b16 %v7946, %v7942
        %v7995 = vpack.c.b16 %v7951, %v7947
        %v7996 = vpack.c.b16 %v7952, %v7948
        %v7997 = vpack.c.b16 %v7953, %v7949
        %v7998 = vpack.c.b16 %v7954, %v7950
        %v7999 = vpack.c.b16 %v7959, %v7955
        %v8000 = vpack.c.b16 %v7960, %v7956
        %v8001 = vpack.c.b16 %v7961, %v7957
        %v8002 = vpack.c.b16 %v7962, %v7958
        %v8003 = vpack.c.b16 %v7967, %v7963
        %v8004 = vpack.c.b16 %v7968, %v7964
        %v8005 = vpack.c.b16 %v7969, %v7965
        %v8006 = vpack.c.b16 %v7970, %v7966
        %v8007 = vpack.c.b16 %v7975, %v7971
        %v8008 = vpack.c.b16 %v7976, %v7972
        %v8009 = vpack.c.b16 %v7977, %v7973
        %v8010 = vpack.c.b16 %v7978, %v7974
        %8043 = vmatprep.subr.bf16.mxu0 %v8008
        %8044 = vmatpush1.bf16.msra.mxu0 %v8007
        %8045 = vmatprep.subr.bf16.mxu0 %v8004
        %8046 = vmatpush1.bf16.msra.mxu0 %v8003
        %8047 = vmatprep.subr.bf16.mxu0 %v8000
        %8048 = vmatpush1.bf16.msra.mxu0 %v7999
        %8049 = vmatprep.subr.bf16.mxu0 %v7996
        %8050 = vmatpush1.bf16.msra.mxu0 %v7995
        %8051 = vmatprep.subr.bf16.mxu0 %v7992
        %8052 = vmatpush1.bf16.msra.mxu0 %v7991
        %8053 = vmatprep.subr.bf16.mxu0 %v7988
        %8054 = vmatpush1.bf16.msra.mxu0 %v7987
        %8055 = vmatprep.subr.bf16.mxu0 %v7984
        %8056 = vmatpush1.bf16.msra.mxu0 %v7983
        %8057 = vmatprep.subr.bf16.mxu0 %v7980
        %8058 = vmatpush1.bf16.msra.mxu0 %v7979
        %8059 = vmatprep.subr.bf16.mxu0 0
        %8060 = vmatpush2.bf16.msra.mxu0 0
        %8061 = vmatprep.subr.bf16.mxu0 0
        %8062 = vmatpush2.bf16.msra.mxu0 0
        %8063 = vmatprep.subr.bf16.mxu0 0
        %8064 = vmatpush2.bf16.msra.mxu0 0
        %8065 = vmatprep.subr.bf16.mxu0 0
        %8066 = vmatpush2.bf16.msra.mxu0 0
        %8067 = vmatprep.subr.bf16.mxu0 0
        %8068 = vmatpush2.bf16.msra.mxu0 0
        %8069 = vmatprep.subr.bf16.mxu0 0
        %8070 = vmatpush2.bf16.msra.mxu0 0
        %8071 = vmatprep.subr.bf16.mxu0 0
        %8072 = vmatpush2.bf16.msra.mxu0 0
        %8073 = vmatprep.subr.bf16.mxu0 0
        %8074 = vmatpush2.bf16.msra.mxu0 0
        %8075 = vmatprep.mubr.bf16.mxu0 0
        %8076 = vmatmul.mubr.bf16.gmra.mxu0 %v7849
        %v8077 = vpop.f32.mrf.mxu0
        %v8078 = vadd.f32 0.0, %v8077
        %v8079 = vpop.f32.mrf.mxu0
        %v8080 = vadd.f32 0.0, %v8079
        %v8081 = vpop.f32.mrf.mxu0
        %v8082 = vpop.f32.mrf.mxu0
        %8083 = vdwg.mxu0
        %8084 = vmatprep.subr.bf16.mxu0 %v8010
        %8085 = vmatpush1.bf16.msra.mxu0 %v8009
        %8086 = vmatprep.subr.bf16.mxu0 %v8006
        %8087 = vmatpush1.bf16.msra.mxu0 %v8005
        %8088 = vmatprep.subr.bf16.mxu0 %v8002
        %8089 = vmatpush1.bf16.msra.mxu0 %v8001
        %8090 = vmatprep.subr.bf16.mxu0 %v7998
        %8091 = vmatpush1.bf16.msra.mxu0 %v7997
        %8092 = vmatprep.subr.bf16.mxu0 %v7994
        %8093 = vmatpush1.bf16.msra.mxu0 %v7993
        %8094 = vmatprep.subr.bf16.mxu0 %v7990
        %8095 = vmatpush1.bf16.msra.mxu0 %v7989
        %8096 = vmatprep.subr.bf16.mxu0 %v7986
        %8097 = vmatpush1.bf16.msra.mxu0 %v7985
        %8098 = vmatprep.subr.bf16.mxu0 %v7982
        %8099 = vmatpush1.bf16.msra.mxu0 %v7981
        %8100 = vmatprep.subr.bf16.mxu0 0
        %8101 = vmatpush2.bf16.msra.mxu0 0
        %8102 = vmatprep.subr.bf16.mxu0 0
        %8103 = vmatpush2.bf16.msra.mxu0 0
        %8104 = vmatprep.subr.bf16.mxu0 0
        %8105 = vmatpush2.bf16.msra.mxu0 0
        %8106 = vmatprep.subr.bf16.mxu0 0
        %8107 = vmatpush2.bf16.msra.mxu0 0
        %8108 = vmatprep.subr.bf16.mxu0 0
        %8109 = vmatpush2.bf16.msra.mxu0 0
        %8110 = vmatprep.subr.bf16.mxu0 0
        %8111 = vmatpush2.bf16.msra.mxu0 0
        %8112 = vmatprep.subr.bf16.mxu0 0
        %8113 = vmatpush2.bf16.msra.mxu0 0
        %8114 = vmatprep.subr.bf16.mxu0 0
        %8115 = vmatpush2.bf16.msra.mxu0 0
        %8116 = vmatprep.mubr.bf16.mxu0 0
        %8117 = vmatmul.mubr.bf16.gmra.mxu0 %v7849
        %v8118 = vpop.f32.mrf.mxu0
        %v8119 = vadd.f32 0.0, %v8118
        %v8120 = vpop.f32.mrf.mxu0
        %v8121 = vadd.f32 0.0, %v8120
        %v8122 = vpop.f32.mrf.mxu0
        %v8123 = vpop.f32.mrf.mxu0
        %8124 = vdwg.mxu0
        %v8125 = vadd.f32 %v7844, %v8078
        %v8126 = vadd.f32 %v7845, %v8080
        %v8127 = vadd.f32 %v7846, %v8119
        %v8128 = vadd.f32 %v7847, %v8121
        %v8129 = vld [vmem:[#allocation8 + $0x5] sm:$0xf]
        %v8130 = vpack.c.bf16 %v8129, %v8129
        %s8131 = scalar_lea.vmem %s7, 1792
        %v8132 = vld [vmem:[%s8131] sm:$0xff]
        %v8133 = vld [vmem:[%s8131 + $0x8] sm:$0xff]
        %v8134 = vld [vmem:[%s8131 + $0x10] sm:$0xff]
        %v8135 = vld [vmem:[%s8131 + $0x18] sm:$0xff]
        %v8136 = vld [vmem:[%s8131 + $0x20] sm:$0xff]
        %v8137 = vld [vmem:[%s8131 + $0x28] sm:$0xff]
        %v8138 = vld [vmem:[%s8131 + $0x30] sm:$0xff]
        %v8139 = vld [vmem:[%s8131 + $0x38] sm:$0xff]
        %v8140 = vld [vmem:[%s8131 + $0x40] sm:$0xff]
        %v8141 = vld [vmem:[%s8131 + $0x48] sm:$0xff]
        %v8142 = vld [vmem:[%s8131 + $0x50] sm:$0xff]
        %v8143 = vld [vmem:[%s8131 + $0x58] sm:$0xff]
        %v8144 = vld [vmem:[%s8131 + $0x60] sm:$0xff]
        %v8145 = vld [vmem:[%s8131 + $0x68] sm:$0xff]
        %v8146 = vld [vmem:[%s8131 + $0x70] sm:$0xff]
        %v8147 = vld [vmem:[%s8131 + $0x78] sm:$0xff]
        %v8148 = vld [vmem:[%s8131 + $0x80] sm:$0xff]
        %v8149 = vld [vmem:[%s8131 + $0x88] sm:$0xff]
        %v8150 = vld [vmem:[%s8131 + $0x90] sm:$0xff]
        %v8151 = vld [vmem:[%s8131 + $0x98] sm:$0xff]
        %v8152 = vld [vmem:[%s8131 + $0xa0] sm:$0xff]
        %v8153 = vld [vmem:[%s8131 + $0xa8] sm:$0xff]
        %v8154 = vld [vmem:[%s8131 + $0xb0] sm:$0xff]
        %v8155 = vld [vmem:[%s8131 + $0xb8] sm:$0xff]
        %v8156 = vld [vmem:[%s8131 + $0xc0] sm:$0xff]
        %v8157 = vld [vmem:[%s8131 + $0xc8] sm:$0xff]
        %v8158 = vld [vmem:[%s8131 + $0xd0] sm:$0xff]
        %v8159 = vld [vmem:[%s8131 + $0xd8] sm:$0xff]
        %v8160 = vld [vmem:[%s8131 + $0xe0] sm:$0xff]
        %v8161 = vld [vmem:[%s8131 + $0xe8] sm:$0xff]
        %v8162 = vld [vmem:[%s8131 + $0xf0] sm:$0xff]
        %v8163 = vld [vmem:[%s8131 + $0xf8] sm:$0xff]
        %v8196 = vunpack.c.l.b16 %v8132
        %v8197 = vunpack.c.h.b16 %v8132
        %v8198 = vunpack.c.l.b16 %v8133
        %v8199 = vunpack.c.h.b16 %v8133
        %v8200 = vunpack.c.l.b16 %v8134
        %v8201 = vunpack.c.h.b16 %v8134
        %v8202 = vunpack.c.l.b16 %v8135
        %v8203 = vunpack.c.h.b16 %v8135
        %v8204 = vunpack.c.l.b16 %v8136
        %v8205 = vunpack.c.h.b16 %v8136
        %v8206 = vunpack.c.l.b16 %v8137
        %v8207 = vunpack.c.h.b16 %v8137
        %v8208 = vunpack.c.l.b16 %v8138
        %v8209 = vunpack.c.h.b16 %v8138
        %v8210 = vunpack.c.l.b16 %v8139
        %v8211 = vunpack.c.h.b16 %v8139
        %v8212 = vunpack.c.l.b16 %v8140
        %v8213 = vunpack.c.h.b16 %v8140
        %v8214 = vunpack.c.l.b16 %v8141
        %v8215 = vunpack.c.h.b16 %v8141
        %v8216 = vunpack.c.l.b16 %v8142
        %v8217 = vunpack.c.h.b16 %v8142
        %v8218 = vunpack.c.l.b16 %v8143
        %v8219 = vunpack.c.h.b16 %v8143
        %v8220 = vunpack.c.l.b16 %v8144
        %v8221 = vunpack.c.h.b16 %v8144
        %v8222 = vunpack.c.l.b16 %v8145
        %v8223 = vunpack.c.h.b16 %v8145
        %v8224 = vunpack.c.l.b16 %v8146
        %v8225 = vunpack.c.h.b16 %v8146
        %v8226 = vunpack.c.l.b16 %v8147
        %v8227 = vunpack.c.h.b16 %v8147
        %v8228 = vunpack.c.l.b16 %v8148
        %v8229 = vunpack.c.h.b16 %v8148
        %v8230 = vunpack.c.l.b16 %v8149
        %v8231 = vunpack.c.h.b16 %v8149
        %v8232 = vunpack.c.l.b16 %v8150
        %v8233 = vunpack.c.h.b16 %v8150
        %v8234 = vunpack.c.l.b16 %v8151
        %v8235 = vunpack.c.h.b16 %v8151
        %v8236 = vunpack.c.l.b16 %v8152
        %v8237 = vunpack.c.h.b16 %v8152
        %v8238 = vunpack.c.l.b16 %v8153
        %v8239 = vunpack.c.h.b16 %v8153
        %v8240 = vunpack.c.l.b16 %v8154
        %v8241 = vunpack.c.h.b16 %v8154
        %v8242 = vunpack.c.l.b16 %v8155
        %v8243 = vunpack.c.h.b16 %v8155
        %v8244 = vunpack.c.l.b16 %v8156
        %v8245 = vunpack.c.h.b16 %v8156
        %v8246 = vunpack.c.l.b16 %v8157
        %v8247 = vunpack.c.h.b16 %v8157
        %v8248 = vunpack.c.l.b16 %v8158
        %v8249 = vunpack.c.h.b16 %v8158
        %v8250 = vunpack.c.l.b16 %v8159
        %v8251 = vunpack.c.h.b16 %v8159
        %v8252 = vunpack.c.l.b16 %v8160
        %v8253 = vunpack.c.h.b16 %v8160
        %v8254 = vunpack.c.l.b16 %v8161
        %v8255 = vunpack.c.h.b16 %v8161
        %v8256 = vunpack.c.l.b16 %v8162
        %v8257 = vunpack.c.h.b16 %v8162
        %v8258 = vunpack.c.l.b16 %v8163
        %v8259 = vunpack.c.h.b16 %v8163
        %v8260 = vpack.c.b16 %v8200, %v8196
        %v8261 = vpack.c.b16 %v8201, %v8197
        %v8262 = vpack.c.b16 %v8202, %v8198
        %v8263 = vpack.c.b16 %v8203, %v8199
        %v8264 = vpack.c.b16 %v8208, %v8204
        %v8265 = vpack.c.b16 %v8209, %v8205
        %v8266 = vpack.c.b16 %v8210, %v8206
        %v8267 = vpack.c.b16 %v8211, %v8207
        %v8268 = vpack.c.b16 %v8216, %v8212
        %v8269 = vpack.c.b16 %v8217, %v8213
        %v8270 = vpack.c.b16 %v8218, %v8214
        %v8271 = vpack.c.b16 %v8219, %v8215
        %v8272 = vpack.c.b16 %v8224, %v8220
        %v8273 = vpack.c.b16 %v8225, %v8221
        %v8274 = vpack.c.b16 %v8226, %v8222
        %v8275 = vpack.c.b16 %v8227, %v8223
        %v8276 = vpack.c.b16 %v8232, %v8228
        %v8277 = vpack.c.b16 %v8233, %v8229
        %v8278 = vpack.c.b16 %v8234, %v8230
        %v8279 = vpack.c.b16 %v8235, %v8231
        %v8280 = vpack.c.b16 %v8240, %v8236
        %v8281 = vpack.c.b16 %v8241, %v8237
        %v8282 = vpack.c.b16 %v8242, %v8238
        %v8283 = vpack.c.b16 %v8243, %v8239
        %v8284 = vpack.c.b16 %v8248, %v8244
        %v8285 = vpack.c.b16 %v8249, %v8245
        %v8286 = vpack.c.b16 %v8250, %v8246
        %v8287 = vpack.c.b16 %v8251, %v8247
        %v8288 = vpack.c.b16 %v8256, %v8252
        %v8289 = vpack.c.b16 %v8257, %v8253
        %v8290 = vpack.c.b16 %v8258, %v8254
        %v8291 = vpack.c.b16 %v8259, %v8255
        %8324 = vmatprep.subr.bf16.mxu0 %v8289
        %8325 = vmatpush1.bf16.msra.mxu0 %v8288
        %8326 = vmatprep.subr.bf16.mxu0 %v8285
        %8327 = vmatpush1.bf16.msra.mxu0 %v8284
        %8328 = vmatprep.subr.bf16.mxu0 %v8281
        %8329 = vmatpush1.bf16.msra.mxu0 %v8280
        %8330 = vmatprep.subr.bf16.mxu0 %v8277
        %8331 = vmatpush1.bf16.msra.mxu0 %v8276
        %8332 = vmatprep.subr.bf16.mxu0 %v8273
        %8333 = vmatpush1.bf16.msra.mxu0 %v8272
        %8334 = vmatprep.subr.bf16.mxu0 %v8269
        %8335 = vmatpush1.bf16.msra.mxu0 %v8268
        %8336 = vmatprep.subr.bf16.mxu0 %v8265
        %8337 = vmatpush1.bf16.msra.mxu0 %v8264
        %8338 = vmatprep.subr.bf16.mxu0 %v8261
        %8339 = vmatpush1.bf16.msra.mxu0 %v8260
        %8340 = vmatprep.subr.bf16.mxu0 0
        %8341 = vmatpush2.bf16.msra.mxu0 0
        %8342 = vmatprep.subr.bf16.mxu0 0
        %8343 = vmatpush2.bf16.msra.mxu0 0
        %8344 = vmatprep.subr.bf16.mxu0 0
        %8345 = vmatpush2.bf16.msra.mxu0 0
        %8346 = vmatprep.subr.bf16.mxu0 0
        %8347 = vmatpush2.bf16.msra.mxu0 0
        %8348 = vmatprep.subr.bf16.mxu0 0
        %8349 = vmatpush2.bf16.msra.mxu0 0
        %8350 = vmatprep.subr.bf16.mxu0 0
        %8351 = vmatpush2.bf16.msra.mxu0 0
        %8352 = vmatprep.subr.bf16.mxu0 0
        %8353 = vmatpush2.bf16.msra.mxu0 0
        %8354 = vmatprep.subr.bf16.mxu0 0
        %8355 = vmatpush2.bf16.msra.mxu0 0
        %8356 = vmatprep.mubr.bf16.mxu0 0
        %8357 = vmatmul.mubr.bf16.gmra.mxu0 %v8130
        %v8358 = vpop.f32.mrf.mxu0
        %v8359 = vadd.f32 0.0, %v8358
        %v8360 = vpop.f32.mrf.mxu0
        %v8361 = vadd.f32 0.0, %v8360
        %v8362 = vpop.f32.mrf.mxu0
        %v8363 = vpop.f32.mrf.mxu0
        %8364 = vdwg.mxu0
        %8365 = vmatprep.subr.bf16.mxu0 %v8291
        %8366 = vmatpush1.bf16.msra.mxu0 %v8290
        %8367 = vmatprep.subr.bf16.mxu0 %v8287
        %8368 = vmatpush1.bf16.msra.mxu0 %v8286
        %8369 = vmatprep.subr.bf16.mxu0 %v8283
        %8370 = vmatpush1.bf16.msra.mxu0 %v8282
        %8371 = vmatprep.subr.bf16.mxu0 %v8279
        %8372 = vmatpush1.bf16.msra.mxu0 %v8278
        %8373 = vmatprep.subr.bf16.mxu0 %v8275
        %8374 = vmatpush1.bf16.msra.mxu0 %v8274
        %8375 = vmatprep.subr.bf16.mxu0 %v8271
        %8376 = vmatpush1.bf16.msra.mxu0 %v8270
        %8377 = vmatprep.subr.bf16.mxu0 %v8267
        %8378 = vmatpush1.bf16.msra.mxu0 %v8266
        %8379 = vmatprep.subr.bf16.mxu0 %v8263
        %8380 = vmatpush1.bf16.msra.mxu0 %v8262
        %8381 = vmatprep.subr.bf16.mxu0 0
        %8382 = vmatpush2.bf16.msra.mxu0 0
        %8383 = vmatprep.subr.bf16.mxu0 0
        %8384 = vmatpush2.bf16.msra.mxu0 0
        %8385 = vmatprep.subr.bf16.mxu0 0
        %8386 = vmatpush2.bf16.msra.mxu0 0
        %8387 = vmatprep.subr.bf16.mxu0 0
        %8388 = vmatpush2.bf16.msra.mxu0 0
        %8389 = vmatprep.subr.bf16.mxu0 0
        %8390 = vmatpush2.bf16.msra.mxu0 0
        %8391 = vmatprep.subr.bf16.mxu0 0
        %8392 = vmatpush2.bf16.msra.mxu0 0
        %8393 = vmatprep.subr.bf16.mxu0 0
        %8394 = vmatpush2.bf16.msra.mxu0 0
        %8395 = vmatprep.subr.bf16.mxu0 0
        %8396 = vmatpush2.bf16.msra.mxu0 0
        %8397 = vmatprep.mubr.bf16.mxu0 0
        %8398 = vmatmul.mubr.bf16.gmra.mxu0 %v8130
        %v8399 = vpop.f32.mrf.mxu0
        %v8400 = vadd.f32 0.0, %v8399
        %v8401 = vpop.f32.mrf.mxu0
        %v8402 = vadd.f32 0.0, %v8401
        %v8403 = vpop.f32.mrf.mxu0
        %v8404 = vpop.f32.mrf.mxu0
        %8405 = vdwg.mxu0
        %v8406 = vadd.f32 %v8125, %v8359
        %v8407 = vadd.f32 %v8126, %v8361
        %v8408 = vadd.f32 %v8127, %v8400
        %v8409 = vadd.f32 %v8128, %v8402
        %v8410 = vld [vmem:[#allocation8 + $0x6] sm:$0xf]
        %v8411 = vsel %vm6722, %v8410, 0.0
        %v8412 = vpack.c.bf16 %v8411, %v8411
        %s8413 = scalar_lea.vmem %s7, 2048
        %v8414 = vld [vmem:[%s8413] sm:$0xff]
        %v8415 = vld [vmem:[%s8413 + $0x8] sm:$0xff]
        %v8416 = vld [vmem:[%s8413 + $0x10] sm:$0xff]
        %v8417 = vld [vmem:[%s8413 + $0x18] sm:$0xff]
        %v8418 = vld [vmem:[%s8413 + $0x20] sm:$0xff]
        %v8419 = vld [vmem:[%s8413 + $0x28] sm:$0xff]
        %v8420 = vld [vmem:[%s8413 + $0x30] sm:$0xff]
        %v8421 = vld [vmem:[%s8413 + $0x38] sm:$0xff]
        %v8422 = vld [vmem:[%s8413 + $0x40] sm:$0xff]
        %v8423 = vld [vmem:[%s8413 + $0x48] sm:$0xff]
        %v8424 = vld [vmem:[%s8413 + $0x50] sm:$0xff]
        %v8425 = vld [vmem:[%s8413 + $0x58] sm:$0xff]
        %v8426 = vld [vmem:[%s8413 + $0x60] sm:$0xff]
        %v8427 = vld [vmem:[%s8413 + $0x68] sm:$0xff]
        %v8428 = vld [vmem:[%s8413 + $0x70] sm:$0xff]
        %v8429 = vld [vmem:[%s8413 + $0x78] sm:$0xff]
        %v8430 = vld [vmem:[%s8413 + $0x80] sm:$0xff]
        %v8431 = vld [vmem:[%s8413 + $0x88] sm:$0xff]
        %v8432 = vld [vmem:[%s8413 + $0x90] sm:$0xff]
        %v8433 = vld [vmem:[%s8413 + $0x98] sm:$0xff]
        %v8434 = vld [vmem:[%s8413 + $0xa0] sm:$0xff]
        %v8435 = vld [vmem:[%s8413 + $0xa8] sm:$0xff]
        %v8436 = vld [vmem:[%s8413 + $0xb0] sm:$0xff]
        %v8437 = vld [vmem:[%s8413 + $0xb8] sm:$0xff]
        %v8438 = vld [vmem:[%s8413 + $0xc0] sm:$0xff]
        %v8439 = vld [vmem:[%s8413 + $0xc8] sm:$0xff]
        %v8440 = vld [vmem:[%s8413 + $0xd0] sm:$0xff]
        %v8441 = vld [vmem:[%s8413 + $0xd8] sm:$0xff]
        %v8442 = vld [vmem:[%s8413 + $0xe0] sm:$0xff]
        %v8443 = vld [vmem:[%s8413 + $0xe8] sm:$0xff]
        %v8444 = vld [vmem:[%s8413 + $0xf0] sm:$0xff]
        %v8445 = vld [vmem:[%s8413 + $0xf8] sm:$0xff]
        %v8478 = vunpack.c.l.b16 %v8414
        %v8479 = vunpack.c.h.b16 %v8414
        %v8480 = vunpack.c.l.b16 %v8415
        %v8481 = vunpack.c.h.b16 %v8415
        %v8482 = vunpack.c.l.b16 %v8416
        %v8483 = vunpack.c.h.b16 %v8416
        %v8484 = vunpack.c.l.b16 %v8417
        %v8485 = vunpack.c.h.b16 %v8417
        %v8486 = vunpack.c.l.b16 %v8418
        %v8487 = vunpack.c.h.b16 %v8418
        %v8488 = vunpack.c.l.b16 %v8419
        %v8489 = vunpack.c.h.b16 %v8419
        %v8490 = vunpack.c.l.b16 %v8420
        %v8491 = vunpack.c.h.b16 %v8420
        %v8492 = vunpack.c.l.b16 %v8421
        %v8493 = vunpack.c.h.b16 %v8421
        %v8494 = vunpack.c.l.b16 %v8422
        %v8495 = vunpack.c.h.b16 %v8422
        %v8496 = vunpack.c.l.b16 %v8423
        %v8497 = vunpack.c.h.b16 %v8423
        %v8498 = vunpack.c.l.b16 %v8424
        %v8499 = vunpack.c.h.b16 %v8424
        %v8500 = vunpack.c.l.b16 %v8425
        %v8501 = vunpack.c.h.b16 %v8425
        %v8502 = vunpack.c.l.b16 %v8426
        %v8503 = vunpack.c.h.b16 %v8426
        %v8504 = vunpack.c.l.b16 %v8427
        %v8505 = vunpack.c.h.b16 %v8427
        %v8506 = vunpack.c.l.b16 %v8428
        %v8507 = vunpack.c.h.b16 %v8428
        %v8508 = vunpack.c.l.b16 %v8429
        %v8509 = vunpack.c.h.b16 %v8429
        %v8510 = vunpack.c.l.b16 %v8430
        %v8511 = vunpack.c.h.b16 %v8430
        %v8512 = vunpack.c.l.b16 %v8431
        %v8513 = vunpack.c.h.b16 %v8431
        %v8514 = vunpack.c.l.b16 %v8432
        %v8515 = vunpack.c.h.b16 %v8432
        %v8516 = vunpack.c.l.b16 %v8433
        %v8517 = vunpack.c.h.b16 %v8433
        %v8518 = vunpack.c.l.b16 %v8434
        %v8519 = vunpack.c.h.b16 %v8434
        %v8520 = vunpack.c.l.b16 %v8435
        %v8521 = vunpack.c.h.b16 %v8435
        %v8522 = vunpack.c.l.b16 %v8436
        %v8523 = vunpack.c.h.b16 %v8436
        %v8524 = vunpack.c.l.b16 %v8437
        %v8525 = vunpack.c.h.b16 %v8437
        %v8526 = vunpack.c.l.b16 %v8438
        %v8527 = vunpack.c.h.b16 %v8438
        %v8528 = vunpack.c.l.b16 %v8439
        %v8529 = vunpack.c.h.b16 %v8439
        %v8530 = vunpack.c.l.b16 %v8440
        %v8531 = vunpack.c.h.b16 %v8440
        %v8532 = vunpack.c.l.b16 %v8441
        %v8533 = vunpack.c.h.b16 %v8441
        %v8534 = vunpack.c.l.b16 %v8442
        %v8535 = vunpack.c.h.b16 %v8442
        %v8536 = vunpack.c.l.b16 %v8443
        %v8537 = vunpack.c.h.b16 %v8443
        %v8538 = vunpack.c.l.b16 %v8444
        %v8539 = vunpack.c.h.b16 %v8444
        %v8540 = vunpack.c.l.b16 %v8445
        %v8541 = vunpack.c.h.b16 %v8445
        %v8542 = vpack.c.b16 %v8482, %v8478
        %v8543 = vpack.c.b16 %v8483, %v8479
        %v8544 = vpack.c.b16 %v8484, %v8480
        %v8545 = vpack.c.b16 %v8485, %v8481
        %v8546 = vpack.c.b16 %v8490, %v8486
        %v8547 = vpack.c.b16 %v8491, %v8487
        %v8548 = vpack.c.b16 %v8492, %v8488
        %v8549 = vpack.c.b16 %v8493, %v8489
        %v8550 = vpack.c.b16 %v8498, %v8494
        %v8551 = vpack.c.b16 %v8499, %v8495
        %v8552 = vpack.c.b16 %v8500, %v8496
        %v8553 = vpack.c.b16 %v8501, %v8497
        %v8554 = vpack.c.b16 %v8506, %v8502
        %v8555 = vpack.c.b16 %v8507, %v8503
        %v8556 = vpack.c.b16 %v8508, %v8504
        %v8557 = vpack.c.b16 %v8509, %v8505
        %v8558 = vpack.c.b16 %v8514, %v8510
        %v8559 = vpack.c.b16 %v8515, %v8511
        %v8560 = vpack.c.b16 %v8516, %v8512
        %v8561 = vpack.c.b16 %v8517, %v8513
        %v8562 = vpack.c.b16 %v8522, %v8518
        %v8563 = vpack.c.b16 %v8523, %v8519
        %v8564 = vpack.c.b16 %v8524, %v8520
        %v8565 = vpack.c.b16 %v8525, %v8521
        %v8566 = vpack.c.b16 %v8530, %v8526
        %v8567 = vpack.c.b16 %v8531, %v8527
        %v8568 = vpack.c.b16 %v8532, %v8528
        %v8569 = vpack.c.b16 %v8533, %v8529
        %v8570 = vpack.c.b16 %v8538, %v8534
        %v8571 = vpack.c.b16 %v8539, %v8535
        %v8572 = vpack.c.b16 %v8540, %v8536
        %v8573 = vpack.c.b16 %v8541, %v8537
        %8606 = vmatprep.subr.bf16.mxu0 %v8571
        %8607 = vmatpush1.bf16.msra.mxu0 %v8570
        %8608 = vmatprep.subr.bf16.mxu0 %v8567
        %8609 = vmatpush1.bf16.msra.mxu0 %v8566
        %8610 = vmatprep.subr.bf16.mxu0 %v8563
        %8611 = vmatpush1.bf16.msra.mxu0 %v8562
        %8612 = vmatprep.subr.bf16.mxu0 %v8559
        %8613 = vmatpush1.bf16.msra.mxu0 %v8558
        %8614 = vmatprep.subr.bf16.mxu0 %v8555
        %8615 = vmatpush1.bf16.msra.mxu0 %v8554
        %8616 = vmatprep.subr.bf16.mxu0 %v8551
        %8617 = vmatpush1.bf16.msra.mxu0 %v8550
        %8618 = vmatprep.subr.bf16.mxu0 %v8547
        %8619 = vmatpush1.bf16.msra.mxu0 %v8546
        %8620 = vmatprep.subr.bf16.mxu0 %v8543
        %8621 = vmatpush1.bf16.msra.mxu0 %v8542
        %8622 = vmatprep.subr.bf16.mxu0 0
        %8623 = vmatpush2.bf16.msra.mxu0 0
        %8624 = vmatprep.subr.bf16.mxu0 0
        %8625 = vmatpush2.bf16.msra.mxu0 0
        %8626 = vmatprep.subr.bf16.mxu0 0
        %8627 = vmatpush2.bf16.msra.mxu0 0
        %8628 = vmatprep.subr.bf16.mxu0 0
        %8629 = vmatpush2.bf16.msra.mxu0 0
        %8630 = vmatprep.subr.bf16.mxu0 0
        %8631 = vmatpush2.bf16.msra.mxu0 0
        %8632 = vmatprep.subr.bf16.mxu0 0
        %8633 = vmatpush2.bf16.msra.mxu0 0
        %8634 = vmatprep.subr.bf16.mxu0 0
        %8635 = vmatpush2.bf16.msra.mxu0 0
        %8636 = vmatprep.subr.bf16.mxu0 0
        %8637 = vmatpush2.bf16.msra.mxu0 0
        %8638 = vmatprep.mubr.bf16.mxu0 0
        %8639 = vmatmul.mubr.bf16.gmra.mxu0 %v8412
        %v8640 = vpop.f32.mrf.mxu0
        %v8641 = vadd.f32 0.0, %v8640
        %v8642 = vpop.f32.mrf.mxu0
        %v8643 = vadd.f32 0.0, %v8642
        %v8644 = vpop.f32.mrf.mxu0
        %v8645 = vpop.f32.mrf.mxu0
        %8646 = vdwg.mxu0
        %8647 = vmatprep.subr.bf16.mxu0 %v8573
        %8648 = vmatpush1.bf16.msra.mxu0 %v8572
        %8649 = vmatprep.subr.bf16.mxu0 %v8569
        %8650 = vmatpush1.bf16.msra.mxu0 %v8568
        %8651 = vmatprep.subr.bf16.mxu0 %v8565
        %8652 = vmatpush1.bf16.msra.mxu0 %v8564
        %8653 = vmatprep.subr.bf16.mxu0 %v8561
        %8654 = vmatpush1.bf16.msra.mxu0 %v8560
        %8655 = vmatprep.subr.bf16.mxu0 %v8557
        %8656 = vmatpush1.bf16.msra.mxu0 %v8556
        %8657 = vmatprep.subr.bf16.mxu0 %v8553
        %8658 = vmatpush1.bf16.msra.mxu0 %v8552
        %8659 = vmatprep.subr.bf16.mxu0 %v8549
        %8660 = vmatpush1.bf16.msra.mxu0 %v8548
        %8661 = vmatprep.subr.bf16.mxu0 %v8545
        %8662 = vmatpush1.bf16.msra.mxu0 %v8544
        %8663 = vmatprep.subr.bf16.mxu0 0
        %8664 = vmatpush2.bf16.msra.mxu0 0
        %8665 = vmatprep.subr.bf16.mxu0 0
        %8666 = vmatpush2.bf16.msra.mxu0 0
        %8667 = vmatprep.subr.bf16.mxu0 0
        %8668 = vmatpush2.bf16.msra.mxu0 0
        %8669 = vmatprep.subr.bf16.mxu0 0
        %8670 = vmatpush2.bf16.msra.mxu0 0
        %8671 = vmatprep.subr.bf16.mxu0 0
        %8672 = vmatpush2.bf16.msra.mxu0 0
        %8673 = vmatprep.subr.bf16.mxu0 0
        %8674 = vmatpush2.bf16.msra.mxu0 0
        %8675 = vmatprep.subr.bf16.mxu0 0
        %8676 = vmatpush2.bf16.msra.mxu0 0
        %8677 = vmatprep.subr.bf16.mxu0 0
        %8678 = vmatpush2.bf16.msra.mxu0 0
        %8679 = vmatprep.mubr.bf16.mxu0 0
        %8680 = vmatmul.mubr.bf16.gmra.mxu0 %v8412
        %v8681 = vpop.f32.mrf.mxu0
        %v8682 = vadd.f32 0.0, %v8681
        %v8683 = vpop.f32.mrf.mxu0
        %v8684 = vadd.f32 0.0, %v8683
        %v8685 = vpop.f32.mrf.mxu0
        %v8686 = vpop.f32.mrf.mxu0
        %8687 = vdwg.mxu0
        %v8688 = vadd.f32 %v8406, %v8641
        %v8689 = vadd.f32 %v8407, %v8643
        %v8690 = vadd.f32 %v8408, %v8682
        %v8691 = vadd.f32 %v8409, %v8684
        %v8692 = vld [vmem:[%s8] sm:$0xf]
        %v8694 = vlaneseq
        %v8695 = vshrl.u32 %v8694, 7
        %v8696 = vsub.s32 0, %v8695
        %v8697 = vrot.slane %v8692, %v8696
        %v8698 = vlaneseq
        %v8699 = vshrl.u32 %v8698, 7
        %v8700 = vsub.s32 1, %v8699
        %v8701 = vrot.slane %v8692, %v8700
        %v8702 = vlaneseq
        %v8703 = vshrl.u32 %v8702, 7
        %v8704 = vsub.s32 2, %v8703
        %v8705 = vrot.slane %v8692, %v8704
        %v8706 = vlaneseq
        %v8707 = vshrl.u32 %v8706, 7
        %v8708 = vsub.s32 3, %v8707
        %v8709 = vrot.slane %v8692, %v8708
        %v8714 = vadd.f32 %v8688, %v8697
        %v8715 = vadd.f32 %v8689, %v8701
        %v8716 = vadd.f32 %v8690, %v8705
        %v8717 = vadd.f32 %v8691, %v8709
        %v8718 = vmax.f32 %v8714, 0.0
        %v8719 = vmax.f32 %v8715, 0.0
        %v8720 = vmax.f32 %v8716, 0.0
        %v8721 = vmax.f32 %v8717, 0.0
        %vm8722 = vcmask 1043456
        %v8723 = vsel %vm8722, %v8718, -inf
        %v8724 = vrot.slane %v8723, 4
        %v8725 = vmax.f32 %v8723, %v8724
        %v8726 = vrot.slane %v8725, 2
        %v8727 = vmax.f32 %v8725, %v8726
        %v8728 = vrot.slane %v8727, 1
        %v8729 = vmax.f32 %v8727, %v8728
        %v8730 = vsel %vm8722, %v8719, -inf
        %v8731 = vrot.slane %v8730, 4
        %v8732 = vmax.f32 %v8730, %v8731
        %v8733 = vrot.slane %v8732, 2
        %v8734 = vmax.f32 %v8732, %v8733
        %v8735 = vrot.slane %v8734, 1
        %v8736 = vmax.f32 %v8734, %v8735
        %v8737 = vsel %vm8722, %v8720, -inf
        %v8738 = vrot.slane %v8737, 4
        %v8739 = vmax.f32 %v8737, %v8738
        %v8740 = vrot.slane %v8739, 2
        %v8741 = vmax.f32 %v8739, %v8740
        %v8742 = vrot.slane %v8741, 1
        %v8743 = vmax.f32 %v8741, %v8742
        %v8744 = vsel %vm8722, %v8721, -inf
        %v8745 = vrot.slane %v8744, 4
        %v8746 = vmax.f32 %v8744, %v8745
        %v8747 = vrot.slane %v8746, 2
        %v8748 = vmax.f32 %v8746, %v8747
        %v8749 = vrot.slane %v8748, 1
        %v8750 = vmax.f32 %v8748, %v8749
        %v8751 = vpack.c.bf16 %v8729, %v8729
        %v8752 = vpack.c.bf16 %v8736, %v8736
        %v8753 = vpack.c.bf16 %v8743, %v8743
        %v8754 = vpack.c.bf16 %v8750, %v8750
        %v8755 = vld [vmem:[%s9] sm:$0xf]
        %v8756 = vld [vmem:[%s9 + $0x4] sm:$0xf]
        %v8757 = vld [vmem:[%s9 + $0x8] sm:$0xf]
        %v8758 = vld [vmem:[%s9 + $0xc] sm:$0xf]
        %v8759 = vld [vmem:[%s9 + $0x10] sm:$0xf]
        %v8760 = vld [vmem:[%s9 + $0x14] sm:$0xf]
        %v8761 = vld [vmem:[%s9 + $0x18] sm:$0xf]
        %v8762 = vld [vmem:[%s9 + $0x1c] sm:$0xf]
        %v8763 = vld [vmem:[%s9 + $0x20] sm:$0xf]
        %v8764 = vld [vmem:[%s9 + $0x24] sm:$0xf]
        %v8765 = vld [vmem:[%s9 + $0x28] sm:$0xf]
        %v8766 = vld [vmem:[%s9 + $0x2c] sm:$0xf]
        %v8767 = vld [vmem:[%s9 + $0x30] sm:$0xf]
        %v8768 = vld [vmem:[%s9 + $0x34] sm:$0xf]
        %v8769 = vld [vmem:[%s9 + $0x38] sm:$0xf]
        %v8770 = vld [vmem:[%s9 + $0x3c] sm:$0xf]
        %v8771 = vld [vmem:[%s9 + $0x40] sm:$0xf]
        %v8772 = vld [vmem:[%s9 + $0x44] sm:$0xf]
        %v8773 = vld [vmem:[%s9 + $0x48] sm:$0xf]
        %v8774 = vld [vmem:[%s9 + $0x4c] sm:$0xf]
        %v8775 = vld [vmem:[%s9 + $0x50] sm:$0xf]
        %v8776 = vld [vmem:[%s9 + $0x54] sm:$0xf]
        %v8777 = vld [vmem:[%s9 + $0x58] sm:$0xf]
        %v8778 = vld [vmem:[%s9 + $0x5c] sm:$0xf]
        %v8779 = vld [vmem:[%s9 + $0x60] sm:$0xf]
        %v8780 = vld [vmem:[%s9 + $0x64] sm:$0xf]
        %v8781 = vld [vmem:[%s9 + $0x68] sm:$0xf]
        %v8782 = vld [vmem:[%s9 + $0x6c] sm:$0xf]
        %v8783 = vld [vmem:[%s9 + $0x70] sm:$0xf]
        %v8784 = vld [vmem:[%s9 + $0x74] sm:$0xf]
        %v8785 = vld [vmem:[%s9 + $0x78] sm:$0xf]
        %v8786 = vld [vmem:[%s9 + $0x7c] sm:$0xf]
        %v8787 = vld [vmem:[%s9 + $0x80] sm:$0xf]
        %v8788 = vld [vmem:[%s9 + $0x84] sm:$0xf]
        %v8789 = vld [vmem:[%s9 + $0x88] sm:$0xf]
        %v8790 = vld [vmem:[%s9 + $0x8c] sm:$0xf]
        %v8791 = vld [vmem:[%s9 + $0x90] sm:$0xf]
        %v8792 = vld [vmem:[%s9 + $0x94] sm:$0xf]
        %v8793 = vld [vmem:[%s9 + $0x98] sm:$0xf]
        %v8794 = vld [vmem:[%s9 + $0x9c] sm:$0xf]
        %v8795 = vld [vmem:[%s9 + $0xa0] sm:$0xf]
        %v8796 = vld [vmem:[%s9 + $0xa4] sm:$0xf]
        %v8797 = vld [vmem:[%s9 + $0xa8] sm:$0xf]
        %v8798 = vld [vmem:[%s9 + $0xac] sm:$0xf]
        %v8799 = vld [vmem:[%s9 + $0xb0] sm:$0xf]
        %v8800 = vld [vmem:[%s9 + $0xb4] sm:$0xf]
        %v8801 = vld [vmem:[%s9 + $0xb8] sm:$0xf]
        %v8802 = vld [vmem:[%s9 + $0xbc] sm:$0xf]
        %v8803 = vld [vmem:[%s9 + $0xc0] sm:$0xf]
        %v8804 = vld [vmem:[%s9 + $0xc4] sm:$0xf]
        %v8805 = vld [vmem:[%s9 + $0xc8] sm:$0xf]
        %v8806 = vld [vmem:[%s9 + $0xcc] sm:$0xf]
        %v8807 = vld [vmem:[%s9 + $0xd0] sm:$0xf]
        %v8808 = vld [vmem:[%s9 + $0xd4] sm:$0xf]
        %v8809 = vld [vmem:[%s9 + $0xd8] sm:$0xf]
        %v8810 = vld [vmem:[%s9 + $0xdc] sm:$0xf]
        %v8811 = vld [vmem:[%s9 + $0xe0] sm:$0xf]
        %v8812 = vld [vmem:[%s9 + $0xe4] sm:$0xf]
        %v8813 = vld [vmem:[%s9 + $0xe8] sm:$0xf]
        %v8814 = vld [vmem:[%s9 + $0xec] sm:$0xf]
        %v8815 = vld [vmem:[%s9 + $0xf0] sm:$0xf]
        %v8816 = vld [vmem:[%s9 + $0xf4] sm:$0xf]
        %v8817 = vld [vmem:[%s9 + $0xf8] sm:$0xf]
        %v8818 = vld [vmem:[%s9 + $0xfc] sm:$0xf]
        %v8819 = vld [vmem:[%s10] sm:$0x1]
        %v8884 = vunpack.c.l.b16 %v8755
        %v8885 = vunpack.c.l.b16 %v8756
        %v8886 = vunpack.c.l.b16 %v8757
        %v8887 = vunpack.c.l.b16 %v8758
        %v8888 = vunpack.c.l.b16 %v8759
        %v8889 = vunpack.c.l.b16 %v8760
        %v8890 = vunpack.c.l.b16 %v8761
        %v8891 = vunpack.c.l.b16 %v8762
        %v8892 = vunpack.c.l.b16 %v8763
        %v8893 = vunpack.c.l.b16 %v8764
        %v8894 = vunpack.c.l.b16 %v8765
        %v8895 = vunpack.c.l.b16 %v8766
        %v8896 = vunpack.c.l.b16 %v8767
        %v8897 = vunpack.c.l.b16 %v8768
        %v8898 = vunpack.c.l.b16 %v8769
        %v8899 = vunpack.c.l.b16 %v8770
        %v8900 = vunpack.c.l.b16 %v8771
        %v8901 = vunpack.c.l.b16 %v8772
        %v8902 = vunpack.c.l.b16 %v8773
        %v8903 = vunpack.c.l.b16 %v8774
        %v8904 = vunpack.c.l.b16 %v8775
        %v8905 = vunpack.c.l.b16 %v8776
        %v8906 = vunpack.c.l.b16 %v8777
        %v8907 = vunpack.c.l.b16 %v8778
        %v8908 = vunpack.c.l.b16 %v8779
        %v8909 = vunpack.c.l.b16 %v8780
        %v8910 = vunpack.c.l.b16 %v8781
        %v8911 = vunpack.c.l.b16 %v8782
        %v8912 = vunpack.c.l.b16 %v8783
        %v8913 = vunpack.c.l.b16 %v8784
        %v8914 = vunpack.c.l.b16 %v8785
        %v8915 = vunpack.c.l.b16 %v8786
        %v8916 = vunpack.c.l.b16 %v8787
        %v8917 = vunpack.c.l.b16 %v8788
        %v8918 = vunpack.c.l.b16 %v8789
        %v8919 = vunpack.c.l.b16 %v8790
        %v8920 = vunpack.c.l.b16 %v8791
        %v8921 = vunpack.c.l.b16 %v8792
        %v8922 = vunpack.c.l.b16 %v8793
        %v8923 = vunpack.c.l.b16 %v8794
        %v8924 = vunpack.c.l.b16 %v8795
        %v8925 = vunpack.c.l.b16 %v8796
        %v8926 = vunpack.c.l.b16 %v8797
        %v8927 = vunpack.c.l.b16 %v8798
        %v8928 = vunpack.c.l.b16 %v8799
        %v8929 = vunpack.c.l.b16 %v8800
        %v8930 = vunpack.c.l.b16 %v8801
        %v8931 = vunpack.c.l.b16 %v8802
        %v8932 = vunpack.c.l.b16 %v8803
        %v8933 = vunpack.c.l.b16 %v8804
        %v8934 = vunpack.c.l.b16 %v8805
        %v8935 = vunpack.c.l.b16 %v8806
        %v8936 = vunpack.c.l.b16 %v8807
        %v8937 = vunpack.c.l.b16 %v8808
        %v8938 = vunpack.c.l.b16 %v8809
        %v8939 = vunpack.c.l.b16 %v8810
        %v8940 = vunpack.c.l.b16 %v8811
        %v8941 = vunpack.c.l.b16 %v8812
        %v8942 = vunpack.c.l.b16 %v8813
        %v8943 = vunpack.c.l.b16 %v8814
        %v8944 = vunpack.c.l.b16 %v8815
        %v8945 = vunpack.c.l.b16 %v8816
        %v8946 = vunpack.c.l.b16 %v8817
        %v8947 = vunpack.c.l.b16 %v8818
        %v8948 = vpack.c.b16 %v8885, %v8884
        %v8949 = vpack.c.b16 %v8887, %v8886
        %v8950 = vpack.c.b16 %v8889, %v8888
        %v8951 = vpack.c.b16 %v8891, %v8890
        %v8952 = vpack.c.b16 %v8893, %v8892
        %v8953 = vpack.c.b16 %v8895, %v8894
        %v8954 = vpack.c.b16 %v8897, %v8896
        %v8955 = vpack.c.b16 %v8899, %v8898
        %v8956 = vpack.c.b16 %v8901, %v8900
        %v8957 = vpack.c.b16 %v8903, %v8902
        %v8958 = vpack.c.b16 %v8905, %v8904
        %v8959 = vpack.c.b16 %v8907, %v8906
        %v8960 = vpack.c.b16 %v8909, %v8908
        %v8961 = vpack.c.b16 %v8911, %v8910
        %v8962 = vpack.c.b16 %v8913, %v8912
        %v8963 = vpack.c.b16 %v8915, %v8914
        %v8964 = vpack.c.b16 %v8917, %v8916
        %v8965 = vpack.c.b16 %v8919, %v8918
        %v8966 = vpack.c.b16 %v8921, %v8920
        %v8967 = vpack.c.b16 %v8923, %v8922
        %v8968 = vpack.c.b16 %v8925, %v8924
        %v8969 = vpack.c.b16 %v8927, %v8926
        %v8970 = vpack.c.b16 %v8929, %v8928
        %v8971 = vpack.c.b16 %v8931, %v8930
        %v8972 = vpack.c.b16 %v8933, %v8932
        %v8973 = vpack.c.b16 %v8935, %v8934
        %v8974 = vpack.c.b16 %v8937, %v8936
        %v8975 = vpack.c.b16 %v8939, %v8938
        %v8976 = vpack.c.b16 %v8941, %v8940
        %v8977 = vpack.c.b16 %v8943, %v8942
        %v8978 = vpack.c.b16 %v8945, %v8944
        %v8979 = vpack.c.b16 %v8947, %v8946
        %9012 = vmatprep.subr.bf16.mxu0 0
        %9013 = vmatpush1.bf16.msra.mxu0 %v8955
        %9014 = vmatprep.subr.bf16.mxu0 0
        %9015 = vmatpush1.bf16.msra.mxu0 %v8954
        %9016 = vmatprep.subr.bf16.mxu0 0
        %9017 = vmatpush1.bf16.msra.mxu0 %v8953
        %9018 = vmatprep.subr.bf16.mxu0 0
        %9019 = vmatpush1.bf16.msra.mxu0 %v8952
        %9020 = vmatprep.subr.bf16.mxu0 0
        %9021 = vmatpush1.bf16.msra.mxu0 %v8951
        %9022 = vmatprep.subr.bf16.mxu0 0
        %9023 = vmatpush1.bf16.msra.mxu0 %v8950
        %9024 = vmatprep.subr.bf16.mxu0 0
        %9025 = vmatpush1.bf16.msra.mxu0 %v8949
        %9026 = vmatprep.subr.bf16.mxu0 0
        %9027 = vmatpush1.bf16.msra.mxu0 %v8948
        %9028 = vmatprep.subr.bf16.mxu0 0
        %9029 = vmatpush2.bf16.msra.mxu0 %v8963
        %9030 = vmatprep.subr.bf16.mxu0 0
        %9031 = vmatpush2.bf16.msra.mxu0 %v8962
        %9032 = vmatprep.subr.bf16.mxu0 0
        %9033 = vmatpush2.bf16.msra.mxu0 %v8961
        %9034 = vmatprep.subr.bf16.mxu0 0
        %9035 = vmatpush2.bf16.msra.mxu0 %v8960
        %9036 = vmatprep.subr.bf16.mxu0 0
        %9037 = vmatpush2.bf16.msra.mxu0 %v8959
        %9038 = vmatprep.subr.bf16.mxu0 0
        %9039 = vmatpush2.bf16.msra.mxu0 %v8958
        %9040 = vmatprep.subr.bf16.mxu0 0
        %9041 = vmatpush2.bf16.msra.mxu0 %v8957
        %9042 = vmatprep.subr.bf16.mxu0 0
        %9043 = vmatpush2.bf16.msra.mxu0 %v8956
        %9044 = vmatprep.mubr.bf16.mxu0 %v8752
        %9045 = vmatmul.mubr.bf16.gmra.mxu0 %v8751
        %v9046 = vpop.f32.mrf.mxu0
        %v9047 = vadd.f32 %v8819, %v9046
        %v9048 = vpop.f32.mrf.mxu0
        %v9049 = vpop.f32.mrf.mxu0
        %v9050 = vpop.f32.mrf.mxu0
        %9051 = vdwg.mxu0
        %9052 = vmatprep.subr.bf16.mxu0 0
        %9053 = vmatpush1.bf16.msra.mxu0 %v8971
        %9054 = vmatprep.subr.bf16.mxu0 0
        %9055 = vmatpush1.bf16.msra.mxu0 %v8970
        %9056 = vmatprep.subr.bf16.mxu0 0
        %9057 = vmatpush1.bf16.msra.mxu0 %v8969
        %9058 = vmatprep.subr.bf16.mxu0 0
        %9059 = vmatpush1.bf16.msra.mxu0 %v8968
        %9060 = vmatprep.subr.bf16.mxu0 0
        %9061 = vmatpush1.bf16.msra.mxu0 %v8967
        %9062 = vmatprep.subr.bf16.mxu0 0
        %9063 = vmatpush1.bf16.msra.mxu0 %v8966
        %9064 = vmatprep.subr.bf16.mxu0 0
        %9065 = vmatpush1.bf16.msra.mxu0 %v8965
        %9066 = vmatprep.subr.bf16.mxu0 0
        %9067 = vmatpush1.bf16.msra.mxu0 %v8964
        %9068 = vmatprep.subr.bf16.mxu0 0
        %9069 = vmatpush2.bf16.msra.mxu0 %v8979
        %9070 = vmatprep.subr.bf16.mxu0 0
        %9071 = vmatpush2.bf16.msra.mxu0 %v8978
        %9072 = vmatprep.subr.bf16.mxu0 0
        %9073 = vmatpush2.bf16.msra.mxu0 %v8977
        %9074 = vmatprep.subr.bf16.mxu0 0
        %9075 = vmatpush2.bf16.msra.mxu0 %v8976
        %9076 = vmatprep.subr.bf16.mxu0 0
        %9077 = vmatpush2.bf16.msra.mxu0 %v8975
        %9078 = vmatprep.subr.bf16.mxu0 0
        %9079 = vmatpush2.bf16.msra.mxu0 %v8974
        %9080 = vmatprep.subr.bf16.mxu0 0
        %9081 = vmatpush2.bf16.msra.mxu0 %v8973
        %9082 = vmatprep.subr.bf16.mxu0 0
        %9083 = vmatpush2.bf16.msra.mxu0 %v8972
        %9084 = vmatprep.mubr.bf16.mxu0 %v8754
        %9085 = vmatmul.mubr.bf16.gmra.mxu0 %v8753
        %v9086 = vpop.f32.mrf.mxu0
        %v9087 = vadd.f32 %v9047, %v9086
        %v9088 = vpop.f32.mrf.mxu0
        %v9089 = vpop.f32.mrf.mxu0
        %v9090 = vpop.f32.mrf.mxu0
        %9091 = vdwg.mxu0
        %vm9092 = vcmask 122880
        %9093 = vst.msk [vmem:[%s378] sm:$0x1] %vm9092, %v9087
        %s9094 = sand.u32 %s269, 1
        %s9095 = scalar_lea.sflag [#allocation10], %s9094
        %s9096 = sand.u32 %s269, 1
        %s9097 = scalar_lea.vmem [#allocation9], %s9096
        // Predicated region
        $region65: #{vgg_forward.1} parent=63 // pred_check
          %p9098 = pneg %p279
        $region66: #{vgg_forward.1} parent=63 // pred_check_branch
          %9100 = sbr.rel (%p9098) target = $region68
        $region67: #{vgg_forward.1} parent=63 // pred_region
          %s9102 = ssub.s32 16, 16
          %9103 = vsyncadd %s9095, %s9102
          %s9104 = smul.addr %s25, 16
          %s9105 = scalar_lea.hbm %s11, %s9104
          %s9107 = sshll.u32 %s9097, 4
          %s9108 = int_to_ptr.vmem [resolvable:$true] %s9107
          %9110 = dma.vmem_to_hbm [thread:$0]  %s9108, 16, %s9105, %s9095
        $region68: #{vgg_forward.1} parent=63 // pred_fallthru
          _
      $region64: #{vgg_forward.1} parent=5 // pred_fallthru
        _
      %p9111 = scmp.le.s32.totalorder 2, %s20
      // Predicated region
      $region69: #{vgg_forward.1} parent=5 // pred_check
        %p9112 = pneg %p9111
      $region70: #{vgg_forward.1} parent=5 // pred_check_branch
        %9114 = sbr.rel (%p9112) target = $region72
      $region71: #{vgg_forward.1} parent=5 // pred_region
        %s9115 = ssub.s32 %s20, 2
        // Predicated region
        $region73: #{vgg_forward.1} parent=71 // pred_check
          %p9116 = pneg %p285
        $region74: #{vgg_forward.1} parent=71 // pred_check_branch
          %9118 = sbr.rel (%p9116) target = $region76
        $region75: #{vgg_forward.1} parent=71 // pred_region
          %s9119 = sand.u32 %s270, 1
          %s9120 = scalar_lea.sflag [#allocation10], %s9119
          %s9121 = sand.u32 %s270, 1
          %s9122 = scalar_lea.vmem [#allocation9], %s9121
          %9123 = dma.done %s9120, 16
        $region76: #{vgg_forward.1} parent=71 // pred_fallthru
          _
      $region72: #{vgg_forward.1} parent=5 // pred_fallthru
        _
    $region6: #{vgg_forward.1} parent=1 // loop_footer
      %s24 = sadd.s32 1, %s20
    $region7: #{vgg_forward.1} parent=1 // loop_footer_branch
      %19 = sbr.rel target = $region3
    $region8: #{vgg_forward.1} parent=1 // loop_exit
      _
    %9124 = vsyncpa [#allocation10], 1
    %s9125 = scalar_lea.sflag [#allocation10], 1
    %9126 = vsyncpa %s9125, 1

</llo_original>
